<compile_context>
chip_gen: v7x
topology: tpu7x:2x2x1
jax: 0.10.0
libtpu: 0.0.40
codegen_flags: <defaults>
</compile_context>

<pallas_src>
import functools

import jax
import jax.numpy as jnp
import numpy as np
from jax.experimental import pallas as pl
from jax.experimental.pallas import tpu as pltpu

CONV_CFG = ((8, 4), (4, 2), (3, 1))      # (kernel, stride) of the three conv layers
CONV_CH = (32, 64, 64)                   # conv output channels
FC_HIDDEN = 256


def _out_dim(d, k, s):
    return (d - k) // s + 1


# ---------------------------------------------------------------------------
# Parameter init (PyTorch layouts) and one-time conversion to kernel layouts.
# ---------------------------------------------------------------------------
def init_torch_layout_params(key, in_channels, n_actions, conv_out_size):
    """Kaiming-normal weights / zero biases, stored in PyTorch-native layouts."""
    ks = jax.random.split(key, 7)

    def kaiming(k, shape, fan_in):
        return (2.0 / fan_in) ** 0.5 * jax.random.normal(k, shape, jnp.float32)

    c1, c2, c3 = CONV_CH
    return {
        "c1w": kaiming(ks[0], (c1, in_channels, 8, 8), in_channels * 64),
        "c1b": jnp.zeros((c1,), jnp.float32),
        "c2w": kaiming(ks[1], (c2, c1, 4, 4), c1 * 16),
        "c2b": jnp.zeros((c2,), jnp.float32),
        "c3w": kaiming(ks[2], (c3, c2, 3, 3), c2 * 9),
        "c3b": jnp.zeros((c3,), jnp.float32),
        "v1w": kaiming(ks[3], (FC_HIDDEN, conv_out_size), conv_out_size),
        "v1b": jnp.zeros((FC_HIDDEN,), jnp.float32),
        "v2w": kaiming(ks[4], (1, FC_HIDDEN), FC_HIDDEN),
        "v2b": jnp.zeros((1,), jnp.float32),
        "a1w": kaiming(ks[5], (FC_HIDDEN, conv_out_size), conv_out_size),
        "a1b": jnp.zeros((FC_HIDDEN,), jnp.float32),
        "a2w": kaiming(ks[6], (n_actions, FC_HIDDEN), FC_HIDDEN),
        "a2b": jnp.zeros((n_actions,), jnp.float32),
    }


def _patch_feature_perm(in_channels, k):
    """Permutation p s.t. conv_general_dilated_patches(...)[..., f] equals the
    PyTorch-order (c, kh, kw) flattened patch entry p[f].  Derived from the op
    itself with an index probe so the weight packing can never drift from the
    op's channel-layout convention."""
    probe = jnp.arange(in_channels * k * k, dtype=jnp.float32)
    probe = probe.reshape(1, in_channels, k, k)
    pat = jax.lax.conv_general_dilated_patches(
        probe, filter_shape=(k, k), window_strides=(1, 1), padding="VALID",
        dimension_numbers=("NCHW", "HWIO", "NHWC"))
    return np.asarray(pat).reshape(-1).astype(np.int64)


def prepare_params(tp, conv3_out_hw):
    """Convert PyTorch-layout params to the fused kernel's layout (done once)."""
    oh3, ow3 = conv3_out_hw
    bf16 = jnp.bfloat16
    hid = FC_HIDDEN

    def conv_khkwc(w):                       # rows ordered (kh, kw, c_in)
        oc, ic, kh, kw = w.shape
        return jnp.transpose(w, (2, 3, 1, 0)).reshape(kh * kw * ic, oc)

    def fc1_nhwc(w):                         # permute NCHW-flatten rows -> NHWC-flatten
        h_, f = w.shape
        c = f // (oh3 * ow3)
        return jnp.transpose(w.reshape(h_, c, oh3, ow3), (2, 3, 1, 0)).reshape(f, h_)

    # conv1 weight rows must follow conv_general_dilated_patches' feature order.
    perm1 = _patch_feature_perm(tp["c1w"].shape[1], tp["c1w"].shape[2])
    w1_rows = tp["c1w"].reshape(tp["c1w"].shape[0], -1).T        # (c*kh*kw, OC)
    w1 = w1_rows[perm1, :]

    # Merged dueling second layer: block-diagonal (2*HID, 1+A) weight so the
    # value scalar and the advantage vector come out of ONE lane-dense GEMM.
    n_act = tp["a2w"].shape[0]
    wh2 = jnp.zeros((2 * hid, 1 + n_act), jnp.float32)
    wh2 = wh2.at[:hid, :1].set(jnp.transpose(tp["v2w"]))
    wh2 = wh2.at[hid:, 1:].set(jnp.transpose(tp["a2w"]))

    return {
        "w1": w1.astype(bf16),                      "b1": tp["c1b"].reshape(1, -1),
        "w2": conv_khkwc(tp["c2w"]).astype(bf16),   "b2": tp["c2b"].reshape(1, -1),
        "w3": conv_khkwc(tp["c3w"]).astype(bf16),   "b3": tp["c3b"].reshape(1, -1),
        # fused value||advantage first layer: one lane-dense (F, 512) GEMM.
        "wh1": jnp.concatenate(
            [fc1_nhwc(tp["v1w"]), fc1_nhwc(tp["a1w"])], axis=1).astype(bf16),
        "bh1": jnp.concatenate([tp["v1b"], tp["a1b"]]).reshape(1, -1),
        # fused value|advantage second layer (block-diagonal).
        "wh2": wh2.astype(bf16),
        "bh2": jnp.concatenate([tp["v2b"], tp["a2b"]]).reshape(1, -1),
    }


# ---------------------------------------------------------------------------
# Fused forward pass (matches DuelingDQN.forward semantics).
# ---------------------------------------------------------------------------
def dueling_dqn_forward(params, x, *, block_b=8):
    x = x.astype(jnp.float32)                                    # x.float()
    n, c_in, h, w = x.shape
    (k1, s1), (k2, s2), (k3, s3) = CONV_CFG
    c1, c2, c3 = CONV_CH
    n_actions = params["wh2"].shape[1] - 1

    oh1, ow1 = _out_dim(h, k1, s1), _out_dim(w, k1, s1)
    oh2, ow2 = _out_dim(oh1, k2, s2), _out_dim(ow1, k2, s2)
    oh3, ow3 = _out_dim(oh2, k3, s3), _out_dim(ow2, k3, s3)
    s1_sz, s2_sz, s3_sz = oh1 * ow1, oh2 * ow2, oh3 * ow3
    kp1, kp2, kp3 = c_in * k1 * k1, k2 * k2 * c1, k3 * k3 * c2

    # Pad the batch to a multiple of block_b; grid steps are batch tiles.
    n_pad = block_b * ((n + block_b - 1) // block_b)
    if n_pad != n:
        x = jnp.pad(x, ((0, n_pad - n), (0, 0), (0, 0), (0, 0)))
    g = n_pad // block_b

    # conv1 im2col: a single fused XLA op (no Python slice loop / transposes).
    # TODO(synk): move conv1's im2col in-kernel for v5e/v6e (it expands the input
    # HBM read ~4x); v7x's 3.2 TB/s HBM largely hides it.
    p1 = jax.lax.conv_general_dilated_patches(
        x, filter_shape=(k1, k1), window_strides=(s1, s1), padding="VALID",
        dimension_numbers=("NCHW", "HWIO", "NHWC"))              # (N, OH1, OW1, KP1)
    # Fold the batch tile into the GEMM M dimension: each grid step gets one
    # lane-dense (block_b*OH1*OW1, KP1) slab (no in-kernel reshapes needed).
    p1 = p1.reshape(g, block_b * s1_sz, kp1).astype(jnp.bfloat16)

    def kernel(p1_ref, w1_ref, b1_ref, w2_ref, b2_ref, w3_ref, b3_ref,
               wh1_ref, bh1_ref, wh2_ref, bh2_ref, o_ref, h1_s, p2_s, p3_s):
        f32, bf16 = jnp.float32, jnp.bfloat16

        # ---- conv1: one (B*S1, KP1) x (KP1, C1) GEMM + bias + ReLU ----------
        h1 = jnp.dot(p1_ref[0], w1_ref[...], preferred_element_type=f32)
        h1_s[...] = jnp.maximum(h1 + b1_ref[...], 0.0)       # (B*S1, C1), NHWC rows

        # ---- conv2 (k=4, s=2): strided in-VMEM im2col, one GEMM -------------
        # Static unroll stays small at these spatial dims (block_b*OH2*K2*K2).
        # TODO(synk): for 84x84-scale configs convert these scatter loops to
        # batched lax.fori_loop copies over a (block_b, S, C) layout (and bf16
        # scratch) to bound code size / vreg pressure and widen each store.
        for b in range(block_b):
            for i2 in range(oh2):
                for kh in range(k2):
                    for kw in range(k2):
                        src = b * s1_sz + (s2 * i2 + kh) * ow1 + kw
                        dst = (kh * k2 + kw) * c1
                        p2_s[pl.ds(b * s2_sz + i2 * ow2, ow2), pl.ds(dst, c1)] = (
                            h1_s[pl.ds(src, ow2, stride=s2), :])
        h2 = jnp.dot(p2_s[...].astype(bf16), w2_ref[...], preferred_element_type=f32)
        h2 = jnp.maximum(h2 + b2_ref[...], 0.0)               # (B*S2, C2)

        # ---- conv3 (k=3, s=1): contiguous im2col, one GEMM ------------------
        for b in range(block_b):
            for i3 in range(oh3):
                for kh in range(k3):
                    for kw in range(k3):
                        src = b * s2_sz + (i3 + kh) * ow2 + kw
                        dst = (kh * k3 + kw) * c2
                        p3_s[pl.ds(b * s3_sz + i3 * ow3, ow3), pl.ds(dst, c2)] = (
                            h2[src:src + ow3, :])
        h3 = jnp.dot(p3_s[...].astype(bf16), w3_ref[...], preferred_element_type=f32)
        h3 = jnp.maximum(h3 + b3_ref[...], 0.0)               # (B*S3, C3)

        # ---- flatten: rows are already (sample, spatial)-major; FC1 weight
        # rows were pre-permuted to NHWC-flatten order, so a single reshape
        # (identity when OH3*OW3 == 1) replaces the old slice+concat loop.
        hf = h3 if s3_sz == 1 else h3.reshape(block_b, s3_sz * c3)

        # ---- dueling head: two batched GEMMs, value+advantage fused ---------
        hcat = jnp.dot(hf.astype(bf16), wh1_ref[...], preferred_element_type=f32)
        hcat = jnp.maximum(hcat + bh1_ref[...], 0.0)          # (B, 2*HID)
        head = jnp.dot(hcat.astype(bf16), wh2_ref[...], preferred_element_type=f32)
        head = head + bh2_ref[...]                            # (B, 1+A): [val | adv]
        val = head[:, :1]
        adv = head[:, 1:]
        o_ref[0] = val + (adv - jnp.mean(adv, axis=1, keepdims=True))

    weight_args = (params["w1"], params["b1"], params["w2"], params["b2"],
                   params["w3"], params["b3"], params["wh1"], params["bh1"],
                   params["wh2"], params["bh2"])

    in_specs = [pl.BlockSpec((1, block_b * s1_sz, kp1), lambda i: (i, 0, 0))]
    # Constant index maps -> weights/biases are DMA'd once and stay VMEM-resident
    # across grid steps (no per-step re-fetch).
    in_specs += [pl.BlockSpec(p.shape, lambda i: (0, 0)) for p in weight_args]

    # VMEM budget: double-buffered p1 block + scratches + (double-buffered) weights.
    weight_bytes = sum(int(np.prod(p.shape)) * p.dtype.itemsize for p in weight_args)
    vmem_bytes = (2 * block_b * s1_sz * kp1 * 2
                  + block_b * (s1_sz * c1 + s2_sz * kp2 + s3_sz * kp3) * 4
                  + 2 * weight_bytes
                  + 2 * block_b * n_actions * 4)
    vmem_limit = int(min(max(vmem_bytes + (8 << 20), 32 << 20), 64 << 20))

    out = pl.pallas_call(
        kernel,
        out_shape=jax.ShapeDtypeStruct((g, block_b, n_actions), jnp.float32),
        grid=(g,),                                   # one batch tile per grid step
        in_specs=in_specs,
        out_specs=pl.BlockSpec((1, block_b, n_actions), lambda i: (i, 0, 0)),
        scratch_shapes=[
            pltpu.VMEM((block_b * s1_sz, c1), jnp.float32),    # conv1 activations
            pltpu.VMEM((block_b * s2_sz, kp2), jnp.float32),   # conv2 im2col patches
            pltpu.VMEM((block_b * s3_sz, kp3), jnp.float32),   # conv3 im2col patches
        ],
        compiler_params=pltpu.CompilerParams(
            dimension_semantics=("parallel",),       # batch tiles split across TCs
            vmem_limit_bytes=vmem_limit),
    )(p1, *weight_args)
    return out.reshape(n_pad, n_actions)[:n]


# ---------------------------------------------------------------------------
# Pure-JAX reference (PyTorch layouts) for a correctness check.
# ---------------------------------------------------------------------------
def reference_forward(tp, x):
    x = x.astype(jnp.float32)

    def conv_relu(h, w, b, s):
        y = jax.lax.conv_general_dilated(
            h, w, window_strides=(s, s), padding="VALID",
            dimension_numbers=("NCHW", "OIHW", "NCHW"))
        return jax.nn.relu(y + b.reshape(1, -1, 1, 1))

    h = conv_relu(x, tp["c1w"], tp["c1b"], 4)
    h = conv_relu(h, tp["c2w"], tp["c2b"], 2)
    h = conv_relu(h, tp["c3w"], tp["c3b"], 1)
    f = h.reshape(h.shape[0], -1)                                # NCHW flatten (.view)
    val = jax.nn.relu(f @ tp["v1w"].T + tp["v1b"]) @ tp["v2w"].T + tp["v2b"]
    adv = jax.nn.relu(f @ tp["a1w"].T + tp["a1b"]) @ tp["a2w"].T + tp["a2b"]
    return val + (adv - adv.mean(axis=1, keepdims=True))


if __name__ == "__main__":
    key = jax.random.PRNGKey(0)
    kx, kp = jax.random.split(key)

    # Small Atari-like config: 4 stacked frames, 36x36 spatial (smallest size
    # valid for the 8/4 -> 4/2 -> 3/1 conv stack), 6 actions.
    input_shape = (4, 36, 36)
    n_actions = 6
    batch = 6
    block_b = 4           # padded batch 8 -> grid=(2,): even split on v7x's 2 TCs

    (k1_, s1_), (k2_, s2_), (k3_, s3_) = CONV_CFG
    oh = _out_dim(_out_dim(_out_dim(input_shape[1], k1_, s1_), k2_, s2_), k3_, s3_)
    ow = _out_dim(_out_dim(_out_dim(input_shape[2], k1_, s1_), k2_, s2_), k3_, s3_)
    conv_out_size = CONV_CH[2] * oh * ow

    tparams = init_torch_layout_params(kp, input_shape[0], n_actions, conv_out_size)
    params = prepare_params(tparams, (oh, ow))
    x = jax.random.normal(kx, (batch,) + input_shape, dtype=jnp.float32)

    fwd = jax.jit(functools.partial(dueling_dqn_forward, block_b=block_b))
    out = fwd(params, x)
    jax.block_until_ready(out)
    assert out.shape == (batch, n_actions), out.shape
    assert out.dtype == jnp.float32

    # Correctness check against the pure-JAX reference (tolerance covers the
    # kernel's bf16 weight/activation rounding; f32 accumulation inside).
    ref = reference_forward(tparams, x)
    np.testing.assert_allclose(np.asarray(out), np.asarray(ref), rtol=0.1, atol=0.2)

    print("KERNEL_OK")
</pallas_src>

<mosaic_0001>
module attributes {stable_mosaic.version = 11 : i64} {
  func.func @kernel(%arg0: i32, %arg1: memref<1x256x256xbf16, #tpu.memory_space<vmem>>, %arg2: memref<256x32xbf16, #tpu.memory_space<vmem>>, %arg3: memref<1x32xf32, #tpu.memory_space<vmem>>, %arg4: memref<512x64xbf16, #tpu.memory_space<vmem>>, %arg5: memref<1x64xf32, #tpu.memory_space<vmem>>, %arg6: memref<576x64xbf16, #tpu.memory_space<vmem>>, %arg7: memref<1x64xf32, #tpu.memory_space<vmem>>, %arg8: memref<64x512xbf16, #tpu.memory_space<vmem>>, %arg9: memref<1x512xf32, #tpu.memory_space<vmem>>, %arg10: memref<512x7xbf16, #tpu.memory_space<vmem>>, %arg11: memref<1x7xf32, #tpu.memory_space<vmem>>, %arg12: memref<1x4x6xf32, #tpu.memory_space<vmem>>, %arg13: memref<256x32xf32, #tpu.memory_space<vmem>>, %arg14: memref<36x512xf32, #tpu.memory_space<vmem>>, %arg15: memref<4x576xf32, #tpu.memory_space<vmem>>) attributes {dimension_semantics = [#tpu.dimension_semantics<parallel>], iteration_bounds = array<i64: 2>, scalar_prefetch = 0 : i64, scratch_operands = 3 : i64, tpu.core_type = #tpu.core_type<tc>, window_params = [{transform_indices = @transform_0, window_bounds = array<i64: 1, 256, 256>}, {pipeline_mode = #tpu.pipeline_mode<synchronous>, transform_indices = @transform_1, window_bounds = array<i64: 256, 32>}, {pipeline_mode = #tpu.pipeline_mode<synchronous>, transform_indices = @transform_2, window_bounds = array<i64: 1, 32>}, {pipeline_mode = #tpu.pipeline_mode<synchronous>, transform_indices = @transform_3, window_bounds = array<i64: 512, 64>}, {pipeline_mode = #tpu.pipeline_mode<synchronous>, transform_indices = @transform_4, window_bounds = array<i64: 1, 64>}, {pipeline_mode = #tpu.pipeline_mode<synchronous>, transform_indices = @transform_5, window_bounds = array<i64: 576, 64>}, {pipeline_mode = #tpu.pipeline_mode<synchronous>, transform_indices = @transform_6, window_bounds = array<i64: 1, 64>}, {pipeline_mode = #tpu.pipeline_mode<synchronous>, transform_indices = @transform_7, window_bounds = array<i64: 64, 512>}, {pipeline_mode = #tpu.pipeline_mode<synchronous>, transform_indices = @transform_8, window_bounds = array<i64: 1, 512>}, {pipeline_mode = #tpu.pipeline_mode<synchronous>, transform_indices = @transform_9, window_bounds = array<i64: 512, 7>}, {pipeline_mode = #tpu.pipeline_mode<synchronous>, transform_indices = @transform_10, window_bounds = array<i64: 1, 7>}, {transform_indices = @transform_11, window_bounds = array<i64: 1, 4, 6>}]} {
    %c0 = arith.constant 0 : index
    %c0_0 = arith.constant 0 : index
    %c0_1 = arith.constant 0 : index
    %0 = vector.load %arg1[%c0, %c0_0, %c0_1] : memref<1x256x256xbf16, #tpu.memory_space<vmem>>, vector<1x256x256xbf16>
    %1 = vector.shape_cast %0 : vector<1x256x256xbf16> to vector<256x256xbf16>
    %c0_2 = arith.constant 0 : index
    %c0_3 = arith.constant 0 : index
    %2 = vector.load %arg2[%c0_2, %c0_3] : memref<256x32xbf16, #tpu.memory_space<vmem>>, vector<256x32xbf16>
    %cst = arith.constant dense<0.000000e+00> : vector<256x32xf32>
    %3 = tpu.matmul %1, %2, %cst {dimension_numbers = #tpu.dot_dimension_numbers<[1], [0], [0], [1], [0, 0, 1, 1], [], []>} : vector<256x256xbf16>, vector<256x32xbf16>, vector<256x32xf32> -> vector<256x32xf32>
    %c0_4 = arith.constant 0 : index
    %c0_5 = arith.constant 0 : index
    %4 = vector.load %arg3[%c0_4, %c0_5] : memref<1x32xf32, #tpu.memory_space<vmem>>, vector<1x32xf32>
    %5 = vector.broadcast %4 : vector<1x32xf32> to vector<256x32xf32>
    %6 = arith.addf %3, %5 : vector<256x32xf32>
    %cst_6 = arith.constant 0.000000e+00 : f32
    %7 = vector.broadcast %cst_6 : f32 to vector<256x32xf32>
    %8 = arith.maximumf %6, %7 : vector<256x32xf32>
    %c0_7 = arith.constant 0 : index
    %c0_8 = arith.constant 0 : index
    %9 = vector.load %arg13[%c0_7, %c0_8] : memref<256x32xf32, #tpu.memory_space<vmem>>, vector<256x32xf32>
    tpu.vector_store %arg13[%c0_7, %c0_8], %8 {strides = array<i32>} : memref<256x32xf32, #tpu.memory_space<vmem>>, vector<256x32xf32>,
    %c0_9 = arith.constant 0 : index
    %c0_10 = arith.constant 0 : index
    %10 = tpu.strided_load %arg13[%c0_9, %c0_10] {strides = array<i32: 2, 1>} : memref<256x32xf32, #tpu.memory_space<vmem>>, vector<3x32xf32>
    %c0_11 = arith.constant 0 : index
    %c0_12 = arith.constant 0 : index
    %11 = vector.load %arg14[%c0_11, %c0_12] : memref<36x512xf32, #tpu.memory_space<vmem>>, vector<3x32xf32>
    tpu.vector_store %arg14[%c0_11, %c0_12], %10 {strides = array<i32>} : memref<36x512xf32, #tpu.memory_space<vmem>>, vector<3x32xf32>,
    %c1 = arith.constant 1 : index
    %c0_13 = arith.constant 0 : index
    %12 = tpu.strided_load %arg13[%c1, %c0_13] {strides = array<i32: 2, 1>} : memref<256x32xf32, #tpu.memory_space<vmem>>, vector<3x32xf32>
    %c0_14 = arith.constant 0 : index
    %c32 = arith.constant 32 : index
    %13 = vector.load %arg14[%c0_14, %c32] : memref<36x512xf32, #tpu.memory_space<vmem>>, vector<3x32xf32>
    tpu.vector_store %arg14[%c0_14, %c32], %12 {strides = array<i32>} : memref<36x512xf32, #tpu.memory_space<vmem>>, vector<3x32xf32>,
    %c2 = arith.constant 2 : index
    %c0_15 = arith.constant 0 : index
    %14 = tpu.strided_load %arg13[%c2, %c0_15] {strides = array<i32: 2, 1>} : memref<256x32xf32, #tpu.memory_space<vmem>>, vector<3x32xf32>
    %c0_16 = arith.constant 0 : index
    %c64 = arith.constant 64 : index
    %15 = vector.load %arg14[%c0_16, %c64] : memref<36x512xf32, #tpu.memory_space<vmem>>, vector<3x32xf32>
    tpu.vector_store %arg14[%c0_16, %c64], %14 {strides = array<i32>} : memref<36x512xf32, #tpu.memory_space<vmem>>, vector<3x32xf32>,
    %c3 = arith.constant 3 : index
    %c0_17 = arith.constant 0 : index
    %16 = tpu.strided_load %arg13[%c3, %c0_17] {strides = array<i32: 2, 1>} : memref<256x32xf32, #tpu.memory_space<vmem>>, vector<3x32xf32>
    %c0_18 = arith.constant 0 : index
    %c96 = arith.constant 96 : index
    %17 = vector.load %arg14[%c0_18, %c96] : memref<36x512xf32, #tpu.memory_space<vmem>>, vector<3x32xf32>
    tpu.vector_store %arg14[%c0_18, %c96], %16 {strides = array<i32>} : memref<36x512xf32, #tpu.memory_space<vmem>>, vector<3x32xf32>,
    %c8 = arith.constant 8 : index
    %c0_19 = arith.constant 0 : index
    %18 = tpu.strided_load %arg13[%c8, %c0_19] {strides = array<i32: 2, 1>} : memref<256x32xf32, #tpu.memory_space<vmem>>, vector<3x32xf32>
    %c0_20 = arith.constant 0 : index
    %c128 = arith.constant 128 : index
    %19 = vector.load %arg14[%c0_20, %c128] : memref<36x512xf32, #tpu.memory_space<vmem>>, vector<3x32xf32>
    tpu.vector_store %arg14[%c0_20, %c128], %18 {strides = array<i32>} : memref<36x512xf32, #tpu.memory_space<vmem>>, vector<3x32xf32>,
    %c9 = arith.constant 9 : index
    %c0_21 = arith.constant 0 : index
    %20 = tpu.strided_load %arg13[%c9, %c0_21] {strides = array<i32: 2, 1>} : memref<256x32xf32, #tpu.memory_space<vmem>>, vector<3x32xf32>
    %c0_22 = arith.constant 0 : index
    %c160 = arith.constant 160 : index
    %21 = vector.load %arg14[%c0_22, %c160] : memref<36x512xf32, #tpu.memory_space<vmem>>, vector<3x32xf32>
    tpu.vector_store %arg14[%c0_22, %c160], %20 {strides = array<i32>} : memref<36x512xf32, #tpu.memory_space<vmem>>, vector<3x32xf32>,
    %c10 = arith.constant 10 : index
    %c0_23 = arith.constant 0 : index
    %22 = tpu.strided_load %arg13[%c10, %c0_23] {strides = array<i32: 2, 1>} : memref<256x32xf32, #tpu.memory_space<vmem>>, vector<3x32xf32>
    %c0_24 = arith.constant 0 : index
    %c192 = arith.constant 192 : index
    %23 = vector.load %arg14[%c0_24, %c192] : memref<36x512xf32, #tpu.memory_space<vmem>>, vector<3x32xf32>
    tpu.vector_store %arg14[%c0_24, %c192], %22 {strides = array<i32>} : memref<36x512xf32, #tpu.memory_space<vmem>>, vector<3x32xf32>,
    %c11 = arith.constant 11 : index
    %c0_25 = arith.constant 0 : index
    %24 = tpu.strided_load %arg13[%c11, %c0_25] {strides = array<i32: 2, 1>} : memref<256x32xf32, #tpu.memory_space<vmem>>, vector<3x32xf32>
    %c0_26 = arith.constant 0 : index
    %c224 = arith.constant 224 : index
    %25 = vector.load %arg14[%c0_26, %c224] : memref<36x512xf32, #tpu.memory_space<vmem>>, vector<3x32xf32>
    tpu.vector_store %arg14[%c0_26, %c224], %24 {strides = array<i32>} : memref<36x512xf32, #tpu.memory_space<vmem>>, vector<3x32xf32>,
    %c16 = arith.constant 16 : index
    %c0_27 = arith.constant 0 : index
    %26 = tpu.strided_load %arg13[%c16, %c0_27] {strides = array<i32: 2, 1>} : memref<256x32xf32, #tpu.memory_space<vmem>>, vector<3x32xf32>
    %c0_28 = arith.constant 0 : index
    %c256 = arith.constant 256 : index
    %27 = vector.load %arg14[%c0_28, %c256] : memref<36x512xf32, #tpu.memory_space<vmem>>, vector<3x32xf32>
    tpu.vector_store %arg14[%c0_28, %c256], %26 {strides = array<i32>} : memref<36x512xf32, #tpu.memory_space<vmem>>, vector<3x32xf32>,
    %c17 = arith.constant 17 : index
    %c0_29 = arith.constant 0 : index
    %28 = tpu.strided_load %arg13[%c17, %c0_29] {strides = array<i32: 2, 1>} : memref<256x32xf32, #tpu.memory_space<vmem>>, vector<3x32xf32>
    %c0_30 = arith.constant 0 : index
    %c288 = arith.constant 288 : index
    %29 = vector.load %arg14[%c0_30, %c288] : memref<36x512xf32, #tpu.memory_space<vmem>>, vector<3x32xf32>
    tpu.vector_store %arg14[%c0_30, %c288], %28 {strides = array<i32>} : memref<36x512xf32, #tpu.memory_space<vmem>>, vector<3x32xf32>,
    %c18 = arith.constant 18 : index
    %c0_31 = arith.constant 0 : index
    %30 = tpu.strided_load %arg13[%c18, %c0_31] {strides = array<i32: 2, 1>} : memref<256x32xf32, #tpu.memory_space<vmem>>, vector<3x32xf32>
    %c0_32 = arith.constant 0 : index
    %c320 = arith.constant 320 : index
    %31 = vector.load %arg14[%c0_32, %c320] : memref<36x512xf32, #tpu.memory_space<vmem>>, vector<3x32xf32>
    tpu.vector_store %arg14[%c0_32, %c320], %30 {strides = array<i32>} : memref<36x512xf32, #tpu.memory_space<vmem>>, vector<3x32xf32>,
    %c19 = arith.constant 19 : index
    %c0_33 = arith.constant 0 : index
    %32 = tpu.strided_load %arg13[%c19, %c0_33] {strides = array<i32: 2, 1>} : memref<256x32xf32, #tpu.memory_space<vmem>>, vector<3x32xf32>
    %c0_34 = arith.constant 0 : index
    %c352 = arith.constant 352 : index
    %33 = vector.load %arg14[%c0_34, %c352] : memref<36x512xf32, #tpu.memory_space<vmem>>, vector<3x32xf32>
    tpu.vector_store %arg14[%c0_34, %c352], %32 {strides = array<i32>} : memref<36x512xf32, #tpu.memory_space<vmem>>, vector<3x32xf32>,
    %c24 = arith.constant 24 : index
    %c0_35 = arith.constant 0 : index
    %34 = tpu.strided_load %arg13[%c24, %c0_35] {strides = array<i32: 2, 1>} : memref<256x32xf32, #tpu.memory_space<vmem>>, vector<3x32xf32>
    %c0_36 = arith.constant 0 : index
    %c384 = arith.constant 384 : index
    %35 = vector.load %arg14[%c0_36, %c384] : memref<36x512xf32, #tpu.memory_space<vmem>>, vector<3x32xf32>
    tpu.vector_store %arg14[%c0_36, %c384], %34 {strides = array<i32>} : memref<36x512xf32, #tpu.memory_space<vmem>>, vector<3x32xf32>,
    %c25 = arith.constant 25 : index
    %c0_37 = arith.constant 0 : index
    %36 = tpu.strided_load %arg13[%c25, %c0_37] {strides = array<i32: 2, 1>} : memref<256x32xf32, #tpu.memory_space<vmem>>, vector<3x32xf32>
    %c0_38 = arith.constant 0 : index
    %c416 = arith.constant 416 : index
    %37 = vector.load %arg14[%c0_38, %c416] : memref<36x512xf32, #tpu.memory_space<vmem>>, vector<3x32xf32>
    tpu.vector_store %arg14[%c0_38, %c416], %36 {strides = array<i32>} : memref<36x512xf32, #tpu.memory_space<vmem>>, vector<3x32xf32>,
    %c26 = arith.constant 26 : index
    %c0_39 = arith.constant 0 : index
    %38 = tpu.strided_load %arg13[%c26, %c0_39] {strides = array<i32: 2, 1>} : memref<256x32xf32, #tpu.memory_space<vmem>>, vector<3x32xf32>
    %c0_40 = arith.constant 0 : index
    %c448 = arith.constant 448 : index
    %39 = vector.load %arg14[%c0_40, %c448] : memref<36x512xf32, #tpu.memory_space<vmem>>, vector<3x32xf32>
    tpu.vector_store %arg14[%c0_40, %c448], %38 {strides = array<i32>} : memref<36x512xf32, #tpu.memory_space<vmem>>, vector<3x32xf32>,
    %c27 = arith.constant 27 : index
    %c0_41 = arith.constant 0 : index
    %40 = tpu.strided_load %arg13[%c27, %c0_41] {strides = array<i32: 2, 1>} : memref<256x32xf32, #tpu.memory_space<vmem>>, vector<3x32xf32>
    %c0_42 = arith.constant 0 : index
    %c480 = arith.constant 480 : index
    %41 = vector.load %arg14[%c0_42, %c480] : memref<36x512xf32, #tpu.memory_space<vmem>>, vector<3x32xf32>
    tpu.vector_store %arg14[%c0_42, %c480], %40 {strides = array<i32>} : memref<36x512xf32, #tpu.memory_space<vmem>>, vector<3x32xf32>,
    %c16_43 = arith.constant 16 : index
    %c0_44 = arith.constant 0 : index
    %42 = tpu.strided_load %arg13[%c16_43, %c0_44] {strides = array<i32: 2, 1>} : memref<256x32xf32, #tpu.memory_space<vmem>>, vector<3x32xf32>
    %c3_45 = arith.constant 3 : index
    %c0_46 = arith.constant 0 : index
    %43 = vector.load %arg14[%c3_45, %c0_46] : memref<36x512xf32, #tpu.memory_space<vmem>>, vector<3x32xf32>
    tpu.vector_store %arg14[%c3_45, %c0_46], %42 {strides = array<i32>} : memref<36x512xf32, #tpu.memory_space<vmem>>, vector<3x32xf32>,
    %c17_47 = arith.constant 17 : index
    %c0_48 = arith.constant 0 : index
    %44 = tpu.strided_load %arg13[%c17_47, %c0_48] {strides = array<i32: 2, 1>} : memref<256x32xf32, #tpu.memory_space<vmem>>, vector<3x32xf32>
    %c3_49 = arith.constant 3 : index
    %c32_50 = arith.constant 32 : index
    %45 = vector.load %arg14[%c3_49, %c32_50] : memref<36x512xf32, #tpu.memory_space<vmem>>, vector<3x32xf32>
    tpu.vector_store %arg14[%c3_49, %c32_50], %44 {strides = array<i32>} : memref<36x512xf32, #tpu.memory_space<vmem>>, vector<3x32xf32>,
    %c18_51 = arith.constant 18 : index
    %c0_52 = arith.constant 0 : index
    %46 = tpu.strided_load %arg13[%c18_51, %c0_52] {strides = array<i32: 2, 1>} : memref<256x32xf32, #tpu.memory_space<vmem>>, vector<3x32xf32>
    %c3_53 = arith.constant 3 : index
    %c64_54 = arith.constant 64 : index
    %47 = vector.load %arg14[%c3_53, %c64_54] : memref<36x512xf32, #tpu.memory_space<vmem>>, vector<3x32xf32>
    tpu.vector_store %arg14[%c3_53, %c64_54], %46 {strides = array<i32>} : memref<36x512xf32, #tpu.memory_space<vmem>>, vector<3x32xf32>,
    %c19_55 = arith.constant 19 : index
    %c0_56 = arith.constant 0 : index
    %48 = tpu.strided_load %arg13[%c19_55, %c0_56] {strides = array<i32: 2, 1>} : memref<256x32xf32, #tpu.memory_space<vmem>>, vector<3x32xf32>
    %c3_57 = arith.constant 3 : index
    %c96_58 = arith.constant 96 : index
    %49 = vector.load %arg14[%c3_57, %c96_58] : memref<36x512xf32, #tpu.memory_space<vmem>>, vector<3x32xf32>
    tpu.vector_store %arg14[%c3_57, %c96_58], %48 {strides = array<i32>} : memref<36x512xf32, #tpu.memory_space<vmem>>, vector<3x32xf32>,
    %c24_59 = arith.constant 24 : index
    %c0_60 = arith.constant 0 : index
    %50 = tpu.strided_load %arg13[%c24_59, %c0_60] {strides = array<i32: 2, 1>} : memref<256x32xf32, #tpu.memory_space<vmem>>, vector<3x32xf32>
    %c3_61 = arith.constant 3 : index
    %c128_62 = arith.constant 128 : index
    %51 = vector.load %arg14[%c3_61, %c128_62] : memref<36x512xf32, #tpu.memory_space<vmem>>, vector<3x32xf32>
    tpu.vector_store %arg14[%c3_61, %c128_62], %50 {strides = array<i32>} : memref<36x512xf32, #tpu.memory_space<vmem>>, vector<3x32xf32>,
    %c25_63 = arith.constant 25 : index
    %c0_64 = arith.constant 0 : index
    %52 = tpu.strided_load %arg13[%c25_63, %c0_64] {strides = array<i32: 2, 1>} : memref<256x32xf32, #tpu.memory_space<vmem>>, vector<3x32xf32>
    %c3_65 = arith.constant 3 : index
    %c160_66 = arith.constant 160 : index
    %53 = vector.load %arg14[%c3_65, %c160_66] : memref<36x512xf32, #tpu.memory_space<vmem>>, vector<3x32xf32>
    tpu.vector_store %arg14[%c3_65, %c160_66], %52 {strides = array<i32>} : memref<36x512xf32, #tpu.memory_space<vmem>>, vector<3x32xf32>,
    %c26_67 = arith.constant 26 : index
    %c0_68 = arith.constant 0 : index
    %54 = tpu.strided_load %arg13[%c26_67, %c0_68] {strides = array<i32: 2, 1>} : memref<256x32xf32, #tpu.memory_space<vmem>>, vector<3x32xf32>
    %c3_69 = arith.constant 3 : index
    %c192_70 = arith.constant 192 : index
    %55 = vector.load %arg14[%c3_69, %c192_70] : memref<36x512xf32, #tpu.memory_space<vmem>>, vector<3x32xf32>
    tpu.vector_store %arg14[%c3_69, %c192_70], %54 {strides = array<i32>} : memref<36x512xf32, #tpu.memory_space<vmem>>, vector<3x32xf32>,
    %c27_71 = arith.constant 27 : index
    %c0_72 = arith.constant 0 : index
    %56 = tpu.strided_load %arg13[%c27_71, %c0_72] {strides = array<i32: 2, 1>} : memref<256x32xf32, #tpu.memory_space<vmem>>, vector<3x32xf32>
    %c3_73 = arith.constant 3 : index
    %c224_74 = arith.constant 224 : index
    %57 = vector.load %arg14[%c3_73, %c224_74] : memref<36x512xf32, #tpu.memory_space<vmem>>, vector<3x32xf32>
    tpu.vector_store %arg14[%c3_73, %c224_74], %56 {strides = array<i32>} : memref<36x512xf32, #tpu.memory_space<vmem>>, vector<3x32xf32>,
    %c32_75 = arith.constant 32 : index
    %c0_76 = arith.constant 0 : index
    %58 = tpu.strided_load %arg13[%c32_75, %c0_76] {strides = array<i32: 2, 1>} : memref<256x32xf32, #tpu.memory_space<vmem>>, vector<3x32xf32>
    %c3_77 = arith.constant 3 : index
    %c256_78 = arith.constant 256 : index
    %59 = vector.load %arg14[%c3_77, %c256_78] : memref<36x512xf32, #tpu.memory_space<vmem>>, vector<3x32xf32>
    tpu.vector_store %arg14[%c3_77, %c256_78], %58 {strides = array<i32>} : memref<36x512xf32, #tpu.memory_space<vmem>>, vector<3x32xf32>,
    %c33 = arith.constant 33 : index
    %c0_79 = arith.constant 0 : index
    %60 = tpu.strided_load %arg13[%c33, %c0_79] {strides = array<i32: 2, 1>} : memref<256x32xf32, #tpu.memory_space<vmem>>, vector<3x32xf32>
    %c3_80 = arith.constant 3 : index
    %c288_81 = arith.constant 288 : index
    %61 = vector.load %arg14[%c3_80, %c288_81] : memref<36x512xf32, #tpu.memory_space<vmem>>, vector<3x32xf32>
    tpu.vector_store %arg14[%c3_80, %c288_81], %60 {strides = array<i32>} : memref<36x512xf32, #tpu.memory_space<vmem>>, vector<3x32xf32>,
    %c34 = arith.constant 34 : index
    %c0_82 = arith.constant 0 : index
    %62 = tpu.strided_load %arg13[%c34, %c0_82] {strides = array<i32: 2, 1>} : memref<256x32xf32, #tpu.memory_space<vmem>>, vector<3x32xf32>
    %c3_83 = arith.constant 3 : index
    %c320_84 = arith.constant 320 : index
    %63 = vector.load %arg14[%c3_83, %c320_84] : memref<36x512xf32, #tpu.memory_space<vmem>>, vector<3x32xf32>
    tpu.vector_store %arg14[%c3_83, %c320_84], %62 {strides = array<i32>} : memref<36x512xf32, #tpu.memory_space<vmem>>, vector<3x32xf32>,
    %c35 = arith.constant 35 : index
    %c0_85 = arith.constant 0 : index
    %64 = tpu.strided_load %arg13[%c35, %c0_85] {strides = array<i32: 2, 1>} : memref<256x32xf32, #tpu.memory_space<vmem>>, vector<3x32xf32>
    %c3_86 = arith.constant 3 : index
    %c352_87 = arith.constant 352 : index
    %65 = vector.load %arg14[%c3_86, %c352_87] : memref<36x512xf32, #tpu.memory_space<vmem>>, vector<3x32xf32>
    tpu.vector_store %arg14[%c3_86, %c352_87], %64 {strides = array<i32>} : memref<36x512xf32, #tpu.memory_space<vmem>>, vector<3x32xf32>,
    %c40 = arith.constant 40 : index
    %c0_88 = arith.constant 0 : index
    %66 = tpu.strided_load %arg13[%c40, %c0_88] {strides = array<i32: 2, 1>} : memref<256x32xf32, #tpu.memory_space<vmem>>, vector<3x32xf32>
    %c3_89 = arith.constant 3 : index
    %c384_90 = arith.constant 384 : index
    %67 = vector.load %arg14[%c3_89, %c384_90] : memref<36x512xf32, #tpu.memory_space<vmem>>, vector<3x32xf32>
    tpu.vector_store %arg14[%c3_89, %c384_90], %66 {strides = array<i32>} : memref<36x512xf32, #tpu.memory_space<vmem>>, vector<3x32xf32>,
    %c41 = arith.constant 41 : index
    %c0_91 = arith.constant 0 : index
    %68 = tpu.strided_load %arg13[%c41, %c0_91] {strides = array<i32: 2, 1>} : memref<256x32xf32, #tpu.memory_space<vmem>>, vector<3x32xf32>
    %c3_92 = arith.constant 3 : index
    %c416_93 = arith.constant 416 : index
    %69 = vector.load %arg14[%c3_92, %c416_93] : memref<36x512xf32, #tpu.memory_space<vmem>>, vector<3x32xf32>
    tpu.vector_store %arg14[%c3_92, %c416_93], %68 {strides = array<i32>} : memref<36x512xf32, #tpu.memory_space<vmem>>, vector<3x32xf32>,
    %c42 = arith.constant 42 : index
    %c0_94 = arith.constant 0 : index
    %70 = tpu.strided_load %arg13[%c42, %c0_94] {strides = array<i32: 2, 1>} : memref<256x32xf32, #tpu.memory_space<vmem>>, vector<3x32xf32>
    %c3_95 = arith.constant 3 : index
    %c448_96 = arith.constant 448 : index
    %71 = vector.load %arg14[%c3_95, %c448_96] : memref<36x512xf32, #tpu.memory_space<vmem>>, vector<3x32xf32>
    tpu.vector_store %arg14[%c3_95, %c448_96], %70 {strides = array<i32>} : memref<36x512xf32, #tpu.memory_space<vmem>>, vector<3x32xf32>,
    %c43 = arith.constant 43 : index
    %c0_97 = arith.constant 0 : index
    %72 = tpu.strided_load %arg13[%c43, %c0_97] {strides = array<i32: 2, 1>} : memref<256x32xf32, #tpu.memory_space<vmem>>, vector<3x32xf32>
    %c3_98 = arith.constant 3 : index
    %c480_99 = arith.constant 480 : index
    %73 = vector.load %arg14[%c3_98, %c480_99] : memref<36x512xf32, #tpu.memory_space<vmem>>, vector<3x32xf32>
    tpu.vector_store %arg14[%c3_98, %c480_99], %72 {strides = array<i32>} : memref<36x512xf32, #tpu.memory_space<vmem>>, vector<3x32xf32>,
    %c32_100 = arith.constant 32 : index
    %c0_101 = arith.constant 0 : index
    %74 = tpu.strided_load %arg13[%c32_100, %c0_101] {strides = array<i32: 2, 1>} : memref<256x32xf32, #tpu.memory_space<vmem>>, vector<3x32xf32>
    %c6 = arith.constant 6 : index
    %c0_102 = arith.constant 0 : index
    %75 = vector.load %arg14[%c6, %c0_102] : memref<36x512xf32, #tpu.memory_space<vmem>>, vector<3x32xf32>
    tpu.vector_store %arg14[%c6, %c0_102], %74 {strides = array<i32>} : memref<36x512xf32, #tpu.memory_space<vmem>>, vector<3x32xf32>,
    %c33_103 = arith.constant 33 : index
    %c0_104 = arith.constant 0 : index
    %76 = tpu.strided_load %arg13[%c33_103, %c0_104] {strides = array<i32: 2, 1>} : memref<256x32xf32, #tpu.memory_space<vmem>>, vector<3x32xf32>
    %c6_105 = arith.constant 6 : index
    %c32_106 = arith.constant 32 : index
    %77 = vector.load %arg14[%c6_105, %c32_106] : memref<36x512xf32, #tpu.memory_space<vmem>>, vector<3x32xf32>
    tpu.vector_store %arg14[%c6_105, %c32_106], %76 {strides = array<i32>} : memref<36x512xf32, #tpu.memory_space<vmem>>, vector<3x32xf32>,
    %c34_107 = arith.constant 34 : index
    %c0_108 = arith.constant 0 : index
    %78 = tpu.strided_load %arg13[%c34_107, %c0_108] {strides = array<i32: 2, 1>} : memref<256x32xf32, #tpu.memory_space<vmem>>, vector<3x32xf32>
    %c6_109 = arith.constant 6 : index
    %c64_110 = arith.constant 64 : index
    %79 = vector.load %arg14[%c6_109, %c64_110] : memref<36x512xf32, #tpu.memory_space<vmem>>, vector<3x32xf32>
    tpu.vector_store %arg14[%c6_109, %c64_110], %78 {strides = array<i32>} : memref<36x512xf32, #tpu.memory_space<vmem>>, vector<3x32xf32>,
    %c35_111 = arith.constant 35 : index
    %c0_112 = arith.constant 0 : index
    %80 = tpu.strided_load %arg13[%c35_111, %c0_112] {strides = array<i32: 2, 1>} : memref<256x32xf32, #tpu.memory_space<vmem>>, vector<3x32xf32>
    %c6_113 = arith.constant 6 : index
    %c96_114 = arith.constant 96 : index
    %81 = vector.load %arg14[%c6_113, %c96_114] : memref<36x512xf32, #tpu.memory_space<vmem>>, vector<3x32xf32>
    tpu.vector_store %arg14[%c6_113, %c96_114], %80 {strides = array<i32>} : memref<36x512xf32, #tpu.memory_space<vmem>>, vector<3x32xf32>,
    %c40_115 = arith.constant 40 : index
    %c0_116 = arith.constant 0 : index
    %82 = tpu.strided_load %arg13[%c40_115, %c0_116] {strides = array<i32: 2, 1>} : memref<256x32xf32, #tpu.memory_space<vmem>>, vector<3x32xf32>
    %c6_117 = arith.constant 6 : index
    %c128_118 = arith.constant 128 : index
    %83 = vector.load %arg14[%c6_117, %c128_118] : memref<36x512xf32, #tpu.memory_space<vmem>>, vector<3x32xf32>
    tpu.vector_store %arg14[%c6_117, %c128_118], %82 {strides = array<i32>} : memref<36x512xf32, #tpu.memory_space<vmem>>, vector<3x32xf32>,
    %c41_119 = arith.constant 41 : index
    %c0_120 = arith.constant 0 : index
    %84 = tpu.strided_load %arg13[%c41_119, %c0_120] {strides = array<i32: 2, 1>} : memref<256x32xf32, #tpu.memory_space<vmem>>, vector<3x32xf32>
    %c6_121 = arith.constant 6 : index
    %c160_122 = arith.constant 160 : index
    %85 = vector.load %arg14[%c6_121, %c160_122] : memref<36x512xf32, #tpu.memory_space<vmem>>, vector<3x32xf32>
    tpu.vector_store %arg14[%c6_121, %c160_122], %84 {strides = array<i32>} : memref<36x512xf32, #tpu.memory_space<vmem>>, vector<3x32xf32>,
    %c42_123 = arith.constant 42 : index
    %c0_124 = arith.constant 0 : index
    %86 = tpu.strided_load %arg13[%c42_123, %c0_124] {strides = array<i32: 2, 1>} : memref<256x32xf32, #tpu.memory_space<vmem>>, vector<3x32xf32>
    %c6_125 = arith.constant 6 : index
    %c192_126 = arith.constant 192 : index
    %87 = vector.load %arg14[%c6_125, %c192_126] : memref<36x512xf32, #tpu.memory_space<vmem>>, vector<3x32xf32>
    tpu.vector_store %arg14[%c6_125, %c192_126], %86 {strides = array<i32>} : memref<36x512xf32, #tpu.memory_space<vmem>>, vector<3x32xf32>,
    %c43_127 = arith.constant 43 : index
    %c0_128 = arith.constant 0 : index
    %88 = tpu.strided_load %arg13[%c43_127, %c0_128] {strides = array<i32: 2, 1>} : memref<256x32xf32, #tpu.memory_space<vmem>>, vector<3x32xf32>
    %c6_129 = arith.constant 6 : index
    %c224_130 = arith.constant 224 : index
    %89 = vector.load %arg14[%c6_129, %c224_130] : memref<36x512xf32, #tpu.memory_space<vmem>>, vector<3x32xf32>
    tpu.vector_store %arg14[%c6_129, %c224_130], %88 {strides = array<i32>} : memref<36x512xf32, #tpu.memory_space<vmem>>, vector<3x32xf32>,
    %c48 = arith.constant 48 : index
    %c0_131 = arith.constant 0 : index
    %90 = tpu.strided_load %arg13[%c48, %c0_131] {strides = array<i32: 2, 1>} : memref<256x32xf32, #tpu.memory_space<vmem>>, vector<3x32xf32>
    %c6_132 = arith.constant 6 : index
    %c256_133 = arith.constant 256 : index
    %91 = vector.load %arg14[%c6_132, %c256_133] : memref<36x512xf32, #tpu.memory_space<vmem>>, vector<3x32xf32>
    tpu.vector_store %arg14[%c6_132, %c256_133], %90 {strides = array<i32>} : memref<36x512xf32, #tpu.memory_space<vmem>>, vector<3x32xf32>,
    %c49 = arith.constant 49 : index
    %c0_134 = arith.constant 0 : index
    %92 = tpu.strided_load %arg13[%c49, %c0_134] {strides = array<i32: 2, 1>} : memref<256x32xf32, #tpu.memory_space<vmem>>, vector<3x32xf32>
    %c6_135 = arith.constant 6 : index
    %c288_136 = arith.constant 288 : index
    %93 = vector.load %arg14[%c6_135, %c288_136] : memref<36x512xf32, #tpu.memory_space<vmem>>, vector<3x32xf32>
    tpu.vector_store %arg14[%c6_135, %c288_136], %92 {strides = array<i32>} : memref<36x512xf32, #tpu.memory_space<vmem>>, vector<3x32xf32>,
    %c50 = arith.constant 50 : index
    %c0_137 = arith.constant 0 : index
    %94 = tpu.strided_load %arg13[%c50, %c0_137] {strides = array<i32: 2, 1>} : memref<256x32xf32, #tpu.memory_space<vmem>>, vector<3x32xf32>
    %c6_138 = arith.constant 6 : index
    %c320_139 = arith.constant 320 : index
    %95 = vector.load %arg14[%c6_138, %c320_139] : memref<36x512xf32, #tpu.memory_space<vmem>>, vector<3x32xf32>
    tpu.vector_store %arg14[%c6_138, %c320_139], %94 {strides = array<i32>} : memref<36x512xf32, #tpu.memory_space<vmem>>, vector<3x32xf32>,
    %c51 = arith.constant 51 : index
    %c0_140 = arith.constant 0 : index
    %96 = tpu.strided_load %arg13[%c51, %c0_140] {strides = array<i32: 2, 1>} : memref<256x32xf32, #tpu.memory_space<vmem>>, vector<3x32xf32>
    %c6_141 = arith.constant 6 : index
    %c352_142 = arith.constant 352 : index
    %97 = vector.load %arg14[%c6_141, %c352_142] : memref<36x512xf32, #tpu.memory_space<vmem>>, vector<3x32xf32>
    tpu.vector_store %arg14[%c6_141, %c352_142], %96 {strides = array<i32>} : memref<36x512xf32, #tpu.memory_space<vmem>>, vector<3x32xf32>,
    %c56 = arith.constant 56 : index
    %c0_143 = arith.constant 0 : index
    %98 = tpu.strided_load %arg13[%c56, %c0_143] {strides = array<i32: 2, 1>} : memref<256x32xf32, #tpu.memory_space<vmem>>, vector<3x32xf32>
    %c6_144 = arith.constant 6 : index
    %c384_145 = arith.constant 384 : index
    %99 = vector.load %arg14[%c6_144, %c384_145] : memref<36x512xf32, #tpu.memory_space<vmem>>, vector<3x32xf32>
    tpu.vector_store %arg14[%c6_144, %c384_145], %98 {strides = array<i32>} : memref<36x512xf32, #tpu.memory_space<vmem>>, vector<3x32xf32>,
    %c57 = arith.constant 57 : index
    %c0_146 = arith.constant 0 : index
    %100 = tpu.strided_load %arg13[%c57, %c0_146] {strides = array<i32: 2, 1>} : memref<256x32xf32, #tpu.memory_space<vmem>>, vector<3x32xf32>
    %c6_147 = arith.constant 6 : index
    %c416_148 = arith.constant 416 : index
    %101 = vector.load %arg14[%c6_147, %c416_148] : memref<36x512xf32, #tpu.memory_space<vmem>>, vector<3x32xf32>
    tpu.vector_store %arg14[%c6_147, %c416_148], %100 {strides = array<i32>} : memref<36x512xf32, #tpu.memory_space<vmem>>, vector<3x32xf32>,
    %c58 = arith.constant 58 : index
    %c0_149 = arith.constant 0 : index
    %102 = tpu.strided_load %arg13[%c58, %c0_149] {strides = array<i32: 2, 1>} : memref<256x32xf32, #tpu.memory_space<vmem>>, vector<3x32xf32>
    %c6_150 = arith.constant 6 : index
    %c448_151 = arith.constant 448 : index
    %103 = vector.load %arg14[%c6_150, %c448_151] : memref<36x512xf32, #tpu.memory_space<vmem>>, vector<3x32xf32>
    tpu.vector_store %arg14[%c6_150, %c448_151], %102 {strides = array<i32>} : memref<36x512xf32, #tpu.memory_space<vmem>>, vector<3x32xf32>,
    %c59 = arith.constant 59 : index
    %c0_152 = arith.constant 0 : index
    %104 = tpu.strided_load %arg13[%c59, %c0_152] {strides = array<i32: 2, 1>} : memref<256x32xf32, #tpu.memory_space<vmem>>, vector<3x32xf32>
    %c6_153 = arith.constant 6 : index
    %c480_154 = arith.constant 480 : index
    %105 = vector.load %arg14[%c6_153, %c480_154] : memref<36x512xf32, #tpu.memory_space<vmem>>, vector<3x32xf32>
    tpu.vector_store %arg14[%c6_153, %c480_154], %104 {strides = array<i32>} : memref<36x512xf32, #tpu.memory_space<vmem>>, vector<3x32xf32>,
    %c64_155 = arith.constant 64 : index
    %c0_156 = arith.constant 0 : index
    %106 = tpu.strided_load %arg13[%c64_155, %c0_156] {strides = array<i32: 2, 1>} : memref<256x32xf32, #tpu.memory_space<vmem>>, vector<3x32xf32>
    %c9_157 = arith.constant 9 : index
    %c0_158 = arith.constant 0 : index
    %107 = vector.load %arg14[%c9_157, %c0_158] : memref<36x512xf32, #tpu.memory_space<vmem>>, vector<3x32xf32>
    tpu.vector_store %arg14[%c9_157, %c0_158], %106 {strides = array<i32>} : memref<36x512xf32, #tpu.memory_space<vmem>>, vector<3x32xf32>,
    %c65 = arith.constant 65 : index
    %c0_159 = arith.constant 0 : index
    %108 = tpu.strided_load %arg13[%c65, %c0_159] {strides = array<i32: 2, 1>} : memref<256x32xf32, #tpu.memory_space<vmem>>, vector<3x32xf32>
    %c9_160 = arith.constant 9 : index
    %c32_161 = arith.constant 32 : index
    %109 = vector.load %arg14[%c9_160, %c32_161] : memref<36x512xf32, #tpu.memory_space<vmem>>, vector<3x32xf32>
    tpu.vector_store %arg14[%c9_160, %c32_161], %108 {strides = array<i32>} : memref<36x512xf32, #tpu.memory_space<vmem>>, vector<3x32xf32>,
    %c66 = arith.constant 66 : index
    %c0_162 = arith.constant 0 : index
    %110 = tpu.strided_load %arg13[%c66, %c0_162] {strides = array<i32: 2, 1>} : memref<256x32xf32, #tpu.memory_space<vmem>>, vector<3x32xf32>
    %c9_163 = arith.constant 9 : index
    %c64_164 = arith.constant 64 : index
    %111 = vector.load %arg14[%c9_163, %c64_164] : memref<36x512xf32, #tpu.memory_space<vmem>>, vector<3x32xf32>
    tpu.vector_store %arg14[%c9_163, %c64_164], %110 {strides = array<i32>} : memref<36x512xf32, #tpu.memory_space<vmem>>, vector<3x32xf32>,
    %c67 = arith.constant 67 : index
    %c0_165 = arith.constant 0 : index
    %112 = tpu.strided_load %arg13[%c67, %c0_165] {strides = array<i32: 2, 1>} : memref<256x32xf32, #tpu.memory_space<vmem>>, vector<3x32xf32>
    %c9_166 = arith.constant 9 : index
    %c96_167 = arith.constant 96 : index
    %113 = vector.load %arg14[%c9_166, %c96_167] : memref<36x512xf32, #tpu.memory_space<vmem>>, vector<3x32xf32>
    tpu.vector_store %arg14[%c9_166, %c96_167], %112 {strides = array<i32>} : memref<36x512xf32, #tpu.memory_space<vmem>>, vector<3x32xf32>,
    %c72 = arith.constant 72 : index
    %c0_168 = arith.constant 0 : index
    %114 = tpu.strided_load %arg13[%c72, %c0_168] {strides = array<i32: 2, 1>} : memref<256x32xf32, #tpu.memory_space<vmem>>, vector<3x32xf32>
    %c9_169 = arith.constant 9 : index
    %c128_170 = arith.constant 128 : index
    %115 = vector.load %arg14[%c9_169, %c128_170] : memref<36x512xf32, #tpu.memory_space<vmem>>, vector<3x32xf32>
    tpu.vector_store %arg14[%c9_169, %c128_170], %114 {strides = array<i32>} : memref<36x512xf32, #tpu.memory_space<vmem>>, vector<3x32xf32>,
    %c73 = arith.constant 73 : index
    %c0_171 = arith.constant 0 : index
    %116 = tpu.strided_load %arg13[%c73, %c0_171] {strides = array<i32: 2, 1>} : memref<256x32xf32, #tpu.memory_space<vmem>>, vector<3x32xf32>
    %c9_172 = arith.constant 9 : index
    %c160_173 = arith.constant 160 : index
    %117 = vector.load %arg14[%c9_172, %c160_173] : memref<36x512xf32, #tpu.memory_space<vmem>>, vector<3x32xf32>
    tpu.vector_store %arg14[%c9_172, %c160_173], %116 {strides = array<i32>} : memref<36x512xf32, #tpu.memory_space<vmem>>, vector<3x32xf32>,
    %c74 = arith.constant 74 : index
    %c0_174 = arith.constant 0 : index
    %118 = tpu.strided_load %arg13[%c74, %c0_174] {strides = array<i32: 2, 1>} : memref<256x32xf32, #tpu.memory_space<vmem>>, vector<3x32xf32>
    %c9_175 = arith.constant 9 : index
    %c192_176 = arith.constant 192 : index
    %119 = vector.load %arg14[%c9_175, %c192_176] : memref<36x512xf32, #tpu.memory_space<vmem>>, vector<3x32xf32>
    tpu.vector_store %arg14[%c9_175, %c192_176], %118 {strides = array<i32>} : memref<36x512xf32, #tpu.memory_space<vmem>>, vector<3x32xf32>,
    %c75 = arith.constant 75 : index
    %c0_177 = arith.constant 0 : index
    %120 = tpu.strided_load %arg13[%c75, %c0_177] {strides = array<i32: 2, 1>} : memref<256x32xf32, #tpu.memory_space<vmem>>, vector<3x32xf32>
    %c9_178 = arith.constant 9 : index
    %c224_179 = arith.constant 224 : index
    %121 = vector.load %arg14[%c9_178, %c224_179] : memref<36x512xf32, #tpu.memory_space<vmem>>, vector<3x32xf32>
    tpu.vector_store %arg14[%c9_178, %c224_179], %120 {strides = array<i32>} : memref<36x512xf32, #tpu.memory_space<vmem>>, vector<3x32xf32>,
    %c80 = arith.constant 80 : index
    %c0_180 = arith.constant 0 : index
    %122 = tpu.strided_load %arg13[%c80, %c0_180] {strides = array<i32: 2, 1>} : memref<256x32xf32, #tpu.memory_space<vmem>>, vector<3x32xf32>
    %c9_181 = arith.constant 9 : index
    %c256_182 = arith.constant 256 : index
    %123 = vector.load %arg14[%c9_181, %c256_182] : memref<36x512xf32, #tpu.memory_space<vmem>>, vector<3x32xf32>
    tpu.vector_store %arg14[%c9_181, %c256_182], %122 {strides = array<i32>} : memref<36x512xf32, #tpu.memory_space<vmem>>, vector<3x32xf32>,
    %c81 = arith.constant 81 : index
    %c0_183 = arith.constant 0 : index
    %124 = tpu.strided_load %arg13[%c81, %c0_183] {strides = array<i32: 2, 1>} : memref<256x32xf32, #tpu.memory_space<vmem>>, vector<3x32xf32>
    %c9_184 = arith.constant 9 : index
    %c288_185 = arith.constant 288 : index
    %125 = vector.load %arg14[%c9_184, %c288_185] : memref<36x512xf32, #tpu.memory_space<vmem>>, vector<3x32xf32>
    tpu.vector_store %arg14[%c9_184, %c288_185], %124 {strides = array<i32>} : memref<36x512xf32, #tpu.memory_space<vmem>>, vector<3x32xf32>,
    %c82 = arith.constant 82 : index
    %c0_186 = arith.constant 0 : index
    %126 = tpu.strided_load %arg13[%c82, %c0_186] {strides = array<i32: 2, 1>} : memref<256x32xf32, #tpu.memory_space<vmem>>, vector<3x32xf32>
    %c9_187 = arith.constant 9 : index
    %c320_188 = arith.constant 320 : index
    %127 = vector.load %arg14[%c9_187, %c320_188] : memref<36x512xf32, #tpu.memory_space<vmem>>, vector<3x32xf32>
    tpu.vector_store %arg14[%c9_187, %c320_188], %126 {strides = array<i32>} : memref<36x512xf32, #tpu.memory_space<vmem>>, vector<3x32xf32>,
    %c83 = arith.constant 83 : index
    %c0_189 = arith.constant 0 : index
    %128 = tpu.strided_load %arg13[%c83, %c0_189] {strides = array<i32: 2, 1>} : memref<256x32xf32, #tpu.memory_space<vmem>>, vector<3x32xf32>
    %c9_190 = arith.constant 9 : index
    %c352_191 = arith.constant 352 : index
    %129 = vector.load %arg14[%c9_190, %c352_191] : memref<36x512xf32, #tpu.memory_space<vmem>>, vector<3x32xf32>
    tpu.vector_store %arg14[%c9_190, %c352_191], %128 {strides = array<i32>} : memref<36x512xf32, #tpu.memory_space<vmem>>, vector<3x32xf32>,
    %c88 = arith.constant 88 : index
    %c0_192 = arith.constant 0 : index
    %130 = tpu.strided_load %arg13[%c88, %c0_192] {strides = array<i32: 2, 1>} : memref<256x32xf32, #tpu.memory_space<vmem>>, vector<3x32xf32>
    %c9_193 = arith.constant 9 : index
    %c384_194 = arith.constant 384 : index
    %131 = vector.load %arg14[%c9_193, %c384_194] : memref<36x512xf32, #tpu.memory_space<vmem>>, vector<3x32xf32>
    tpu.vector_store %arg14[%c9_193, %c384_194], %130 {strides = array<i32>} : memref<36x512xf32, #tpu.memory_space<vmem>>, vector<3x32xf32>,
    %c89 = arith.constant 89 : index
    %c0_195 = arith.constant 0 : index
    %132 = tpu.strided_load %arg13[%c89, %c0_195] {strides = array<i32: 2, 1>} : memref<256x32xf32, #tpu.memory_space<vmem>>, vector<3x32xf32>
    %c9_196 = arith.constant 9 : index
    %c416_197 = arith.constant 416 : index
    %133 = vector.load %arg14[%c9_196, %c416_197] : memref<36x512xf32, #tpu.memory_space<vmem>>, vector<3x32xf32>
    tpu.vector_store %arg14[%c9_196, %c416_197], %132 {strides = array<i32>} : memref<36x512xf32, #tpu.memory_space<vmem>>, vector<3x32xf32>,
    %c90 = arith.constant 90 : index
    %c0_198 = arith.constant 0 : index
    %134 = tpu.strided_load %arg13[%c90, %c0_198] {strides = array<i32: 2, 1>} : memref<256x32xf32, #tpu.memory_space<vmem>>, vector<3x32xf32>
    %c9_199 = arith.constant 9 : index
    %c448_200 = arith.constant 448 : index
    %135 = vector.load %arg14[%c9_199, %c448_200] : memref<36x512xf32, #tpu.memory_space<vmem>>, vector<3x32xf32>
    tpu.vector_store %arg14[%c9_199, %c448_200], %134 {strides = array<i32>} : memref<36x512xf32, #tpu.memory_space<vmem>>, vector<3x32xf32>,
    %c91 = arith.constant 91 : index
    %c0_201 = arith.constant 0 : index
    %136 = tpu.strided_load %arg13[%c91, %c0_201] {strides = array<i32: 2, 1>} : memref<256x32xf32, #tpu.memory_space<vmem>>, vector<3x32xf32>
    %c9_202 = arith.constant 9 : index
    %c480_203 = arith.constant 480 : index
    %137 = vector.load %arg14[%c9_202, %c480_203] : memref<36x512xf32, #tpu.memory_space<vmem>>, vector<3x32xf32>
    tpu.vector_store %arg14[%c9_202, %c480_203], %136 {strides = array<i32>} : memref<36x512xf32, #tpu.memory_space<vmem>>, vector<3x32xf32>,
    %c80_204 = arith.constant 80 : index
    %c0_205 = arith.constant 0 : index
    %138 = tpu.strided_load %arg13[%c80_204, %c0_205] {strides = array<i32: 2, 1>} : memref<256x32xf32, #tpu.memory_space<vmem>>, vector<3x32xf32>
    %c12 = arith.constant 12 : index
    %c0_206 = arith.constant 0 : index
    %139 = vector.load %arg14[%c12, %c0_206] : memref<36x512xf32, #tpu.memory_space<vmem>>, vector<3x32xf32>
    tpu.vector_store %arg14[%c12, %c0_206], %138 {strides = array<i32>} : memref<36x512xf32, #tpu.memory_space<vmem>>, vector<3x32xf32>,
    %c81_207 = arith.constant 81 : index
    %c0_208 = arith.constant 0 : index
    %140 = tpu.strided_load %arg13[%c81_207, %c0_208] {strides = array<i32: 2, 1>} : memref<256x32xf32, #tpu.memory_space<vmem>>, vector<3x32xf32>
    %c12_209 = arith.constant 12 : index
    %c32_210 = arith.constant 32 : index
    %141 = vector.load %arg14[%c12_209, %c32_210] : memref<36x512xf32, #tpu.memory_space<vmem>>, vector<3x32xf32>
    tpu.vector_store %arg14[%c12_209, %c32_210], %140 {strides = array<i32>} : memref<36x512xf32, #tpu.memory_space<vmem>>, vector<3x32xf32>,
    %c82_211 = arith.constant 82 : index
    %c0_212 = arith.constant 0 : index
    %142 = tpu.strided_load %arg13[%c82_211, %c0_212] {strides = array<i32: 2, 1>} : memref<256x32xf32, #tpu.memory_space<vmem>>, vector<3x32xf32>
    %c12_213 = arith.constant 12 : index
    %c64_214 = arith.constant 64 : index
    %143 = vector.load %arg14[%c12_213, %c64_214] : memref<36x512xf32, #tpu.memory_space<vmem>>, vector<3x32xf32>
    tpu.vector_store %arg14[%c12_213, %c64_214], %142 {strides = array<i32>} : memref<36x512xf32, #tpu.memory_space<vmem>>, vector<3x32xf32>,
    %c83_215 = arith.constant 83 : index
    %c0_216 = arith.constant 0 : index
    %144 = tpu.strided_load %arg13[%c83_215, %c0_216] {strides = array<i32: 2, 1>} : memref<256x32xf32, #tpu.memory_space<vmem>>, vector<3x32xf32>
    %c12_217 = arith.constant 12 : index
    %c96_218 = arith.constant 96 : index
    %145 = vector.load %arg14[%c12_217, %c96_218] : memref<36x512xf32, #tpu.memory_space<vmem>>, vector<3x32xf32>
    tpu.vector_store %arg14[%c12_217, %c96_218], %144 {strides = array<i32>} : memref<36x512xf32, #tpu.memory_space<vmem>>, vector<3x32xf32>,
    %c88_219 = arith.constant 88 : index
    %c0_220 = arith.constant 0 : index
    %146 = tpu.strided_load %arg13[%c88_219, %c0_220] {strides = array<i32: 2, 1>} : memref<256x32xf32, #tpu.memory_space<vmem>>, vector<3x32xf32>
    %c12_221 = arith.constant 12 : index
    %c128_222 = arith.constant 128 : index
    %147 = vector.load %arg14[%c12_221, %c128_222] : memref<36x512xf32, #tpu.memory_space<vmem>>, vector<3x32xf32>
    tpu.vector_store %arg14[%c12_221, %c128_222], %146 {strides = array<i32>} : memref<36x512xf32, #tpu.memory_space<vmem>>, vector<3x32xf32>,
    %c89_223 = arith.constant 89 : index
    %c0_224 = arith.constant 0 : index
    %148 = tpu.strided_load %arg13[%c89_223, %c0_224] {strides = array<i32: 2, 1>} : memref<256x32xf32, #tpu.memory_space<vmem>>, vector<3x32xf32>
    %c12_225 = arith.constant 12 : index
    %c160_226 = arith.constant 160 : index
    %149 = vector.load %arg14[%c12_225, %c160_226] : memref<36x512xf32, #tpu.memory_space<vmem>>, vector<3x32xf32>
    tpu.vector_store %arg14[%c12_225, %c160_226], %148 {strides = array<i32>} : memref<36x512xf32, #tpu.memory_space<vmem>>, vector<3x32xf32>,
    %c90_227 = arith.constant 90 : index
    %c0_228 = arith.constant 0 : index
    %150 = tpu.strided_load %arg13[%c90_227, %c0_228] {strides = array<i32: 2, 1>} : memref<256x32xf32, #tpu.memory_space<vmem>>, vector<3x32xf32>
    %c12_229 = arith.constant 12 : index
    %c192_230 = arith.constant 192 : index
    %151 = vector.load %arg14[%c12_229, %c192_230] : memref<36x512xf32, #tpu.memory_space<vmem>>, vector<3x32xf32>
    tpu.vector_store %arg14[%c12_229, %c192_230], %150 {strides = array<i32>} : memref<36x512xf32, #tpu.memory_space<vmem>>, vector<3x32xf32>,
    %c91_231 = arith.constant 91 : index
    %c0_232 = arith.constant 0 : index
    %152 = tpu.strided_load %arg13[%c91_231, %c0_232] {strides = array<i32: 2, 1>} : memref<256x32xf32, #tpu.memory_space<vmem>>, vector<3x32xf32>
    %c12_233 = arith.constant 12 : index
    %c224_234 = arith.constant 224 : index
    %153 = vector.load %arg14[%c12_233, %c224_234] : memref<36x512xf32, #tpu.memory_space<vmem>>, vector<3x32xf32>
    tpu.vector_store %arg14[%c12_233, %c224_234], %152 {strides = array<i32>} : memref<36x512xf32, #tpu.memory_space<vmem>>, vector<3x32xf32>,
    %c96_235 = arith.constant 96 : index
    %c0_236 = arith.constant 0 : index
    %154 = tpu.strided_load %arg13[%c96_235, %c0_236] {strides = array<i32: 2, 1>} : memref<256x32xf32, #tpu.memory_space<vmem>>, vector<3x32xf32>
    %c12_237 = arith.constant 12 : index
    %c256_238 = arith.constant 256 : index
    %155 = vector.load %arg14[%c12_237, %c256_238] : memref<36x512xf32, #tpu.memory_space<vmem>>, vector<3x32xf32>
    tpu.vector_store %arg14[%c12_237, %c256_238], %154 {strides = array<i32>} : memref<36x512xf32, #tpu.memory_space<vmem>>, vector<3x32xf32>,
    %c97 = arith.constant 97 : index
    %c0_239 = arith.constant 0 : index
    %156 = tpu.strided_load %arg13[%c97, %c0_239] {strides = array<i32: 2, 1>} : memref<256x32xf32, #tpu.memory_space<vmem>>, vector<3x32xf32>
    %c12_240 = arith.constant 12 : index
    %c288_241 = arith.constant 288 : index
    %157 = vector.load %arg14[%c12_240, %c288_241] : memref<36x512xf32, #tpu.memory_space<vmem>>, vector<3x32xf32>
    tpu.vector_store %arg14[%c12_240, %c288_241], %156 {strides = array<i32>} : memref<36x512xf32, #tpu.memory_space<vmem>>, vector<3x32xf32>,
    %c98 = arith.constant 98 : index
    %c0_242 = arith.constant 0 : index
    %158 = tpu.strided_load %arg13[%c98, %c0_242] {strides = array<i32: 2, 1>} : memref<256x32xf32, #tpu.memory_space<vmem>>, vector<3x32xf32>
    %c12_243 = arith.constant 12 : index
    %c320_244 = arith.constant 320 : index
    %159 = vector.load %arg14[%c12_243, %c320_244] : memref<36x512xf32, #tpu.memory_space<vmem>>, vector<3x32xf32>
    tpu.vector_store %arg14[%c12_243, %c320_244], %158 {strides = array<i32>} : memref<36x512xf32, #tpu.memory_space<vmem>>, vector<3x32xf32>,
    %c99 = arith.constant 99 : index
    %c0_245 = arith.constant 0 : index
    %160 = tpu.strided_load %arg13[%c99, %c0_245] {strides = array<i32: 2, 1>} : memref<256x32xf32, #tpu.memory_space<vmem>>, vector<3x32xf32>
    %c12_246 = arith.constant 12 : index
    %c352_247 = arith.constant 352 : index
    %161 = vector.load %arg14[%c12_246, %c352_247] : memref<36x512xf32, #tpu.memory_space<vmem>>, vector<3x32xf32>
    tpu.vector_store %arg14[%c12_246, %c352_247], %160 {strides = array<i32>} : memref<36x512xf32, #tpu.memory_space<vmem>>, vector<3x32xf32>,
    %c104 = arith.constant 104 : index
    %c0_248 = arith.constant 0 : index
    %162 = tpu.strided_load %arg13[%c104, %c0_248] {strides = array<i32: 2, 1>} : memref<256x32xf32, #tpu.memory_space<vmem>>, vector<3x32xf32>
    %c12_249 = arith.constant 12 : index
    %c384_250 = arith.constant 384 : index
    %163 = vector.load %arg14[%c12_249, %c384_250] : memref<36x512xf32, #tpu.memory_space<vmem>>, vector<3x32xf32>
    tpu.vector_store %arg14[%c12_249, %c384_250], %162 {strides = array<i32>} : memref<36x512xf32, #tpu.memory_space<vmem>>, vector<3x32xf32>,
    %c105 = arith.constant 105 : index
    %c0_251 = arith.constant 0 : index
    %164 = tpu.strided_load %arg13[%c105, %c0_251] {strides = array<i32: 2, 1>} : memref<256x32xf32, #tpu.memory_space<vmem>>, vector<3x32xf32>
    %c12_252 = arith.constant 12 : index
    %c416_253 = arith.constant 416 : index
    %165 = vector.load %arg14[%c12_252, %c416_253] : memref<36x512xf32, #tpu.memory_space<vmem>>, vector<3x32xf32>
    tpu.vector_store %arg14[%c12_252, %c416_253], %164 {strides = array<i32>} : memref<36x512xf32, #tpu.memory_space<vmem>>, vector<3x32xf32>,
    %c106 = arith.constant 106 : index
    %c0_254 = arith.constant 0 : index
    %166 = tpu.strided_load %arg13[%c106, %c0_254] {strides = array<i32: 2, 1>} : memref<256x32xf32, #tpu.memory_space<vmem>>, vector<3x32xf32>
    %c12_255 = arith.constant 12 : index
    %c448_256 = arith.constant 448 : index
    %167 = vector.load %arg14[%c12_255, %c448_256] : memref<36x512xf32, #tpu.memory_space<vmem>>, vector<3x32xf32>
    tpu.vector_store %arg14[%c12_255, %c448_256], %166 {strides = array<i32>} : memref<36x512xf32, #tpu.memory_space<vmem>>, vector<3x32xf32>,
    %c107 = arith.constant 107 : index
    %c0_257 = arith.constant 0 : index
    %168 = tpu.strided_load %arg13[%c107, %c0_257] {strides = array<i32: 2, 1>} : memref<256x32xf32, #tpu.memory_space<vmem>>, vector<3x32xf32>
    %c12_258 = arith.constant 12 : index
    %c480_259 = arith.constant 480 : index
    %169 = vector.load %arg14[%c12_258, %c480_259] : memref<36x512xf32, #tpu.memory_space<vmem>>, vector<3x32xf32>
    tpu.vector_store %arg14[%c12_258, %c480_259], %168 {strides = array<i32>} : memref<36x512xf32, #tpu.memory_space<vmem>>, vector<3x32xf32>,
    %c96_260 = arith.constant 96 : index
    %c0_261 = arith.constant 0 : index
    %170 = tpu.strided_load %arg13[%c96_260, %c0_261] {strides = array<i32: 2, 1>} : memref<256x32xf32, #tpu.memory_space<vmem>>, vector<3x32xf32>
    %c15 = arith.constant 15 : index
    %c0_262 = arith.constant 0 : index
    %171 = vector.load %arg14[%c15, %c0_262] : memref<36x512xf32, #tpu.memory_space<vmem>>, vector<3x32xf32>
    tpu.vector_store %arg14[%c15, %c0_262], %170 {strides = array<i32>} : memref<36x512xf32, #tpu.memory_space<vmem>>, vector<3x32xf32>,
    %c97_263 = arith.constant 97 : index
    %c0_264 = arith.constant 0 : index
    %172 = tpu.strided_load %arg13[%c97_263, %c0_264] {strides = array<i32: 2, 1>} : memref<256x32xf32, #tpu.memory_space<vmem>>, vector<3x32xf32>
    %c15_265 = arith.constant 15 : index
    %c32_266 = arith.constant 32 : index
    %173 = vector.load %arg14[%c15_265, %c32_266] : memref<36x512xf32, #tpu.memory_space<vmem>>, vector<3x32xf32>
    tpu.vector_store %arg14[%c15_265, %c32_266], %172 {strides = array<i32>} : memref<36x512xf32, #tpu.memory_space<vmem>>, vector<3x32xf32>,
    %c98_267 = arith.constant 98 : index
    %c0_268 = arith.constant 0 : index
    %174 = tpu.strided_load %arg13[%c98_267, %c0_268] {strides = array<i32: 2, 1>} : memref<256x32xf32, #tpu.memory_space<vmem>>, vector<3x32xf32>
    %c15_269 = arith.constant 15 : index
    %c64_270 = arith.constant 64 : index
    %175 = vector.load %arg14[%c15_269, %c64_270] : memref<36x512xf32, #tpu.memory_space<vmem>>, vector<3x32xf32>
    tpu.vector_store %arg14[%c15_269, %c64_270], %174 {strides = array<i32>} : memref<36x512xf32, #tpu.memory_space<vmem>>, vector<3x32xf32>,
    %c99_271 = arith.constant 99 : index
    %c0_272 = arith.constant 0 : index
    %176 = tpu.strided_load %arg13[%c99_271, %c0_272] {strides = array<i32: 2, 1>} : memref<256x32xf32, #tpu.memory_space<vmem>>, vector<3x32xf32>
    %c15_273 = arith.constant 15 : index
    %c96_274 = arith.constant 96 : index
    %177 = vector.load %arg14[%c15_273, %c96_274] : memref<36x512xf32, #tpu.memory_space<vmem>>, vector<3x32xf32>
    tpu.vector_store %arg14[%c15_273, %c96_274], %176 {strides = array<i32>} : memref<36x512xf32, #tpu.memory_space<vmem>>, vector<3x32xf32>,
    %c104_275 = arith.constant 104 : index
    %c0_276 = arith.constant 0 : index
    %178 = tpu.strided_load %arg13[%c104_275, %c0_276] {strides = array<i32: 2, 1>} : memref<256x32xf32, #tpu.memory_space<vmem>>, vector<3x32xf32>
    %c15_277 = arith.constant 15 : index
    %c128_278 = arith.constant 128 : index
    %179 = vector.load %arg14[%c15_277, %c128_278] : memref<36x512xf32, #tpu.memory_space<vmem>>, vector<3x32xf32>
    tpu.vector_store %arg14[%c15_277, %c128_278], %178 {strides = array<i32>} : memref<36x512xf32, #tpu.memory_space<vmem>>, vector<3x32xf32>,
    %c105_279 = arith.constant 105 : index
    %c0_280 = arith.constant 0 : index
    %180 = tpu.strided_load %arg13[%c105_279, %c0_280] {strides = array<i32: 2, 1>} : memref<256x32xf32, #tpu.memory_space<vmem>>, vector<3x32xf32>
    %c15_281 = arith.constant 15 : index
    %c160_282 = arith.constant 160 : index
    %181 = vector.load %arg14[%c15_281, %c160_282] : memref<36x512xf32, #tpu.memory_space<vmem>>, vector<3x32xf32>
    tpu.vector_store %arg14[%c15_281, %c160_282], %180 {strides = array<i32>} : memref<36x512xf32, #tpu.memory_space<vmem>>, vector<3x32xf32>,
    %c106_283 = arith.constant 106 : index
    %c0_284 = arith.constant 0 : index
    %182 = tpu.strided_load %arg13[%c106_283, %c0_284] {strides = array<i32: 2, 1>} : memref<256x32xf32, #tpu.memory_space<vmem>>, vector<3x32xf32>
    %c15_285 = arith.constant 15 : index
    %c192_286 = arith.constant 192 : index
    %183 = vector.load %arg14[%c15_285, %c192_286] : memref<36x512xf32, #tpu.memory_space<vmem>>, vector<3x32xf32>
    tpu.vector_store %arg14[%c15_285, %c192_286], %182 {strides = array<i32>} : memref<36x512xf32, #tpu.memory_space<vmem>>, vector<3x32xf32>,
    %c107_287 = arith.constant 107 : index
    %c0_288 = arith.constant 0 : index
    %184 = tpu.strided_load %arg13[%c107_287, %c0_288] {strides = array<i32: 2, 1>} : memref<256x32xf32, #tpu.memory_space<vmem>>, vector<3x32xf32>
    %c15_289 = arith.constant 15 : index
    %c224_290 = arith.constant 224 : index
    %185 = vector.load %arg14[%c15_289, %c224_290] : memref<36x512xf32, #tpu.memory_space<vmem>>, vector<3x32xf32>
    tpu.vector_store %arg14[%c15_289, %c224_290], %184 {strides = array<i32>} : memref<36x512xf32, #tpu.memory_space<vmem>>, vector<3x32xf32>,
    %c112 = arith.constant 112 : index
    %c0_291 = arith.constant 0 : index
    %186 = tpu.strided_load %arg13[%c112, %c0_291] {strides = array<i32: 2, 1>} : memref<256x32xf32, #tpu.memory_space<vmem>>, vector<3x32xf32>
    %c15_292 = arith.constant 15 : index
    %c256_293 = arith.constant 256 : index
    %187 = vector.load %arg14[%c15_292, %c256_293] : memref<36x512xf32, #tpu.memory_space<vmem>>, vector<3x32xf32>
    tpu.vector_store %arg14[%c15_292, %c256_293], %186 {strides = array<i32>} : memref<36x512xf32, #tpu.memory_space<vmem>>, vector<3x32xf32>,
    %c113 = arith.constant 113 : index
    %c0_294 = arith.constant 0 : index
    %188 = tpu.strided_load %arg13[%c113, %c0_294] {strides = array<i32: 2, 1>} : memref<256x32xf32, #tpu.memory_space<vmem>>, vector<3x32xf32>
    %c15_295 = arith.constant 15 : index
    %c288_296 = arith.constant 288 : index
    %189 = vector.load %arg14[%c15_295, %c288_296] : memref<36x512xf32, #tpu.memory_space<vmem>>, vector<3x32xf32>
    tpu.vector_store %arg14[%c15_295, %c288_296], %188 {strides = array<i32>} : memref<36x512xf32, #tpu.memory_space<vmem>>, vector<3x32xf32>,
    %c114 = arith.constant 114 : index
    %c0_297 = arith.constant 0 : index
    %190 = tpu.strided_load %arg13[%c114, %c0_297] {strides = array<i32: 2, 1>} : memref<256x32xf32, #tpu.memory_space<vmem>>, vector<3x32xf32>
    %c15_298 = arith.constant 15 : index
    %c320_299 = arith.constant 320 : index
    %191 = vector.load %arg14[%c15_298, %c320_299] : memref<36x512xf32, #tpu.memory_space<vmem>>, vector<3x32xf32>
    tpu.vector_store %arg14[%c15_298, %c320_299], %190 {strides = array<i32>} : memref<36x512xf32, #tpu.memory_space<vmem>>, vector<3x32xf32>,
    %c115 = arith.constant 115 : index
    %c0_300 = arith.constant 0 : index
    %192 = tpu.strided_load %arg13[%c115, %c0_300] {strides = array<i32: 2, 1>} : memref<256x32xf32, #tpu.memory_space<vmem>>, vector<3x32xf32>
    %c15_301 = arith.constant 15 : index
    %c352_302 = arith.constant 352 : index
    %193 = vector.load %arg14[%c15_301, %c352_302] : memref<36x512xf32, #tpu.memory_space<vmem>>, vector<3x32xf32>
    tpu.vector_store %arg14[%c15_301, %c352_302], %192 {strides = array<i32>} : memref<36x512xf32, #tpu.memory_space<vmem>>, vector<3x32xf32>,
    %c120 = arith.constant 120 : index
    %c0_303 = arith.constant 0 : index
    %194 = tpu.strided_load %arg13[%c120, %c0_303] {strides = array<i32: 2, 1>} : memref<256x32xf32, #tpu.memory_space<vmem>>, vector<3x32xf32>
    %c15_304 = arith.constant 15 : index
    %c384_305 = arith.constant 384 : index
    %195 = vector.load %arg14[%c15_304, %c384_305] : memref<36x512xf32, #tpu.memory_space<vmem>>, vector<3x32xf32>
    tpu.vector_store %arg14[%c15_304, %c384_305], %194 {strides = array<i32>} : memref<36x512xf32, #tpu.memory_space<vmem>>, vector<3x32xf32>,
    %c121 = arith.constant 121 : index
    %c0_306 = arith.constant 0 : index
    %196 = tpu.strided_load %arg13[%c121, %c0_306] {strides = array<i32: 2, 1>} : memref<256x32xf32, #tpu.memory_space<vmem>>, vector<3x32xf32>
    %c15_307 = arith.constant 15 : index
    %c416_308 = arith.constant 416 : index
    %197 = vector.load %arg14[%c15_307, %c416_308] : memref<36x512xf32, #tpu.memory_space<vmem>>, vector<3x32xf32>
    tpu.vector_store %arg14[%c15_307, %c416_308], %196 {strides = array<i32>} : memref<36x512xf32, #tpu.memory_space<vmem>>, vector<3x32xf32>,
    %c122 = arith.constant 122 : index
    %c0_309 = arith.constant 0 : index
    %198 = tpu.strided_load %arg13[%c122, %c0_309] {strides = array<i32: 2, 1>} : memref<256x32xf32, #tpu.memory_space<vmem>>, vector<3x32xf32>
    %c15_310 = arith.constant 15 : index
    %c448_311 = arith.constant 448 : index
    %199 = vector.load %arg14[%c15_310, %c448_311] : memref<36x512xf32, #tpu.memory_space<vmem>>, vector<3x32xf32>
    tpu.vector_store %arg14[%c15_310, %c448_311], %198 {strides = array<i32>} : memref<36x512xf32, #tpu.memory_space<vmem>>, vector<3x32xf32>,
    %c123 = arith.constant 123 : index
    %c0_312 = arith.constant 0 : index
    %200 = tpu.strided_load %arg13[%c123, %c0_312] {strides = array<i32: 2, 1>} : memref<256x32xf32, #tpu.memory_space<vmem>>, vector<3x32xf32>
    %c15_313 = arith.constant 15 : index
    %c480_314 = arith.constant 480 : index
    %201 = vector.load %arg14[%c15_313, %c480_314] : memref<36x512xf32, #tpu.memory_space<vmem>>, vector<3x32xf32>
    tpu.vector_store %arg14[%c15_313, %c480_314], %200 {strides = array<i32>} : memref<36x512xf32, #tpu.memory_space<vmem>>, vector<3x32xf32>,
    %c128_315 = arith.constant 128 : index
    %c0_316 = arith.constant 0 : index
    %202 = tpu.strided_load %arg13[%c128_315, %c0_316] {strides = array<i32: 2, 1>} : memref<256x32xf32, #tpu.memory_space<vmem>>, vector<3x32xf32>
    %c18_317 = arith.constant 18 : index
    %c0_318 = arith.constant 0 : index
    %203 = vector.load %arg14[%c18_317, %c0_318] : memref<36x512xf32, #tpu.memory_space<vmem>>, vector<3x32xf32>
    tpu.vector_store %arg14[%c18_317, %c0_318], %202 {strides = array<i32>} : memref<36x512xf32, #tpu.memory_space<vmem>>, vector<3x32xf32>,
    %c129 = arith.constant 129 : index
    %c0_319 = arith.constant 0 : index
    %204 = tpu.strided_load %arg13[%c129, %c0_319] {strides = array<i32: 2, 1>} : memref<256x32xf32, #tpu.memory_space<vmem>>, vector<3x32xf32>
    %c18_320 = arith.constant 18 : index
    %c32_321 = arith.constant 32 : index
    %205 = vector.load %arg14[%c18_320, %c32_321] : memref<36x512xf32, #tpu.memory_space<vmem>>, vector<3x32xf32>
    tpu.vector_store %arg14[%c18_320, %c32_321], %204 {strides = array<i32>} : memref<36x512xf32, #tpu.memory_space<vmem>>, vector<3x32xf32>,
    %c130 = arith.constant 130 : index
    %c0_322 = arith.constant 0 : index
    %206 = tpu.strided_load %arg13[%c130, %c0_322] {strides = array<i32: 2, 1>} : memref<256x32xf32, #tpu.memory_space<vmem>>, vector<3x32xf32>
    %c18_323 = arith.constant 18 : index
    %c64_324 = arith.constant 64 : index
    %207 = vector.load %arg14[%c18_323, %c64_324] : memref<36x512xf32, #tpu.memory_space<vmem>>, vector<3x32xf32>
    tpu.vector_store %arg14[%c18_323, %c64_324], %206 {strides = array<i32>} : memref<36x512xf32, #tpu.memory_space<vmem>>, vector<3x32xf32>,
    %c131 = arith.constant 131 : index
    %c0_325 = arith.constant 0 : index
    %208 = tpu.strided_load %arg13[%c131, %c0_325] {strides = array<i32: 2, 1>} : memref<256x32xf32, #tpu.memory_space<vmem>>, vector<3x32xf32>
    %c18_326 = arith.constant 18 : index
    %c96_327 = arith.constant 96 : index
    %209 = vector.load %arg14[%c18_326, %c96_327] : memref<36x512xf32, #tpu.memory_space<vmem>>, vector<3x32xf32>
    tpu.vector_store %arg14[%c18_326, %c96_327], %208 {strides = array<i32>} : memref<36x512xf32, #tpu.memory_space<vmem>>, vector<3x32xf32>,
    %c136 = arith.constant 136 : index
    %c0_328 = arith.constant 0 : index
    %210 = tpu.strided_load %arg13[%c136, %c0_328] {strides = array<i32: 2, 1>} : memref<256x32xf32, #tpu.memory_space<vmem>>, vector<3x32xf32>
    %c18_329 = arith.constant 18 : index
    %c128_330 = arith.constant 128 : index
    %211 = vector.load %arg14[%c18_329, %c128_330] : memref<36x512xf32, #tpu.memory_space<vmem>>, vector<3x32xf32>
    tpu.vector_store %arg14[%c18_329, %c128_330], %210 {strides = array<i32>} : memref<36x512xf32, #tpu.memory_space<vmem>>, vector<3x32xf32>,
    %c137 = arith.constant 137 : index
    %c0_331 = arith.constant 0 : index
    %212 = tpu.strided_load %arg13[%c137, %c0_331] {strides = array<i32: 2, 1>} : memref<256x32xf32, #tpu.memory_space<vmem>>, vector<3x32xf32>
    %c18_332 = arith.constant 18 : index
    %c160_333 = arith.constant 160 : index
    %213 = vector.load %arg14[%c18_332, %c160_333] : memref<36x512xf32, #tpu.memory_space<vmem>>, vector<3x32xf32>
    tpu.vector_store %arg14[%c18_332, %c160_333], %212 {strides = array<i32>} : memref<36x512xf32, #tpu.memory_space<vmem>>, vector<3x32xf32>,
    %c138 = arith.constant 138 : index
    %c0_334 = arith.constant 0 : index
    %214 = tpu.strided_load %arg13[%c138, %c0_334] {strides = array<i32: 2, 1>} : memref<256x32xf32, #tpu.memory_space<vmem>>, vector<3x32xf32>
    %c18_335 = arith.constant 18 : index
    %c192_336 = arith.constant 192 : index
    %215 = vector.load %arg14[%c18_335, %c192_336] : memref<36x512xf32, #tpu.memory_space<vmem>>, vector<3x32xf32>
    tpu.vector_store %arg14[%c18_335, %c192_336], %214 {strides = array<i32>} : memref<36x512xf32, #tpu.memory_space<vmem>>, vector<3x32xf32>,
    %c139 = arith.constant 139 : index
    %c0_337 = arith.constant 0 : index
    %216 = tpu.strided_load %arg13[%c139, %c0_337] {strides = array<i32: 2, 1>} : memref<256x32xf32, #tpu.memory_space<vmem>>, vector<3x32xf32>
    %c18_338 = arith.constant 18 : index
    %c224_339 = arith.constant 224 : index
    %217 = vector.load %arg14[%c18_338, %c224_339] : memref<36x512xf32, #tpu.memory_space<vmem>>, vector<3x32xf32>
    tpu.vector_store %arg14[%c18_338, %c224_339], %216 {strides = array<i32>} : memref<36x512xf32, #tpu.memory_space<vmem>>, vector<3x32xf32>,
    %c144 = arith.constant 144 : index
    %c0_340 = arith.constant 0 : index
    %218 = tpu.strided_load %arg13[%c144, %c0_340] {strides = array<i32: 2, 1>} : memref<256x32xf32, #tpu.memory_space<vmem>>, vector<3x32xf32>
    %c18_341 = arith.constant 18 : index
    %c256_342 = arith.constant 256 : index
    %219 = vector.load %arg14[%c18_341, %c256_342] : memref<36x512xf32, #tpu.memory_space<vmem>>, vector<3x32xf32>
    tpu.vector_store %arg14[%c18_341, %c256_342], %218 {strides = array<i32>} : memref<36x512xf32, #tpu.memory_space<vmem>>, vector<3x32xf32>,
    %c145 = arith.constant 145 : index
    %c0_343 = arith.constant 0 : index
    %220 = tpu.strided_load %arg13[%c145, %c0_343] {strides = array<i32: 2, 1>} : memref<256x32xf32, #tpu.memory_space<vmem>>, vector<3x32xf32>
    %c18_344 = arith.constant 18 : index
    %c288_345 = arith.constant 288 : index
    %221 = vector.load %arg14[%c18_344, %c288_345] : memref<36x512xf32, #tpu.memory_space<vmem>>, vector<3x32xf32>
    tpu.vector_store %arg14[%c18_344, %c288_345], %220 {strides = array<i32>} : memref<36x512xf32, #tpu.memory_space<vmem>>, vector<3x32xf32>,
    %c146 = arith.constant 146 : index
    %c0_346 = arith.constant 0 : index
    %222 = tpu.strided_load %arg13[%c146, %c0_346] {strides = array<i32: 2, 1>} : memref<256x32xf32, #tpu.memory_space<vmem>>, vector<3x32xf32>
    %c18_347 = arith.constant 18 : index
    %c320_348 = arith.constant 320 : index
    %223 = vector.load %arg14[%c18_347, %c320_348] : memref<36x512xf32, #tpu.memory_space<vmem>>, vector<3x32xf32>
    tpu.vector_store %arg14[%c18_347, %c320_348], %222 {strides = array<i32>} : memref<36x512xf32, #tpu.memory_space<vmem>>, vector<3x32xf32>,
    %c147 = arith.constant 147 : index
    %c0_349 = arith.constant 0 : index
    %224 = tpu.strided_load %arg13[%c147, %c0_349] {strides = array<i32: 2, 1>} : memref<256x32xf32, #tpu.memory_space<vmem>>, vector<3x32xf32>
    %c18_350 = arith.constant 18 : index
    %c352_351 = arith.constant 352 : index
    %225 = vector.load %arg14[%c18_350, %c352_351] : memref<36x512xf32, #tpu.memory_space<vmem>>, vector<3x32xf32>
    tpu.vector_store %arg14[%c18_350, %c352_351], %224 {strides = array<i32>} : memref<36x512xf32, #tpu.memory_space<vmem>>, vector<3x32xf32>,
    %c152 = arith.constant 152 : index
    %c0_352 = arith.constant 0 : index
    %226 = tpu.strided_load %arg13[%c152, %c0_352] {strides = array<i32: 2, 1>} : memref<256x32xf32, #tpu.memory_space<vmem>>, vector<3x32xf32>
    %c18_353 = arith.constant 18 : index
    %c384_354 = arith.constant 384 : index
    %227 = vector.load %arg14[%c18_353, %c384_354] : memref<36x512xf32, #tpu.memory_space<vmem>>, vector<3x32xf32>
    tpu.vector_store %arg14[%c18_353, %c384_354], %226 {strides = array<i32>} : memref<36x512xf32, #tpu.memory_space<vmem>>, vector<3x32xf32>,
    %c153 = arith.constant 153 : index
    %c0_355 = arith.constant 0 : index
    %228 = tpu.strided_load %arg13[%c153, %c0_355] {strides = array<i32: 2, 1>} : memref<256x32xf32, #tpu.memory_space<vmem>>, vector<3x32xf32>
    %c18_356 = arith.constant 18 : index
    %c416_357 = arith.constant 416 : index
    %229 = vector.load %arg14[%c18_356, %c416_357] : memref<36x512xf32, #tpu.memory_space<vmem>>, vector<3x32xf32>
    tpu.vector_store %arg14[%c18_356, %c416_357], %228 {strides = array<i32>} : memref<36x512xf32, #tpu.memory_space<vmem>>, vector<3x32xf32>,
    %c154 = arith.constant 154 : index
    %c0_358 = arith.constant 0 : index
    %230 = tpu.strided_load %arg13[%c154, %c0_358] {strides = array<i32: 2, 1>} : memref<256x32xf32, #tpu.memory_space<vmem>>, vector<3x32xf32>
    %c18_359 = arith.constant 18 : index
    %c448_360 = arith.constant 448 : index
    %231 = vector.load %arg14[%c18_359, %c448_360] : memref<36x512xf32, #tpu.memory_space<vmem>>, vector<3x32xf32>
    tpu.vector_store %arg14[%c18_359, %c448_360], %230 {strides = array<i32>} : memref<36x512xf32, #tpu.memory_space<vmem>>, vector<3x32xf32>,
    %c155 = arith.constant 155 : index
    %c0_361 = arith.constant 0 : index
    %232 = tpu.strided_load %arg13[%c155, %c0_361] {strides = array<i32: 2, 1>} : memref<256x32xf32, #tpu.memory_space<vmem>>, vector<3x32xf32>
    %c18_362 = arith.constant 18 : index
    %c480_363 = arith.constant 480 : index
    %233 = vector.load %arg14[%c18_362, %c480_363] : memref<36x512xf32, #tpu.memory_space<vmem>>, vector<3x32xf32>
    tpu.vector_store %arg14[%c18_362, %c480_363], %232 {strides = array<i32>} : memref<36x512xf32, #tpu.memory_space<vmem>>, vector<3x32xf32>,
    %c144_364 = arith.constant 144 : index
    %c0_365 = arith.constant 0 : index
    %234 = tpu.strided_load %arg13[%c144_364, %c0_365] {strides = array<i32: 2, 1>} : memref<256x32xf32, #tpu.memory_space<vmem>>, vector<3x32xf32>
    %c21 = arith.constant 21 : index
    %c0_366 = arith.constant 0 : index
    %235 = vector.load %arg14[%c21, %c0_366] : memref<36x512xf32, #tpu.memory_space<vmem>>, vector<3x32xf32>
    tpu.vector_store %arg14[%c21, %c0_366], %234 {strides = array<i32>} : memref<36x512xf32, #tpu.memory_space<vmem>>, vector<3x32xf32>,
    %c145_367 = arith.constant 145 : index
    %c0_368 = arith.constant 0 : index
    %236 = tpu.strided_load %arg13[%c145_367, %c0_368] {strides = array<i32: 2, 1>} : memref<256x32xf32, #tpu.memory_space<vmem>>, vector<3x32xf32>
    %c21_369 = arith.constant 21 : index
    %c32_370 = arith.constant 32 : index
    %237 = vector.load %arg14[%c21_369, %c32_370] : memref<36x512xf32, #tpu.memory_space<vmem>>, vector<3x32xf32>
    tpu.vector_store %arg14[%c21_369, %c32_370], %236 {strides = array<i32>} : memref<36x512xf32, #tpu.memory_space<vmem>>, vector<3x32xf32>,
    %c146_371 = arith.constant 146 : index
    %c0_372 = arith.constant 0 : index
    %238 = tpu.strided_load %arg13[%c146_371, %c0_372] {strides = array<i32: 2, 1>} : memref<256x32xf32, #tpu.memory_space<vmem>>, vector<3x32xf32>
    %c21_373 = arith.constant 21 : index
    %c64_374 = arith.constant 64 : index
    %239 = vector.load %arg14[%c21_373, %c64_374] : memref<36x512xf32, #tpu.memory_space<vmem>>, vector<3x32xf32>
    tpu.vector_store %arg14[%c21_373, %c64_374], %238 {strides = array<i32>} : memref<36x512xf32, #tpu.memory_space<vmem>>, vector<3x32xf32>,
    %c147_375 = arith.constant 147 : index
    %c0_376 = arith.constant 0 : index
    %240 = tpu.strided_load %arg13[%c147_375, %c0_376] {strides = array<i32: 2, 1>} : memref<256x32xf32, #tpu.memory_space<vmem>>, vector<3x32xf32>
    %c21_377 = arith.constant 21 : index
    %c96_378 = arith.constant 96 : index
    %241 = vector.load %arg14[%c21_377, %c96_378] : memref<36x512xf32, #tpu.memory_space<vmem>>, vector<3x32xf32>
    tpu.vector_store %arg14[%c21_377, %c96_378], %240 {strides = array<i32>} : memref<36x512xf32, #tpu.memory_space<vmem>>, vector<3x32xf32>,
    %c152_379 = arith.constant 152 : index
    %c0_380 = arith.constant 0 : index
    %242 = tpu.strided_load %arg13[%c152_379, %c0_380] {strides = array<i32: 2, 1>} : memref<256x32xf32, #tpu.memory_space<vmem>>, vector<3x32xf32>
    %c21_381 = arith.constant 21 : index
    %c128_382 = arith.constant 128 : index
    %243 = vector.load %arg14[%c21_381, %c128_382] : memref<36x512xf32, #tpu.memory_space<vmem>>, vector<3x32xf32>
    tpu.vector_store %arg14[%c21_381, %c128_382], %242 {strides = array<i32>} : memref<36x512xf32, #tpu.memory_space<vmem>>, vector<3x32xf32>,
    %c153_383 = arith.constant 153 : index
    %c0_384 = arith.constant 0 : index
    %244 = tpu.strided_load %arg13[%c153_383, %c0_384] {strides = array<i32: 2, 1>} : memref<256x32xf32, #tpu.memory_space<vmem>>, vector<3x32xf32>
    %c21_385 = arith.constant 21 : index
    %c160_386 = arith.constant 160 : index
    %245 = vector.load %arg14[%c21_385, %c160_386] : memref<36x512xf32, #tpu.memory_space<vmem>>, vector<3x32xf32>
    tpu.vector_store %arg14[%c21_385, %c160_386], %244 {strides = array<i32>} : memref<36x512xf32, #tpu.memory_space<vmem>>, vector<3x32xf32>,
    %c154_387 = arith.constant 154 : index
    %c0_388 = arith.constant 0 : index
    %246 = tpu.strided_load %arg13[%c154_387, %c0_388] {strides = array<i32: 2, 1>} : memref<256x32xf32, #tpu.memory_space<vmem>>, vector<3x32xf32>
    %c21_389 = arith.constant 21 : index
    %c192_390 = arith.constant 192 : index
    %247 = vector.load %arg14[%c21_389, %c192_390] : memref<36x512xf32, #tpu.memory_space<vmem>>, vector<3x32xf32>
    tpu.vector_store %arg14[%c21_389, %c192_390], %246 {strides = array<i32>} : memref<36x512xf32, #tpu.memory_space<vmem>>, vector<3x32xf32>,
    %c155_391 = arith.constant 155 : index
    %c0_392 = arith.constant 0 : index
    %248 = tpu.strided_load %arg13[%c155_391, %c0_392] {strides = array<i32: 2, 1>} : memref<256x32xf32, #tpu.memory_space<vmem>>, vector<3x32xf32>
    %c21_393 = arith.constant 21 : index
    %c224_394 = arith.constant 224 : index
    %249 = vector.load %arg14[%c21_393, %c224_394] : memref<36x512xf32, #tpu.memory_space<vmem>>, vector<3x32xf32>
    tpu.vector_store %arg14[%c21_393, %c224_394], %248 {strides = array<i32>} : memref<36x512xf32, #tpu.memory_space<vmem>>, vector<3x32xf32>,
    %c160_395 = arith.constant 160 : index
    %c0_396 = arith.constant 0 : index
    %250 = tpu.strided_load %arg13[%c160_395, %c0_396] {strides = array<i32: 2, 1>} : memref<256x32xf32, #tpu.memory_space<vmem>>, vector<3x32xf32>
    %c21_397 = arith.constant 21 : index
    %c256_398 = arith.constant 256 : index
    %251 = vector.load %arg14[%c21_397, %c256_398] : memref<36x512xf32, #tpu.memory_space<vmem>>, vector<3x32xf32>
    tpu.vector_store %arg14[%c21_397, %c256_398], %250 {strides = array<i32>} : memref<36x512xf32, #tpu.memory_space<vmem>>, vector<3x32xf32>,
    %c161 = arith.constant 161 : index
    %c0_399 = arith.constant 0 : index
    %252 = tpu.strided_load %arg13[%c161, %c0_399] {strides = array<i32: 2, 1>} : memref<256x32xf32, #tpu.memory_space<vmem>>, vector<3x32xf32>
    %c21_400 = arith.constant 21 : index
    %c288_401 = arith.constant 288 : index
    %253 = vector.load %arg14[%c21_400, %c288_401] : memref<36x512xf32, #tpu.memory_space<vmem>>, vector<3x32xf32>
    tpu.vector_store %arg14[%c21_400, %c288_401], %252 {strides = array<i32>} : memref<36x512xf32, #tpu.memory_space<vmem>>, vector<3x32xf32>,
    %c162 = arith.constant 162 : index
    %c0_402 = arith.constant 0 : index
    %254 = tpu.strided_load %arg13[%c162, %c0_402] {strides = array<i32: 2, 1>} : memref<256x32xf32, #tpu.memory_space<vmem>>, vector<3x32xf32>
    %c21_403 = arith.constant 21 : index
    %c320_404 = arith.constant 320 : index
    %255 = vector.load %arg14[%c21_403, %c320_404] : memref<36x512xf32, #tpu.memory_space<vmem>>, vector<3x32xf32>
    tpu.vector_store %arg14[%c21_403, %c320_404], %254 {strides = array<i32>} : memref<36x512xf32, #tpu.memory_space<vmem>>, vector<3x32xf32>,
    %c163 = arith.constant 163 : index
    %c0_405 = arith.constant 0 : index
    %256 = tpu.strided_load %arg13[%c163, %c0_405] {strides = array<i32: 2, 1>} : memref<256x32xf32, #tpu.memory_space<vmem>>, vector<3x32xf32>
    %c21_406 = arith.constant 21 : index
    %c352_407 = arith.constant 352 : index
    %257 = vector.load %arg14[%c21_406, %c352_407] : memref<36x512xf32, #tpu.memory_space<vmem>>, vector<3x32xf32>
    tpu.vector_store %arg14[%c21_406, %c352_407], %256 {strides = array<i32>} : memref<36x512xf32, #tpu.memory_space<vmem>>, vector<3x32xf32>,
    %c168 = arith.constant 168 : index
    %c0_408 = arith.constant 0 : index
    %258 = tpu.strided_load %arg13[%c168, %c0_408] {strides = array<i32: 2, 1>} : memref<256x32xf32, #tpu.memory_space<vmem>>, vector<3x32xf32>
    %c21_409 = arith.constant 21 : index
    %c384_410 = arith.constant 384 : index
    %259 = vector.load %arg14[%c21_409, %c384_410] : memref<36x512xf32, #tpu.memory_space<vmem>>, vector<3x32xf32>
    tpu.vector_store %arg14[%c21_409, %c384_410], %258 {strides = array<i32>} : memref<36x512xf32, #tpu.memory_space<vmem>>, vector<3x32xf32>,
    %c169 = arith.constant 169 : index
    %c0_411 = arith.constant 0 : index
    %260 = tpu.strided_load %arg13[%c169, %c0_411] {strides = array<i32: 2, 1>} : memref<256x32xf32, #tpu.memory_space<vmem>>, vector<3x32xf32>
    %c21_412 = arith.constant 21 : index
    %c416_413 = arith.constant 416 : index
    %261 = vector.load %arg14[%c21_412, %c416_413] : memref<36x512xf32, #tpu.memory_space<vmem>>, vector<3x32xf32>
    tpu.vector_store %arg14[%c21_412, %c416_413], %260 {strides = array<i32>} : memref<36x512xf32, #tpu.memory_space<vmem>>, vector<3x32xf32>,
    %c170 = arith.constant 170 : index
    %c0_414 = arith.constant 0 : index
    %262 = tpu.strided_load %arg13[%c170, %c0_414] {strides = array<i32: 2, 1>} : memref<256x32xf32, #tpu.memory_space<vmem>>, vector<3x32xf32>
    %c21_415 = arith.constant 21 : index
    %c448_416 = arith.constant 448 : index
    %263 = vector.load %arg14[%c21_415, %c448_416] : memref<36x512xf32, #tpu.memory_space<vmem>>, vector<3x32xf32>
    tpu.vector_store %arg14[%c21_415, %c448_416], %262 {strides = array<i32>} : memref<36x512xf32, #tpu.memory_space<vmem>>, vector<3x32xf32>,
    %c171 = arith.constant 171 : index
    %c0_417 = arith.constant 0 : index
    %264 = tpu.strided_load %arg13[%c171, %c0_417] {strides = array<i32: 2, 1>} : memref<256x32xf32, #tpu.memory_space<vmem>>, vector<3x32xf32>
    %c21_418 = arith.constant 21 : index
    %c480_419 = arith.constant 480 : index
    %265 = vector.load %arg14[%c21_418, %c480_419] : memref<36x512xf32, #tpu.memory_space<vmem>>, vector<3x32xf32>
    tpu.vector_store %arg14[%c21_418, %c480_419], %264 {strides = array<i32>} : memref<36x512xf32, #tpu.memory_space<vmem>>, vector<3x32xf32>,
    %c160_420 = arith.constant 160 : index
    %c0_421 = arith.constant 0 : index
    %266 = tpu.strided_load %arg13[%c160_420, %c0_421] {strides = array<i32: 2, 1>} : memref<256x32xf32, #tpu.memory_space<vmem>>, vector<3x32xf32>
    %c24_422 = arith.constant 24 : index
    %c0_423 = arith.constant 0 : index
    %267 = vector.load %arg14[%c24_422, %c0_423] : memref<36x512xf32, #tpu.memory_space<vmem>>, vector<3x32xf32>
    tpu.vector_store %arg14[%c24_422, %c0_423], %266 {strides = array<i32>} : memref<36x512xf32, #tpu.memory_space<vmem>>, vector<3x32xf32>,
    %c161_424 = arith.constant 161 : index
    %c0_425 = arith.constant 0 : index
    %268 = tpu.strided_load %arg13[%c161_424, %c0_425] {strides = array<i32: 2, 1>} : memref<256x32xf32, #tpu.memory_space<vmem>>, vector<3x32xf32>
    %c24_426 = arith.constant 24 : index
    %c32_427 = arith.constant 32 : index
    %269 = vector.load %arg14[%c24_426, %c32_427] : memref<36x512xf32, #tpu.memory_space<vmem>>, vector<3x32xf32>
    tpu.vector_store %arg14[%c24_426, %c32_427], %268 {strides = array<i32>} : memref<36x512xf32, #tpu.memory_space<vmem>>, vector<3x32xf32>,
    %c162_428 = arith.constant 162 : index
    %c0_429 = arith.constant 0 : index
    %270 = tpu.strided_load %arg13[%c162_428, %c0_429] {strides = array<i32: 2, 1>} : memref<256x32xf32, #tpu.memory_space<vmem>>, vector<3x32xf32>
    %c24_430 = arith.constant 24 : index
    %c64_431 = arith.constant 64 : index
    %271 = vector.load %arg14[%c24_430, %c64_431] : memref<36x512xf32, #tpu.memory_space<vmem>>, vector<3x32xf32>
    tpu.vector_store %arg14[%c24_430, %c64_431], %270 {strides = array<i32>} : memref<36x512xf32, #tpu.memory_space<vmem>>, vector<3x32xf32>,
    %c163_432 = arith.constant 163 : index
    %c0_433 = arith.constant 0 : index
    %272 = tpu.strided_load %arg13[%c163_432, %c0_433] {strides = array<i32: 2, 1>} : memref<256x32xf32, #tpu.memory_space<vmem>>, vector<3x32xf32>
    %c24_434 = arith.constant 24 : index
    %c96_435 = arith.constant 96 : index
    %273 = vector.load %arg14[%c24_434, %c96_435] : memref<36x512xf32, #tpu.memory_space<vmem>>, vector<3x32xf32>
    tpu.vector_store %arg14[%c24_434, %c96_435], %272 {strides = array<i32>} : memref<36x512xf32, #tpu.memory_space<vmem>>, vector<3x32xf32>,
    %c168_436 = arith.constant 168 : index
    %c0_437 = arith.constant 0 : index
    %274 = tpu.strided_load %arg13[%c168_436, %c0_437] {strides = array<i32: 2, 1>} : memref<256x32xf32, #tpu.memory_space<vmem>>, vector<3x32xf32>
    %c24_438 = arith.constant 24 : index
    %c128_439 = arith.constant 128 : index
    %275 = vector.load %arg14[%c24_438, %c128_439] : memref<36x512xf32, #tpu.memory_space<vmem>>, vector<3x32xf32>
    tpu.vector_store %arg14[%c24_438, %c128_439], %274 {strides = array<i32>} : memref<36x512xf32, #tpu.memory_space<vmem>>, vector<3x32xf32>,
    %c169_440 = arith.constant 169 : index
    %c0_441 = arith.constant 0 : index
    %276 = tpu.strided_load %arg13[%c169_440, %c0_441] {strides = array<i32: 2, 1>} : memref<256x32xf32, #tpu.memory_space<vmem>>, vector<3x32xf32>
    %c24_442 = arith.constant 24 : index
    %c160_443 = arith.constant 160 : index
    %277 = vector.load %arg14[%c24_442, %c160_443] : memref<36x512xf32, #tpu.memory_space<vmem>>, vector<3x32xf32>
    tpu.vector_store %arg14[%c24_442, %c160_443], %276 {strides = array<i32>} : memref<36x512xf32, #tpu.memory_space<vmem>>, vector<3x32xf32>,
    %c170_444 = arith.constant 170 : index
    %c0_445 = arith.constant 0 : index
    %278 = tpu.strided_load %arg13[%c170_444, %c0_445] {strides = array<i32: 2, 1>} : memref<256x32xf32, #tpu.memory_space<vmem>>, vector<3x32xf32>
    %c24_446 = arith.constant 24 : index
    %c192_447 = arith.constant 192 : index
    %279 = vector.load %arg14[%c24_446, %c192_447] : memref<36x512xf32, #tpu.memory_space<vmem>>, vector<3x32xf32>
    tpu.vector_store %arg14[%c24_446, %c192_447], %278 {strides = array<i32>} : memref<36x512xf32, #tpu.memory_space<vmem>>, vector<3x32xf32>,
    %c171_448 = arith.constant 171 : index
    %c0_449 = arith.constant 0 : index
    %280 = tpu.strided_load %arg13[%c171_448, %c0_449] {strides = array<i32: 2, 1>} : memref<256x32xf32, #tpu.memory_space<vmem>>, vector<3x32xf32>
    %c24_450 = arith.constant 24 : index
    %c224_451 = arith.constant 224 : index
    %281 = vector.load %arg14[%c24_450, %c224_451] : memref<36x512xf32, #tpu.memory_space<vmem>>, vector<3x32xf32>
    tpu.vector_store %arg14[%c24_450, %c224_451], %280 {strides = array<i32>} : memref<36x512xf32, #tpu.memory_space<vmem>>, vector<3x32xf32>,
    %c176 = arith.constant 176 : index
    %c0_452 = arith.constant 0 : index
    %282 = tpu.strided_load %arg13[%c176, %c0_452] {strides = array<i32: 2, 1>} : memref<256x32xf32, #tpu.memory_space<vmem>>, vector<3x32xf32>
    %c24_453 = arith.constant 24 : index
    %c256_454 = arith.constant 256 : index
    %283 = vector.load %arg14[%c24_453, %c256_454] : memref<36x512xf32, #tpu.memory_space<vmem>>, vector<3x32xf32>
    tpu.vector_store %arg14[%c24_453, %c256_454], %282 {strides = array<i32>} : memref<36x512xf32, #tpu.memory_space<vmem>>, vector<3x32xf32>,
    %c177 = arith.constant 177 : index
    %c0_455 = arith.constant 0 : index
    %284 = tpu.strided_load %arg13[%c177, %c0_455] {strides = array<i32: 2, 1>} : memref<256x32xf32, #tpu.memory_space<vmem>>, vector<3x32xf32>
    %c24_456 = arith.constant 24 : index
    %c288_457 = arith.constant 288 : index
    %285 = vector.load %arg14[%c24_456, %c288_457] : memref<36x512xf32, #tpu.memory_space<vmem>>, vector<3x32xf32>
    tpu.vector_store %arg14[%c24_456, %c288_457], %284 {strides = array<i32>} : memref<36x512xf32, #tpu.memory_space<vmem>>, vector<3x32xf32>,
    %c178 = arith.constant 178 : index
    %c0_458 = arith.constant 0 : index
    %286 = tpu.strided_load %arg13[%c178, %c0_458] {strides = array<i32: 2, 1>} : memref<256x32xf32, #tpu.memory_space<vmem>>, vector<3x32xf32>
    %c24_459 = arith.constant 24 : index
    %c320_460 = arith.constant 320 : index
    %287 = vector.load %arg14[%c24_459, %c320_460] : memref<36x512xf32, #tpu.memory_space<vmem>>, vector<3x32xf32>
    tpu.vector_store %arg14[%c24_459, %c320_460], %286 {strides = array<i32>} : memref<36x512xf32, #tpu.memory_space<vmem>>, vector<3x32xf32>,
    %c179 = arith.constant 179 : index
    %c0_461 = arith.constant 0 : index
    %288 = tpu.strided_load %arg13[%c179, %c0_461] {strides = array<i32: 2, 1>} : memref<256x32xf32, #tpu.memory_space<vmem>>, vector<3x32xf32>
    %c24_462 = arith.constant 24 : index
    %c352_463 = arith.constant 352 : index
    %289 = vector.load %arg14[%c24_462, %c352_463] : memref<36x512xf32, #tpu.memory_space<vmem>>, vector<3x32xf32>
    tpu.vector_store %arg14[%c24_462, %c352_463], %288 {strides = array<i32>} : memref<36x512xf32, #tpu.memory_space<vmem>>, vector<3x32xf32>,
    %c184 = arith.constant 184 : index
    %c0_464 = arith.constant 0 : index
    %290 = tpu.strided_load %arg13[%c184, %c0_464] {strides = array<i32: 2, 1>} : memref<256x32xf32, #tpu.memory_space<vmem>>, vector<3x32xf32>
    %c24_465 = arith.constant 24 : index
    %c384_466 = arith.constant 384 : index
    %291 = vector.load %arg14[%c24_465, %c384_466] : memref<36x512xf32, #tpu.memory_space<vmem>>, vector<3x32xf32>
    tpu.vector_store %arg14[%c24_465, %c384_466], %290 {strides = array<i32>} : memref<36x512xf32, #tpu.memory_space<vmem>>, vector<3x32xf32>,
    %c185 = arith.constant 185 : index
    %c0_467 = arith.constant 0 : index
    %292 = tpu.strided_load %arg13[%c185, %c0_467] {strides = array<i32: 2, 1>} : memref<256x32xf32, #tpu.memory_space<vmem>>, vector<3x32xf32>
    %c24_468 = arith.constant 24 : index
    %c416_469 = arith.constant 416 : index
    %293 = vector.load %arg14[%c24_468, %c416_469] : memref<36x512xf32, #tpu.memory_space<vmem>>, vector<3x32xf32>
    tpu.vector_store %arg14[%c24_468, %c416_469], %292 {strides = array<i32>} : memref<36x512xf32, #tpu.memory_space<vmem>>, vector<3x32xf32>,
    %c186 = arith.constant 186 : index
    %c0_470 = arith.constant 0 : index
    %294 = tpu.strided_load %arg13[%c186, %c0_470] {strides = array<i32: 2, 1>} : memref<256x32xf32, #tpu.memory_space<vmem>>, vector<3x32xf32>
    %c24_471 = arith.constant 24 : index
    %c448_472 = arith.constant 448 : index
    %295 = vector.load %arg14[%c24_471, %c448_472] : memref<36x512xf32, #tpu.memory_space<vmem>>, vector<3x32xf32>
    tpu.vector_store %arg14[%c24_471, %c448_472], %294 {strides = array<i32>} : memref<36x512xf32, #tpu.memory_space<vmem>>, vector<3x32xf32>,
    %c187 = arith.constant 187 : index
    %c0_473 = arith.constant 0 : index
    %296 = tpu.strided_load %arg13[%c187, %c0_473] {strides = array<i32: 2, 1>} : memref<256x32xf32, #tpu.memory_space<vmem>>, vector<3x32xf32>
    %c24_474 = arith.constant 24 : index
    %c480_475 = arith.constant 480 : index
    %297 = vector.load %arg14[%c24_474, %c480_475] : memref<36x512xf32, #tpu.memory_space<vmem>>, vector<3x32xf32>
    tpu.vector_store %arg14[%c24_474, %c480_475], %296 {strides = array<i32>} : memref<36x512xf32, #tpu.memory_space<vmem>>, vector<3x32xf32>,
    %c192_476 = arith.constant 192 : index
    %c0_477 = arith.constant 0 : index
    %298 = tpu.strided_load %arg13[%c192_476, %c0_477] {strides = array<i32: 2, 1>} : memref<256x32xf32, #tpu.memory_space<vmem>>, vector<3x32xf32>
    %c27_478 = arith.constant 27 : index
    %c0_479 = arith.constant 0 : index
    %299 = vector.load %arg14[%c27_478, %c0_479] : memref<36x512xf32, #tpu.memory_space<vmem>>, vector<3x32xf32>
    tpu.vector_store %arg14[%c27_478, %c0_479], %298 {strides = array<i32>} : memref<36x512xf32, #tpu.memory_space<vmem>>, vector<3x32xf32>,
    %c193 = arith.constant 193 : index
    %c0_480 = arith.constant 0 : index
    %300 = tpu.strided_load %arg13[%c193, %c0_480] {strides = array<i32: 2, 1>} : memref<256x32xf32, #tpu.memory_space<vmem>>, vector<3x32xf32>
    %c27_481 = arith.constant 27 : index
    %c32_482 = arith.constant 32 : index
    %301 = vector.load %arg14[%c27_481, %c32_482] : memref<36x512xf32, #tpu.memory_space<vmem>>, vector<3x32xf32>
    tpu.vector_store %arg14[%c27_481, %c32_482], %300 {strides = array<i32>} : memref<36x512xf32, #tpu.memory_space<vmem>>, vector<3x32xf32>,
    %c194 = arith.constant 194 : index
    %c0_483 = arith.constant 0 : index
    %302 = tpu.strided_load %arg13[%c194, %c0_483] {strides = array<i32: 2, 1>} : memref<256x32xf32, #tpu.memory_space<vmem>>, vector<3x32xf32>
    %c27_484 = arith.constant 27 : index
    %c64_485 = arith.constant 64 : index
    %303 = vector.load %arg14[%c27_484, %c64_485] : memref<36x512xf32, #tpu.memory_space<vmem>>, vector<3x32xf32>
    tpu.vector_store %arg14[%c27_484, %c64_485], %302 {strides = array<i32>} : memref<36x512xf32, #tpu.memory_space<vmem>>, vector<3x32xf32>,
    %c195 = arith.constant 195 : index
    %c0_486 = arith.constant 0 : index
    %304 = tpu.strided_load %arg13[%c195, %c0_486] {strides = array<i32: 2, 1>} : memref<256x32xf32, #tpu.memory_space<vmem>>, vector<3x32xf32>
    %c27_487 = arith.constant 27 : index
    %c96_488 = arith.constant 96 : index
    %305 = vector.load %arg14[%c27_487, %c96_488] : memref<36x512xf32, #tpu.memory_space<vmem>>, vector<3x32xf32>
    tpu.vector_store %arg14[%c27_487, %c96_488], %304 {strides = array<i32>} : memref<36x512xf32, #tpu.memory_space<vmem>>, vector<3x32xf32>,
    %c200 = arith.constant 200 : index
    %c0_489 = arith.constant 0 : index
    %306 = tpu.strided_load %arg13[%c200, %c0_489] {strides = array<i32: 2, 1>} : memref<256x32xf32, #tpu.memory_space<vmem>>, vector<3x32xf32>
    %c27_490 = arith.constant 27 : index
    %c128_491 = arith.constant 128 : index
    %307 = vector.load %arg14[%c27_490, %c128_491] : memref<36x512xf32, #tpu.memory_space<vmem>>, vector<3x32xf32>
    tpu.vector_store %arg14[%c27_490, %c128_491], %306 {strides = array<i32>} : memref<36x512xf32, #tpu.memory_space<vmem>>, vector<3x32xf32>,
    %c201 = arith.constant 201 : index
    %c0_492 = arith.constant 0 : index
    %308 = tpu.strided_load %arg13[%c201, %c0_492] {strides = array<i32: 2, 1>} : memref<256x32xf32, #tpu.memory_space<vmem>>, vector<3x32xf32>
    %c27_493 = arith.constant 27 : index
    %c160_494 = arith.constant 160 : index
    %309 = vector.load %arg14[%c27_493, %c160_494] : memref<36x512xf32, #tpu.memory_space<vmem>>, vector<3x32xf32>
    tpu.vector_store %arg14[%c27_493, %c160_494], %308 {strides = array<i32>} : memref<36x512xf32, #tpu.memory_space<vmem>>, vector<3x32xf32>,
    %c202 = arith.constant 202 : index
    %c0_495 = arith.constant 0 : index
    %310 = tpu.strided_load %arg13[%c202, %c0_495] {strides = array<i32: 2, 1>} : memref<256x32xf32, #tpu.memory_space<vmem>>, vector<3x32xf32>
    %c27_496 = arith.constant 27 : index
    %c192_497 = arith.constant 192 : index
    %311 = vector.load %arg14[%c27_496, %c192_497] : memref<36x512xf32, #tpu.memory_space<vmem>>, vector<3x32xf32>
    tpu.vector_store %arg14[%c27_496, %c192_497], %310 {strides = array<i32>} : memref<36x512xf32, #tpu.memory_space<vmem>>, vector<3x32xf32>,
    %c203 = arith.constant 203 : index
    %c0_498 = arith.constant 0 : index
    %312 = tpu.strided_load %arg13[%c203, %c0_498] {strides = array<i32: 2, 1>} : memref<256x32xf32, #tpu.memory_space<vmem>>, vector<3x32xf32>
    %c27_499 = arith.constant 27 : index
    %c224_500 = arith.constant 224 : index
    %313 = vector.load %arg14[%c27_499, %c224_500] : memref<36x512xf32, #tpu.memory_space<vmem>>, vector<3x32xf32>
    tpu.vector_store %arg14[%c27_499, %c224_500], %312 {strides = array<i32>} : memref<36x512xf32, #tpu.memory_space<vmem>>, vector<3x32xf32>,
    %c208 = arith.constant 208 : index
    %c0_501 = arith.constant 0 : index
    %314 = tpu.strided_load %arg13[%c208, %c0_501] {strides = array<i32: 2, 1>} : memref<256x32xf32, #tpu.memory_space<vmem>>, vector<3x32xf32>
    %c27_502 = arith.constant 27 : index
    %c256_503 = arith.constant 256 : index
    %315 = vector.load %arg14[%c27_502, %c256_503] : memref<36x512xf32, #tpu.memory_space<vmem>>, vector<3x32xf32>
    tpu.vector_store %arg14[%c27_502, %c256_503], %314 {strides = array<i32>} : memref<36x512xf32, #tpu.memory_space<vmem>>, vector<3x32xf32>,
    %c209 = arith.constant 209 : index
    %c0_504 = arith.constant 0 : index
    %316 = tpu.strided_load %arg13[%c209, %c0_504] {strides = array<i32: 2, 1>} : memref<256x32xf32, #tpu.memory_space<vmem>>, vector<3x32xf32>
    %c27_505 = arith.constant 27 : index
    %c288_506 = arith.constant 288 : index
    %317 = vector.load %arg14[%c27_505, %c288_506] : memref<36x512xf32, #tpu.memory_space<vmem>>, vector<3x32xf32>
    tpu.vector_store %arg14[%c27_505, %c288_506], %316 {strides = array<i32>} : memref<36x512xf32, #tpu.memory_space<vmem>>, vector<3x32xf32>,
    %c210 = arith.constant 210 : index
    %c0_507 = arith.constant 0 : index
    %318 = tpu.strided_load %arg13[%c210, %c0_507] {strides = array<i32: 2, 1>} : memref<256x32xf32, #tpu.memory_space<vmem>>, vector<3x32xf32>
    %c27_508 = arith.constant 27 : index
    %c320_509 = arith.constant 320 : index
    %319 = vector.load %arg14[%c27_508, %c320_509] : memref<36x512xf32, #tpu.memory_space<vmem>>, vector<3x32xf32>
    tpu.vector_store %arg14[%c27_508, %c320_509], %318 {strides = array<i32>} : memref<36x512xf32, #tpu.memory_space<vmem>>, vector<3x32xf32>,
    %c211 = arith.constant 211 : index
    %c0_510 = arith.constant 0 : index
    %320 = tpu.strided_load %arg13[%c211, %c0_510] {strides = array<i32: 2, 1>} : memref<256x32xf32, #tpu.memory_space<vmem>>, vector<3x32xf32>
    %c27_511 = arith.constant 27 : index
    %c352_512 = arith.constant 352 : index
    %321 = vector.load %arg14[%c27_511, %c352_512] : memref<36x512xf32, #tpu.memory_space<vmem>>, vector<3x32xf32>
    tpu.vector_store %arg14[%c27_511, %c352_512], %320 {strides = array<i32>} : memref<36x512xf32, #tpu.memory_space<vmem>>, vector<3x32xf32>,
    %c216 = arith.constant 216 : index
    %c0_513 = arith.constant 0 : index
    %322 = tpu.strided_load %arg13[%c216, %c0_513] {strides = array<i32: 2, 1>} : memref<256x32xf32, #tpu.memory_space<vmem>>, vector<3x32xf32>
    %c27_514 = arith.constant 27 : index
    %c384_515 = arith.constant 384 : index
    %323 = vector.load %arg14[%c27_514, %c384_515] : memref<36x512xf32, #tpu.memory_space<vmem>>, vector<3x32xf32>
    tpu.vector_store %arg14[%c27_514, %c384_515], %322 {strides = array<i32>} : memref<36x512xf32, #tpu.memory_space<vmem>>, vector<3x32xf32>,
    %c217 = arith.constant 217 : index
    %c0_516 = arith.constant 0 : index
    %324 = tpu.strided_load %arg13[%c217, %c0_516] {strides = array<i32: 2, 1>} : memref<256x32xf32, #tpu.memory_space<vmem>>, vector<3x32xf32>
    %c27_517 = arith.constant 27 : index
    %c416_518 = arith.constant 416 : index
    %325 = vector.load %arg14[%c27_517, %c416_518] : memref<36x512xf32, #tpu.memory_space<vmem>>, vector<3x32xf32>
    tpu.vector_store %arg14[%c27_517, %c416_518], %324 {strides = array<i32>} : memref<36x512xf32, #tpu.memory_space<vmem>>, vector<3x32xf32>,
    %c218 = arith.constant 218 : index
    %c0_519 = arith.constant 0 : index
    %326 = tpu.strided_load %arg13[%c218, %c0_519] {strides = array<i32: 2, 1>} : memref<256x32xf32, #tpu.memory_space<vmem>>, vector<3x32xf32>
    %c27_520 = arith.constant 27 : index
    %c448_521 = arith.constant 448 : index
    %327 = vector.load %arg14[%c27_520, %c448_521] : memref<36x512xf32, #tpu.memory_space<vmem>>, vector<3x32xf32>
    tpu.vector_store %arg14[%c27_520, %c448_521], %326 {strides = array<i32>} : memref<36x512xf32, #tpu.memory_space<vmem>>, vector<3x32xf32>,
    %c219 = arith.constant 219 : index
    %c0_522 = arith.constant 0 : index
    %328 = tpu.strided_load %arg13[%c219, %c0_522] {strides = array<i32: 2, 1>} : memref<256x32xf32, #tpu.memory_space<vmem>>, vector<3x32xf32>
    %c27_523 = arith.constant 27 : index
    %c480_524 = arith.constant 480 : index
    %329 = vector.load %arg14[%c27_523, %c480_524] : memref<36x512xf32, #tpu.memory_space<vmem>>, vector<3x32xf32>
    tpu.vector_store %arg14[%c27_523, %c480_524], %328 {strides = array<i32>} : memref<36x512xf32, #tpu.memory_space<vmem>>, vector<3x32xf32>,
    %c208_525 = arith.constant 208 : index
    %c0_526 = arith.constant 0 : index
    %330 = tpu.strided_load %arg13[%c208_525, %c0_526] {strides = array<i32: 2, 1>} : memref<256x32xf32, #tpu.memory_space<vmem>>, vector<3x32xf32>
    %c30 = arith.constant 30 : index
    %c0_527 = arith.constant 0 : index
    %331 = vector.load %arg14[%c30, %c0_527] : memref<36x512xf32, #tpu.memory_space<vmem>>, vector<3x32xf32>
    tpu.vector_store %arg14[%c30, %c0_527], %330 {strides = array<i32>} : memref<36x512xf32, #tpu.memory_space<vmem>>, vector<3x32xf32>,
    %c209_528 = arith.constant 209 : index
    %c0_529 = arith.constant 0 : index
    %332 = tpu.strided_load %arg13[%c209_528, %c0_529] {strides = array<i32: 2, 1>} : memref<256x32xf32, #tpu.memory_space<vmem>>, vector<3x32xf32>
    %c30_530 = arith.constant 30 : index
    %c32_531 = arith.constant 32 : index
    %333 = vector.load %arg14[%c30_530, %c32_531] : memref<36x512xf32, #tpu.memory_space<vmem>>, vector<3x32xf32>
    tpu.vector_store %arg14[%c30_530, %c32_531], %332 {strides = array<i32>} : memref<36x512xf32, #tpu.memory_space<vmem>>, vector<3x32xf32>,
    %c210_532 = arith.constant 210 : index
    %c0_533 = arith.constant 0 : index
    %334 = tpu.strided_load %arg13[%c210_532, %c0_533] {strides = array<i32: 2, 1>} : memref<256x32xf32, #tpu.memory_space<vmem>>, vector<3x32xf32>
    %c30_534 = arith.constant 30 : index
    %c64_535 = arith.constant 64 : index
    %335 = vector.load %arg14[%c30_534, %c64_535] : memref<36x512xf32, #tpu.memory_space<vmem>>, vector<3x32xf32>
    tpu.vector_store %arg14[%c30_534, %c64_535], %334 {strides = array<i32>} : memref<36x512xf32, #tpu.memory_space<vmem>>, vector<3x32xf32>,
    %c211_536 = arith.constant 211 : index
    %c0_537 = arith.constant 0 : index
    %336 = tpu.strided_load %arg13[%c211_536, %c0_537] {strides = array<i32: 2, 1>} : memref<256x32xf32, #tpu.memory_space<vmem>>, vector<3x32xf32>
    %c30_538 = arith.constant 30 : index
    %c96_539 = arith.constant 96 : index
    %337 = vector.load %arg14[%c30_538, %c96_539] : memref<36x512xf32, #tpu.memory_space<vmem>>, vector<3x32xf32>
    tpu.vector_store %arg14[%c30_538, %c96_539], %336 {strides = array<i32>} : memref<36x512xf32, #tpu.memory_space<vmem>>, vector<3x32xf32>,
    %c216_540 = arith.constant 216 : index
    %c0_541 = arith.constant 0 : index
    %338 = tpu.strided_load %arg13[%c216_540, %c0_541] {strides = array<i32: 2, 1>} : memref<256x32xf32, #tpu.memory_space<vmem>>, vector<3x32xf32>
    %c30_542 = arith.constant 30 : index
    %c128_543 = arith.constant 128 : index
    %339 = vector.load %arg14[%c30_542, %c128_543] : memref<36x512xf32, #tpu.memory_space<vmem>>, vector<3x32xf32>
    tpu.vector_store %arg14[%c30_542, %c128_543], %338 {strides = array<i32>} : memref<36x512xf32, #tpu.memory_space<vmem>>, vector<3x32xf32>,
    %c217_544 = arith.constant 217 : index
    %c0_545 = arith.constant 0 : index
    %340 = tpu.strided_load %arg13[%c217_544, %c0_545] {strides = array<i32: 2, 1>} : memref<256x32xf32, #tpu.memory_space<vmem>>, vector<3x32xf32>
    %c30_546 = arith.constant 30 : index
    %c160_547 = arith.constant 160 : index
    %341 = vector.load %arg14[%c30_546, %c160_547] : memref<36x512xf32, #tpu.memory_space<vmem>>, vector<3x32xf32>
    tpu.vector_store %arg14[%c30_546, %c160_547], %340 {strides = array<i32>} : memref<36x512xf32, #tpu.memory_space<vmem>>, vector<3x32xf32>,
    %c218_548 = arith.constant 218 : index
    %c0_549 = arith.constant 0 : index
    %342 = tpu.strided_load %arg13[%c218_548, %c0_549] {strides = array<i32: 2, 1>} : memref<256x32xf32, #tpu.memory_space<vmem>>, vector<3x32xf32>
    %c30_550 = arith.constant 30 : index
    %c192_551 = arith.constant 192 : index
    %343 = vector.load %arg14[%c30_550, %c192_551] : memref<36x512xf32, #tpu.memory_space<vmem>>, vector<3x32xf32>
    tpu.vector_store %arg14[%c30_550, %c192_551], %342 {strides = array<i32>} : memref<36x512xf32, #tpu.memory_space<vmem>>, vector<3x32xf32>,
    %c219_552 = arith.constant 219 : index
    %c0_553 = arith.constant 0 : index
    %344 = tpu.strided_load %arg13[%c219_552, %c0_553] {strides = array<i32: 2, 1>} : memref<256x32xf32, #tpu.memory_space<vmem>>, vector<3x32xf32>
    %c30_554 = arith.constant 30 : index
    %c224_555 = arith.constant 224 : index
    %345 = vector.load %arg14[%c30_554, %c224_555] : memref<36x512xf32, #tpu.memory_space<vmem>>, vector<3x32xf32>
    tpu.vector_store %arg14[%c30_554, %c224_555], %344 {strides = array<i32>} : memref<36x512xf32, #tpu.memory_space<vmem>>, vector<3x32xf32>,
    %c224_556 = arith.constant 224 : index
    %c0_557 = arith.constant 0 : index
    %346 = tpu.strided_load %arg13[%c224_556, %c0_557] {strides = array<i32: 2, 1>} : memref<256x32xf32, #tpu.memory_space<vmem>>, vector<3x32xf32>
    %c30_558 = arith.constant 30 : index
    %c256_559 = arith.constant 256 : index
    %347 = vector.load %arg14[%c30_558, %c256_559] : memref<36x512xf32, #tpu.memory_space<vmem>>, vector<3x32xf32>
    tpu.vector_store %arg14[%c30_558, %c256_559], %346 {strides = array<i32>} : memref<36x512xf32, #tpu.memory_space<vmem>>, vector<3x32xf32>,
    %c225 = arith.constant 225 : index
    %c0_560 = arith.constant 0 : index
    %348 = tpu.strided_load %arg13[%c225, %c0_560] {strides = array<i32: 2, 1>} : memref<256x32xf32, #tpu.memory_space<vmem>>, vector<3x32xf32>
    %c30_561 = arith.constant 30 : index
    %c288_562 = arith.constant 288 : index
    %349 = vector.load %arg14[%c30_561, %c288_562] : memref<36x512xf32, #tpu.memory_space<vmem>>, vector<3x32xf32>
    tpu.vector_store %arg14[%c30_561, %c288_562], %348 {strides = array<i32>} : memref<36x512xf32, #tpu.memory_space<vmem>>, vector<3x32xf32>,
    %c226 = arith.constant 226 : index
    %c0_563 = arith.constant 0 : index
    %350 = tpu.strided_load %arg13[%c226, %c0_563] {strides = array<i32: 2, 1>} : memref<256x32xf32, #tpu.memory_space<vmem>>, vector<3x32xf32>
    %c30_564 = arith.constant 30 : index
    %c320_565 = arith.constant 320 : index
    %351 = vector.load %arg14[%c30_564, %c320_565] : memref<36x512xf32, #tpu.memory_space<vmem>>, vector<3x32xf32>
    tpu.vector_store %arg14[%c30_564, %c320_565], %350 {strides = array<i32>} : memref<36x512xf32, #tpu.memory_space<vmem>>, vector<3x32xf32>,
    %c227 = arith.constant 227 : index
    %c0_566 = arith.constant 0 : index
    %352 = tpu.strided_load %arg13[%c227, %c0_566] {strides = array<i32: 2, 1>} : memref<256x32xf32, #tpu.memory_space<vmem>>, vector<3x32xf32>
    %c30_567 = arith.constant 30 : index
    %c352_568 = arith.constant 352 : index
    %353 = vector.load %arg14[%c30_567, %c352_568] : memref<36x512xf32, #tpu.memory_space<vmem>>, vector<3x32xf32>
    tpu.vector_store %arg14[%c30_567, %c352_568], %352 {strides = array<i32>} : memref<36x512xf32, #tpu.memory_space<vmem>>, vector<3x32xf32>,
    %c232 = arith.constant 232 : index
    %c0_569 = arith.constant 0 : index
    %354 = tpu.strided_load %arg13[%c232, %c0_569] {strides = array<i32: 2, 1>} : memref<256x32xf32, #tpu.memory_space<vmem>>, vector<3x32xf32>
    %c30_570 = arith.constant 30 : index
    %c384_571 = arith.constant 384 : index
    %355 = vector.load %arg14[%c30_570, %c384_571] : memref<36x512xf32, #tpu.memory_space<vmem>>, vector<3x32xf32>
    tpu.vector_store %arg14[%c30_570, %c384_571], %354 {strides = array<i32>} : memref<36x512xf32, #tpu.memory_space<vmem>>, vector<3x32xf32>,
    %c233 = arith.constant 233 : index
    %c0_572 = arith.constant 0 : index
    %356 = tpu.strided_load %arg13[%c233, %c0_572] {strides = array<i32: 2, 1>} : memref<256x32xf32, #tpu.memory_space<vmem>>, vector<3x32xf32>
    %c30_573 = arith.constant 30 : index
    %c416_574 = arith.constant 416 : index
    %357 = vector.load %arg14[%c30_573, %c416_574] : memref<36x512xf32, #tpu.memory_space<vmem>>, vector<3x32xf32>
    tpu.vector_store %arg14[%c30_573, %c416_574], %356 {strides = array<i32>} : memref<36x512xf32, #tpu.memory_space<vmem>>, vector<3x32xf32>,
    %c234 = arith.constant 234 : index
    %c0_575 = arith.constant 0 : index
    %358 = tpu.strided_load %arg13[%c234, %c0_575] {strides = array<i32: 2, 1>} : memref<256x32xf32, #tpu.memory_space<vmem>>, vector<3x32xf32>
    %c30_576 = arith.constant 30 : index
    %c448_577 = arith.constant 448 : index
    %359 = vector.load %arg14[%c30_576, %c448_577] : memref<36x512xf32, #tpu.memory_space<vmem>>, vector<3x32xf32>
    tpu.vector_store %arg14[%c30_576, %c448_577], %358 {strides = array<i32>} : memref<36x512xf32, #tpu.memory_space<vmem>>, vector<3x32xf32>,
    %c235 = arith.constant 235 : index
    %c0_578 = arith.constant 0 : index
    %360 = tpu.strided_load %arg13[%c235, %c0_578] {strides = array<i32: 2, 1>} : memref<256x32xf32, #tpu.memory_space<vmem>>, vector<3x32xf32>
    %c30_579 = arith.constant 30 : index
    %c480_580 = arith.constant 480 : index
    %361 = vector.load %arg14[%c30_579, %c480_580] : memref<36x512xf32, #tpu.memory_space<vmem>>, vector<3x32xf32>
    tpu.vector_store %arg14[%c30_579, %c480_580], %360 {strides = array<i32>} : memref<36x512xf32, #tpu.memory_space<vmem>>, vector<3x32xf32>,
    %c224_581 = arith.constant 224 : index
    %c0_582 = arith.constant 0 : index
    %362 = tpu.strided_load %arg13[%c224_581, %c0_582] {strides = array<i32: 2, 1>} : memref<256x32xf32, #tpu.memory_space<vmem>>, vector<3x32xf32>
    %c33_583 = arith.constant 33 : index
    %c0_584 = arith.constant 0 : index
    %363 = vector.load %arg14[%c33_583, %c0_584] : memref<36x512xf32, #tpu.memory_space<vmem>>, vector<3x32xf32>
    tpu.vector_store %arg14[%c33_583, %c0_584], %362 {strides = array<i32>} : memref<36x512xf32, #tpu.memory_space<vmem>>, vector<3x32xf32>,
    %c225_585 = arith.constant 225 : index
    %c0_586 = arith.constant 0 : index
    %364 = tpu.strided_load %arg13[%c225_585, %c0_586] {strides = array<i32: 2, 1>} : memref<256x32xf32, #tpu.memory_space<vmem>>, vector<3x32xf32>
    %c33_587 = arith.constant 33 : index
    %c32_588 = arith.constant 32 : index
    %365 = vector.load %arg14[%c33_587, %c32_588] : memref<36x512xf32, #tpu.memory_space<vmem>>, vector<3x32xf32>
    tpu.vector_store %arg14[%c33_587, %c32_588], %364 {strides = array<i32>} : memref<36x512xf32, #tpu.memory_space<vmem>>, vector<3x32xf32>,
    %c226_589 = arith.constant 226 : index
    %c0_590 = arith.constant 0 : index
    %366 = tpu.strided_load %arg13[%c226_589, %c0_590] {strides = array<i32: 2, 1>} : memref<256x32xf32, #tpu.memory_space<vmem>>, vector<3x32xf32>
    %c33_591 = arith.constant 33 : index
    %c64_592 = arith.constant 64 : index
    %367 = vector.load %arg14[%c33_591, %c64_592] : memref<36x512xf32, #tpu.memory_space<vmem>>, vector<3x32xf32>
    tpu.vector_store %arg14[%c33_591, %c64_592], %366 {strides = array<i32>} : memref<36x512xf32, #tpu.memory_space<vmem>>, vector<3x32xf32>,
    %c227_593 = arith.constant 227 : index
    %c0_594 = arith.constant 0 : index
    %368 = tpu.strided_load %arg13[%c227_593, %c0_594] {strides = array<i32: 2, 1>} : memref<256x32xf32, #tpu.memory_space<vmem>>, vector<3x32xf32>
    %c33_595 = arith.constant 33 : index
    %c96_596 = arith.constant 96 : index
    %369 = vector.load %arg14[%c33_595, %c96_596] : memref<36x512xf32, #tpu.memory_space<vmem>>, vector<3x32xf32>
    tpu.vector_store %arg14[%c33_595, %c96_596], %368 {strides = array<i32>} : memref<36x512xf32, #tpu.memory_space<vmem>>, vector<3x32xf32>,
    %c232_597 = arith.constant 232 : index
    %c0_598 = arith.constant 0 : index
    %370 = tpu.strided_load %arg13[%c232_597, %c0_598] {strides = array<i32: 2, 1>} : memref<256x32xf32, #tpu.memory_space<vmem>>, vector<3x32xf32>
    %c33_599 = arith.constant 33 : index
    %c128_600 = arith.constant 128 : index
    %371 = vector.load %arg14[%c33_599, %c128_600] : memref<36x512xf32, #tpu.memory_space<vmem>>, vector<3x32xf32>
    tpu.vector_store %arg14[%c33_599, %c128_600], %370 {strides = array<i32>} : memref<36x512xf32, #tpu.memory_space<vmem>>, vector<3x32xf32>,
    %c233_601 = arith.constant 233 : index
    %c0_602 = arith.constant 0 : index
    %372 = tpu.strided_load %arg13[%c233_601, %c0_602] {strides = array<i32: 2, 1>} : memref<256x32xf32, #tpu.memory_space<vmem>>, vector<3x32xf32>
    %c33_603 = arith.constant 33 : index
    %c160_604 = arith.constant 160 : index
    %373 = vector.load %arg14[%c33_603, %c160_604] : memref<36x512xf32, #tpu.memory_space<vmem>>, vector<3x32xf32>
    tpu.vector_store %arg14[%c33_603, %c160_604], %372 {strides = array<i32>} : memref<36x512xf32, #tpu.memory_space<vmem>>, vector<3x32xf32>,
    %c234_605 = arith.constant 234 : index
    %c0_606 = arith.constant 0 : index
    %374 = tpu.strided_load %arg13[%c234_605, %c0_606] {strides = array<i32: 2, 1>} : memref<256x32xf32, #tpu.memory_space<vmem>>, vector<3x32xf32>
    %c33_607 = arith.constant 33 : index
    %c192_608 = arith.constant 192 : index
    %375 = vector.load %arg14[%c33_607, %c192_608] : memref<36x512xf32, #tpu.memory_space<vmem>>, vector<3x32xf32>
    tpu.vector_store %arg14[%c33_607, %c192_608], %374 {strides = array<i32>} : memref<36x512xf32, #tpu.memory_space<vmem>>, vector<3x32xf32>,
    %c235_609 = arith.constant 235 : index
    %c0_610 = arith.constant 0 : index
    %376 = tpu.strided_load %arg13[%c235_609, %c0_610] {strides = array<i32: 2, 1>} : memref<256x32xf32, #tpu.memory_space<vmem>>, vector<3x32xf32>
    %c33_611 = arith.constant 33 : index
    %c224_612 = arith.constant 224 : index
    %377 = vector.load %arg14[%c33_611, %c224_612] : memref<36x512xf32, #tpu.memory_space<vmem>>, vector<3x32xf32>
    tpu.vector_store %arg14[%c33_611, %c224_612], %376 {strides = array<i32>} : memref<36x512xf32, #tpu.memory_space<vmem>>, vector<3x32xf32>,
    %c240 = arith.constant 240 : index
    %c0_613 = arith.constant 0 : index
    %378 = tpu.strided_load %arg13[%c240, %c0_613] {strides = array<i32: 2, 1>} : memref<256x32xf32, #tpu.memory_space<vmem>>, vector<3x32xf32>
    %c33_614 = arith.constant 33 : index
    %c256_615 = arith.constant 256 : index
    %379 = vector.load %arg14[%c33_614, %c256_615] : memref<36x512xf32, #tpu.memory_space<vmem>>, vector<3x32xf32>
    tpu.vector_store %arg14[%c33_614, %c256_615], %378 {strides = array<i32>} : memref<36x512xf32, #tpu.memory_space<vmem>>, vector<3x32xf32>,
    %c241 = arith.constant 241 : index
    %c0_616 = arith.constant 0 : index
    %380 = tpu.strided_load %arg13[%c241, %c0_616] {strides = array<i32: 2, 1>} : memref<256x32xf32, #tpu.memory_space<vmem>>, vector<3x32xf32>
    %c33_617 = arith.constant 33 : index
    %c288_618 = arith.constant 288 : index
    %381 = vector.load %arg14[%c33_617, %c288_618] : memref<36x512xf32, #tpu.memory_space<vmem>>, vector<3x32xf32>
    tpu.vector_store %arg14[%c33_617, %c288_618], %380 {strides = array<i32>} : memref<36x512xf32, #tpu.memory_space<vmem>>, vector<3x32xf32>,
    %c242 = arith.constant 242 : index
    %c0_619 = arith.constant 0 : index
    %382 = tpu.strided_load %arg13[%c242, %c0_619] {strides = array<i32: 2, 1>} : memref<256x32xf32, #tpu.memory_space<vmem>>, vector<3x32xf32>
    %c33_620 = arith.constant 33 : index
    %c320_621 = arith.constant 320 : index
    %383 = vector.load %arg14[%c33_620, %c320_621] : memref<36x512xf32, #tpu.memory_space<vmem>>, vector<3x32xf32>
    tpu.vector_store %arg14[%c33_620, %c320_621], %382 {strides = array<i32>} : memref<36x512xf32, #tpu.memory_space<vmem>>, vector<3x32xf32>,
    %c243 = arith.constant 243 : index
    %c0_622 = arith.constant 0 : index
    %384 = tpu.strided_load %arg13[%c243, %c0_622] {strides = array<i32: 2, 1>} : memref<256x32xf32, #tpu.memory_space<vmem>>, vector<3x32xf32>
    %c33_623 = arith.constant 33 : index
    %c352_624 = arith.constant 352 : index
    %385 = vector.load %arg14[%c33_623, %c352_624] : memref<36x512xf32, #tpu.memory_space<vmem>>, vector<3x32xf32>
    tpu.vector_store %arg14[%c33_623, %c352_624], %384 {strides = array<i32>} : memref<36x512xf32, #tpu.memory_space<vmem>>, vector<3x32xf32>,
    %c248 = arith.constant 248 : index
    %c0_625 = arith.constant 0 : index
    %386 = tpu.strided_load %arg13[%c248, %c0_625] {strides = array<i32: 2, 1>} : memref<256x32xf32, #tpu.memory_space<vmem>>, vector<3x32xf32>
    %c33_626 = arith.constant 33 : index
    %c384_627 = arith.constant 384 : index
    %387 = vector.load %arg14[%c33_626, %c384_627] : memref<36x512xf32, #tpu.memory_space<vmem>>, vector<3x32xf32>
    tpu.vector_store %arg14[%c33_626, %c384_627], %386 {strides = array<i32>} : memref<36x512xf32, #tpu.memory_space<vmem>>, vector<3x32xf32>,
    %c249 = arith.constant 249 : index
    %c0_628 = arith.constant 0 : index
    %388 = tpu.strided_load %arg13[%c249, %c0_628] {strides = array<i32: 2, 1>} : memref<256x32xf32, #tpu.memory_space<vmem>>, vector<3x32xf32>
    %c33_629 = arith.constant 33 : index
    %c416_630 = arith.constant 416 : index
    %389 = vector.load %arg14[%c33_629, %c416_630] : memref<36x512xf32, #tpu.memory_space<vmem>>, vector<3x32xf32>
    tpu.vector_store %arg14[%c33_629, %c416_630], %388 {strides = array<i32>} : memref<36x512xf32, #tpu.memory_space<vmem>>, vector<3x32xf32>,
    %c250 = arith.constant 250 : index
    %c0_631 = arith.constant 0 : index
    %390 = tpu.strided_load %arg13[%c250, %c0_631] {strides = array<i32: 2, 1>} : memref<256x32xf32, #tpu.memory_space<vmem>>, vector<3x32xf32>
    %c33_632 = arith.constant 33 : index
    %c448_633 = arith.constant 448 : index
    %391 = vector.load %arg14[%c33_632, %c448_633] : memref<36x512xf32, #tpu.memory_space<vmem>>, vector<3x32xf32>
    tpu.vector_store %arg14[%c33_632, %c448_633], %390 {strides = array<i32>} : memref<36x512xf32, #tpu.memory_space<vmem>>, vector<3x32xf32>,
    %c251 = arith.constant 251 : index
    %c0_634 = arith.constant 0 : index
    %392 = tpu.strided_load %arg13[%c251, %c0_634] {strides = array<i32: 2, 1>} : memref<256x32xf32, #tpu.memory_space<vmem>>, vector<3x32xf32>
    %c33_635 = arith.constant 33 : index
    %c480_636 = arith.constant 480 : index
    %393 = vector.load %arg14[%c33_635, %c480_636] : memref<36x512xf32, #tpu.memory_space<vmem>>, vector<3x32xf32>
    tpu.vector_store %arg14[%c33_635, %c480_636], %392 {strides = array<i32>} : memref<36x512xf32, #tpu.memory_space<vmem>>, vector<3x32xf32>,
    %c0_637 = arith.constant 0 : index
    %c0_638 = arith.constant 0 : index
    %394 = vector.load %arg14[%c0_637, %c0_638] : memref<36x512xf32, #tpu.memory_space<vmem>>, vector<36x512xf32>
    %395 = arith.truncf %394 : vector<36x512xf32> to vector<36x512xbf16>
    %c0_639 = arith.constant 0 : index
    %c0_640 = arith.constant 0 : index
    %396 = vector.load %arg4[%c0_639, %c0_640] : memref<512x64xbf16, #tpu.memory_space<vmem>>, vector<512x64xbf16>
    %cst_641 = arith.constant dense<0.000000e+00> : vector<36x64xf32>
    %397 = tpu.matmul %395, %396, %cst_641 {dimension_numbers = #tpu.dot_dimension_numbers<[1], [0], [0], [1], [0, 0, 1, 1], [], []>} : vector<36x512xbf16>, vector<512x64xbf16>, vector<36x64xf32> -> vector<36x64xf32>
    %c0_642 = arith.constant 0 : index
    %c0_643 = arith.constant 0 : index
    %398 = vector.load %arg5[%c0_642, %c0_643] : memref<1x64xf32, #tpu.memory_space<vmem>>, vector<1x64xf32>
    %399 = vector.broadcast %398 : vector<1x64xf32> to vector<36x64xf32>
    %400 = arith.addf %397, %399 : vector<36x64xf32>
    %cst_644 = arith.constant 0.000000e+00 : f32
    %401 = vector.broadcast %cst_644 : f32 to vector<36x64xf32>
    %402 = arith.maximumf %400, %401 : vector<36x64xf32>
    %403 = vector.extract_strided_slice %402 {offsets = [0, 0], sizes = [1, 64], strides = [1, 1]} : vector<36x64xf32> to vector<1x64xf32>
    %c0_645 = arith.constant 0 : index
    %c0_646 = arith.constant 0 : index
    %404 = vector.load %arg15[%c0_645, %c0_646] : memref<4x576xf32, #tpu.memory_space<vmem>>, vector<1x64xf32>
    tpu.vector_store %arg15[%c0_645, %c0_646], %403 {strides = array<i32>} : memref<4x576xf32, #tpu.memory_space<vmem>>, vector<1x64xf32>,
    %405 = vector.extract_strided_slice %402 {offsets = [1, 0], sizes = [1, 64], strides = [1, 1]} : vector<36x64xf32> to vector<1x64xf32>
    %c0_647 = arith.constant 0 : index
    %c64_648 = arith.constant 64 : index
    %406 = vector.load %arg15[%c0_647, %c64_648] : memref<4x576xf32, #tpu.memory_space<vmem>>, vector<1x64xf32>
    tpu.vector_store %arg15[%c0_647, %c64_648], %405 {strides = array<i32>} : memref<4x576xf32, #tpu.memory_space<vmem>>, vector<1x64xf32>,
    %407 = vector.extract_strided_slice %402 {offsets = [2, 0], sizes = [1, 64], strides = [1, 1]} : vector<36x64xf32> to vector<1x64xf32>
    %c0_649 = arith.constant 0 : index
    %c128_650 = arith.constant 128 : index
    %408 = vector.load %arg15[%c0_649, %c128_650] : memref<4x576xf32, #tpu.memory_space<vmem>>, vector<1x64xf32>
    tpu.vector_store %arg15[%c0_649, %c128_650], %407 {strides = array<i32>} : memref<4x576xf32, #tpu.memory_space<vmem>>, vector<1x64xf32>,
    %409 = vector.extract_strided_slice %402 {offsets = [3, 0], sizes = [1, 64], strides = [1, 1]} : vector<36x64xf32> to vector<1x64xf32>
    %c0_651 = arith.constant 0 : index
    %c192_652 = arith.constant 192 : index
    %410 = vector.load %arg15[%c0_651, %c192_652] : memref<4x576xf32, #tpu.memory_space<vmem>>, vector<1x64xf32>
    tpu.vector_store %arg15[%c0_651, %c192_652], %409 {strides = array<i32>} : memref<4x576xf32, #tpu.memory_space<vmem>>, vector<1x64xf32>,
    %411 = vector.extract_strided_slice %402 {offsets = [4, 0], sizes = [1, 64], strides = [1, 1]} : vector<36x64xf32> to vector<1x64xf32>
    %c0_653 = arith.constant 0 : index
    %c256_654 = arith.constant 256 : index
    %412 = vector.load %arg15[%c0_653, %c256_654] : memref<4x576xf32, #tpu.memory_space<vmem>>, vector<1x64xf32>
    tpu.vector_store %arg15[%c0_653, %c256_654], %411 {strides = array<i32>} : memref<4x576xf32, #tpu.memory_space<vmem>>, vector<1x64xf32>,
    %413 = vector.extract_strided_slice %402 {offsets = [5, 0], sizes = [1, 64], strides = [1, 1]} : vector<36x64xf32> to vector<1x64xf32>
    %c0_655 = arith.constant 0 : index
    %c320_656 = arith.constant 320 : index
    %414 = vector.load %arg15[%c0_655, %c320_656] : memref<4x576xf32, #tpu.memory_space<vmem>>, vector<1x64xf32>
    tpu.vector_store %arg15[%c0_655, %c320_656], %413 {strides = array<i32>} : memref<4x576xf32, #tpu.memory_space<vmem>>, vector<1x64xf32>,
    %415 = vector.extract_strided_slice %402 {offsets = [6, 0], sizes = [1, 64], strides = [1, 1]} : vector<36x64xf32> to vector<1x64xf32>
    %c0_657 = arith.constant 0 : index
    %c384_658 = arith.constant 384 : index
    %416 = vector.load %arg15[%c0_657, %c384_658] : memref<4x576xf32, #tpu.memory_space<vmem>>, vector<1x64xf32>
    tpu.vector_store %arg15[%c0_657, %c384_658], %415 {strides = array<i32>} : memref<4x576xf32, #tpu.memory_space<vmem>>, vector<1x64xf32>,
    %417 = vector.extract_strided_slice %402 {offsets = [7, 0], sizes = [1, 64], strides = [1, 1]} : vector<36x64xf32> to vector<1x64xf32>
    %c0_659 = arith.constant 0 : index
    %c448_660 = arith.constant 448 : index
    %418 = vector.load %arg15[%c0_659, %c448_660] : memref<4x576xf32, #tpu.memory_space<vmem>>, vector<1x64xf32>
    tpu.vector_store %arg15[%c0_659, %c448_660], %417 {strides = array<i32>} : memref<4x576xf32, #tpu.memory_space<vmem>>, vector<1x64xf32>,
    %419 = vector.extract_strided_slice %402 {offsets = [8, 0], sizes = [1, 64], strides = [1, 1]} : vector<36x64xf32> to vector<1x64xf32>
    %c0_661 = arith.constant 0 : index
    %c512 = arith.constant 512 : index
    %420 = vector.load %arg15[%c0_661, %c512] : memref<4x576xf32, #tpu.memory_space<vmem>>, vector<1x64xf32>
    tpu.vector_store %arg15[%c0_661, %c512], %419 {strides = array<i32>} : memref<4x576xf32, #tpu.memory_space<vmem>>, vector<1x64xf32>,
    %421 = vector.extract_strided_slice %402 {offsets = [9, 0], sizes = [1, 64], strides = [1, 1]} : vector<36x64xf32> to vector<1x64xf32>
    %c1_662 = arith.constant 1 : index
    %c0_663 = arith.constant 0 : index
    %422 = vector.load %arg15[%c1_662, %c0_663] : memref<4x576xf32, #tpu.memory_space<vmem>>, vector<1x64xf32>
    tpu.vector_store %arg15[%c1_662, %c0_663], %421 {strides = array<i32>} : memref<4x576xf32, #tpu.memory_space<vmem>>, vector<1x64xf32>,
    %423 = vector.extract_strided_slice %402 {offsets = [10, 0], sizes = [1, 64], strides = [1, 1]} : vector<36x64xf32> to vector<1x64xf32>
    %c1_664 = arith.constant 1 : index
    %c64_665 = arith.constant 64 : index
    %424 = vector.load %arg15[%c1_664, %c64_665] : memref<4x576xf32, #tpu.memory_space<vmem>>, vector<1x64xf32>
    tpu.vector_store %arg15[%c1_664, %c64_665], %423 {strides = array<i32>} : memref<4x576xf32, #tpu.memory_space<vmem>>, vector<1x64xf32>,
    %425 = vector.extract_strided_slice %402 {offsets = [11, 0], sizes = [1, 64], strides = [1, 1]} : vector<36x64xf32> to vector<1x64xf32>
    %c1_666 = arith.constant 1 : index
    %c128_667 = arith.constant 128 : index
    %426 = vector.load %arg15[%c1_666, %c128_667] : memref<4x576xf32, #tpu.memory_space<vmem>>, vector<1x64xf32>
    tpu.vector_store %arg15[%c1_666, %c128_667], %425 {strides = array<i32>} : memref<4x576xf32, #tpu.memory_space<vmem>>, vector<1x64xf32>,
    %427 = vector.extract_strided_slice %402 {offsets = [12, 0], sizes = [1, 64], strides = [1, 1]} : vector<36x64xf32> to vector<1x64xf32>
    %c1_668 = arith.constant 1 : index
    %c192_669 = arith.constant 192 : index
    %428 = vector.load %arg15[%c1_668, %c192_669] : memref<4x576xf32, #tpu.memory_space<vmem>>, vector<1x64xf32>
    tpu.vector_store %arg15[%c1_668, %c192_669], %427 {strides = array<i32>} : memref<4x576xf32, #tpu.memory_space<vmem>>, vector<1x64xf32>,
    %429 = vector.extract_strided_slice %402 {offsets = [13, 0], sizes = [1, 64], strides = [1, 1]} : vector<36x64xf32> to vector<1x64xf32>
    %c1_670 = arith.constant 1 : index
    %c256_671 = arith.constant 256 : index
    %430 = vector.load %arg15[%c1_670, %c256_671] : memref<4x576xf32, #tpu.memory_space<vmem>>, vector<1x64xf32>
    tpu.vector_store %arg15[%c1_670, %c256_671], %429 {strides = array<i32>} : memref<4x576xf32, #tpu.memory_space<vmem>>, vector<1x64xf32>,
    %431 = vector.extract_strided_slice %402 {offsets = [14, 0], sizes = [1, 64], strides = [1, 1]} : vector<36x64xf32> to vector<1x64xf32>
    %c1_672 = arith.constant 1 : index
    %c320_673 = arith.constant 320 : index
    %432 = vector.load %arg15[%c1_672, %c320_673] : memref<4x576xf32, #tpu.memory_space<vmem>>, vector<1x64xf32>
    tpu.vector_store %arg15[%c1_672, %c320_673], %431 {strides = array<i32>} : memref<4x576xf32, #tpu.memory_space<vmem>>, vector<1x64xf32>,
    %433 = vector.extract_strided_slice %402 {offsets = [15, 0], sizes = [1, 64], strides = [1, 1]} : vector<36x64xf32> to vector<1x64xf32>
    %c1_674 = arith.constant 1 : index
    %c384_675 = arith.constant 384 : index
    %434 = vector.load %arg15[%c1_674, %c384_675] : memref<4x576xf32, #tpu.memory_space<vmem>>, vector<1x64xf32>
    tpu.vector_store %arg15[%c1_674, %c384_675], %433 {strides = array<i32>} : memref<4x576xf32, #tpu.memory_space<vmem>>, vector<1x64xf32>,
    %435 = vector.extract_strided_slice %402 {offsets = [16, 0], sizes = [1, 64], strides = [1, 1]} : vector<36x64xf32> to vector<1x64xf32>
    %c1_676 = arith.constant 1 : index
    %c448_677 = arith.constant 448 : index
    %436 = vector.load %arg15[%c1_676, %c448_677] : memref<4x576xf32, #tpu.memory_space<vmem>>, vector<1x64xf32>
    tpu.vector_store %arg15[%c1_676, %c448_677], %435 {strides = array<i32>} : memref<4x576xf32, #tpu.memory_space<vmem>>, vector<1x64xf32>,
    %437 = vector.extract_strided_slice %402 {offsets = [17, 0], sizes = [1, 64], strides = [1, 1]} : vector<36x64xf32> to vector<1x64xf32>
    %c1_678 = arith.constant 1 : index
    %c512_679 = arith.constant 512 : index
    %438 = vector.load %arg15[%c1_678, %c512_679] : memref<4x576xf32, #tpu.memory_space<vmem>>, vector<1x64xf32>
    tpu.vector_store %arg15[%c1_678, %c512_679], %437 {strides = array<i32>} : memref<4x576xf32, #tpu.memory_space<vmem>>, vector<1x64xf32>,
    %439 = vector.extract_strided_slice %402 {offsets = [18, 0], sizes = [1, 64], strides = [1, 1]} : vector<36x64xf32> to vector<1x64xf32>
    %c2_680 = arith.constant 2 : index
    %c0_681 = arith.constant 0 : index
    %440 = vector.load %arg15[%c2_680, %c0_681] : memref<4x576xf32, #tpu.memory_space<vmem>>, vector<1x64xf32>
    tpu.vector_store %arg15[%c2_680, %c0_681], %439 {strides = array<i32>} : memref<4x576xf32, #tpu.memory_space<vmem>>, vector<1x64xf32>,
    %441 = vector.extract_strided_slice %402 {offsets = [19, 0], sizes = [1, 64], strides = [1, 1]} : vector<36x64xf32> to vector<1x64xf32>
    %c2_682 = arith.constant 2 : index
    %c64_683 = arith.constant 64 : index
    %442 = vector.load %arg15[%c2_682, %c64_683] : memref<4x576xf32, #tpu.memory_space<vmem>>, vector<1x64xf32>
    tpu.vector_store %arg15[%c2_682, %c64_683], %441 {strides = array<i32>} : memref<4x576xf32, #tpu.memory_space<vmem>>, vector<1x64xf32>,
    %443 = vector.extract_strided_slice %402 {offsets = [20, 0], sizes = [1, 64], strides = [1, 1]} : vector<36x64xf32> to vector<1x64xf32>
    %c2_684 = arith.constant 2 : index
    %c128_685 = arith.constant 128 : index
    %444 = vector.load %arg15[%c2_684, %c128_685] : memref<4x576xf32, #tpu.memory_space<vmem>>, vector<1x64xf32>
    tpu.vector_store %arg15[%c2_684, %c128_685], %443 {strides = array<i32>} : memref<4x576xf32, #tpu.memory_space<vmem>>, vector<1x64xf32>,
    %445 = vector.extract_strided_slice %402 {offsets = [21, 0], sizes = [1, 64], strides = [1, 1]} : vector<36x64xf32> to vector<1x64xf32>
    %c2_686 = arith.constant 2 : index
    %c192_687 = arith.constant 192 : index
    %446 = vector.load %arg15[%c2_686, %c192_687] : memref<4x576xf32, #tpu.memory_space<vmem>>, vector<1x64xf32>
    tpu.vector_store %arg15[%c2_686, %c192_687], %445 {strides = array<i32>} : memref<4x576xf32, #tpu.memory_space<vmem>>, vector<1x64xf32>,
    %447 = vector.extract_strided_slice %402 {offsets = [22, 0], sizes = [1, 64], strides = [1, 1]} : vector<36x64xf32> to vector<1x64xf32>
    %c2_688 = arith.constant 2 : index
    %c256_689 = arith.constant 256 : index
    %448 = vector.load %arg15[%c2_688, %c256_689] : memref<4x576xf32, #tpu.memory_space<vmem>>, vector<1x64xf32>
    tpu.vector_store %arg15[%c2_688, %c256_689], %447 {strides = array<i32>} : memref<4x576xf32, #tpu.memory_space<vmem>>, vector<1x64xf32>,
    %449 = vector.extract_strided_slice %402 {offsets = [23, 0], sizes = [1, 64], strides = [1, 1]} : vector<36x64xf32> to vector<1x64xf32>
    %c2_690 = arith.constant 2 : index
    %c320_691 = arith.constant 320 : index
    %450 = vector.load %arg15[%c2_690, %c320_691] : memref<4x576xf32, #tpu.memory_space<vmem>>, vector<1x64xf32>
    tpu.vector_store %arg15[%c2_690, %c320_691], %449 {strides = array<i32>} : memref<4x576xf32, #tpu.memory_space<vmem>>, vector<1x64xf32>,
    %451 = vector.extract_strided_slice %402 {offsets = [24, 0], sizes = [1, 64], strides = [1, 1]} : vector<36x64xf32> to vector<1x64xf32>
    %c2_692 = arith.constant 2 : index
    %c384_693 = arith.constant 384 : index
    %452 = vector.load %arg15[%c2_692, %c384_693] : memref<4x576xf32, #tpu.memory_space<vmem>>, vector<1x64xf32>
    tpu.vector_store %arg15[%c2_692, %c384_693], %451 {strides = array<i32>} : memref<4x576xf32, #tpu.memory_space<vmem>>, vector<1x64xf32>,
    %453 = vector.extract_strided_slice %402 {offsets = [25, 0], sizes = [1, 64], strides = [1, 1]} : vector<36x64xf32> to vector<1x64xf32>
    %c2_694 = arith.constant 2 : index
    %c448_695 = arith.constant 448 : index
    %454 = vector.load %arg15[%c2_694, %c448_695] : memref<4x576xf32, #tpu.memory_space<vmem>>, vector<1x64xf32>
    tpu.vector_store %arg15[%c2_694, %c448_695], %453 {strides = array<i32>} : memref<4x576xf32, #tpu.memory_space<vmem>>, vector<1x64xf32>,
    %455 = vector.extract_strided_slice %402 {offsets = [26, 0], sizes = [1, 64], strides = [1, 1]} : vector<36x64xf32> to vector<1x64xf32>
    %c2_696 = arith.constant 2 : index
    %c512_697 = arith.constant 512 : index
    %456 = vector.load %arg15[%c2_696, %c512_697] : memref<4x576xf32, #tpu.memory_space<vmem>>, vector<1x64xf32>
    tpu.vector_store %arg15[%c2_696, %c512_697], %455 {strides = array<i32>} : memref<4x576xf32, #tpu.memory_space<vmem>>, vector<1x64xf32>,
    %457 = vector.extract_strided_slice %402 {offsets = [27, 0], sizes = [1, 64], strides = [1, 1]} : vector<36x64xf32> to vector<1x64xf32>
    %c3_698 = arith.constant 3 : index
    %c0_699 = arith.constant 0 : index
    %458 = vector.load %arg15[%c3_698, %c0_699] : memref<4x576xf32, #tpu.memory_space<vmem>>, vector<1x64xf32>
    tpu.vector_store %arg15[%c3_698, %c0_699], %457 {strides = array<i32>} : memref<4x576xf32, #tpu.memory_space<vmem>>, vector<1x64xf32>,
    %459 = vector.extract_strided_slice %402 {offsets = [28, 0], sizes = [1, 64], strides = [1, 1]} : vector<36x64xf32> to vector<1x64xf32>
    %c3_700 = arith.constant 3 : index
    %c64_701 = arith.constant 64 : index
    %460 = vector.load %arg15[%c3_700, %c64_701] : memref<4x576xf32, #tpu.memory_space<vmem>>, vector<1x64xf32>
    tpu.vector_store %arg15[%c3_700, %c64_701], %459 {strides = array<i32>} : memref<4x576xf32, #tpu.memory_space<vmem>>, vector<1x64xf32>,
    %461 = vector.extract_strided_slice %402 {offsets = [29, 0], sizes = [1, 64], strides = [1, 1]} : vector<36x64xf32> to vector<1x64xf32>
    %c3_702 = arith.constant 3 : index
    %c128_703 = arith.constant 128 : index
    %462 = vector.load %arg15[%c3_702, %c128_703] : memref<4x576xf32, #tpu.memory_space<vmem>>, vector<1x64xf32>
    tpu.vector_store %arg15[%c3_702, %c128_703], %461 {strides = array<i32>} : memref<4x576xf32, #tpu.memory_space<vmem>>, vector<1x64xf32>,
    %463 = vector.extract_strided_slice %402 {offsets = [30, 0], sizes = [1, 64], strides = [1, 1]} : vector<36x64xf32> to vector<1x64xf32>
    %c3_704 = arith.constant 3 : index
    %c192_705 = arith.constant 192 : index
    %464 = vector.load %arg15[%c3_704, %c192_705] : memref<4x576xf32, #tpu.memory_space<vmem>>, vector<1x64xf32>
    tpu.vector_store %arg15[%c3_704, %c192_705], %463 {strides = array<i32>} : memref<4x576xf32, #tpu.memory_space<vmem>>, vector<1x64xf32>,
    %465 = vector.extract_strided_slice %402 {offsets = [31, 0], sizes = [1, 64], strides = [1, 1]} : vector<36x64xf32> to vector<1x64xf32>
    %c3_706 = arith.constant 3 : index
    %c256_707 = arith.constant 256 : index
    %466 = vector.load %arg15[%c3_706, %c256_707] : memref<4x576xf32, #tpu.memory_space<vmem>>, vector<1x64xf32>
    tpu.vector_store %arg15[%c3_706, %c256_707], %465 {strides = array<i32>} : memref<4x576xf32, #tpu.memory_space<vmem>>, vector<1x64xf32>,
    %467 = vector.extract_strided_slice %402 {offsets = [32, 0], sizes = [1, 64], strides = [1, 1]} : vector<36x64xf32> to vector<1x64xf32>
    %c3_708 = arith.constant 3 : index
    %c320_709 = arith.constant 320 : index
    %468 = vector.load %arg15[%c3_708, %c320_709] : memref<4x576xf32, #tpu.memory_space<vmem>>, vector<1x64xf32>
    tpu.vector_store %arg15[%c3_708, %c320_709], %467 {strides = array<i32>} : memref<4x576xf32, #tpu.memory_space<vmem>>, vector<1x64xf32>,
    %469 = vector.extract_strided_slice %402 {offsets = [33, 0], sizes = [1, 64], strides = [1, 1]} : vector<36x64xf32> to vector<1x64xf32>
    %c3_710 = arith.constant 3 : index
    %c384_711 = arith.constant 384 : index
    %470 = vector.load %arg15[%c3_710, %c384_711] : memref<4x576xf32, #tpu.memory_space<vmem>>, vector<1x64xf32>
    tpu.vector_store %arg15[%c3_710, %c384_711], %469 {strides = array<i32>} : memref<4x576xf32, #tpu.memory_space<vmem>>, vector<1x64xf32>,
    %471 = vector.extract_strided_slice %402 {offsets = [34, 0], sizes = [1, 64], strides = [1, 1]} : vector<36x64xf32> to vector<1x64xf32>
    %c3_712 = arith.constant 3 : index
    %c448_713 = arith.constant 448 : index
    %472 = vector.load %arg15[%c3_712, %c448_713] : memref<4x576xf32, #tpu.memory_space<vmem>>, vector<1x64xf32>
    tpu.vector_store %arg15[%c3_712, %c448_713], %471 {strides = array<i32>} : memref<4x576xf32, #tpu.memory_space<vmem>>, vector<1x64xf32>,
    %473 = vector.extract_strided_slice %402 {offsets = [35, 0], sizes = [1, 64], strides = [1, 1]} : vector<36x64xf32> to vector<1x64xf32>
    %c3_714 = arith.constant 3 : index
    %c512_715 = arith.constant 512 : index
    %474 = vector.load %arg15[%c3_714, %c512_715] : memref<4x576xf32, #tpu.memory_space<vmem>>, vector<1x64xf32>
    tpu.vector_store %arg15[%c3_714, %c512_715], %473 {strides = array<i32>} : memref<4x576xf32, #tpu.memory_space<vmem>>, vector<1x64xf32>,
    %c0_716 = arith.constant 0 : index
    %c0_717 = arith.constant 0 : index
    %475 = vector.load %arg15[%c0_716, %c0_717] : memref<4x576xf32, #tpu.memory_space<vmem>>, vector<4x576xf32>
    %476 = arith.truncf %475 : vector<4x576xf32> to vector<4x576xbf16>
    %c0_718 = arith.constant 0 : index
    %c0_719 = arith.constant 0 : index
    %477 = vector.load %arg6[%c0_718, %c0_719] : memref<576x64xbf16, #tpu.memory_space<vmem>>, vector<576x64xbf16>
    %cst_720 = arith.constant dense<0.000000e+00> : vector<4x64xf32>
    %478 = tpu.matmul %476, %477, %cst_720 {dimension_numbers = #tpu.dot_dimension_numbers<[1], [0], [0], [1], [0, 0, 1, 1], [], []>} : vector<4x576xbf16>, vector<576x64xbf16>, vector<4x64xf32> -> vector<4x64xf32>
    %c0_721 = arith.constant 0 : index
    %c0_722 = arith.constant 0 : index
    %479 = vector.load %arg7[%c0_721, %c0_722] : memref<1x64xf32, #tpu.memory_space<vmem>>, vector<1x64xf32>
    %480 = vector.broadcast %479 : vector<1x64xf32> to vector<4x64xf32>
    %481 = arith.addf %478, %480 : vector<4x64xf32>
    %cst_723 = arith.constant 0.000000e+00 : f32
    %482 = vector.broadcast %cst_723 : f32 to vector<4x64xf32>
    %483 = arith.maximumf %481, %482 : vector<4x64xf32>
    %484 = arith.truncf %483 : vector<4x64xf32> to vector<4x64xbf16>
    %c0_724 = arith.constant 0 : index
    %c0_725 = arith.constant 0 : index
    %485 = vector.load %arg8[%c0_724, %c0_725] : memref<64x512xbf16, #tpu.memory_space<vmem>>, vector<64x512xbf16>
    %cst_726 = arith.constant dense<0.000000e+00> : vector<4x512xf32>
    %486 = tpu.matmul %484, %485, %cst_726 {dimension_numbers = #tpu.dot_dimension_numbers<[1], [0], [0], [1], [0, 0, 1, 1], [], []>} : vector<4x64xbf16>, vector<64x512xbf16>, vector<4x512xf32> -> vector<4x512xf32>
    %c0_727 = arith.constant 0 : index
    %c0_728 = arith.constant 0 : index
    %487 = vector.load %arg9[%c0_727, %c0_728] : memref<1x512xf32, #tpu.memory_space<vmem>>, vector<1x512xf32>
    %488 = vector.broadcast %487 : vector<1x512xf32> to vector<4x512xf32>
    %489 = arith.addf %486, %488 : vector<4x512xf32>
    %cst_729 = arith.constant 0.000000e+00 : f32
    %490 = vector.broadcast %cst_729 : f32 to vector<4x512xf32>
    %491 = arith.maximumf %489, %490 : vector<4x512xf32>
    %492 = arith.truncf %491 : vector<4x512xf32> to vector<4x512xbf16>
    %c0_730 = arith.constant 0 : index
    %c0_731 = arith.constant 0 : index
    %493 = vector.load %arg10[%c0_730, %c0_731] : memref<512x7xbf16, #tpu.memory_space<vmem>>, vector<512x7xbf16>
    %cst_732 = arith.constant dense<0.000000e+00> : vector<4x7xf32>
    %494 = tpu.matmul %492, %493, %cst_732 {dimension_numbers = #tpu.dot_dimension_numbers<[1], [0], [0], [1], [0, 0, 1, 1], [], []>} : vector<4x512xbf16>, vector<512x7xbf16>, vector<4x7xf32> -> vector<4x7xf32>
    %c0_733 = arith.constant 0 : index
    %c0_734 = arith.constant 0 : index
    %495 = vector.load %arg11[%c0_733, %c0_734] : memref<1x7xf32, #tpu.memory_space<vmem>>, vector<1x7xf32>
    %496 = vector.broadcast %495 : vector<1x7xf32> to vector<4x7xf32>
    %497 = arith.addf %494, %496 : vector<4x7xf32>
    %498 = vector.extract_strided_slice %497 {offsets = [0, 0], sizes = [4, 1], strides = [1, 1]} : vector<4x7xf32> to vector<4x1xf32>
    %499 = vector.extract_strided_slice %497 {offsets = [0, 1], sizes = [4, 6], strides = [1, 1]} : vector<4x7xf32> to vector<4x6xf32>
    %cst_735 = arith.constant dense<0.000000e+00> : vector<4xf32>
    %500 = vector.multi_reduction <add>, %499, %cst_735 [1] : vector<4x6xf32> to vector<4xf32>
    %501 = vector.shape_cast %500 : vector<4xf32> to vector<4x1xf32>
    %cst_736 = arith.constant 6.000000e+00 : f32
    %502 = vector.broadcast %cst_736 : f32 to vector<4x1xf32>
    %503 = arith.divf %501, %502 : vector<4x1xf32>
    %504 = vector.broadcast %503 : vector<4x1xf32> to vector<4x6xf32>
    %505 = arith.subf %499, %504 : vector<4x6xf32>
    %506 = vector.broadcast %498 : vector<4x1xf32> to vector<4x6xf32>
    %507 = arith.addf %506, %505 : vector<4x6xf32>
    %c0_737 = arith.constant 0 : index
    %c0_738 = arith.constant 0 : index
    %c0_739 = arith.constant 0 : index
    %508 = vector.load %arg12[%c0_737, %c0_738, %c0_739] : memref<1x4x6xf32, #tpu.memory_space<vmem>>, vector<1x4x6xf32>
    %509 = vector.shape_cast %508 : vector<1x4x6xf32> to vector<4x6xf32>
    %510 = vector.shape_cast %507 : vector<4x6xf32> to vector<1x4x6xf32>
    tpu.vector_store %arg12[%c0_737, %c0_738, %c0_739], %510 {strides = array<i32>} : memref<1x4x6xf32, #tpu.memory_space<vmem>>, vector<1x4x6xf32>,
    return
  }
  func.func @transform_0(%arg0: i32) -> (i32, i32, i32) {
    %c0_i32 = arith.constant 0 : i32
    %c0_i32_0 = arith.constant 0 : i32
    %c0_i32_1 = arith.constant 0 : i32
    return %arg0, %c0_i32, %c0_i32_0 : i32, i32, i32
  }
  func.func @transform_1(%arg0: i32) -> (i32, i32) {
    %c0_i32 = arith.constant 0 : i32
    %c0_i32_0 = arith.constant 0 : i32
    %c0_i32_1 = arith.constant 0 : i32
    return %c0_i32, %c0_i32_0 : i32, i32
  }
  func.func @transform_2(%arg0: i32) -> (i32, i32) {
    %c0_i32 = arith.constant 0 : i32
    %c0_i32_0 = arith.constant 0 : i32
    %c0_i32_1 = arith.constant 0 : i32
    return %c0_i32, %c0_i32_0 : i32, i32
  }
  func.func @transform_3(%arg0: i32) -> (i32, i32) {
    %c0_i32 = arith.constant 0 : i32
    %c0_i32_0 = arith.constant 0 : i32
    %c0_i32_1 = arith.constant 0 : i32
    return %c0_i32, %c0_i32_0 : i32, i32
  }
  func.func @transform_4(%arg0: i32) -> (i32, i32) {
    %c0_i32 = arith.constant 0 : i32
    %c0_i32_0 = arith.constant 0 : i32
    %c0_i32_1 = arith.constant 0 : i32
    return %c0_i32, %c0_i32_0 : i32, i32
  }
  func.func @transform_5(%arg0: i32) -> (i32, i32) {
    %c0_i32 = arith.constant 0 : i32
    %c0_i32_0 = arith.constant 0 : i32
    %c0_i32_1 = arith.constant 0 : i32
    return %c0_i32, %c0_i32_0 : i32, i32
  }
  func.func @transform_6(%arg0: i32) -> (i32, i32) {
    %c0_i32 = arith.constant 0 : i32
    %c0_i32_0 = arith.constant 0 : i32
    %c0_i32_1 = arith.constant 0 : i32
    return %c0_i32, %c0_i32_0 : i32, i32
  }
  func.func @transform_7(%arg0: i32) -> (i32, i32) {
    %c0_i32 = arith.constant 0 : i32
    %c0_i32_0 = arith.constant 0 : i32
    %c0_i32_1 = arith.constant 0 : i32
    return %c0_i32, %c0_i32_0 : i32, i32
  }
  func.func @transform_8(%arg0: i32) -> (i32, i32) {
    %c0_i32 = arith.constant 0 : i32
    %c0_i32_0 = arith.constant 0 : i32
    %c0_i32_1 = arith.constant 0 : i32
    return %c0_i32, %c0_i32_0 : i32, i32
  }
  func.func @transform_9(%arg0: i32) -> (i32, i32) {
    %c0_i32 = arith.constant 0 : i32
    %c0_i32_0 = arith.constant 0 : i32
    %c0_i32_1 = arith.constant 0 : i32
    return %c0_i32, %c0_i32_0 : i32, i32
  }
  func.func @transform_10(%arg0: i32) -> (i32, i32) {
    %c0_i32 = arith.constant 0 : i32
    %c0_i32_0 = arith.constant 0 : i32
    %c0_i32_1 = arith.constant 0 : i32
    return %c0_i32, %c0_i32_0 : i32, i32
  }
  func.func @transform_11(%arg0: i32) -> (i32, i32, i32) {
    %c0_i32 = arith.constant 0 : i32
    %c0_i32_0 = arith.constant 0 : i32
    %c0_i32_1 = arith.constant 0 : i32
    return %arg0, %c0_i32, %c0_i32_0 : i32, i32, i32
  }
}

</mosaic_0001>

<llo_original>
// kernel: dueling_dqn_forward.1
$region0: #{dueling_dqn_forward.1}
  #allocation0 [shape = 'u32[]', space=smem, size = 0x4, offset = 0x4, fixed_abs, tag = 'smem constant byte address 0x4 - core index']
  #allocation1 [shape = 'u32[144,128]{1,0:T(1,128)}', space=vmem, size = 0x12000, scoped, tag = 'internal scratch']
  #allocation2 [shape = 'f32[256,32]{1,0:T(8,128)}', space=vmem, size = 0x20000, scoped, tag = 'scratch operand']
  #allocation3 [shape = 'f32[36,512]{1,0:T(8,128)}', space=vmem, size = 0x14000, scoped, tag = 'scratch operand']
  #allocation4 [shape = 'f32[4,576]{1,0:T(4,128)}', space=vmem, size = 0x2800, scoped, tag = 'scratch operand']
  %s0 = inlined_call_operand.vmem [shape: bf16[2,256,256], index: 0, kind: input, shape index: {}]
  %s1 = inlined_call_operand.vmem [shape: bf16[256,32], index: 1, kind: input, shape index: {}]
  %s2 = inlined_call_operand.vmem [shape: f32[1,32], index: 2, kind: input, shape index: {}]
  %s3 = inlined_call_operand.vmem [shape: bf16[512,64], index: 3, kind: input, shape index: {}]
  %s4 = inlined_call_operand.vmem [shape: f32[1,64], index: 4, kind: input, shape index: {}]
  %s5 = inlined_call_operand.vmem [shape: bf16[576,64], index: 5, kind: input, shape index: {}]
  %s6 = inlined_call_operand.vmem [shape: f32[1,64], index: 6, kind: input, shape index: {}]
  %s7 = inlined_call_operand.vmem [shape: bf16[64,512], index: 7, kind: input, shape index: {}]
  %s8 = inlined_call_operand.vmem [shape: f32[1,512], index: 8, kind: input, shape index: {}]
  %s9 = inlined_call_operand.vmem [shape: bf16[512,7], index: 9, kind: input, shape index: {}]
  %s10 = inlined_call_operand.vmem [shape: f32[1,7], index: 10, kind: input, shape index: {}]
  %s11 = inlined_call_operand.hbm [shape: f32[2,4,6], index: 11, kind: output, shape index: {}]
  %s12 = sld [smem:[#allocation0]]
  $region77: #{dueling_dqn_forward.1} parent=0
    _
  %s14 = ssub.s32 1, %s12
  %s15 = scalar_select 0, %s14, %s12
  $region1: #{dueling_dqn_forward.1} parent=0
    #allocation5 [shape = 'u8[4096]{0}', space=vmem, size = 0x1000, scoped, tag = 'output window, operand 0']
    #allocation6 [shape = 's32[2]{0}', space=sflag, size = 0x8, scoped, tag = 'scoped memory for dueling_dqn_forward.1']
    %16 = vsyncpa [#allocation6], 0
    %s17 = scalar_lea.sflag [#allocation6], 1
    %18 = vsyncpa %s17, 0
    loop: start=0, step=1, limit=4
    $region2: #{dueling_dqn_forward.1} parent=1 // loop_pre_header
      _
    $region3: #{dueling_dqn_forward.1} parent=1 // loop_header
      %s20 = sphi 0, %s24
      %p21 = scmp.ge.s32.totalorder %s20, 4
      %s30 = sphi 0, %s32
      %s33 = sphi 0, %s30
      %s34 = sphi 0, %s33
      %s50 = sphi 0, %s34
      %s54 = sphi 0, %s54
      %s56 = sphi 0, %s54
      %s57 = sphi 0, %s56
      %s71 = sphi 0, %s57
      %s75 = sphi 0, %s75
      %s77 = sphi 0, %s75
      %s78 = sphi 0, %s77
      %s92 = sphi 0, %s78
      %s96 = sphi 0, %s96
      %s98 = sphi 0, %s96
      %s99 = sphi 0, %s98
      %s113 = sphi 0, %s99
      %s117 = sphi 0, %s117
      %s119 = sphi 0, %s117
      %s120 = sphi 0, %s119
      %s134 = sphi 0, %s120
      %s138 = sphi 0, %s138
      %s140 = sphi 0, %s138
      %s141 = sphi 0, %s140
      %s155 = sphi 0, %s141
      %s159 = sphi 0, %s159
      %s161 = sphi 0, %s159
      %s162 = sphi 0, %s161
      %s176 = sphi 0, %s162
      %s180 = sphi 0, %s180
      %s182 = sphi 0, %s180
      %s183 = sphi 0, %s182
      %s197 = sphi 0, %s183
      %s201 = sphi 0, %s201
      %s203 = sphi 0, %s201
      %s204 = sphi 0, %s203
      %s218 = sphi 0, %s204
      %s222 = sphi 0, %s222
      %s224 = sphi 0, %s222
      %s225 = sphi 0, %s224
      %s239 = sphi 0, %s225
      %s243 = sphi 0, %s243
      %s245 = sphi 0, %s243
      %s246 = sphi 0, %s245
      %s260 = sphi 0, %s246
      %s266 = sphi 0, %s268
      %s269 = sphi 0, %s266
      %s270 = sphi 0, %s269
      %s286 = sphi 0, %s270
    $region4: #{dueling_dqn_forward.1} parent=1 // loop_header_branch
      %23 = sbr.rel (%p21) target = $region8
    $region5: #{dueling_dqn_forward.1} parent=1 // loop_body
      %s25 = ssub.s32 %s20, 1
      %s26 = ssub.s32 %s20, 2
      %s27 = sadd.s32 %s20, 1
      %s28 = ssub.s32 %s20, %s27
      %p29 = scmp.eq.s32.totalorder %s28, 0
      %s31 = sadd.s32 %s30, 1
      %s32 = scalar_select %p29, %s30, %s31
      %p35 = pneg %p29
      %p36 = scmp.eq.s32.totalorder %s20, 1
      %p37 = por %p35, %p36
      %p38 = scmp.ne.s32.totalorder %s30, %s33
      %p39 = scmp.eq.s32.totalorder %s20, 0
      %p40 = por %p38, %p39
      %p41 = scmp.ne.s32.totalorder %s30, %s33
      %p42 = scmp.eq.s32.totalorder %s25, 1
      %p43 = por %p41, %p42
      %p44 = scmp.ne.s32.totalorder %s33, %s34
      %p45 = scmp.eq.s32.totalorder %s25, 0
      %p46 = por %p44, %p45
      %p47 = scmp.ne.s32.totalorder %s33, %s34
      %p48 = scmp.eq.s32.totalorder %s26, 1
      %p49 = por %p47, %p48
      %p51 = scmp.ne.s32.totalorder %s34, %s50
      %p52 = scmp.eq.s32.totalorder %s26, 0
      %p53 = por %p51, %p52
      %s55 = sadd.s32 %s54, 1
      %p58 = scmp.eq.s32.totalorder %s20, 1
      %p59 = scmp.ne.s32.totalorder %s54, %s56
      %p60 = scmp.eq.s32.totalorder %s20, 0
      %p61 = por %p59, %p60
      %p62 = scmp.ne.s32.totalorder %s54, %s56
      %p63 = scmp.eq.s32.totalorder %s25, 1
      %p64 = por %p62, %p63
      %p65 = scmp.ne.s32.totalorder %s56, %s57
      %p66 = scmp.eq.s32.totalorder %s25, 0
      %p67 = por %p65, %p66
      %p68 = scmp.ne.s32.totalorder %s56, %s57
      %p69 = scmp.eq.s32.totalorder %s26, 1
      %p70 = por %p68, %p69
      %p72 = scmp.ne.s32.totalorder %s57, %s71
      %p73 = scmp.eq.s32.totalorder %s26, 0
      %p74 = por %p72, %p73
      %s76 = sadd.s32 %s75, 1
      %p79 = scmp.eq.s32.totalorder %s20, 1
      %p80 = scmp.ne.s32.totalorder %s75, %s77
      %p81 = scmp.eq.s32.totalorder %s20, 0
      %p82 = por %p80, %p81
      %p83 = scmp.ne.s32.totalorder %s75, %s77
      %p84 = scmp.eq.s32.totalorder %s25, 1
      %p85 = por %p83, %p84
      %p86 = scmp.ne.s32.totalorder %s77, %s78
      %p87 = scmp.eq.s32.totalorder %s25, 0
      %p88 = por %p86, %p87
      %p89 = scmp.ne.s32.totalorder %s77, %s78
      %p90 = scmp.eq.s32.totalorder %s26, 1
      %p91 = por %p89, %p90
      %p93 = scmp.ne.s32.totalorder %s78, %s92
      %p94 = scmp.eq.s32.totalorder %s26, 0
      %p95 = por %p93, %p94
      %s97 = sadd.s32 %s96, 1
      %p100 = scmp.eq.s32.totalorder %s20, 1
      %p101 = scmp.ne.s32.totalorder %s96, %s98
      %p102 = scmp.eq.s32.totalorder %s20, 0
      %p103 = por %p101, %p102
      %p104 = scmp.ne.s32.totalorder %s96, %s98
      %p105 = scmp.eq.s32.totalorder %s25, 1
      %p106 = por %p104, %p105
      %p107 = scmp.ne.s32.totalorder %s98, %s99
      %p108 = scmp.eq.s32.totalorder %s25, 0
      %p109 = por %p107, %p108
      %p110 = scmp.ne.s32.totalorder %s98, %s99
      %p111 = scmp.eq.s32.totalorder %s26, 1
      %p112 = por %p110, %p111
      %p114 = scmp.ne.s32.totalorder %s99, %s113
      %p115 = scmp.eq.s32.totalorder %s26, 0
      %p116 = por %p114, %p115
      %s118 = sadd.s32 %s117, 1
      %p121 = scmp.eq.s32.totalorder %s20, 1
      %p122 = scmp.ne.s32.totalorder %s117, %s119
      %p123 = scmp.eq.s32.totalorder %s20, 0
      %p124 = por %p122, %p123
      %p125 = scmp.ne.s32.totalorder %s117, %s119
      %p126 = scmp.eq.s32.totalorder %s25, 1
      %p127 = por %p125, %p126
      %p128 = scmp.ne.s32.totalorder %s119, %s120
      %p129 = scmp.eq.s32.totalorder %s25, 0
      %p130 = por %p128, %p129
      %p131 = scmp.ne.s32.totalorder %s119, %s120
      %p132 = scmp.eq.s32.totalorder %s26, 1
      %p133 = por %p131, %p132
      %p135 = scmp.ne.s32.totalorder %s120, %s134
      %p136 = scmp.eq.s32.totalorder %s26, 0
      %p137 = por %p135, %p136
      %s139 = sadd.s32 %s138, 1
      %p142 = scmp.eq.s32.totalorder %s20, 1
      %p143 = scmp.ne.s32.totalorder %s138, %s140
      %p144 = scmp.eq.s32.totalorder %s20, 0
      %p145 = por %p143, %p144
      %p146 = scmp.ne.s32.totalorder %s138, %s140
      %p147 = scmp.eq.s32.totalorder %s25, 1
      %p148 = por %p146, %p147
      %p149 = scmp.ne.s32.totalorder %s140, %s141
      %p150 = scmp.eq.s32.totalorder %s25, 0
      %p151 = por %p149, %p150
      %p152 = scmp.ne.s32.totalorder %s140, %s141
      %p153 = scmp.eq.s32.totalorder %s26, 1
      %p154 = por %p152, %p153
      %p156 = scmp.ne.s32.totalorder %s141, %s155
      %p157 = scmp.eq.s32.totalorder %s26, 0
      %p158 = por %p156, %p157
      %s160 = sadd.s32 %s159, 1
      %p163 = scmp.eq.s32.totalorder %s20, 1
      %p164 = scmp.ne.s32.totalorder %s159, %s161
      %p165 = scmp.eq.s32.totalorder %s20, 0
      %p166 = por %p164, %p165
      %p167 = scmp.ne.s32.totalorder %s159, %s161
      %p168 = scmp.eq.s32.totalorder %s25, 1
      %p169 = por %p167, %p168
      %p170 = scmp.ne.s32.totalorder %s161, %s162
      %p171 = scmp.eq.s32.totalorder %s25, 0
      %p172 = por %p170, %p171
      %p173 = scmp.ne.s32.totalorder %s161, %s162
      %p174 = scmp.eq.s32.totalorder %s26, 1
      %p175 = por %p173, %p174
      %p177 = scmp.ne.s32.totalorder %s162, %s176
      %p178 = scmp.eq.s32.totalorder %s26, 0
      %p179 = por %p177, %p178
      %s181 = sadd.s32 %s180, 1
      %p184 = scmp.eq.s32.totalorder %s20, 1
      %p185 = scmp.ne.s32.totalorder %s180, %s182
      %p186 = scmp.eq.s32.totalorder %s20, 0
      %p187 = por %p185, %p186
      %p188 = scmp.ne.s32.totalorder %s180, %s182
      %p189 = scmp.eq.s32.totalorder %s25, 1
      %p190 = por %p188, %p189
      %p191 = scmp.ne.s32.totalorder %s182, %s183
      %p192 = scmp.eq.s32.totalorder %s25, 0
      %p193 = por %p191, %p192
      %p194 = scmp.ne.s32.totalorder %s182, %s183
      %p195 = scmp.eq.s32.totalorder %s26, 1
      %p196 = por %p194, %p195
      %p198 = scmp.ne.s32.totalorder %s183, %s197
      %p199 = scmp.eq.s32.totalorder %s26, 0
      %p200 = por %p198, %p199
      %s202 = sadd.s32 %s201, 1
      %p205 = scmp.eq.s32.totalorder %s20, 1
      %p206 = scmp.ne.s32.totalorder %s201, %s203
      %p207 = scmp.eq.s32.totalorder %s20, 0
      %p208 = por %p206, %p207
      %p209 = scmp.ne.s32.totalorder %s201, %s203
      %p210 = scmp.eq.s32.totalorder %s25, 1
      %p211 = por %p209, %p210
      %p212 = scmp.ne.s32.totalorder %s203, %s204
      %p213 = scmp.eq.s32.totalorder %s25, 0
      %p214 = por %p212, %p213
      %p215 = scmp.ne.s32.totalorder %s203, %s204
      %p216 = scmp.eq.s32.totalorder %s26, 1
      %p217 = por %p215, %p216
      %p219 = scmp.ne.s32.totalorder %s204, %s218
      %p220 = scmp.eq.s32.totalorder %s26, 0
      %p221 = por %p219, %p220
      %s223 = sadd.s32 %s222, 1
      %p226 = scmp.eq.s32.totalorder %s20, 1
      %p227 = scmp.ne.s32.totalorder %s222, %s224
      %p228 = scmp.eq.s32.totalorder %s20, 0
      %p229 = por %p227, %p228
      %p230 = scmp.ne.s32.totalorder %s222, %s224
      %p231 = scmp.eq.s32.totalorder %s25, 1
      %p232 = por %p230, %p231
      %p233 = scmp.ne.s32.totalorder %s224, %s225
      %p234 = scmp.eq.s32.totalorder %s25, 0
      %p235 = por %p233, %p234
      %p236 = scmp.ne.s32.totalorder %s224, %s225
      %p237 = scmp.eq.s32.totalorder %s26, 1
      %p238 = por %p236, %p237
      %p240 = scmp.ne.s32.totalorder %s225, %s239
      %p241 = scmp.eq.s32.totalorder %s26, 0
      %p242 = por %p240, %p241
      %s244 = sadd.s32 %s243, 1
      %p247 = scmp.eq.s32.totalorder %s20, 1
      %p248 = scmp.ne.s32.totalorder %s243, %s245
      %p249 = scmp.eq.s32.totalorder %s20, 0
      %p250 = por %p248, %p249
      %p251 = scmp.ne.s32.totalorder %s243, %s245
      %p252 = scmp.eq.s32.totalorder %s25, 1
      %p253 = por %p251, %p252
      %p254 = scmp.ne.s32.totalorder %s245, %s246
      %p255 = scmp.eq.s32.totalorder %s25, 0
      %p256 = por %p254, %p255
      %p257 = scmp.ne.s32.totalorder %s245, %s246
      %p258 = scmp.eq.s32.totalorder %s26, 1
      %p259 = por %p257, %p258
      %p261 = scmp.ne.s32.totalorder %s246, %s260
      %p262 = scmp.eq.s32.totalorder %s26, 0
      %p263 = por %p261, %p262
      %s264 = ssub.s32 %s20, %s27
      %p265 = scmp.eq.s32.totalorder %s264, 0
      %s267 = sadd.s32 %s266, 1
      %s268 = scalar_select %p265, %s266, %s267
      %p271 = pneg %p265
      %p272 = scmp.eq.s32.totalorder %s20, 1
      %p273 = por %p271, %p272
      %p274 = scmp.ne.s32.totalorder %s266, %s269
      %p275 = scmp.eq.s32.totalorder %s20, 0
      %p276 = por %p274, %p275
      %p277 = scmp.ne.s32.totalorder %s266, %s269
      %p278 = scmp.eq.s32.totalorder %s25, 1
      %p279 = por %p277, %p278
      %p280 = scmp.ne.s32.totalorder %s269, %s270
      %p281 = scmp.eq.s32.totalorder %s25, 0
      %p282 = por %p280, %p281
      %p283 = scmp.ne.s32.totalorder %s269, %s270
      %p284 = scmp.eq.s32.totalorder %s26, 1
      %p285 = por %p283, %p284
      %p287 = scmp.ne.s32.totalorder %s270, %s286
      %p288 = scmp.eq.s32.totalorder %s26, 0
      %p289 = por %p287, %p288
      %p290 = scmp.le.s32.totalorder 1, %s20
      %p291 = scmp.lt.s32.totalorder %s20, 3
      %p292 = pnand %p290, %p291
      %p293 = pneg %p292
      // Predicated region
      $region9: #{dueling_dqn_forward.1} parent=5 // pred_check
        _
      $region10: #{dueling_dqn_forward.1} parent=5 // pred_check_branch
        %295 = sbr.rel (%p292) target = $region12
      $region11: #{dueling_dqn_forward.1} parent=5 // pred_region
        %s296 = ssub.s32 %s20, 1
        // Predicated region
        $region13: #{dueling_dqn_forward.1} parent=11 // pred_check
          %p297 = pneg %p67
        $region14: #{dueling_dqn_forward.1} parent=11 // pred_check_branch
          %299 = sbr.rel (%p297) target = $region16
        $region15: #{dueling_dqn_forward.1} parent=11 // pred_region
          _
        $region16: #{dueling_dqn_forward.1} parent=11 // pred_fallthru
          _
        // Predicated region
        $region17: #{dueling_dqn_forward.1} parent=11 // pred_check
          %p300 = pneg %p88
        $region18: #{dueling_dqn_forward.1} parent=11 // pred_check_branch
          %302 = sbr.rel (%p300) target = $region20
        $region19: #{dueling_dqn_forward.1} parent=11 // pred_region
          _
        $region20: #{dueling_dqn_forward.1} parent=11 // pred_fallthru
          _
        // Predicated region
        $region21: #{dueling_dqn_forward.1} parent=11 // pred_check
          %p303 = pneg %p109
        $region22: #{dueling_dqn_forward.1} parent=11 // pred_check_branch
          %305 = sbr.rel (%p303) target = $region24
        $region23: #{dueling_dqn_forward.1} parent=11 // pred_region
          _
        $region24: #{dueling_dqn_forward.1} parent=11 // pred_fallthru
          _
        // Predicated region
        $region25: #{dueling_dqn_forward.1} parent=11 // pred_check
          %p306 = pneg %p130
        $region26: #{dueling_dqn_forward.1} parent=11 // pred_check_branch
          %308 = sbr.rel (%p306) target = $region28
        $region27: #{dueling_dqn_forward.1} parent=11 // pred_region
          _
        $region28: #{dueling_dqn_forward.1} parent=11 // pred_fallthru
          _
        // Predicated region
        $region29: #{dueling_dqn_forward.1} parent=11 // pred_check
          %p309 = pneg %p151
        $region30: #{dueling_dqn_forward.1} parent=11 // pred_check_branch
          %311 = sbr.rel (%p309) target = $region32
        $region31: #{dueling_dqn_forward.1} parent=11 // pred_region
          _
        $region32: #{dueling_dqn_forward.1} parent=11 // pred_fallthru
          _
        // Predicated region
        $region33: #{dueling_dqn_forward.1} parent=11 // pred_check
          %p312 = pneg %p172
        $region34: #{dueling_dqn_forward.1} parent=11 // pred_check_branch
          %314 = sbr.rel (%p312) target = $region36
        $region35: #{dueling_dqn_forward.1} parent=11 // pred_region
          _
        $region36: #{dueling_dqn_forward.1} parent=11 // pred_fallthru
          _
        // Predicated region
        $region37: #{dueling_dqn_forward.1} parent=11 // pred_check
          %p315 = pneg %p193
        $region38: #{dueling_dqn_forward.1} parent=11 // pred_check_branch
          %317 = sbr.rel (%p315) target = $region40
        $region39: #{dueling_dqn_forward.1} parent=11 // pred_region
          _
        $region40: #{dueling_dqn_forward.1} parent=11 // pred_fallthru
          _
        // Predicated region
        $region41: #{dueling_dqn_forward.1} parent=11 // pred_check
          %p318 = pneg %p214
        $region42: #{dueling_dqn_forward.1} parent=11 // pred_check_branch
          %320 = sbr.rel (%p318) target = $region44
        $region43: #{dueling_dqn_forward.1} parent=11 // pred_region
          _
        $region44: #{dueling_dqn_forward.1} parent=11 // pred_fallthru
          _
        // Predicated region
        $region45: #{dueling_dqn_forward.1} parent=11 // pred_check
          %p321 = pneg %p235
        $region46: #{dueling_dqn_forward.1} parent=11 // pred_check_branch
          %323 = sbr.rel (%p321) target = $region48
        $region47: #{dueling_dqn_forward.1} parent=11 // pred_region
          _
        $region48: #{dueling_dqn_forward.1} parent=11 // pred_fallthru
          _
        // Predicated region
        $region49: #{dueling_dqn_forward.1} parent=11 // pred_check
          %p324 = pneg %p256
        $region50: #{dueling_dqn_forward.1} parent=11 // pred_check_branch
          %326 = sbr.rel (%p324) target = $region52
        $region51: #{dueling_dqn_forward.1} parent=11 // pred_region
          _
        $region52: #{dueling_dqn_forward.1} parent=11 // pred_fallthru
          _
      $region12: #{dueling_dqn_forward.1} parent=5 // pred_fallthru
        _
      %p327 = scmp.lt.s32.totalorder %s20, 2
      // Predicated region
      $region53: #{dueling_dqn_forward.1} parent=5 // pred_check
        %p328 = pneg %p327
      $region54: #{dueling_dqn_forward.1} parent=5 // pred_check_branch
        %330 = sbr.rel (%p328) target = $region56
      $region55: #{dueling_dqn_forward.1} parent=5 // pred_region
        // Predicated region
        $region57: #{dueling_dqn_forward.1} parent=55 // pred_check
          %p331 = pneg %p40
        $region58: #{dueling_dqn_forward.1} parent=55 // pred_check_branch
          %333 = sbr.rel (%p331) target = $region60
        $region59: #{dueling_dqn_forward.1} parent=55 // pred_region
          %p334 = scmp.lt.s32.totalorder %s20, 1
          %s335 = scalar_select %p334, %s20, 1
          %s336 = smul.addr %s335, 64
          %s337 = smul.addr %s336, 4
          %s338 = scalar_lea.vmem %s0, %s337
        $region60: #{dueling_dqn_forward.1} parent=55 // pred_fallthru
          _
      $region56: #{dueling_dqn_forward.1} parent=5 // pred_fallthru
        _
      %p339 = scmp.le.s32.totalorder 1, %s20
      %p340 = scmp.lt.s32.totalorder %s20, 3
      %p341 = pnand %p339, %p340
      %p342 = pneg %p341
      // Predicated region
      $region61: #{dueling_dqn_forward.1} parent=5 // pred_check
        _
      $region62: #{dueling_dqn_forward.1} parent=5 // pred_check_branch
        %344 = sbr.rel (%p341) target = $region64
      $region63: #{dueling_dqn_forward.1} parent=5 // pred_region
        %s345 = ssub.s32 %s20, 1
        %p346 = scmp.lt.s32.totalorder %s25, 1
        %s347 = scalar_select %p346, %s25, 1
        %s348 = smul.addr %s347, 64
        %s349 = smul.addr %s348, 4
        %s350 = scalar_lea.vmem %s0, %s349
        %p351 = pneg %p46
        %p352 = pneg %p43
        %p353 = pneg %p67
        %p354 = pneg %p64
        %p355 = pneg %p88
        %p356 = pneg %p85
        %p357 = pneg %p109
        %p358 = pneg %p106
        %p359 = pneg %p130
        %p360 = pneg %p127
        %p361 = pneg %p151
        %p362 = pneg %p148
        %p363 = pneg %p172
        %p364 = pneg %p169
        %p365 = pneg %p193
        %p366 = pneg %p190
        %p367 = pneg %p214
        %p368 = pneg %p211
        %p369 = pneg %p235
        %p370 = pneg %p232
        %p371 = pneg %p256
        %p372 = pneg %p253
        %p373 = pneg %p282
        %p374 = pneg %p279
        %s375 = sand.u32 %s269, 1
        %s376 = scalar_lea.sflag [#allocation6], %s375
        %s377 = sand.u32 %s269, 1
        %s378 = smul.addr %s377, 4
        %s379 = scalar_lea.vmem [#allocation5], %s378
        %p380 = scmp.lt.s32.totalorder %s25, 1
        %s381 = scalar_select %p380, %s25, 1
        %s382 = smul.addr %s381, 64
        %s383 = smul.addr %s382, 4
        %s384 = scalar_lea.vmem %s0, %s383
        %v386 = vld [vmem:[%s384] sm:$0xff]
        %v387 = vld [vmem:[%s384 + $0x8] sm:$0xff]
        %v388 = vld [vmem:[%s384 + $0x10] sm:$0xff]
        %v389 = vld [vmem:[%s384 + $0x18] sm:$0xff]
        %v390 = vld [vmem:[%s384 + $0x20] sm:$0xff]
        %v391 = vld [vmem:[%s384 + $0x28] sm:$0xff]
        %v392 = vld [vmem:[%s384 + $0x30] sm:$0xff]
        %v393 = vld [vmem:[%s384 + $0x38] sm:$0xff]
        %v394 = vld [vmem:[%s384 + $0x40] sm:$0xff]
        %v395 = vld [vmem:[%s384 + $0x48] sm:$0xff]
        %v396 = vld [vmem:[%s384 + $0x50] sm:$0xff]
        %v397 = vld [vmem:[%s384 + $0x58] sm:$0xff]
        %v398 = vld [vmem:[%s384 + $0x60] sm:$0xff]
        %v399 = vld [vmem:[%s384 + $0x68] sm:$0xff]
        %v400 = vld [vmem:[%s384 + $0x70] sm:$0xff]
        %v401 = vld [vmem:[%s384 + $0x78] sm:$0xff]
        %v402 = vld [vmem:[%s384 + $0x80] sm:$0xff]
        %v403 = vld [vmem:[%s384 + $0x88] sm:$0xff]
        %v404 = vld [vmem:[%s384 + $0x90] sm:$0xff]
        %v405 = vld [vmem:[%s384 + $0x98] sm:$0xff]
        %v406 = vld [vmem:[%s384 + $0xa0] sm:$0xff]
        %v407 = vld [vmem:[%s384 + $0xa8] sm:$0xff]
        %v408 = vld [vmem:[%s384 + $0xb0] sm:$0xff]
        %v409 = vld [vmem:[%s384 + $0xb8] sm:$0xff]
        %v410 = vld [vmem:[%s384 + $0xc0] sm:$0xff]
        %v411 = vld [vmem:[%s384 + $0xc8] sm:$0xff]
        %v412 = vld [vmem:[%s384 + $0xd0] sm:$0xff]
        %v413 = vld [vmem:[%s384 + $0xd8] sm:$0xff]
        %v414 = vld [vmem:[%s384 + $0xe0] sm:$0xff]
        %v415 = vld [vmem:[%s384 + $0xe8] sm:$0xff]
        %v416 = vld [vmem:[%s384 + $0xf0] sm:$0xff]
        %v417 = vld [vmem:[%s384 + $0xf8] sm:$0xff]
        %v418 = vld [vmem:[%s1] sm:$0xf]
        %v419 = vld [vmem:[%s1 + $0x4] sm:$0xf]
        %v420 = vld [vmem:[%s1 + $0x8] sm:$0xf]
        %v421 = vld [vmem:[%s1 + $0xc] sm:$0xf]
        %v422 = vld [vmem:[%s1 + $0x10] sm:$0xf]
        %v423 = vld [vmem:[%s1 + $0x14] sm:$0xf]
        %v424 = vld [vmem:[%s1 + $0x18] sm:$0xf]
        %v425 = vld [vmem:[%s1 + $0x1c] sm:$0xf]
        %v426 = vld [vmem:[%s1 + $0x20] sm:$0xf]
        %v427 = vld [vmem:[%s1 + $0x24] sm:$0xf]
        %v428 = vld [vmem:[%s1 + $0x28] sm:$0xf]
        %v429 = vld [vmem:[%s1 + $0x2c] sm:$0xf]
        %v430 = vld [vmem:[%s1 + $0x30] sm:$0xf]
        %v431 = vld [vmem:[%s1 + $0x34] sm:$0xf]
        %v432 = vld [vmem:[%s1 + $0x38] sm:$0xf]
        %v433 = vld [vmem:[%s1 + $0x3c] sm:$0xf]
        %v434 = vld [vmem:[%s1 + $0x40] sm:$0xf]
        %v435 = vld [vmem:[%s1 + $0x44] sm:$0xf]
        %v436 = vld [vmem:[%s1 + $0x48] sm:$0xf]
        %v437 = vld [vmem:[%s1 + $0x4c] sm:$0xf]
        %v438 = vld [vmem:[%s1 + $0x50] sm:$0xf]
        %v439 = vld [vmem:[%s1 + $0x54] sm:$0xf]
        %v440 = vld [vmem:[%s1 + $0x58] sm:$0xf]
        %v441 = vld [vmem:[%s1 + $0x5c] sm:$0xf]
        %v442 = vld [vmem:[%s1 + $0x60] sm:$0xf]
        %v443 = vld [vmem:[%s1 + $0x64] sm:$0xf]
        %v444 = vld [vmem:[%s1 + $0x68] sm:$0xf]
        %v445 = vld [vmem:[%s1 + $0x6c] sm:$0xf]
        %v446 = vld [vmem:[%s1 + $0x70] sm:$0xf]
        %v447 = vld [vmem:[%s1 + $0x74] sm:$0xf]
        %v448 = vld [vmem:[%s1 + $0x78] sm:$0xf]
        %v449 = vld [vmem:[%s1 + $0x7c] sm:$0xf]
        %v450 = vld [vmem:[%s2] sm:$0x1]
        %v452 = vlaneseq
        %v453 = vshrl.u32 %v452, 7
        %v454 = vsub.s32 0, %v453
        %v455 = vrot.slane %v450, %v454
        %v489 = vunpack.c.l.b16 %v386
        %v490 = vunpack.c.h.b16 %v386
        %v491 = vunpack.c.l.b16 %v387
        %v492 = vunpack.c.h.b16 %v387
        %v493 = vunpack.c.l.b16 %v388
        %v494 = vunpack.c.h.b16 %v388
        %v495 = vunpack.c.l.b16 %v389
        %v496 = vunpack.c.h.b16 %v389
        %v497 = vunpack.c.l.b16 %v390
        %v498 = vunpack.c.h.b16 %v390
        %v499 = vunpack.c.l.b16 %v391
        %v500 = vunpack.c.h.b16 %v391
        %v501 = vunpack.c.l.b16 %v392
        %v502 = vunpack.c.h.b16 %v392
        %v503 = vunpack.c.l.b16 %v393
        %v504 = vunpack.c.h.b16 %v393
        %v505 = vunpack.c.l.b16 %v394
        %v506 = vunpack.c.h.b16 %v394
        %v507 = vunpack.c.l.b16 %v395
        %v508 = vunpack.c.h.b16 %v395
        %v509 = vunpack.c.l.b16 %v396
        %v510 = vunpack.c.h.b16 %v396
        %v511 = vunpack.c.l.b16 %v397
        %v512 = vunpack.c.h.b16 %v397
        %v513 = vunpack.c.l.b16 %v398
        %v514 = vunpack.c.h.b16 %v398
        %v515 = vunpack.c.l.b16 %v399
        %v516 = vunpack.c.h.b16 %v399
        %v517 = vunpack.c.l.b16 %v400
        %v518 = vunpack.c.h.b16 %v400
        %v519 = vunpack.c.l.b16 %v401
        %v520 = vunpack.c.h.b16 %v401
        %v521 = vunpack.c.l.b16 %v402
        %v522 = vunpack.c.h.b16 %v402
        %v523 = vunpack.c.l.b16 %v403
        %v524 = vunpack.c.h.b16 %v403
        %v525 = vunpack.c.l.b16 %v404
        %v526 = vunpack.c.h.b16 %v404
        %v527 = vunpack.c.l.b16 %v405
        %v528 = vunpack.c.h.b16 %v405
        %v529 = vunpack.c.l.b16 %v406
        %v530 = vunpack.c.h.b16 %v406
        %v531 = vunpack.c.l.b16 %v407
        %v532 = vunpack.c.h.b16 %v407
        %v533 = vunpack.c.l.b16 %v408
        %v534 = vunpack.c.h.b16 %v408
        %v535 = vunpack.c.l.b16 %v409
        %v536 = vunpack.c.h.b16 %v409
        %v537 = vunpack.c.l.b16 %v410
        %v538 = vunpack.c.h.b16 %v410
        %v539 = vunpack.c.l.b16 %v411
        %v540 = vunpack.c.h.b16 %v411
        %v541 = vunpack.c.l.b16 %v412
        %v542 = vunpack.c.h.b16 %v412
        %v543 = vunpack.c.l.b16 %v413
        %v544 = vunpack.c.h.b16 %v413
        %v545 = vunpack.c.l.b16 %v414
        %v546 = vunpack.c.h.b16 %v414
        %v547 = vunpack.c.l.b16 %v415
        %v548 = vunpack.c.h.b16 %v415
        %v549 = vunpack.c.l.b16 %v416
        %v550 = vunpack.c.h.b16 %v416
        %v551 = vunpack.c.l.b16 %v417
        %v552 = vunpack.c.h.b16 %v417
        %v553 = vpack.c.b16 %v491, %v489
        %v554 = vpack.c.b16 %v492, %v490
        %v555 = vpack.c.b16 %v495, %v493
        %v556 = vpack.c.b16 %v496, %v494
        %v557 = vpack.c.b16 %v499, %v497
        %v558 = vpack.c.b16 %v500, %v498
        %v559 = vpack.c.b16 %v503, %v501
        %v560 = vpack.c.b16 %v504, %v502
        %v561 = vpack.c.b16 %v507, %v505
        %v562 = vpack.c.b16 %v508, %v506
        %v563 = vpack.c.b16 %v511, %v509
        %v564 = vpack.c.b16 %v512, %v510
        %v565 = vpack.c.b16 %v515, %v513
        %v566 = vpack.c.b16 %v516, %v514
        %v567 = vpack.c.b16 %v519, %v517
        %v568 = vpack.c.b16 %v520, %v518
        %v569 = vpack.c.b16 %v523, %v521
        %v570 = vpack.c.b16 %v524, %v522
        %v571 = vpack.c.b16 %v527, %v525
        %v572 = vpack.c.b16 %v528, %v526
        %v573 = vpack.c.b16 %v531, %v529
        %v574 = vpack.c.b16 %v532, %v530
        %v575 = vpack.c.b16 %v535, %v533
        %v576 = vpack.c.b16 %v536, %v534
        %v577 = vpack.c.b16 %v539, %v537
        %v578 = vpack.c.b16 %v540, %v538
        %v579 = vpack.c.b16 %v543, %v541
        %v580 = vpack.c.b16 %v544, %v542
        %v581 = vpack.c.b16 %v547, %v545
        %v582 = vpack.c.b16 %v548, %v546
        %v583 = vpack.c.b16 %v551, %v549
        %v584 = vpack.c.b16 %v552, %v550
        %v649 = vunpack.c.l.b16 %v418
        %v650 = vunpack.c.l.b16 %v419
        %v651 = vunpack.c.l.b16 %v420
        %v652 = vunpack.c.l.b16 %v421
        %v653 = vunpack.c.l.b16 %v422
        %v654 = vunpack.c.l.b16 %v423
        %v655 = vunpack.c.l.b16 %v424
        %v656 = vunpack.c.l.b16 %v425
        %v657 = vunpack.c.l.b16 %v426
        %v658 = vunpack.c.l.b16 %v427
        %v659 = vunpack.c.l.b16 %v428
        %v660 = vunpack.c.l.b16 %v429
        %v661 = vunpack.c.l.b16 %v430
        %v662 = vunpack.c.l.b16 %v431
        %v663 = vunpack.c.l.b16 %v432
        %v664 = vunpack.c.l.b16 %v433
        %v665 = vunpack.c.l.b16 %v434
        %v666 = vunpack.c.l.b16 %v435
        %v667 = vunpack.c.l.b16 %v436
        %v668 = vunpack.c.l.b16 %v437
        %v669 = vunpack.c.l.b16 %v438
        %v670 = vunpack.c.l.b16 %v439
        %v671 = vunpack.c.l.b16 %v440
        %v672 = vunpack.c.l.b16 %v441
        %v673 = vunpack.c.l.b16 %v442
        %v674 = vunpack.c.l.b16 %v443
        %v675 = vunpack.c.l.b16 %v444
        %v676 = vunpack.c.l.b16 %v445
        %v677 = vunpack.c.l.b16 %v446
        %v678 = vunpack.c.l.b16 %v447
        %v679 = vunpack.c.l.b16 %v448
        %v680 = vunpack.c.l.b16 %v449
        %v681 = vpack.c.b16 %v650, %v649
        %v682 = vpack.c.b16 %v652, %v651
        %v683 = vpack.c.b16 %v654, %v653
        %v684 = vpack.c.b16 %v656, %v655
        %v685 = vpack.c.b16 %v658, %v657
        %v686 = vpack.c.b16 %v660, %v659
        %v687 = vpack.c.b16 %v662, %v661
        %v688 = vpack.c.b16 %v664, %v663
        %v689 = vpack.c.b16 %v666, %v665
        %v690 = vpack.c.b16 %v668, %v667
        %v691 = vpack.c.b16 %v670, %v669
        %v692 = vpack.c.b16 %v672, %v671
        %v693 = vpack.c.b16 %v674, %v673
        %v694 = vpack.c.b16 %v676, %v675
        %v695 = vpack.c.b16 %v678, %v677
        %v696 = vpack.c.b16 %v680, %v679
        %713 = vmatprep.subr.bf16.mxu0 0
        %714 = vmatpush1.bf16.msra.mxu0 %v681
        %715 = vmatprep.subr.bf16.mxu0 0
        %716 = vmatpush1.bf16.msra.mxu0 %v682
        %717 = vmatprep.subr.bf16.mxu0 0
        %718 = vmatpush1.bf16.msra.mxu0 %v683
        %719 = vmatprep.subr.bf16.mxu0 0
        %720 = vmatpush1.bf16.msra.mxu0 %v684
        %721 = vmatprep.subr.bf16.mxu0 0
        %722 = vmatpush1.bf16.msra.mxu0 %v685
        %723 = vmatprep.subr.bf16.mxu0 0
        %724 = vmatpush1.bf16.msra.mxu0 %v686
        %725 = vmatprep.subr.bf16.mxu0 0
        %726 = vmatpush1.bf16.msra.mxu0 %v687
        %727 = vmatprep.subr.bf16.mxu0 0
        %728 = vmatpush1.bf16.msra.mxu0 %v688
        %729 = vmatprep.subr.bf16.mxu0 0
        %730 = vmatpush1.bf16.msra.mxu0 %v689
        %731 = vmatprep.subr.bf16.mxu0 0
        %732 = vmatpush1.bf16.msra.mxu0 %v690
        %733 = vmatprep.subr.bf16.mxu0 0
        %734 = vmatpush1.bf16.msra.mxu0 %v691
        %735 = vmatprep.subr.bf16.mxu0 0
        %736 = vmatpush1.bf16.msra.mxu0 %v692
        %737 = vmatprep.subr.bf16.mxu0 0
        %738 = vmatpush1.bf16.msra.mxu0 %v693
        %739 = vmatprep.subr.bf16.mxu0 0
        %740 = vmatpush1.bf16.msra.mxu0 %v694
        %741 = vmatprep.subr.bf16.mxu0 0
        %742 = vmatpush1.bf16.msra.mxu0 %v695
        %743 = vmatprep.subr.bf16.mxu0 0
        %744 = vmatpush1.bf16.msra.mxu0 %v696
        %745 = vmatprep.mubr.bf16.mxu0 %v554
        %746 = vmatmul.mubr.bf16.gmra.mrb[0].mxu0 %v553
        %v747 = vpop.f32.mrb[0].mxu0
        %v748 = vadd.f32 %v455, %v747
        %v749 = vpop.f32.mrb[0].mxu0
        %v750 = vpop.f32.mrb[0].mxu0
        %v751 = vadd.f32 %v455, %v750
        %v752 = vpop.f32.mrb[0].mxu0
        %753 = vmatprep.mubr.bf16.mxu0 %v556
        %754 = vmatmul.mubr.bf16.gmra.mrb[0].mxu0 %v555
        %v755 = vpop.f32.mrb[0].mxu0
        %v756 = vadd.f32 %v455, %v755
        %v757 = vpop.f32.mrb[0].mxu0
        %v758 = vpop.f32.mrb[0].mxu0
        %v759 = vadd.f32 %v455, %v758
        %v760 = vpop.f32.mrb[0].mxu0
        %761 = vmatprep.mubr.bf16.mxu0 %v558
        %762 = vmatmul.mubr.bf16.gmra.mrb[0].mxu0 %v557
        %v763 = vpop.f32.mrb[0].mxu0
        %v764 = vadd.f32 %v455, %v763
        %v765 = vpop.f32.mrb[0].mxu0
        %v766 = vpop.f32.mrb[0].mxu0
        %v767 = vadd.f32 %v455, %v766
        %v768 = vpop.f32.mrb[0].mxu0
        %769 = vmatprep.mubr.bf16.mxu0 %v560
        %770 = vmatmul.mubr.bf16.gmra.mrb[0].mxu0 %v559
        %v771 = vpop.f32.mrb[0].mxu0
        %v772 = vadd.f32 %v455, %v771
        %v773 = vpop.f32.mrb[0].mxu0
        %v774 = vpop.f32.mrb[0].mxu0
        %v775 = vadd.f32 %v455, %v774
        %v776 = vpop.f32.mrb[0].mxu0
        %777 = vmatprep.mubr.bf16.mxu0 %v562
        %778 = vmatmul.mubr.bf16.gmra.mrb[0].mxu0 %v561
        %v779 = vpop.f32.mrb[0].mxu0
        %v780 = vadd.f32 %v455, %v779
        %v781 = vpop.f32.mrb[0].mxu0
        %v782 = vpop.f32.mrb[0].mxu0
        %v783 = vadd.f32 %v455, %v782
        %v784 = vpop.f32.mrb[0].mxu0
        %785 = vmatprep.mubr.bf16.mxu0 %v564
        %786 = vmatmul.mubr.bf16.gmra.mrb[0].mxu0 %v563
        %v787 = vpop.f32.mrb[0].mxu0
        %v788 = vadd.f32 %v455, %v787
        %v789 = vpop.f32.mrb[0].mxu0
        %v790 = vpop.f32.mrb[0].mxu0
        %v791 = vadd.f32 %v455, %v790
        %v792 = vpop.f32.mrb[0].mxu0
        %793 = vmatprep.mubr.bf16.mxu0 %v566
        %794 = vmatmul.mubr.bf16.gmra.mrb[0].mxu0 %v565
        %v795 = vpop.f32.mrb[0].mxu0
        %v796 = vadd.f32 %v455, %v795
        %v797 = vpop.f32.mrb[0].mxu0
        %v798 = vpop.f32.mrb[0].mxu0
        %v799 = vadd.f32 %v455, %v798
        %v800 = vpop.f32.mrb[0].mxu0
        %801 = vmatprep.mubr.bf16.mxu0 %v568
        %802 = vmatmul.mubr.bf16.gmra.mrb[0].mxu0 %v567
        %v803 = vpop.f32.mrb[0].mxu0
        %v804 = vadd.f32 %v455, %v803
        %v805 = vpop.f32.mrb[0].mxu0
        %v806 = vpop.f32.mrb[0].mxu0
        %v807 = vadd.f32 %v455, %v806
        %v808 = vpop.f32.mrb[0].mxu0
        %809 = vmatprep.mubr.bf16.mxu0 %v570
        %810 = vmatmul.mubr.bf16.gmra.mrb[0].mxu0 %v569
        %v811 = vpop.f32.mrb[0].mxu0
        %v812 = vadd.f32 %v455, %v811
        %v813 = vpop.f32.mrb[0].mxu0
        %v814 = vpop.f32.mrb[0].mxu0
        %v815 = vadd.f32 %v455, %v814
        %v816 = vpop.f32.mrb[0].mxu0
        %817 = vmatprep.mubr.bf16.mxu0 %v572
        %818 = vmatmul.mubr.bf16.gmra.mrb[0].mxu0 %v571
        %v819 = vpop.f32.mrb[0].mxu0
        %v820 = vadd.f32 %v455, %v819
        %v821 = vpop.f32.mrb[0].mxu0
        %v822 = vpop.f32.mrb[0].mxu0
        %v823 = vadd.f32 %v455, %v822
        %v824 = vpop.f32.mrb[0].mxu0
        %825 = vmatprep.mubr.bf16.mxu0 %v574
        %826 = vmatmul.mubr.bf16.gmra.mrb[0].mxu0 %v573
        %v827 = vpop.f32.mrb[0].mxu0
        %v828 = vadd.f32 %v455, %v827
        %v829 = vpop.f32.mrb[0].mxu0
        %v830 = vpop.f32.mrb[0].mxu0
        %v831 = vadd.f32 %v455, %v830
        %v832 = vpop.f32.mrb[0].mxu0
        %833 = vmatprep.mubr.bf16.mxu0 %v576
        %834 = vmatmul.mubr.bf16.gmra.mrb[0].mxu0 %v575
        %v835 = vpop.f32.mrb[0].mxu0
        %v836 = vadd.f32 %v455, %v835
        %v837 = vpop.f32.mrb[0].mxu0
        %v838 = vpop.f32.mrb[0].mxu0
        %v839 = vadd.f32 %v455, %v838
        %v840 = vpop.f32.mrb[0].mxu0
        %841 = vmatprep.mubr.bf16.mxu0 %v578
        %842 = vmatmul.mubr.bf16.gmra.mrb[0].mxu0 %v577
        %v843 = vpop.f32.mrb[0].mxu0
        %v844 = vadd.f32 %v455, %v843
        %v845 = vpop.f32.mrb[0].mxu0
        %v846 = vpop.f32.mrb[0].mxu0
        %v847 = vadd.f32 %v455, %v846
        %v848 = vpop.f32.mrb[0].mxu0
        %849 = vmatprep.mubr.bf16.mxu0 %v580
        %850 = vmatmul.mubr.bf16.gmra.mrb[0].mxu0 %v579
        %v851 = vpop.f32.mrb[0].mxu0
        %v852 = vadd.f32 %v455, %v851
        %v853 = vpop.f32.mrb[0].mxu0
        %v854 = vpop.f32.mrb[0].mxu0
        %v855 = vadd.f32 %v455, %v854
        %v856 = vpop.f32.mrb[0].mxu0
        %857 = vmatprep.mubr.bf16.mxu0 %v582
        %858 = vmatmul.mubr.bf16.gmra.mrb[0].mxu0 %v581
        %v859 = vpop.f32.mrb[0].mxu0
        %v860 = vadd.f32 %v455, %v859
        %v861 = vpop.f32.mrb[0].mxu0
        %v862 = vpop.f32.mrb[0].mxu0
        %v863 = vadd.f32 %v455, %v862
        %v864 = vpop.f32.mrb[0].mxu0
        %865 = vmatprep.mubr.bf16.mxu0 %v584
        %866 = vmatmul.mubr.bf16.gmra.mrb[0].mxu0 %v583
        %v867 = vpop.f32.mrb[0].mxu0
        %v868 = vadd.f32 %v455, %v867
        %v869 = vpop.f32.mrb[0].mxu0
        %v870 = vpop.f32.mrb[0].mxu0
        %v871 = vadd.f32 %v455, %v870
        %v872 = vpop.f32.mrb[0].mxu0
        %873 = vdwg.mxu0
        %v874 = vmax.f32 %v748, 0.0
        %v875 = vmax.f32 %v751, 0.0
        %v876 = vmax.f32 %v756, 0.0
        %v877 = vmax.f32 %v759, 0.0
        %v878 = vmax.f32 %v764, 0.0
        %v879 = vmax.f32 %v767, 0.0
        %v880 = vmax.f32 %v772, 0.0
        %v881 = vmax.f32 %v775, 0.0
        %v882 = vmax.f32 %v780, 0.0
        %v883 = vmax.f32 %v783, 0.0
        %v884 = vmax.f32 %v788, 0.0
        %v885 = vmax.f32 %v791, 0.0
        %v886 = vmax.f32 %v796, 0.0
        %v887 = vmax.f32 %v799, 0.0
        %v888 = vmax.f32 %v804, 0.0
        %v889 = vmax.f32 %v807, 0.0
        %v890 = vmax.f32 %v812, 0.0
        %v891 = vmax.f32 %v815, 0.0
        %v892 = vmax.f32 %v820, 0.0
        %v893 = vmax.f32 %v823, 0.0
        %v894 = vmax.f32 %v828, 0.0
        %v895 = vmax.f32 %v831, 0.0
        %v896 = vmax.f32 %v836, 0.0
        %v897 = vmax.f32 %v839, 0.0
        %v898 = vmax.f32 %v844, 0.0
        %v899 = vmax.f32 %v847, 0.0
        %v900 = vmax.f32 %v852, 0.0
        %v901 = vmax.f32 %v855, 0.0
        %v902 = vmax.f32 %v860, 0.0
        %v903 = vmax.f32 %v863, 0.0
        %v904 = vmax.f32 %v868, 0.0
        %v905 = vmax.f32 %v871, 0.0
        %vm906 = vcmask 261120
        %907 = vst.msk [vmem:[#allocation2] sm:$0xff] %vm906, %v874
        %908 = vst.msk [vmem:[#allocation2 + $0x8] sm:$0xff] %vm906, %v875
        %909 = vst.msk [vmem:[#allocation2 + $0x10] sm:$0xff] %vm906, %v876
        %910 = vst.msk [vmem:[#allocation2 + $0x18] sm:$0xff] %vm906, %v877
        %911 = vst.msk [vmem:[#allocation2 + $0x20] sm:$0xff] %vm906, %v878
        %912 = vst.msk [vmem:[#allocation2 + $0x28] sm:$0xff] %vm906, %v879
        %913 = vst.msk [vmem:[#allocation2 + $0x30] sm:$0xff] %vm906, %v880
        %914 = vst.msk [vmem:[#allocation2 + $0x38] sm:$0xff] %vm906, %v881
        %915 = vst.msk [vmem:[#allocation2 + $0x40] sm:$0xff] %vm906, %v882
        %916 = vst.msk [vmem:[#allocation2 + $0x48] sm:$0xff] %vm906, %v883
        %917 = vst.msk [vmem:[#allocation2 + $0x50] sm:$0xff] %vm906, %v884
        %918 = vst.msk [vmem:[#allocation2 + $0x58] sm:$0xff] %vm906, %v885
        %919 = vst.msk [vmem:[#allocation2 + $0x60] sm:$0xff] %vm906, %v886
        %920 = vst.msk [vmem:[#allocation2 + $0x68] sm:$0xff] %vm906, %v887
        %921 = vst.msk [vmem:[#allocation2 + $0x70] sm:$0xff] %vm906, %v888
        %922 = vst.msk [vmem:[#allocation2 + $0x78] sm:$0xff] %vm906, %v889
        %923 = vst.msk [vmem:[#allocation2 + $0x80] sm:$0xff] %vm906, %v890
        %924 = vst.msk [vmem:[#allocation2 + $0x88] sm:$0xff] %vm906, %v891
        %925 = vst.msk [vmem:[#allocation2 + $0x90] sm:$0xff] %vm906, %v892
        %926 = vst.msk [vmem:[#allocation2 + $0x98] sm:$0xff] %vm906, %v893
        %927 = vst.msk [vmem:[#allocation2 + $0xa0] sm:$0xff] %vm906, %v894
        %928 = vst.msk [vmem:[#allocation2 + $0xa8] sm:$0xff] %vm906, %v895
        %929 = vst.msk [vmem:[#allocation2 + $0xb0] sm:$0xff] %vm906, %v896
        %930 = vst.msk [vmem:[#allocation2 + $0xb8] sm:$0xff] %vm906, %v897
        %931 = vst.msk [vmem:[#allocation2 + $0xc0] sm:$0xff] %vm906, %v898
        %932 = vst.msk [vmem:[#allocation2 + $0xc8] sm:$0xff] %vm906, %v899
        %933 = vst.msk [vmem:[#allocation2 + $0xd0] sm:$0xff] %vm906, %v900
        %934 = vst.msk [vmem:[#allocation2 + $0xd8] sm:$0xff] %vm906, %v901
        %935 = vst.msk [vmem:[#allocation2 + $0xe0] sm:$0xff] %vm906, %v902
        %936 = vst.msk [vmem:[#allocation2 + $0xe8] sm:$0xff] %vm906, %v903
        %937 = vst.msk [vmem:[#allocation2 + $0xf0] sm:$0xff] %vm906, %v904
        %938 = vst.msk [vmem:[#allocation2 + $0xf8] sm:$0xff] %vm906, %v905
        %v939 = vld [vmem:[#allocation2] ss:$2 sm:$0x7]
        %vm940 = vcmask 256000
        %941 = vst.msk [vmem:[#allocation3] sm:$0x7] %vm940, %v939
        %s942 = scalar_lea.vmem [#allocation2], 1
        %v943 = vld [vmem:[%s942] ss:$2 sm:$0x7]
        %945 = vrot.lane.b32.xlu0 %v943, 32
        %v946 = vpop.permute.xlu0 %945
        %vm948 = vcmask 518400
        %949 = vst.msk [vmem:[#allocation3] sm:$0x7] %vm948, %v946
        %s950 = scalar_lea.vmem [#allocation2], 2
        %v951 = vld [vmem:[%s950] ss:$2 sm:$0x7]
        %953 = vrot.lane.b32.xlu0 %v951, 64
        %v954 = vpop.permute.xlu0 %953
        %vm956 = vcmask 780800
        %957 = vst.msk [vmem:[#allocation3] sm:$0x7] %vm956, %v954
        %s958 = scalar_lea.vmem [#allocation2], 3
        %v959 = vld [vmem:[%s958] ss:$2 sm:$0x7]
        %961 = vrot.lane.b32.xlu0 %v959, 96
        %v962 = vpop.permute.xlu0 %961
        %vm964 = vcmask 1043200
        %965 = vst.msk [vmem:[#allocation3] sm:$0x7] %vm964, %v962
        %s966 = scalar_lea.vmem [#allocation2], 8
        %v967 = vld [vmem:[%s966] ss:$2 sm:$0x7]
        %968 = vst.msk [vmem:[#allocation3 + $0x8] sm:$0x7] %vm940, %v967
        %s969 = scalar_lea.vmem [#allocation2], 9
        %v970 = vld [vmem:[%s969] ss:$2 sm:$0x7]
        %972 = vrot.lane.b32.xlu0 %v970, 32
        %v973 = vpop.permute.xlu0 %972
        %975 = vst.msk [vmem:[#allocation3 + $0x8] sm:$0x7] %vm948, %v973
        %s976 = scalar_lea.vmem [#allocation2], 10
        %v977 = vld [vmem:[%s976] ss:$2 sm:$0x7]
        %979 = vrot.lane.b32.xlu0 %v977, 64
        %v980 = vpop.permute.xlu0 %979
        %982 = vst.msk [vmem:[#allocation3 + $0x8] sm:$0x7] %vm956, %v980
        %s983 = scalar_lea.vmem [#allocation2], 11
        %v984 = vld [vmem:[%s983] ss:$2 sm:$0x7]
        %986 = vrot.lane.b32.xlu0 %v984, 96
        %v987 = vpop.permute.xlu0 %986
        %989 = vst.msk [vmem:[#allocation3 + $0x8] sm:$0x7] %vm964, %v987
        %s990 = scalar_lea.vmem [#allocation2], 16
        %v991 = vld [vmem:[%s990] ss:$2 sm:$0x7]
        %992 = vst.msk [vmem:[#allocation3 + $0x10] sm:$0x7] %vm940, %v991
        %s993 = scalar_lea.vmem [#allocation2], 17
        %v994 = vld [vmem:[%s993] ss:$2 sm:$0x7]
        %996 = vrot.lane.b32.xlu0 %v994, 32
        %v997 = vpop.permute.xlu0 %996
        %999 = vst.msk [vmem:[#allocation3 + $0x10] sm:$0x7] %vm948, %v997
        %s1000 = scalar_lea.vmem [#allocation2], 18
        %v1001 = vld [vmem:[%s1000] ss:$2 sm:$0x7]
        %1003 = vrot.lane.b32.xlu0 %v1001, 64
        %v1004 = vpop.permute.xlu0 %1003
        %1006 = vst.msk [vmem:[#allocation3 + $0x10] sm:$0x7] %vm956, %v1004
        %s1007 = scalar_lea.vmem [#allocation2], 19
        %v1008 = vld [vmem:[%s1007] ss:$2 sm:$0x7]
        %1010 = vrot.lane.b32.xlu0 %v1008, 96
        %v1011 = vpop.permute.xlu0 %1010
        %1013 = vst.msk [vmem:[#allocation3 + $0x10] sm:$0x7] %vm964, %v1011
        %s1014 = scalar_lea.vmem [#allocation2], 24
        %v1015 = vld [vmem:[%s1014] ss:$2 sm:$0x7]
        %1016 = vst.msk [vmem:[#allocation3 + $0x18] sm:$0x7] %vm940, %v1015
        %s1017 = scalar_lea.vmem [#allocation2], 25
        %v1018 = vld [vmem:[%s1017] ss:$2 sm:$0x7]
        %1020 = vrot.lane.b32.xlu0 %v1018, 32
        %v1021 = vpop.permute.xlu0 %1020
        %1023 = vst.msk [vmem:[#allocation3 + $0x18] sm:$0x7] %vm948, %v1021
        %s1024 = scalar_lea.vmem [#allocation2], 26
        %v1025 = vld [vmem:[%s1024] ss:$2 sm:$0x7]
        %1027 = vrot.lane.b32.xlu0 %v1025, 64
        %v1028 = vpop.permute.xlu0 %1027
        %1030 = vst.msk [vmem:[#allocation3 + $0x18] sm:$0x7] %vm956, %v1028
        %s1031 = scalar_lea.vmem [#allocation2], 27
        %v1032 = vld [vmem:[%s1031] ss:$2 sm:$0x7]
        %1034 = vrot.lane.b32.xlu0 %v1032, 96
        %v1035 = vpop.permute.xlu0 %1034
        %1037 = vst.msk [vmem:[#allocation3 + $0x18] sm:$0x7] %vm964, %v1035
        %v1038 = vld [vmem:[%s990] ss:$2 sm:$0x7]
        %v1040 = vrot.slane %v1038, 5
        %vm1042 = vcmask 259075
        %1043 = vst.msk [vmem:[#allocation3] sm:$0x38] %vm1042, %v1040
        %v1044 = vld [vmem:[%s993] ss:$2 sm:$0x7]
        %v1046 = vrot.slane %v1044, 5
        %1047 = vrot.lane.b32.xlu0 %v1046, 32
        %v1048 = vpop.permute.xlu0 %1047
        %vm1050 = vcmask 521475
        %1051 = vst.msk [vmem:[#allocation3] sm:$0x38] %vm1050, %v1048
        %v1052 = vld [vmem:[%s1000] ss:$2 sm:$0x7]
        %v1054 = vrot.slane %v1052, 5
        %1055 = vrot.lane.b32.xlu0 %v1054, 64
        %v1056 = vpop.permute.xlu0 %1055
        %vm1058 = vcmask 783875
        %1059 = vst.msk [vmem:[#allocation3] sm:$0x38] %vm1058, %v1056
        %v1060 = vld [vmem:[%s1007] ss:$2 sm:$0x7]
        %v1062 = vrot.slane %v1060, 5
        %1063 = vrot.lane.b32.xlu0 %v1062, 96
        %v1064 = vpop.permute.xlu0 %1063
        %vm1066 = vcmask 1046275
        %1067 = vst.msk [vmem:[#allocation3] sm:$0x38] %vm1066, %v1064
        %v1068 = vld [vmem:[%s1014] ss:$2 sm:$0x7]
        %v1070 = vrot.slane %v1068, 5
        %1072 = vst.msk [vmem:[#allocation3 + $0x8] sm:$0x38] %vm1042, %v1070
        %v1073 = vld [vmem:[%s1017] ss:$2 sm:$0x7]
        %v1075 = vrot.slane %v1073, 5
        %1076 = vrot.lane.b32.xlu0 %v1075, 32
        %v1077 = vpop.permute.xlu0 %1076
        %1079 = vst.msk [vmem:[#allocation3 + $0x8] sm:$0x38] %vm1050, %v1077
        %v1080 = vld [vmem:[%s1024] ss:$2 sm:$0x7]
        %v1082 = vrot.slane %v1080, 5
        %1083 = vrot.lane.b32.xlu0 %v1082, 64
        %v1084 = vpop.permute.xlu0 %1083
        %1086 = vst.msk [vmem:[#allocation3 + $0x8] sm:$0x38] %vm1058, %v1084
        %v1087 = vld [vmem:[%s1031] ss:$2 sm:$0x7]
        %v1089 = vrot.slane %v1087, 5
        %1090 = vrot.lane.b32.xlu0 %v1089, 96
        %v1091 = vpop.permute.xlu0 %1090
        %1093 = vst.msk [vmem:[#allocation3 + $0x8] sm:$0x38] %vm1066, %v1091
        %s1094 = scalar_lea.vmem [#allocation2], 32
        %v1095 = vld [vmem:[%s1094] ss:$2 sm:$0x7]
        %v1097 = vrot.slane %v1095, 5
        %1099 = vst.msk [vmem:[#allocation3 + $0x10] sm:$0x38] %vm1042, %v1097
        %s1100 = scalar_lea.vmem [#allocation2], 33
        %v1101 = vld [vmem:[%s1100] ss:$2 sm:$0x7]
        %v1103 = vrot.slane %v1101, 5
        %1104 = vrot.lane.b32.xlu0 %v1103, 32
        %v1105 = vpop.permute.xlu0 %1104
        %1107 = vst.msk [vmem:[#allocation3 + $0x10] sm:$0x38] %vm1050, %v1105
        %s1108 = scalar_lea.vmem [#allocation2], 34
        %v1109 = vld [vmem:[%s1108] ss:$2 sm:$0x7]
        %v1111 = vrot.slane %v1109, 5
        %1112 = vrot.lane.b32.xlu0 %v1111, 64
        %v1113 = vpop.permute.xlu0 %1112
        %1115 = vst.msk [vmem:[#allocation3 + $0x10] sm:$0x38] %vm1058, %v1113
        %s1116 = scalar_lea.vmem [#allocation2], 35
        %v1117 = vld [vmem:[%s1116] ss:$2 sm:$0x7]
        %v1119 = vrot.slane %v1117, 5
        %1120 = vrot.lane.b32.xlu0 %v1119, 96
        %v1121 = vpop.permute.xlu0 %1120
        %1123 = vst.msk [vmem:[#allocation3 + $0x10] sm:$0x38] %vm1066, %v1121
        %s1124 = scalar_lea.vmem [#allocation2], 40
        %v1125 = vld [vmem:[%s1124] ss:$2 sm:$0x7]
        %v1127 = vrot.slane %v1125, 5
        %1129 = vst.msk [vmem:[#allocation3 + $0x18] sm:$0x38] %vm1042, %v1127
        %s1130 = scalar_lea.vmem [#allocation2], 41
        %v1131 = vld [vmem:[%s1130] ss:$2 sm:$0x7]
        %v1133 = vrot.slane %v1131, 5
        %1134 = vrot.lane.b32.xlu0 %v1133, 32
        %v1135 = vpop.permute.xlu0 %1134
        %1137 = vst.msk [vmem:[#allocation3 + $0x18] sm:$0x38] %vm1050, %v1135
        %s1138 = scalar_lea.vmem [#allocation2], 42
        %v1139 = vld [vmem:[%s1138] ss:$2 sm:$0x7]
        %v1141 = vrot.slane %v1139, 5
        %1142 = vrot.lane.b32.xlu0 %v1141, 64
        %v1143 = vpop.permute.xlu0 %1142
        %1145 = vst.msk [vmem:[#allocation3 + $0x18] sm:$0x38] %vm1058, %v1143
        %s1146 = scalar_lea.vmem [#allocation2], 43
        %v1147 = vld [vmem:[%s1146] ss:$2 sm:$0x7]
        %v1149 = vrot.slane %v1147, 5
        %1150 = vrot.lane.b32.xlu0 %v1149, 96
        %v1151 = vpop.permute.xlu0 %1150
        %1153 = vst.msk [vmem:[#allocation3 + $0x18] sm:$0x38] %vm1066, %v1151
        %v1154 = vld [vmem:[%s1094] ss:$2 sm:$0x7]
        %v1156 = vrot.slane %v1154, 2
        %vm1158 = vcmask 261126
        %1159 = vst.msk [vmem:[#allocation3] sm:$0xc0] %vm1158, %v1156
        %vm1160 = vcmask 253952
        %1161 = vst.msk [vmem:[#allocation3 + $0x20] sm:$0x1] %vm1160, %v1156
        %v1162 = vld [vmem:[%s1100] ss:$2 sm:$0x7]
        %v1164 = vrot.slane %v1162, 2
        %1165 = vrot.lane.b32.xlu0 %v1164, 32
        %v1166 = vpop.permute.xlu0 %1165
        %vm1168 = vcmask 523526
        %1169 = vst.msk [vmem:[#allocation3] sm:$0xc0] %vm1168, %v1166
        %vm1170 = vcmask 516352
        %1171 = vst.msk [vmem:[#allocation3 + $0x20] sm:$0x1] %vm1170, %v1166
        %v1172 = vld [vmem:[%s1108] ss:$2 sm:$0x7]
        %v1174 = vrot.slane %v1172, 2
        %1175 = vrot.lane.b32.xlu0 %v1174, 64
        %v1176 = vpop.permute.xlu0 %1175
        %vm1178 = vcmask 785926
        %1179 = vst.msk [vmem:[#allocation3] sm:$0xc0] %vm1178, %v1176
        %vm1180 = vcmask 778752
        %1181 = vst.msk [vmem:[#allocation3 + $0x20] sm:$0x1] %vm1180, %v1176
        %v1182 = vld [vmem:[%s1116] ss:$2 sm:$0x7]
        %v1184 = vrot.slane %v1182, 2
        %1185 = vrot.lane.b32.xlu0 %v1184, 96
        %v1186 = vpop.permute.xlu0 %1185
        %vm1188 = vcmask 1048326
        %1189 = vst.msk [vmem:[#allocation3] sm:$0xc0] %vm1188, %v1186
        %vm1190 = vcmask 1041152
        %1191 = vst.msk [vmem:[#allocation3 + $0x20] sm:$0x1] %vm1190, %v1186
        %v1192 = vld [vmem:[%s1124] ss:$2 sm:$0x7]
        %v1194 = vrot.slane %v1192, 2
        %1196 = vst.msk [vmem:[#allocation3 + $0x8] sm:$0xc0] %vm1158, %v1194
        %1197 = vst.msk [vmem:[#allocation3 + $0x28] sm:$0x1] %vm1160, %v1194
        %v1198 = vld [vmem:[%s1130] ss:$2 sm:$0x7]
        %v1200 = vrot.slane %v1198, 2
        %1201 = vrot.lane.b32.xlu0 %v1200, 32
        %v1202 = vpop.permute.xlu0 %1201
        %1204 = vst.msk [vmem:[#allocation3 + $0x8] sm:$0xc0] %vm1168, %v1202
        %1205 = vst.msk [vmem:[#allocation3 + $0x28] sm:$0x1] %vm1170, %v1202
        %v1206 = vld [vmem:[%s1138] ss:$2 sm:$0x7]
        %v1208 = vrot.slane %v1206, 2
        %1209 = vrot.lane.b32.xlu0 %v1208, 64
        %v1210 = vpop.permute.xlu0 %1209
        %1212 = vst.msk [vmem:[#allocation3 + $0x8] sm:$0xc0] %vm1178, %v1210
        %1213 = vst.msk [vmem:[#allocation3 + $0x28] sm:$0x1] %vm1180, %v1210
        %v1214 = vld [vmem:[%s1146] ss:$2 sm:$0x7]
        %v1216 = vrot.slane %v1214, 2
        %1217 = vrot.lane.b32.xlu0 %v1216, 96
        %v1218 = vpop.permute.xlu0 %1217
        %1220 = vst.msk [vmem:[#allocation3 + $0x8] sm:$0xc0] %vm1188, %v1218
        %1221 = vst.msk [vmem:[#allocation3 + $0x28] sm:$0x1] %vm1190, %v1218
        %s1222 = scalar_lea.vmem [#allocation2], 48
        %v1223 = vld [vmem:[%s1222] ss:$2 sm:$0x7]
        %v1225 = vrot.slane %v1223, 2
        %1227 = vst.msk [vmem:[#allocation3 + $0x10] sm:$0xc0] %vm1158, %v1225
        %1228 = vst.msk [vmem:[#allocation3 + $0x30] sm:$0x1] %vm1160, %v1225
        %s1229 = scalar_lea.vmem [#allocation2], 49
        %v1230 = vld [vmem:[%s1229] ss:$2 sm:$0x7]
        %v1232 = vrot.slane %v1230, 2
        %1233 = vrot.lane.b32.xlu0 %v1232, 32
        %v1234 = vpop.permute.xlu0 %1233
        %1236 = vst.msk [vmem:[#allocation3 + $0x10] sm:$0xc0] %vm1168, %v1234
        %1237 = vst.msk [vmem:[#allocation3 + $0x30] sm:$0x1] %vm1170, %v1234
        %s1238 = scalar_lea.vmem [#allocation2], 50
        %v1239 = vld [vmem:[%s1238] ss:$2 sm:$0x7]
        %v1241 = vrot.slane %v1239, 2
        %1242 = vrot.lane.b32.xlu0 %v1241, 64
        %v1243 = vpop.permute.xlu0 %1242
        %1245 = vst.msk [vmem:[#allocation3 + $0x10] sm:$0xc0] %vm1178, %v1243
        %1246 = vst.msk [vmem:[#allocation3 + $0x30] sm:$0x1] %vm1180, %v1243
        %s1247 = scalar_lea.vmem [#allocation2], 51
        %v1248 = vld [vmem:[%s1247] ss:$2 sm:$0x7]
        %v1250 = vrot.slane %v1248, 2
        %1251 = vrot.lane.b32.xlu0 %v1250, 96
        %v1252 = vpop.permute.xlu0 %1251
        %1254 = vst.msk [vmem:[#allocation3 + $0x10] sm:$0xc0] %vm1188, %v1252
        %1255 = vst.msk [vmem:[#allocation3 + $0x30] sm:$0x1] %vm1190, %v1252
        %s1256 = scalar_lea.vmem [#allocation2], 56
        %v1257 = vld [vmem:[%s1256] ss:$2 sm:$0x7]
        %v1259 = vrot.slane %v1257, 2
        %1261 = vst.msk [vmem:[#allocation3 + $0x18] sm:$0xc0] %vm1158, %v1259
        %1262 = vst.msk [vmem:[#allocation3 + $0x38] sm:$0x1] %vm1160, %v1259
        %s1263 = scalar_lea.vmem [#allocation2], 57
        %v1264 = vld [vmem:[%s1263] ss:$2 sm:$0x7]
        %v1266 = vrot.slane %v1264, 2
        %1267 = vrot.lane.b32.xlu0 %v1266, 32
        %v1268 = vpop.permute.xlu0 %1267
        %1270 = vst.msk [vmem:[#allocation3 + $0x18] sm:$0xc0] %vm1168, %v1268
        %1271 = vst.msk [vmem:[#allocation3 + $0x38] sm:$0x1] %vm1170, %v1268
        %s1272 = scalar_lea.vmem [#allocation2], 58
        %v1273 = vld [vmem:[%s1272] ss:$2 sm:$0x7]
        %v1275 = vrot.slane %v1273, 2
        %1276 = vrot.lane.b32.xlu0 %v1275, 64
        %v1277 = vpop.permute.xlu0 %1276
        %1279 = vst.msk [vmem:[#allocation3 + $0x18] sm:$0xc0] %vm1178, %v1277
        %1280 = vst.msk [vmem:[#allocation3 + $0x38] sm:$0x1] %vm1180, %v1277
        %s1281 = scalar_lea.vmem [#allocation2], 59
        %v1282 = vld [vmem:[%s1281] ss:$2 sm:$0x7]
        %v1284 = vrot.slane %v1282, 2
        %1285 = vrot.lane.b32.xlu0 %v1284, 96
        %v1286 = vpop.permute.xlu0 %1285
        %1288 = vst.msk [vmem:[#allocation3 + $0x18] sm:$0xc0] %vm1188, %v1286
        %1289 = vst.msk [vmem:[#allocation3 + $0x38] sm:$0x1] %vm1190, %v1286
        %s1290 = scalar_lea.vmem [#allocation2], 64
        %v1291 = vld [vmem:[%s1290] ss:$2 sm:$0x7]
        %v1293 = vrot.slane %v1291, 7
        %vm1295 = vcmask 257025
        %1296 = vst.msk [vmem:[#allocation3 + $0x20] sm:$0xe] %vm1295, %v1293
        %s1297 = scalar_lea.vmem [#allocation2], 65
        %v1298 = vld [vmem:[%s1297] ss:$2 sm:$0x7]
        %v1300 = vrot.slane %v1298, 7
        %1301 = vrot.lane.b32.xlu0 %v1300, 32
        %v1302 = vpop.permute.xlu0 %1301
        %vm1304 = vcmask 519425
        %1305 = vst.msk [vmem:[#allocation3 + $0x20] sm:$0xe] %vm1304, %v1302
        %s1306 = scalar_lea.vmem [#allocation2], 66
        %v1307 = vld [vmem:[%s1306] ss:$2 sm:$0x7]
        %v1309 = vrot.slane %v1307, 7
        %1310 = vrot.lane.b32.xlu0 %v1309, 64
        %v1311 = vpop.permute.xlu0 %1310
        %vm1313 = vcmask 781825
        %1314 = vst.msk [vmem:[#allocation3 + $0x20] sm:$0xe] %vm1313, %v1311
        %s1315 = scalar_lea.vmem [#allocation2], 67
        %v1316 = vld [vmem:[%s1315] ss:$2 sm:$0x7]
        %v1318 = vrot.slane %v1316, 7
        %1319 = vrot.lane.b32.xlu0 %v1318, 96
        %v1320 = vpop.permute.xlu0 %1319
        %vm1322 = vcmask 1044225
        %1323 = vst.msk [vmem:[#allocation3 + $0x20] sm:$0xe] %vm1322, %v1320
        %s1324 = scalar_lea.vmem [#allocation2], 72
        %v1325 = vld [vmem:[%s1324] ss:$2 sm:$0x7]
        %v1327 = vrot.slane %v1325, 7
        %1329 = vst.msk [vmem:[#allocation3 + $0x28] sm:$0xe] %vm1295, %v1327
        %s1330 = scalar_lea.vmem [#allocation2], 73
        %v1331 = vld [vmem:[%s1330] ss:$2 sm:$0x7]
        %v1333 = vrot.slane %v1331, 7
        %1334 = vrot.lane.b32.xlu0 %v1333, 32
        %v1335 = vpop.permute.xlu0 %1334
        %1337 = vst.msk [vmem:[#allocation3 + $0x28] sm:$0xe] %vm1304, %v1335
        %s1338 = scalar_lea.vmem [#allocation2], 74
        %v1339 = vld [vmem:[%s1338] ss:$2 sm:$0x7]
        %v1341 = vrot.slane %v1339, 7
        %1342 = vrot.lane.b32.xlu0 %v1341, 64
        %v1343 = vpop.permute.xlu0 %1342
        %1345 = vst.msk [vmem:[#allocation3 + $0x28] sm:$0xe] %vm1313, %v1343
        %s1346 = scalar_lea.vmem [#allocation2], 75
        %v1347 = vld [vmem:[%s1346] ss:$2 sm:$0x7]
        %v1349 = vrot.slane %v1347, 7
        %1350 = vrot.lane.b32.xlu0 %v1349, 96
        %v1351 = vpop.permute.xlu0 %1350
        %1353 = vst.msk [vmem:[#allocation3 + $0x28] sm:$0xe] %vm1322, %v1351
        %s1354 = scalar_lea.vmem [#allocation2], 80
        %v1355 = vld [vmem:[%s1354] ss:$2 sm:$0x7]
        %v1357 = vrot.slane %v1355, 7
        %1359 = vst.msk [vmem:[#allocation3 + $0x30] sm:$0xe] %vm1295, %v1357
        %s1360 = scalar_lea.vmem [#allocation2], 81
        %v1361 = vld [vmem:[%s1360] ss:$2 sm:$0x7]
        %v1363 = vrot.slane %v1361, 7
        %1364 = vrot.lane.b32.xlu0 %v1363, 32
        %v1365 = vpop.permute.xlu0 %1364
        %1367 = vst.msk [vmem:[#allocation3 + $0x30] sm:$0xe] %vm1304, %v1365
        %s1368 = scalar_lea.vmem [#allocation2], 82
        %v1369 = vld [vmem:[%s1368] ss:$2 sm:$0x7]
        %v1371 = vrot.slane %v1369, 7
        %1372 = vrot.lane.b32.xlu0 %v1371, 64
        %v1373 = vpop.permute.xlu0 %1372
        %1375 = vst.msk [vmem:[#allocation3 + $0x30] sm:$0xe] %vm1313, %v1373
        %s1376 = scalar_lea.vmem [#allocation2], 83
        %v1377 = vld [vmem:[%s1376] ss:$2 sm:$0x7]
        %v1379 = vrot.slane %v1377, 7
        %1380 = vrot.lane.b32.xlu0 %v1379, 96
        %v1381 = vpop.permute.xlu0 %1380
        %1383 = vst.msk [vmem:[#allocation3 + $0x30] sm:$0xe] %vm1322, %v1381
        %s1384 = scalar_lea.vmem [#allocation2], 88
        %v1385 = vld [vmem:[%s1384] ss:$2 sm:$0x7]
        %v1387 = vrot.slane %v1385, 7
        %1389 = vst.msk [vmem:[#allocation3 + $0x38] sm:$0xe] %vm1295, %v1387
        %s1390 = scalar_lea.vmem [#allocation2], 89
        %v1391 = vld [vmem:[%s1390] ss:$2 sm:$0x7]
        %v1393 = vrot.slane %v1391, 7
        %1394 = vrot.lane.b32.xlu0 %v1393, 32
        %v1395 = vpop.permute.xlu0 %1394
        %1397 = vst.msk [vmem:[#allocation3 + $0x38] sm:$0xe] %vm1304, %v1395
        %s1398 = scalar_lea.vmem [#allocation2], 90
        %v1399 = vld [vmem:[%s1398] ss:$2 sm:$0x7]
        %v1401 = vrot.slane %v1399, 7
        %1402 = vrot.lane.b32.xlu0 %v1401, 64
        %v1403 = vpop.permute.xlu0 %1402
        %1405 = vst.msk [vmem:[#allocation3 + $0x38] sm:$0xe] %vm1313, %v1403
        %s1406 = scalar_lea.vmem [#allocation2], 91
        %v1407 = vld [vmem:[%s1406] ss:$2 sm:$0x7]
        %v1409 = vrot.slane %v1407, 7
        %1410 = vrot.lane.b32.xlu0 %v1409, 96
        %v1411 = vpop.permute.xlu0 %1410
        %1413 = vst.msk [vmem:[#allocation3 + $0x38] sm:$0xe] %vm1322, %v1411
        %v1414 = vld [vmem:[%s1354] ss:$2 sm:$0x7]
        %v1416 = vrot.slane %v1414, 4
        %vm1418 = vcmask 260100
        %1419 = vst.msk [vmem:[#allocation3 + $0x20] sm:$0x70] %vm1418, %v1416
        %v1420 = vld [vmem:[%s1360] ss:$2 sm:$0x7]
        %v1422 = vrot.slane %v1420, 4
        %1423 = vrot.lane.b32.xlu0 %v1422, 32
        %v1424 = vpop.permute.xlu0 %1423
        %vm1426 = vcmask 522500
        %1427 = vst.msk [vmem:[#allocation3 + $0x20] sm:$0x70] %vm1426, %v1424
        %v1428 = vld [vmem:[%s1368] ss:$2 sm:$0x7]
        %v1430 = vrot.slane %v1428, 4
        %1431 = vrot.lane.b32.xlu0 %v1430, 64
        %v1432 = vpop.permute.xlu0 %1431
        %vm1434 = vcmask 784900
        %1435 = vst.msk [vmem:[#allocation3 + $0x20] sm:$0x70] %vm1434, %v1432
        %v1436 = vld [vmem:[%s1376] ss:$2 sm:$0x7]
        %v1438 = vrot.slane %v1436, 4
        %1439 = vrot.lane.b32.xlu0 %v1438, 96
        %v1440 = vpop.permute.xlu0 %1439
        %vm1442 = vcmask 1047300
        %1443 = vst.msk [vmem:[#allocation3 + $0x20] sm:$0x70] %vm1442, %v1440
        %v1444 = vld [vmem:[%s1384] ss:$2 sm:$0x7]
        %v1446 = vrot.slane %v1444, 4
        %1448 = vst.msk [vmem:[#allocation3 + $0x28] sm:$0x70] %vm1418, %v1446
        %v1449 = vld [vmem:[%s1390] ss:$2 sm:$0x7]
        %v1451 = vrot.slane %v1449, 4
        %1452 = vrot.lane.b32.xlu0 %v1451, 32
        %v1453 = vpop.permute.xlu0 %1452
        %1455 = vst.msk [vmem:[#allocation3 + $0x28] sm:$0x70] %vm1426, %v1453
        %v1456 = vld [vmem:[%s1398] ss:$2 sm:$0x7]
        %v1458 = vrot.slane %v1456, 4
        %1459 = vrot.lane.b32.xlu0 %v1458, 64
        %v1460 = vpop.permute.xlu0 %1459
        %1462 = vst.msk [vmem:[#allocation3 + $0x28] sm:$0x70] %vm1434, %v1460
        %v1463 = vld [vmem:[%s1406] ss:$2 sm:$0x7]
        %v1465 = vrot.slane %v1463, 4
        %1466 = vrot.lane.b32.xlu0 %v1465, 96
        %v1467 = vpop.permute.xlu0 %1466
        %1469 = vst.msk [vmem:[#allocation3 + $0x28] sm:$0x70] %vm1442, %v1467
        %s1470 = scalar_lea.vmem [#allocation2], 96
        %v1471 = vld [vmem:[%s1470] ss:$2 sm:$0x7]
        %v1473 = vrot.slane %v1471, 4
        %1475 = vst.msk [vmem:[#allocation3 + $0x30] sm:$0x70] %vm1418, %v1473
        %s1476 = scalar_lea.vmem [#allocation2], 97
        %v1477 = vld [vmem:[%s1476] ss:$2 sm:$0x7]
        %v1479 = vrot.slane %v1477, 4
        %1480 = vrot.lane.b32.xlu0 %v1479, 32
        %v1481 = vpop.permute.xlu0 %1480
        %1483 = vst.msk [vmem:[#allocation3 + $0x30] sm:$0x70] %vm1426, %v1481
        %s1484 = scalar_lea.vmem [#allocation2], 98
        %v1485 = vld [vmem:[%s1484] ss:$2 sm:$0x7]
        %v1487 = vrot.slane %v1485, 4
        %1488 = vrot.lane.b32.xlu0 %v1487, 64
        %v1489 = vpop.permute.xlu0 %1488
        %1491 = vst.msk [vmem:[#allocation3 + $0x30] sm:$0x70] %vm1434, %v1489
        %s1492 = scalar_lea.vmem [#allocation2], 99
        %v1493 = vld [vmem:[%s1492] ss:$2 sm:$0x7]
        %v1495 = vrot.slane %v1493, 4
        %1496 = vrot.lane.b32.xlu0 %v1495, 96
        %v1497 = vpop.permute.xlu0 %1496
        %1499 = vst.msk [vmem:[#allocation3 + $0x30] sm:$0x70] %vm1442, %v1497
        %s1500 = scalar_lea.vmem [#allocation2], 104
        %v1501 = vld [vmem:[%s1500] ss:$2 sm:$0x7]
        %v1503 = vrot.slane %v1501, 4
        %1505 = vst.msk [vmem:[#allocation3 + $0x38] sm:$0x70] %vm1418, %v1503
        %s1506 = scalar_lea.vmem [#allocation2], 105
        %v1507 = vld [vmem:[%s1506] ss:$2 sm:$0x7]
        %v1509 = vrot.slane %v1507, 4
        %1510 = vrot.lane.b32.xlu0 %v1509, 32
        %v1511 = vpop.permute.xlu0 %1510
        %1513 = vst.msk [vmem:[#allocation3 + $0x38] sm:$0x70] %vm1426, %v1511
        %s1514 = scalar_lea.vmem [#allocation2], 106
        %v1515 = vld [vmem:[%s1514] ss:$2 sm:$0x7]
        %v1517 = vrot.slane %v1515, 4
        %1518 = vrot.lane.b32.xlu0 %v1517, 64
        %v1519 = vpop.permute.xlu0 %1518
        %1521 = vst.msk [vmem:[#allocation3 + $0x38] sm:$0x70] %vm1434, %v1519
        %s1522 = scalar_lea.vmem [#allocation2], 107
        %v1523 = vld [vmem:[%s1522] ss:$2 sm:$0x7]
        %v1525 = vrot.slane %v1523, 4
        %1526 = vrot.lane.b32.xlu0 %v1525, 96
        %v1527 = vpop.permute.xlu0 %1526
        %1529 = vst.msk [vmem:[#allocation3 + $0x38] sm:$0x70] %vm1442, %v1527
        %v1530 = vld [vmem:[%s1470] ss:$2 sm:$0x7]
        %v1532 = vrot.slane %v1530, 1
        %vm1534 = vcmask 261127
        %1535 = vst.msk [vmem:[#allocation3 + $0x20] sm:$0x80] %vm1534, %v1532
        %vm1536 = vcmask 254976
        %1537 = vst.msk [vmem:[#allocation3 + $0x40] sm:$0x3] %vm1536, %v1532
        %v1538 = vld [vmem:[%s1476] ss:$2 sm:$0x7]
        %v1540 = vrot.slane %v1538, 1
        %1541 = vrot.lane.b32.xlu0 %v1540, 32
        %v1542 = vpop.permute.xlu0 %1541
        %vm1544 = vcmask 523527
        %1545 = vst.msk [vmem:[#allocation3 + $0x20] sm:$0x80] %vm1544, %v1542
        %vm1546 = vcmask 517376
        %1547 = vst.msk [vmem:[#allocation3 + $0x40] sm:$0x3] %vm1546, %v1542
        %v1548 = vld [vmem:[%s1484] ss:$2 sm:$0x7]
        %v1550 = vrot.slane %v1548, 1
        %1551 = vrot.lane.b32.xlu0 %v1550, 64
        %v1552 = vpop.permute.xlu0 %1551
        %vm1554 = vcmask 785927
        %1555 = vst.msk [vmem:[#allocation3 + $0x20] sm:$0x80] %vm1554, %v1552
        %vm1556 = vcmask 779776
        %1557 = vst.msk [vmem:[#allocation3 + $0x40] sm:$0x3] %vm1556, %v1552
        %v1558 = vld [vmem:[%s1492] ss:$2 sm:$0x7]
        %v1560 = vrot.slane %v1558, 1
        %1561 = vrot.lane.b32.xlu0 %v1560, 96
        %v1562 = vpop.permute.xlu0 %1561
        %vm1564 = vcmask 1048327
        %1565 = vst.msk [vmem:[#allocation3 + $0x20] sm:$0x80] %vm1564, %v1562
        %vm1566 = vcmask 1042176
        %1567 = vst.msk [vmem:[#allocation3 + $0x40] sm:$0x3] %vm1566, %v1562
        %v1568 = vld [vmem:[%s1500] ss:$2 sm:$0x7]
        %v1570 = vrot.slane %v1568, 1
        %1572 = vst.msk [vmem:[#allocation3 + $0x28] sm:$0x80] %vm1534, %v1570
        %1573 = vst.msk [vmem:[#allocation3 + $0x48] sm:$0x3] %vm1536, %v1570
        %v1574 = vld [vmem:[%s1506] ss:$2 sm:$0x7]
        %v1576 = vrot.slane %v1574, 1
        %1577 = vrot.lane.b32.xlu0 %v1576, 32
        %v1578 = vpop.permute.xlu0 %1577
        %1580 = vst.msk [vmem:[#allocation3 + $0x28] sm:$0x80] %vm1544, %v1578
        %1581 = vst.msk [vmem:[#allocation3 + $0x48] sm:$0x3] %vm1546, %v1578
        %v1582 = vld [vmem:[%s1514] ss:$2 sm:$0x7]
        %v1584 = vrot.slane %v1582, 1
        %1585 = vrot.lane.b32.xlu0 %v1584, 64
        %v1586 = vpop.permute.xlu0 %1585
        %1588 = vst.msk [vmem:[#allocation3 + $0x28] sm:$0x80] %vm1554, %v1586
        %1589 = vst.msk [vmem:[#allocation3 + $0x48] sm:$0x3] %vm1556, %v1586
        %v1590 = vld [vmem:[%s1522] ss:$2 sm:$0x7]
        %v1592 = vrot.slane %v1590, 1
        %1593 = vrot.lane.b32.xlu0 %v1592, 96
        %v1594 = vpop.permute.xlu0 %1593
        %1596 = vst.msk [vmem:[#allocation3 + $0x28] sm:$0x80] %vm1564, %v1594
        %1597 = vst.msk [vmem:[#allocation3 + $0x48] sm:$0x3] %vm1566, %v1594
        %s1598 = scalar_lea.vmem [#allocation2], 112
        %v1599 = vld [vmem:[%s1598] ss:$2 sm:$0x7]
        %v1601 = vrot.slane %v1599, 1
        %1603 = vst.msk [vmem:[#allocation3 + $0x30] sm:$0x80] %vm1534, %v1601
        %1604 = vst.msk [vmem:[#allocation3 + $0x50] sm:$0x3] %vm1536, %v1601
        %s1605 = scalar_lea.vmem [#allocation2], 113
        %v1606 = vld [vmem:[%s1605] ss:$2 sm:$0x7]
        %v1608 = vrot.slane %v1606, 1
        %1609 = vrot.lane.b32.xlu0 %v1608, 32
        %v1610 = vpop.permute.xlu0 %1609
        %1612 = vst.msk [vmem:[#allocation3 + $0x30] sm:$0x80] %vm1544, %v1610
        %1613 = vst.msk [vmem:[#allocation3 + $0x50] sm:$0x3] %vm1546, %v1610
        %s1614 = scalar_lea.vmem [#allocation2], 114
        %v1615 = vld [vmem:[%s1614] ss:$2 sm:$0x7]
        %v1617 = vrot.slane %v1615, 1
        %1618 = vrot.lane.b32.xlu0 %v1617, 64
        %v1619 = vpop.permute.xlu0 %1618
        %1621 = vst.msk [vmem:[#allocation3 + $0x30] sm:$0x80] %vm1554, %v1619
        %1622 = vst.msk [vmem:[#allocation3 + $0x50] sm:$0x3] %vm1556, %v1619
        %s1623 = scalar_lea.vmem [#allocation2], 115
        %v1624 = vld [vmem:[%s1623] ss:$2 sm:$0x7]
        %v1626 = vrot.slane %v1624, 1
        %1627 = vrot.lane.b32.xlu0 %v1626, 96
        %v1628 = vpop.permute.xlu0 %1627
        %1630 = vst.msk [vmem:[#allocation3 + $0x30] sm:$0x80] %vm1564, %v1628
        %1631 = vst.msk [vmem:[#allocation3 + $0x50] sm:$0x3] %vm1566, %v1628
        %s1632 = scalar_lea.vmem [#allocation2], 120
        %v1633 = vld [vmem:[%s1632] ss:$2 sm:$0x7]
        %v1635 = vrot.slane %v1633, 1
        %1637 = vst.msk [vmem:[#allocation3 + $0x38] sm:$0x80] %vm1534, %v1635
        %1638 = vst.msk [vmem:[#allocation3 + $0x58] sm:$0x3] %vm1536, %v1635
        %s1639 = scalar_lea.vmem [#allocation2], 121
        %v1640 = vld [vmem:[%s1639] ss:$2 sm:$0x7]
        %v1642 = vrot.slane %v1640, 1
        %1643 = vrot.lane.b32.xlu0 %v1642, 32
        %v1644 = vpop.permute.xlu0 %1643
        %1646 = vst.msk [vmem:[#allocation3 + $0x38] sm:$0x80] %vm1544, %v1644
        %1647 = vst.msk [vmem:[#allocation3 + $0x58] sm:$0x3] %vm1546, %v1644
        %s1648 = scalar_lea.vmem [#allocation2], 122
        %v1649 = vld [vmem:[%s1648] ss:$2 sm:$0x7]
        %v1651 = vrot.slane %v1649, 1
        %1652 = vrot.lane.b32.xlu0 %v1651, 64
        %v1653 = vpop.permute.xlu0 %1652
        %1655 = vst.msk [vmem:[#allocation3 + $0x38] sm:$0x80] %vm1554, %v1653
        %1656 = vst.msk [vmem:[#allocation3 + $0x58] sm:$0x3] %vm1556, %v1653
        %s1657 = scalar_lea.vmem [#allocation2], 123
        %v1658 = vld [vmem:[%s1657] ss:$2 sm:$0x7]
        %v1660 = vrot.slane %v1658, 1
        %1661 = vrot.lane.b32.xlu0 %v1660, 96
        %v1662 = vpop.permute.xlu0 %1661
        %1664 = vst.msk [vmem:[#allocation3 + $0x38] sm:$0x80] %vm1564, %v1662
        %1665 = vst.msk [vmem:[#allocation3 + $0x58] sm:$0x3] %vm1566, %v1662
        %s1666 = scalar_lea.vmem [#allocation2], 128
        %v1667 = vld [vmem:[%s1666] ss:$2 sm:$0x7]
        %v1669 = vrot.slane %v1667, 6
        %vm1671 = vcmask 258050
        %1672 = vst.msk [vmem:[#allocation3 + $0x40] sm:$0x1c] %vm1671, %v1669
        %s1673 = scalar_lea.vmem [#allocation2], 129
        %v1674 = vld [vmem:[%s1673] ss:$2 sm:$0x7]
        %v1676 = vrot.slane %v1674, 6
        %1677 = vrot.lane.b32.xlu0 %v1676, 32
        %v1678 = vpop.permute.xlu0 %1677
        %vm1680 = vcmask 520450
        %1681 = vst.msk [vmem:[#allocation3 + $0x40] sm:$0x1c] %vm1680, %v1678
        %s1682 = scalar_lea.vmem [#allocation2], 130
        %v1683 = vld [vmem:[%s1682] ss:$2 sm:$0x7]
        %v1685 = vrot.slane %v1683, 6
        %1686 = vrot.lane.b32.xlu0 %v1685, 64
        %v1687 = vpop.permute.xlu0 %1686
        %vm1689 = vcmask 782850
        %1690 = vst.msk [vmem:[#allocation3 + $0x40] sm:$0x1c] %vm1689, %v1687
        %s1691 = scalar_lea.vmem [#allocation2], 131
        %v1692 = vld [vmem:[%s1691] ss:$2 sm:$0x7]
        %v1694 = vrot.slane %v1692, 6
        %1695 = vrot.lane.b32.xlu0 %v1694, 96
        %v1696 = vpop.permute.xlu0 %1695
        %vm1698 = vcmask 1045250
        %1699 = vst.msk [vmem:[#allocation3 + $0x40] sm:$0x1c] %vm1698, %v1696
        %s1700 = scalar_lea.vmem [#allocation2], 136
        %v1701 = vld [vmem:[%s1700] ss:$2 sm:$0x7]
        %v1703 = vrot.slane %v1701, 6
        %1705 = vst.msk [vmem:[#allocation3 + $0x48] sm:$0x1c] %vm1671, %v1703
        %s1706 = scalar_lea.vmem [#allocation2], 137
        %v1707 = vld [vmem:[%s1706] ss:$2 sm:$0x7]
        %v1709 = vrot.slane %v1707, 6
        %1710 = vrot.lane.b32.xlu0 %v1709, 32
        %v1711 = vpop.permute.xlu0 %1710
        %1713 = vst.msk [vmem:[#allocation3 + $0x48] sm:$0x1c] %vm1680, %v1711
        %s1714 = scalar_lea.vmem [#allocation2], 138
        %v1715 = vld [vmem:[%s1714] ss:$2 sm:$0x7]
        %v1717 = vrot.slane %v1715, 6
        %1718 = vrot.lane.b32.xlu0 %v1717, 64
        %v1719 = vpop.permute.xlu0 %1718
        %1721 = vst.msk [vmem:[#allocation3 + $0x48] sm:$0x1c] %vm1689, %v1719
        %s1722 = scalar_lea.vmem [#allocation2], 139
        %v1723 = vld [vmem:[%s1722] ss:$2 sm:$0x7]
        %v1725 = vrot.slane %v1723, 6
        %1726 = vrot.lane.b32.xlu0 %v1725, 96
        %v1727 = vpop.permute.xlu0 %1726
        %1729 = vst.msk [vmem:[#allocation3 + $0x48] sm:$0x1c] %vm1698, %v1727
        %s1730 = scalar_lea.vmem [#allocation2], 144
        %v1731 = vld [vmem:[%s1730] ss:$2 sm:$0x7]
        %v1733 = vrot.slane %v1731, 6
        %1735 = vst.msk [vmem:[#allocation3 + $0x50] sm:$0x1c] %vm1671, %v1733
        %s1736 = scalar_lea.vmem [#allocation2], 145
        %v1737 = vld [vmem:[%s1736] ss:$2 sm:$0x7]
        %v1739 = vrot.slane %v1737, 6
        %1740 = vrot.lane.b32.xlu0 %v1739, 32
        %v1741 = vpop.permute.xlu0 %1740
        %1743 = vst.msk [vmem:[#allocation3 + $0x50] sm:$0x1c] %vm1680, %v1741
        %s1744 = scalar_lea.vmem [#allocation2], 146
        %v1745 = vld [vmem:[%s1744] ss:$2 sm:$0x7]
        %v1747 = vrot.slane %v1745, 6
        %1748 = vrot.lane.b32.xlu0 %v1747, 64
        %v1749 = vpop.permute.xlu0 %1748
        %1751 = vst.msk [vmem:[#allocation3 + $0x50] sm:$0x1c] %vm1689, %v1749
        %s1752 = scalar_lea.vmem [#allocation2], 147
        %v1753 = vld [vmem:[%s1752] ss:$2 sm:$0x7]
        %v1755 = vrot.slane %v1753, 6
        %1756 = vrot.lane.b32.xlu0 %v1755, 96
        %v1757 = vpop.permute.xlu0 %1756
        %1759 = vst.msk [vmem:[#allocation3 + $0x50] sm:$0x1c] %vm1698, %v1757
        %s1760 = scalar_lea.vmem [#allocation2], 152
        %v1761 = vld [vmem:[%s1760] ss:$2 sm:$0x7]
        %v1763 = vrot.slane %v1761, 6
        %1765 = vst.msk [vmem:[#allocation3 + $0x58] sm:$0x1c] %vm1671, %v1763
        %s1766 = scalar_lea.vmem [#allocation2], 153
        %v1767 = vld [vmem:[%s1766] ss:$2 sm:$0x7]
        %v1769 = vrot.slane %v1767, 6
        %1770 = vrot.lane.b32.xlu0 %v1769, 32
        %v1771 = vpop.permute.xlu0 %1770
        %1773 = vst.msk [vmem:[#allocation3 + $0x58] sm:$0x1c] %vm1680, %v1771
        %s1774 = scalar_lea.vmem [#allocation2], 154
        %v1775 = vld [vmem:[%s1774] ss:$2 sm:$0x7]
        %v1777 = vrot.slane %v1775, 6
        %1778 = vrot.lane.b32.xlu0 %v1777, 64
        %v1779 = vpop.permute.xlu0 %1778
        %1781 = vst.msk [vmem:[#allocation3 + $0x58] sm:$0x1c] %vm1689, %v1779
        %s1782 = scalar_lea.vmem [#allocation2], 155
        %v1783 = vld [vmem:[%s1782] ss:$2 sm:$0x7]
        %v1785 = vrot.slane %v1783, 6
        %1786 = vrot.lane.b32.xlu0 %v1785, 96
        %v1787 = vpop.permute.xlu0 %1786
        %1789 = vst.msk [vmem:[#allocation3 + $0x58] sm:$0x1c] %vm1698, %v1787
        %v1790 = vld [vmem:[%s1730] ss:$2 sm:$0x7]
        %v1792 = vrot.slane %v1790, 3
        %vm1794 = vcmask 261125
        %1795 = vst.msk [vmem:[#allocation3 + $0x40] sm:$0xe0] %vm1794, %v1792
        %v1796 = vld [vmem:[%s1736] ss:$2 sm:$0x7]
        %v1798 = vrot.slane %v1796, 3
        %1799 = vrot.lane.b32.xlu0 %v1798, 32
        %v1800 = vpop.permute.xlu0 %1799
        %vm1802 = vcmask 523525
        %1803 = vst.msk [vmem:[#allocation3 + $0x40] sm:$0xe0] %vm1802, %v1800
        %v1804 = vld [vmem:[%s1744] ss:$2 sm:$0x7]
        %v1806 = vrot.slane %v1804, 3
        %1807 = vrot.lane.b32.xlu0 %v1806, 64
        %v1808 = vpop.permute.xlu0 %1807
        %vm1810 = vcmask 785925
        %1811 = vst.msk [vmem:[#allocation3 + $0x40] sm:$0xe0] %vm1810, %v1808
        %v1812 = vld [vmem:[%s1752] ss:$2 sm:$0x7]
        %v1814 = vrot.slane %v1812, 3
        %1815 = vrot.lane.b32.xlu0 %v1814, 96
        %v1816 = vpop.permute.xlu0 %1815
        %vm1818 = vcmask 1048325
        %1819 = vst.msk [vmem:[#allocation3 + $0x40] sm:$0xe0] %vm1818, %v1816
        %v1820 = vld [vmem:[%s1760] ss:$2 sm:$0x7]
        %v1822 = vrot.slane %v1820, 3
        %1824 = vst.msk [vmem:[#allocation3 + $0x48] sm:$0xe0] %vm1794, %v1822
        %v1825 = vld [vmem:[%s1766] ss:$2 sm:$0x7]
        %v1827 = vrot.slane %v1825, 3
        %1828 = vrot.lane.b32.xlu0 %v1827, 32
        %v1829 = vpop.permute.xlu0 %1828
        %1831 = vst.msk [vmem:[#allocation3 + $0x48] sm:$0xe0] %vm1802, %v1829
        %v1832 = vld [vmem:[%s1774] ss:$2 sm:$0x7]
        %v1834 = vrot.slane %v1832, 3
        %1835 = vrot.lane.b32.xlu0 %v1834, 64
        %v1836 = vpop.permute.xlu0 %1835
        %1838 = vst.msk [vmem:[#allocation3 + $0x48] sm:$0xe0] %vm1810, %v1836
        %v1839 = vld [vmem:[%s1782] ss:$2 sm:$0x7]
        %v1841 = vrot.slane %v1839, 3
        %1842 = vrot.lane.b32.xlu0 %v1841, 96
        %v1843 = vpop.permute.xlu0 %1842
        %1845 = vst.msk [vmem:[#allocation3 + $0x48] sm:$0xe0] %vm1818, %v1843
        %s1846 = scalar_lea.vmem [#allocation2], 160
        %v1847 = vld [vmem:[%s1846] ss:$2 sm:$0x7]
        %v1849 = vrot.slane %v1847, 3
        %1851 = vst.msk [vmem:[#allocation3 + $0x50] sm:$0xe0] %vm1794, %v1849
        %s1852 = scalar_lea.vmem [#allocation2], 161
        %v1853 = vld [vmem:[%s1852] ss:$2 sm:$0x7]
        %v1855 = vrot.slane %v1853, 3
        %1856 = vrot.lane.b32.xlu0 %v1855, 32
        %v1857 = vpop.permute.xlu0 %1856
        %1859 = vst.msk [vmem:[#allocation3 + $0x50] sm:$0xe0] %vm1802, %v1857
        %s1860 = scalar_lea.vmem [#allocation2], 162
        %v1861 = vld [vmem:[%s1860] ss:$2 sm:$0x7]
        %v1863 = vrot.slane %v1861, 3
        %1864 = vrot.lane.b32.xlu0 %v1863, 64
        %v1865 = vpop.permute.xlu0 %1864
        %1867 = vst.msk [vmem:[#allocation3 + $0x50] sm:$0xe0] %vm1810, %v1865
        %s1868 = scalar_lea.vmem [#allocation2], 163
        %v1869 = vld [vmem:[%s1868] ss:$2 sm:$0x7]
        %v1871 = vrot.slane %v1869, 3
        %1872 = vrot.lane.b32.xlu0 %v1871, 96
        %v1873 = vpop.permute.xlu0 %1872
        %1875 = vst.msk [vmem:[#allocation3 + $0x50] sm:$0xe0] %vm1818, %v1873
        %s1876 = scalar_lea.vmem [#allocation2], 168
        %v1877 = vld [vmem:[%s1876] ss:$2 sm:$0x7]
        %v1879 = vrot.slane %v1877, 3
        %1881 = vst.msk [vmem:[#allocation3 + $0x58] sm:$0xe0] %vm1794, %v1879
        %s1882 = scalar_lea.vmem [#allocation2], 169
        %v1883 = vld [vmem:[%s1882] ss:$2 sm:$0x7]
        %v1885 = vrot.slane %v1883, 3
        %1886 = vrot.lane.b32.xlu0 %v1885, 32
        %v1887 = vpop.permute.xlu0 %1886
        %1889 = vst.msk [vmem:[#allocation3 + $0x58] sm:$0xe0] %vm1802, %v1887
        %s1890 = scalar_lea.vmem [#allocation2], 170
        %v1891 = vld [vmem:[%s1890] ss:$2 sm:$0x7]
        %v1893 = vrot.slane %v1891, 3
        %1894 = vrot.lane.b32.xlu0 %v1893, 64
        %v1895 = vpop.permute.xlu0 %1894
        %1897 = vst.msk [vmem:[#allocation3 + $0x58] sm:$0xe0] %vm1810, %v1895
        %s1898 = scalar_lea.vmem [#allocation2], 171
        %v1899 = vld [vmem:[%s1898] ss:$2 sm:$0x7]
        %v1901 = vrot.slane %v1899, 3
        %1902 = vrot.lane.b32.xlu0 %v1901, 96
        %v1903 = vpop.permute.xlu0 %1902
        %1905 = vst.msk [vmem:[#allocation3 + $0x58] sm:$0xe0] %vm1818, %v1903
        %v1906 = vld [vmem:[%s1846] ss:$2 sm:$0x7]
        %1907 = vst.msk [vmem:[#allocation3 + $0x60] sm:$0x7] %vm940, %v1906
        %v1908 = vld [vmem:[%s1852] ss:$2 sm:$0x7]
        %1910 = vrot.lane.b32.xlu0 %v1908, 32
        %v1911 = vpop.permute.xlu0 %1910
        %1913 = vst.msk [vmem:[#allocation3 + $0x60] sm:$0x7] %vm948, %v1911
        %v1914 = vld [vmem:[%s1860] ss:$2 sm:$0x7]
        %1916 = vrot.lane.b32.xlu0 %v1914, 64
        %v1917 = vpop.permute.xlu0 %1916
        %1919 = vst.msk [vmem:[#allocation3 + $0x60] sm:$0x7] %vm956, %v1917
        %v1920 = vld [vmem:[%s1868] ss:$2 sm:$0x7]
        %1922 = vrot.lane.b32.xlu0 %v1920, 96
        %v1923 = vpop.permute.xlu0 %1922
        %1925 = vst.msk [vmem:[#allocation3 + $0x60] sm:$0x7] %vm964, %v1923
        %v1926 = vld [vmem:[%s1876] ss:$2 sm:$0x7]
        %1927 = vst.msk [vmem:[#allocation3 + $0x68] sm:$0x7] %vm940, %v1926
        %v1928 = vld [vmem:[%s1882] ss:$2 sm:$0x7]
        %1930 = vrot.lane.b32.xlu0 %v1928, 32
        %v1931 = vpop.permute.xlu0 %1930
        %1933 = vst.msk [vmem:[#allocation3 + $0x68] sm:$0x7] %vm948, %v1931
        %v1934 = vld [vmem:[%s1890] ss:$2 sm:$0x7]
        %1936 = vrot.lane.b32.xlu0 %v1934, 64
        %v1937 = vpop.permute.xlu0 %1936
        %1939 = vst.msk [vmem:[#allocation3 + $0x68] sm:$0x7] %vm956, %v1937
        %v1940 = vld [vmem:[%s1898] ss:$2 sm:$0x7]
        %1942 = vrot.lane.b32.xlu0 %v1940, 96
        %v1943 = vpop.permute.xlu0 %1942
        %1945 = vst.msk [vmem:[#allocation3 + $0x68] sm:$0x7] %vm964, %v1943
        %s1946 = scalar_lea.vmem [#allocation2], 176
        %v1947 = vld [vmem:[%s1946] ss:$2 sm:$0x7]
        %1948 = vst.msk [vmem:[#allocation3 + $0x70] sm:$0x7] %vm940, %v1947
        %s1949 = scalar_lea.vmem [#allocation2], 177
        %v1950 = vld [vmem:[%s1949] ss:$2 sm:$0x7]
        %1952 = vrot.lane.b32.xlu0 %v1950, 32
        %v1953 = vpop.permute.xlu0 %1952
        %1955 = vst.msk [vmem:[#allocation3 + $0x70] sm:$0x7] %vm948, %v1953
        %s1956 = scalar_lea.vmem [#allocation2], 178
        %v1957 = vld [vmem:[%s1956] ss:$2 sm:$0x7]
        %1959 = vrot.lane.b32.xlu0 %v1957, 64
        %v1960 = vpop.permute.xlu0 %1959
        %1962 = vst.msk [vmem:[#allocation3 + $0x70] sm:$0x7] %vm956, %v1960
        %s1963 = scalar_lea.vmem [#allocation2], 179
        %v1964 = vld [vmem:[%s1963] ss:$2 sm:$0x7]
        %1966 = vrot.lane.b32.xlu0 %v1964, 96
        %v1967 = vpop.permute.xlu0 %1966
        %1969 = vst.msk [vmem:[#allocation3 + $0x70] sm:$0x7] %vm964, %v1967
        %s1970 = scalar_lea.vmem [#allocation2], 184
        %v1971 = vld [vmem:[%s1970] ss:$2 sm:$0x7]
        %1972 = vst.msk [vmem:[#allocation3 + $0x78] sm:$0x7] %vm940, %v1971
        %s1973 = scalar_lea.vmem [#allocation2], 185
        %v1974 = vld [vmem:[%s1973] ss:$2 sm:$0x7]
        %1976 = vrot.lane.b32.xlu0 %v1974, 32
        %v1977 = vpop.permute.xlu0 %1976
        %1979 = vst.msk [vmem:[#allocation3 + $0x78] sm:$0x7] %vm948, %v1977
        %s1980 = scalar_lea.vmem [#allocation2], 186
        %v1981 = vld [vmem:[%s1980] ss:$2 sm:$0x7]
        %1983 = vrot.lane.b32.xlu0 %v1981, 64
        %v1984 = vpop.permute.xlu0 %1983
        %1986 = vst.msk [vmem:[#allocation3 + $0x78] sm:$0x7] %vm956, %v1984
        %s1987 = scalar_lea.vmem [#allocation2], 187
        %v1988 = vld [vmem:[%s1987] ss:$2 sm:$0x7]
        %1990 = vrot.lane.b32.xlu0 %v1988, 96
        %v1991 = vpop.permute.xlu0 %1990
        %1993 = vst.msk [vmem:[#allocation3 + $0x78] sm:$0x7] %vm964, %v1991
        %s1994 = scalar_lea.vmem [#allocation2], 192
        %v1995 = vld [vmem:[%s1994] ss:$2 sm:$0x7]
        %v1997 = vrot.slane %v1995, 5
        %1999 = vst.msk [vmem:[#allocation3 + $0x60] sm:$0x38] %vm1042, %v1997
        %s2000 = scalar_lea.vmem [#allocation2], 193
        %v2001 = vld [vmem:[%s2000] ss:$2 sm:$0x7]
        %v2003 = vrot.slane %v2001, 5
        %2004 = vrot.lane.b32.xlu0 %v2003, 32
        %v2005 = vpop.permute.xlu0 %2004
        %2007 = vst.msk [vmem:[#allocation3 + $0x60] sm:$0x38] %vm1050, %v2005
        %s2008 = scalar_lea.vmem [#allocation2], 194
        %v2009 = vld [vmem:[%s2008] ss:$2 sm:$0x7]
        %v2011 = vrot.slane %v2009, 5
        %2012 = vrot.lane.b32.xlu0 %v2011, 64
        %v2013 = vpop.permute.xlu0 %2012
        %2015 = vst.msk [vmem:[#allocation3 + $0x60] sm:$0x38] %vm1058, %v2013
        %s2016 = scalar_lea.vmem [#allocation2], 195
        %v2017 = vld [vmem:[%s2016] ss:$2 sm:$0x7]
        %v2019 = vrot.slane %v2017, 5
        %2020 = vrot.lane.b32.xlu0 %v2019, 96
        %v2021 = vpop.permute.xlu0 %2020
        %2023 = vst.msk [vmem:[#allocation3 + $0x60] sm:$0x38] %vm1066, %v2021
        %s2024 = scalar_lea.vmem [#allocation2], 200
        %v2025 = vld [vmem:[%s2024] ss:$2 sm:$0x7]
        %v2027 = vrot.slane %v2025, 5
        %2029 = vst.msk [vmem:[#allocation3 + $0x68] sm:$0x38] %vm1042, %v2027
        %s2030 = scalar_lea.vmem [#allocation2], 201
        %v2031 = vld [vmem:[%s2030] ss:$2 sm:$0x7]
        %v2033 = vrot.slane %v2031, 5
        %2034 = vrot.lane.b32.xlu0 %v2033, 32
        %v2035 = vpop.permute.xlu0 %2034
        %2037 = vst.msk [vmem:[#allocation3 + $0x68] sm:$0x38] %vm1050, %v2035
        %s2038 = scalar_lea.vmem [#allocation2], 202
        %v2039 = vld [vmem:[%s2038] ss:$2 sm:$0x7]
        %v2041 = vrot.slane %v2039, 5
        %2042 = vrot.lane.b32.xlu0 %v2041, 64
        %v2043 = vpop.permute.xlu0 %2042
        %2045 = vst.msk [vmem:[#allocation3 + $0x68] sm:$0x38] %vm1058, %v2043
        %s2046 = scalar_lea.vmem [#allocation2], 203
        %v2047 = vld [vmem:[%s2046] ss:$2 sm:$0x7]
        %v2049 = vrot.slane %v2047, 5
        %2050 = vrot.lane.b32.xlu0 %v2049, 96
        %v2051 = vpop.permute.xlu0 %2050
        %2053 = vst.msk [vmem:[#allocation3 + $0x68] sm:$0x38] %vm1066, %v2051
        %s2054 = scalar_lea.vmem [#allocation2], 208
        %v2055 = vld [vmem:[%s2054] ss:$2 sm:$0x7]
        %v2057 = vrot.slane %v2055, 5
        %2059 = vst.msk [vmem:[#allocation3 + $0x70] sm:$0x38] %vm1042, %v2057
        %s2060 = scalar_lea.vmem [#allocation2], 209
        %v2061 = vld [vmem:[%s2060] ss:$2 sm:$0x7]
        %v2063 = vrot.slane %v2061, 5
        %2064 = vrot.lane.b32.xlu0 %v2063, 32
        %v2065 = vpop.permute.xlu0 %2064
        %2067 = vst.msk [vmem:[#allocation3 + $0x70] sm:$0x38] %vm1050, %v2065
        %s2068 = scalar_lea.vmem [#allocation2], 210
        %v2069 = vld [vmem:[%s2068] ss:$2 sm:$0x7]
        %v2071 = vrot.slane %v2069, 5
        %2072 = vrot.lane.b32.xlu0 %v2071, 64
        %v2073 = vpop.permute.xlu0 %2072
        %2075 = vst.msk [vmem:[#allocation3 + $0x70] sm:$0x38] %vm1058, %v2073
        %s2076 = scalar_lea.vmem [#allocation2], 211
        %v2077 = vld [vmem:[%s2076] ss:$2 sm:$0x7]
        %v2079 = vrot.slane %v2077, 5
        %2080 = vrot.lane.b32.xlu0 %v2079, 96
        %v2081 = vpop.permute.xlu0 %2080
        %2083 = vst.msk [vmem:[#allocation3 + $0x70] sm:$0x38] %vm1066, %v2081
        %s2084 = scalar_lea.vmem [#allocation2], 216
        %v2085 = vld [vmem:[%s2084] ss:$2 sm:$0x7]
        %v2087 = vrot.slane %v2085, 5
        %2089 = vst.msk [vmem:[#allocation3 + $0x78] sm:$0x38] %vm1042, %v2087
        %s2090 = scalar_lea.vmem [#allocation2], 217
        %v2091 = vld [vmem:[%s2090] ss:$2 sm:$0x7]
        %v2093 = vrot.slane %v2091, 5
        %2094 = vrot.lane.b32.xlu0 %v2093, 32
        %v2095 = vpop.permute.xlu0 %2094
        %2097 = vst.msk [vmem:[#allocation3 + $0x78] sm:$0x38] %vm1050, %v2095
        %s2098 = scalar_lea.vmem [#allocation2], 218
        %v2099 = vld [vmem:[%s2098] ss:$2 sm:$0x7]
        %v2101 = vrot.slane %v2099, 5
        %2102 = vrot.lane.b32.xlu0 %v2101, 64
        %v2103 = vpop.permute.xlu0 %2102
        %2105 = vst.msk [vmem:[#allocation3 + $0x78] sm:$0x38] %vm1058, %v2103
        %s2106 = scalar_lea.vmem [#allocation2], 219
        %v2107 = vld [vmem:[%s2106] ss:$2 sm:$0x7]
        %v2109 = vrot.slane %v2107, 5
        %2110 = vrot.lane.b32.xlu0 %v2109, 96
        %v2111 = vpop.permute.xlu0 %2110
        %2113 = vst.msk [vmem:[#allocation3 + $0x78] sm:$0x38] %vm1066, %v2111
        %v2114 = vld [vmem:[%s2054] ss:$2 sm:$0x7]
        %v2116 = vrot.slane %v2114, 2
        %2118 = vst.msk [vmem:[#allocation3 + $0x60] sm:$0xc0] %vm1158, %v2116
        %2119 = vst.msk [vmem:[#allocation3 + $0x80] sm:$0x1] %vm1160, %v2116
        %v2120 = vld [vmem:[%s2060] ss:$2 sm:$0x7]
        %v2122 = vrot.slane %v2120, 2
        %2123 = vrot.lane.b32.xlu0 %v2122, 32
        %v2124 = vpop.permute.xlu0 %2123
        %2126 = vst.msk [vmem:[#allocation3 + $0x60] sm:$0xc0] %vm1168, %v2124
        %2127 = vst.msk [vmem:[#allocation3 + $0x80] sm:$0x1] %vm1170, %v2124
        %v2128 = vld [vmem:[%s2068] ss:$2 sm:$0x7]
        %v2130 = vrot.slane %v2128, 2
        %2131 = vrot.lane.b32.xlu0 %v2130, 64
        %v2132 = vpop.permute.xlu0 %2131
        %2134 = vst.msk [vmem:[#allocation3 + $0x60] sm:$0xc0] %vm1178, %v2132
        %2135 = vst.msk [vmem:[#allocation3 + $0x80] sm:$0x1] %vm1180, %v2132
        %v2136 = vld [vmem:[%s2076] ss:$2 sm:$0x7]
        %v2138 = vrot.slane %v2136, 2
        %2139 = vrot.lane.b32.xlu0 %v2138, 96
        %v2140 = vpop.permute.xlu0 %2139
        %2142 = vst.msk [vmem:[#allocation3 + $0x60] sm:$0xc0] %vm1188, %v2140
        %2143 = vst.msk [vmem:[#allocation3 + $0x80] sm:$0x1] %vm1190, %v2140
        %v2144 = vld [vmem:[%s2084] ss:$2 sm:$0x7]
        %v2146 = vrot.slane %v2144, 2
        %2148 = vst.msk [vmem:[#allocation3 + $0x68] sm:$0xc0] %vm1158, %v2146
        %2149 = vst.msk [vmem:[#allocation3 + $0x88] sm:$0x1] %vm1160, %v2146
        %v2150 = vld [vmem:[%s2090] ss:$2 sm:$0x7]
        %v2152 = vrot.slane %v2150, 2
        %2153 = vrot.lane.b32.xlu0 %v2152, 32
        %v2154 = vpop.permute.xlu0 %2153
        %2156 = vst.msk [vmem:[#allocation3 + $0x68] sm:$0xc0] %vm1168, %v2154
        %2157 = vst.msk [vmem:[#allocation3 + $0x88] sm:$0x1] %vm1170, %v2154
        %v2158 = vld [vmem:[%s2098] ss:$2 sm:$0x7]
        %v2160 = vrot.slane %v2158, 2
        %2161 = vrot.lane.b32.xlu0 %v2160, 64
        %v2162 = vpop.permute.xlu0 %2161
        %2164 = vst.msk [vmem:[#allocation3 + $0x68] sm:$0xc0] %vm1178, %v2162
        %2165 = vst.msk [vmem:[#allocation3 + $0x88] sm:$0x1] %vm1180, %v2162
        %v2166 = vld [vmem:[%s2106] ss:$2 sm:$0x7]
        %v2168 = vrot.slane %v2166, 2
        %2169 = vrot.lane.b32.xlu0 %v2168, 96
        %v2170 = vpop.permute.xlu0 %2169
        %2172 = vst.msk [vmem:[#allocation3 + $0x68] sm:$0xc0] %vm1188, %v2170
        %2173 = vst.msk [vmem:[#allocation3 + $0x88] sm:$0x1] %vm1190, %v2170
        %s2174 = scalar_lea.vmem [#allocation2], 224
        %v2175 = vld [vmem:[%s2174] ss:$2 sm:$0x7]
        %v2177 = vrot.slane %v2175, 2
        %2179 = vst.msk [vmem:[#allocation3 + $0x70] sm:$0xc0] %vm1158, %v2177
        %2180 = vst.msk [vmem:[#allocation3 + $0x90] sm:$0x1] %vm1160, %v2177
        %s2181 = scalar_lea.vmem [#allocation2], 225
        %v2182 = vld [vmem:[%s2181] ss:$2 sm:$0x7]
        %v2184 = vrot.slane %v2182, 2
        %2185 = vrot.lane.b32.xlu0 %v2184, 32
        %v2186 = vpop.permute.xlu0 %2185
        %2188 = vst.msk [vmem:[#allocation3 + $0x70] sm:$0xc0] %vm1168, %v2186
        %2189 = vst.msk [vmem:[#allocation3 + $0x90] sm:$0x1] %vm1170, %v2186
        %s2190 = scalar_lea.vmem [#allocation2], 226
        %v2191 = vld [vmem:[%s2190] ss:$2 sm:$0x7]
        %v2193 = vrot.slane %v2191, 2
        %2194 = vrot.lane.b32.xlu0 %v2193, 64
        %v2195 = vpop.permute.xlu0 %2194
        %2197 = vst.msk [vmem:[#allocation3 + $0x70] sm:$0xc0] %vm1178, %v2195
        %2198 = vst.msk [vmem:[#allocation3 + $0x90] sm:$0x1] %vm1180, %v2195
        %s2199 = scalar_lea.vmem [#allocation2], 227
        %v2200 = vld [vmem:[%s2199] ss:$2 sm:$0x7]
        %v2202 = vrot.slane %v2200, 2
        %2203 = vrot.lane.b32.xlu0 %v2202, 96
        %v2204 = vpop.permute.xlu0 %2203
        %2206 = vst.msk [vmem:[#allocation3 + $0x70] sm:$0xc0] %vm1188, %v2204
        %2207 = vst.msk [vmem:[#allocation3 + $0x90] sm:$0x1] %vm1190, %v2204
        %s2208 = scalar_lea.vmem [#allocation2], 232
        %v2209 = vld [vmem:[%s2208] ss:$2 sm:$0x7]
        %v2211 = vrot.slane %v2209, 2
        %2213 = vst.msk [vmem:[#allocation3 + $0x78] sm:$0xc0] %vm1158, %v2211
        %2214 = vst.msk [vmem:[#allocation3 + $0x98] sm:$0x1] %vm1160, %v2211
        %s2215 = scalar_lea.vmem [#allocation2], 233
        %v2216 = vld [vmem:[%s2215] ss:$2 sm:$0x7]
        %v2218 = vrot.slane %v2216, 2
        %2219 = vrot.lane.b32.xlu0 %v2218, 32
        %v2220 = vpop.permute.xlu0 %2219
        %2222 = vst.msk [vmem:[#allocation3 + $0x78] sm:$0xc0] %vm1168, %v2220
        %2223 = vst.msk [vmem:[#allocation3 + $0x98] sm:$0x1] %vm1170, %v2220
        %s2224 = scalar_lea.vmem [#allocation2], 234
        %v2225 = vld [vmem:[%s2224] ss:$2 sm:$0x7]
        %v2227 = vrot.slane %v2225, 2
        %2228 = vrot.lane.b32.xlu0 %v2227, 64
        %v2229 = vpop.permute.xlu0 %2228
        %2231 = vst.msk [vmem:[#allocation3 + $0x78] sm:$0xc0] %vm1178, %v2229
        %2232 = vst.msk [vmem:[#allocation3 + $0x98] sm:$0x1] %vm1180, %v2229
        %s2233 = scalar_lea.vmem [#allocation2], 235
        %v2234 = vld [vmem:[%s2233] ss:$2 sm:$0x7]
        %v2236 = vrot.slane %v2234, 2
        %2237 = vrot.lane.b32.xlu0 %v2236, 96
        %v2238 = vpop.permute.xlu0 %2237
        %2240 = vst.msk [vmem:[#allocation3 + $0x78] sm:$0xc0] %vm1188, %v2238
        %2241 = vst.msk [vmem:[#allocation3 + $0x98] sm:$0x1] %vm1190, %v2238
        %v2242 = vld [vmem:[%s2174] ss:$2 sm:$0x7]
        %v2244 = vrot.slane %v2242, 7
        %2246 = vst.msk [vmem:[#allocation3 + $0x80] sm:$0xe] %vm1295, %v2244
        %v2247 = vld [vmem:[%s2181] ss:$2 sm:$0x7]
        %v2249 = vrot.slane %v2247, 7
        %2250 = vrot.lane.b32.xlu0 %v2249, 32
        %v2251 = vpop.permute.xlu0 %2250
        %2253 = vst.msk [vmem:[#allocation3 + $0x80] sm:$0xe] %vm1304, %v2251
        %v2254 = vld [vmem:[%s2190] ss:$2 sm:$0x7]
        %v2256 = vrot.slane %v2254, 7
        %2257 = vrot.lane.b32.xlu0 %v2256, 64
        %v2258 = vpop.permute.xlu0 %2257
        %2260 = vst.msk [vmem:[#allocation3 + $0x80] sm:$0xe] %vm1313, %v2258
        %v2261 = vld [vmem:[%s2199] ss:$2 sm:$0x7]
        %v2263 = vrot.slane %v2261, 7
        %2264 = vrot.lane.b32.xlu0 %v2263, 96
        %v2265 = vpop.permute.xlu0 %2264
        %2267 = vst.msk [vmem:[#allocation3 + $0x80] sm:$0xe] %vm1322, %v2265
        %v2268 = vld [vmem:[%s2208] ss:$2 sm:$0x7]
        %v2270 = vrot.slane %v2268, 7
        %2272 = vst.msk [vmem:[#allocation3 + $0x88] sm:$0xe] %vm1295, %v2270
        %v2273 = vld [vmem:[%s2215] ss:$2 sm:$0x7]
        %v2275 = vrot.slane %v2273, 7
        %2276 = vrot.lane.b32.xlu0 %v2275, 32
        %v2277 = vpop.permute.xlu0 %2276
        %2279 = vst.msk [vmem:[#allocation3 + $0x88] sm:$0xe] %vm1304, %v2277
        %v2280 = vld [vmem:[%s2224] ss:$2 sm:$0x7]
        %v2282 = vrot.slane %v2280, 7
        %2283 = vrot.lane.b32.xlu0 %v2282, 64
        %v2284 = vpop.permute.xlu0 %2283
        %2286 = vst.msk [vmem:[#allocation3 + $0x88] sm:$0xe] %vm1313, %v2284
        %v2287 = vld [vmem:[%s2233] ss:$2 sm:$0x7]
        %v2289 = vrot.slane %v2287, 7
        %2290 = vrot.lane.b32.xlu0 %v2289, 96
        %v2291 = vpop.permute.xlu0 %2290
        %2293 = vst.msk [vmem:[#allocation3 + $0x88] sm:$0xe] %vm1322, %v2291
        %s2294 = scalar_lea.vmem [#allocation2], 240
        %v2295 = vld [vmem:[%s2294] ss:$2 sm:$0x7]
        %v2297 = vrot.slane %v2295, 7
        %2299 = vst.msk [vmem:[#allocation3 + $0x90] sm:$0xe] %vm1295, %v2297
        %s2300 = scalar_lea.vmem [#allocation2], 241
        %v2301 = vld [vmem:[%s2300] ss:$2 sm:$0x7]
        %v2303 = vrot.slane %v2301, 7
        %2304 = vrot.lane.b32.xlu0 %v2303, 32
        %v2305 = vpop.permute.xlu0 %2304
        %2307 = vst.msk [vmem:[#allocation3 + $0x90] sm:$0xe] %vm1304, %v2305
        %s2308 = scalar_lea.vmem [#allocation2], 242
        %v2309 = vld [vmem:[%s2308] ss:$2 sm:$0x7]
        %v2311 = vrot.slane %v2309, 7
        %2312 = vrot.lane.b32.xlu0 %v2311, 64
        %v2313 = vpop.permute.xlu0 %2312
        %2315 = vst.msk [vmem:[#allocation3 + $0x90] sm:$0xe] %vm1313, %v2313
        %s2316 = scalar_lea.vmem [#allocation2], 243
        %v2317 = vld [vmem:[%s2316] ss:$2 sm:$0x7]
        %v2319 = vrot.slane %v2317, 7
        %2320 = vrot.lane.b32.xlu0 %v2319, 96
        %v2321 = vpop.permute.xlu0 %2320
        %2323 = vst.msk [vmem:[#allocation3 + $0x90] sm:$0xe] %vm1322, %v2321
        %s2324 = scalar_lea.vmem [#allocation2], 248
        %v2325 = vld [vmem:[%s2324] ss:$2 sm:$0x7]
        %v2327 = vrot.slane %v2325, 7
        %2329 = vst.msk [vmem:[#allocation3 + $0x98] sm:$0xe] %vm1295, %v2327
        %s2330 = scalar_lea.vmem [#allocation2], 249
        %v2331 = vld [vmem:[%s2330] ss:$2 sm:$0x7]
        %v2333 = vrot.slane %v2331, 7
        %2334 = vrot.lane.b32.xlu0 %v2333, 32
        %v2335 = vpop.permute.xlu0 %2334
        %2337 = vst.msk [vmem:[#allocation3 + $0x98] sm:$0xe] %vm1304, %v2335
        %s2338 = scalar_lea.vmem [#allocation2], 250
        %v2339 = vld [vmem:[%s2338] ss:$2 sm:$0x7]
        %v2341 = vrot.slane %v2339, 7
        %2342 = vrot.lane.b32.xlu0 %v2341, 64
        %v2343 = vpop.permute.xlu0 %2342
        %2345 = vst.msk [vmem:[#allocation3 + $0x98] sm:$0xe] %vm1313, %v2343
        %s2346 = scalar_lea.vmem [#allocation2], 251
        %v2347 = vld [vmem:[%s2346] ss:$2 sm:$0x7]
        %v2349 = vrot.slane %v2347, 7
        %2350 = vrot.lane.b32.xlu0 %v2349, 96
        %v2351 = vpop.permute.xlu0 %2350
        %2353 = vst.msk [vmem:[#allocation3 + $0x98] sm:$0xe] %vm1322, %v2351
        %v2354 = vld [vmem:[#allocation3] sm:$0xff]
        %v2355 = vld [vmem:[#allocation3 + $0x8] sm:$0xff]
        %v2356 = vld [vmem:[#allocation3 + $0x10] sm:$0xff]
        %v2357 = vld [vmem:[#allocation3 + $0x18] sm:$0xff]
        %v2358 = vld [vmem:[#allocation3 + $0x20] sm:$0xff]
        %v2359 = vld [vmem:[#allocation3 + $0x28] sm:$0xff]
        %v2360 = vld [vmem:[#allocation3 + $0x30] sm:$0xff]
        %v2361 = vld [vmem:[#allocation3 + $0x38] sm:$0xff]
        %v2362 = vld [vmem:[#allocation3 + $0x40] sm:$0xff]
        %v2363 = vld [vmem:[#allocation3 + $0x48] sm:$0xff]
        %v2364 = vld [vmem:[#allocation3 + $0x50] sm:$0xff]
        %v2365 = vld [vmem:[#allocation3 + $0x58] sm:$0xff]
        %v2366 = vld [vmem:[#allocation3 + $0x60] sm:$0xff]
        %v2367 = vld [vmem:[#allocation3 + $0x68] sm:$0xff]
        %v2368 = vld [vmem:[#allocation3 + $0x70] sm:$0xff]
        %v2369 = vld [vmem:[#allocation3 + $0x78] sm:$0xff]
        %v2370 = vld [vmem:[#allocation3 + $0x80] sm:$0xf]
        %v2371 = vld [vmem:[#allocation3 + $0x88] sm:$0xf]
        %v2372 = vld [vmem:[#allocation3 + $0x90] sm:$0xf]
        %v2373 = vld [vmem:[#allocation3 + $0x98] sm:$0xf]
        %v2374 = vpack.c.bf16 %v2358, %v2354
        %v2375 = vpack.c.bf16 %v2359, %v2355
        %v2376 = vpack.c.bf16 %v2360, %v2356
        %v2377 = vpack.c.bf16 %v2361, %v2357
        %v2378 = vpack.c.bf16 %v2366, %v2362
        %v2379 = vpack.c.bf16 %v2367, %v2363
        %v2380 = vpack.c.bf16 %v2368, %v2364
        %v2381 = vpack.c.bf16 %v2369, %v2365
        %v2382 = vpack.c.bf16 %v2370, %v2370
        %v2383 = vpack.c.bf16 %v2371, %v2371
        %v2384 = vpack.c.bf16 %v2372, %v2372
        %v2385 = vpack.c.bf16 %v2373, %v2373
        %v2386 = vld [vmem:[%s3] sm:$0xf]
        %v2387 = vld [vmem:[%s3 + $0x4] sm:$0xf]
        %v2388 = vld [vmem:[%s3 + $0x8] sm:$0xf]
        %v2389 = vld [vmem:[%s3 + $0xc] sm:$0xf]
        %v2390 = vld [vmem:[%s3 + $0x10] sm:$0xf]
        %v2391 = vld [vmem:[%s3 + $0x14] sm:$0xf]
        %v2392 = vld [vmem:[%s3 + $0x18] sm:$0xf]
        %v2393 = vld [vmem:[%s3 + $0x1c] sm:$0xf]
        %v2394 = vld [vmem:[%s3 + $0x20] sm:$0xf]
        %v2395 = vld [vmem:[%s3 + $0x24] sm:$0xf]
        %v2396 = vld [vmem:[%s3 + $0x28] sm:$0xf]
        %v2397 = vld [vmem:[%s3 + $0x2c] sm:$0xf]
        %v2398 = vld [vmem:[%s3 + $0x30] sm:$0xf]
        %v2399 = vld [vmem:[%s3 + $0x34] sm:$0xf]
        %v2400 = vld [vmem:[%s3 + $0x38] sm:$0xf]
        %v2401 = vld [vmem:[%s3 + $0x3c] sm:$0xf]
        %v2402 = vld [vmem:[%s3 + $0x40] sm:$0xf]
        %v2403 = vld [vmem:[%s3 + $0x44] sm:$0xf]
        %v2404 = vld [vmem:[%s3 + $0x48] sm:$0xf]
        %v2405 = vld [vmem:[%s3 + $0x4c] sm:$0xf]
        %v2406 = vld [vmem:[%s3 + $0x50] sm:$0xf]
        %v2407 = vld [vmem:[%s3 + $0x54] sm:$0xf]
        %v2408 = vld [vmem:[%s3 + $0x58] sm:$0xf]
        %v2409 = vld [vmem:[%s3 + $0x5c] sm:$0xf]
        %v2410 = vld [vmem:[%s3 + $0x60] sm:$0xf]
        %v2411 = vld [vmem:[%s3 + $0x64] sm:$0xf]
        %v2412 = vld [vmem:[%s3 + $0x68] sm:$0xf]
        %v2413 = vld [vmem:[%s3 + $0x6c] sm:$0xf]
        %v2414 = vld [vmem:[%s3 + $0x70] sm:$0xf]
        %v2415 = vld [vmem:[%s3 + $0x74] sm:$0xf]
        %v2416 = vld [vmem:[%s3 + $0x78] sm:$0xf]
        %v2417 = vld [vmem:[%s3 + $0x7c] sm:$0xf]
        %v2418 = vld [vmem:[%s3 + $0x80] sm:$0xf]
        %v2419 = vld [vmem:[%s3 + $0x84] sm:$0xf]
        %v2420 = vld [vmem:[%s3 + $0x88] sm:$0xf]
        %v2421 = vld [vmem:[%s3 + $0x8c] sm:$0xf]
        %v2422 = vld [vmem:[%s3 + $0x90] sm:$0xf]
        %v2423 = vld [vmem:[%s3 + $0x94] sm:$0xf]
        %v2424 = vld [vmem:[%s3 + $0x98] sm:$0xf]
        %v2425 = vld [vmem:[%s3 + $0x9c] sm:$0xf]
        %v2426 = vld [vmem:[%s3 + $0xa0] sm:$0xf]
        %v2427 = vld [vmem:[%s3 + $0xa4] sm:$0xf]
        %v2428 = vld [vmem:[%s3 + $0xa8] sm:$0xf]
        %v2429 = vld [vmem:[%s3 + $0xac] sm:$0xf]
        %v2430 = vld [vmem:[%s3 + $0xb0] sm:$0xf]
        %v2431 = vld [vmem:[%s3 + $0xb4] sm:$0xf]
        %v2432 = vld [vmem:[%s3 + $0xb8] sm:$0xf]
        %v2433 = vld [vmem:[%s3 + $0xbc] sm:$0xf]
        %v2434 = vld [vmem:[%s3 + $0xc0] sm:$0xf]
        %v2435 = vld [vmem:[%s3 + $0xc4] sm:$0xf]
        %v2436 = vld [vmem:[%s3 + $0xc8] sm:$0xf]
        %v2437 = vld [vmem:[%s3 + $0xcc] sm:$0xf]
        %v2438 = vld [vmem:[%s3 + $0xd0] sm:$0xf]
        %v2439 = vld [vmem:[%s3 + $0xd4] sm:$0xf]
        %v2440 = vld [vmem:[%s3 + $0xd8] sm:$0xf]
        %v2441 = vld [vmem:[%s3 + $0xdc] sm:$0xf]
        %v2442 = vld [vmem:[%s3 + $0xe0] sm:$0xf]
        %v2443 = vld [vmem:[%s3 + $0xe4] sm:$0xf]
        %v2444 = vld [vmem:[%s3 + $0xe8] sm:$0xf]
        %v2445 = vld [vmem:[%s3 + $0xec] sm:$0xf]
        %v2446 = vld [vmem:[%s3 + $0xf0] sm:$0xf]
        %v2447 = vld [vmem:[%s3 + $0xf4] sm:$0xf]
        %v2448 = vld [vmem:[%s3 + $0xf8] sm:$0xf]
        %v2449 = vld [vmem:[%s3 + $0xfc] sm:$0xf]
        %v2450 = vld [vmem:[%s4] sm:$0x1]
        %v2452 = vlaneseq
        %v2453 = vshrl.u32 %v2452, 7
        %v2454 = vsub.s32 0, %v2453
        %v2455 = vrot.slane %v2450, %v2454
        %v2521 = vunpack.c.l.b16 %v2386
        %v2522 = vunpack.c.l.b16 %v2387
        %v2523 = vunpack.c.l.b16 %v2388
        %v2524 = vunpack.c.l.b16 %v2389
        %v2525 = vunpack.c.l.b16 %v2390
        %v2526 = vunpack.c.l.b16 %v2391
        %v2527 = vunpack.c.l.b16 %v2392
        %v2528 = vunpack.c.l.b16 %v2393
        %v2529 = vunpack.c.l.b16 %v2394
        %v2530 = vunpack.c.l.b16 %v2395
        %v2531 = vunpack.c.l.b16 %v2396
        %v2532 = vunpack.c.l.b16 %v2397
        %v2533 = vunpack.c.l.b16 %v2398
        %v2534 = vunpack.c.l.b16 %v2399
        %v2535 = vunpack.c.l.b16 %v2400
        %v2536 = vunpack.c.l.b16 %v2401
        %v2537 = vunpack.c.l.b16 %v2402
        %v2538 = vunpack.c.l.b16 %v2403
        %v2539 = vunpack.c.l.b16 %v2404
        %v2540 = vunpack.c.l.b16 %v2405
        %v2541 = vunpack.c.l.b16 %v2406
        %v2542 = vunpack.c.l.b16 %v2407
        %v2543 = vunpack.c.l.b16 %v2408
        %v2544 = vunpack.c.l.b16 %v2409
        %v2545 = vunpack.c.l.b16 %v2410
        %v2546 = vunpack.c.l.b16 %v2411
        %v2547 = vunpack.c.l.b16 %v2412
        %v2548 = vunpack.c.l.b16 %v2413
        %v2549 = vunpack.c.l.b16 %v2414
        %v2550 = vunpack.c.l.b16 %v2415
        %v2551 = vunpack.c.l.b16 %v2416
        %v2552 = vunpack.c.l.b16 %v2417
        %v2553 = vunpack.c.l.b16 %v2418
        %v2554 = vunpack.c.l.b16 %v2419
        %v2555 = vunpack.c.l.b16 %v2420
        %v2556 = vunpack.c.l.b16 %v2421
        %v2557 = vunpack.c.l.b16 %v2422
        %v2558 = vunpack.c.l.b16 %v2423
        %v2559 = vunpack.c.l.b16 %v2424
        %v2560 = vunpack.c.l.b16 %v2425
        %v2561 = vunpack.c.l.b16 %v2426
        %v2562 = vunpack.c.l.b16 %v2427
        %v2563 = vunpack.c.l.b16 %v2428
        %v2564 = vunpack.c.l.b16 %v2429
        %v2565 = vunpack.c.l.b16 %v2430
        %v2566 = vunpack.c.l.b16 %v2431
        %v2567 = vunpack.c.l.b16 %v2432
        %v2568 = vunpack.c.l.b16 %v2433
        %v2569 = vunpack.c.l.b16 %v2434
        %v2570 = vunpack.c.l.b16 %v2435
        %v2571 = vunpack.c.l.b16 %v2436
        %v2572 = vunpack.c.l.b16 %v2437
        %v2573 = vunpack.c.l.b16 %v2438
        %v2574 = vunpack.c.l.b16 %v2439
        %v2575 = vunpack.c.l.b16 %v2440
        %v2576 = vunpack.c.l.b16 %v2441
        %v2577 = vunpack.c.l.b16 %v2442
        %v2578 = vunpack.c.l.b16 %v2443
        %v2579 = vunpack.c.l.b16 %v2444
        %v2580 = vunpack.c.l.b16 %v2445
        %v2581 = vunpack.c.l.b16 %v2446
        %v2582 = vunpack.c.l.b16 %v2447
        %v2583 = vunpack.c.l.b16 %v2448
        %v2584 = vunpack.c.l.b16 %v2449
        %v2585 = vpack.c.b16 %v2522, %v2521
        %v2586 = vpack.c.b16 %v2524, %v2523
        %v2587 = vpack.c.b16 %v2526, %v2525
        %v2588 = vpack.c.b16 %v2528, %v2527
        %v2589 = vpack.c.b16 %v2530, %v2529
        %v2590 = vpack.c.b16 %v2532, %v2531
        %v2591 = vpack.c.b16 %v2534, %v2533
        %v2592 = vpack.c.b16 %v2536, %v2535
        %v2593 = vpack.c.b16 %v2538, %v2537
        %v2594 = vpack.c.b16 %v2540, %v2539
        %v2595 = vpack.c.b16 %v2542, %v2541
        %v2596 = vpack.c.b16 %v2544, %v2543
        %v2597 = vpack.c.b16 %v2546, %v2545
        %v2598 = vpack.c.b16 %v2548, %v2547
        %v2599 = vpack.c.b16 %v2550, %v2549
        %v2600 = vpack.c.b16 %v2552, %v2551
        %v2601 = vpack.c.b16 %v2554, %v2553
        %v2602 = vpack.c.b16 %v2556, %v2555
        %v2603 = vpack.c.b16 %v2558, %v2557
        %v2604 = vpack.c.b16 %v2560, %v2559
        %v2605 = vpack.c.b16 %v2562, %v2561
        %v2606 = vpack.c.b16 %v2564, %v2563
        %v2607 = vpack.c.b16 %v2566, %v2565
        %v2608 = vpack.c.b16 %v2568, %v2567
        %v2609 = vpack.c.b16 %v2570, %v2569
        %v2610 = vpack.c.b16 %v2572, %v2571
        %v2611 = vpack.c.b16 %v2574, %v2573
        %v2612 = vpack.c.b16 %v2576, %v2575
        %v2613 = vpack.c.b16 %v2578, %v2577
        %v2614 = vpack.c.b16 %v2580, %v2579
        %v2615 = vpack.c.b16 %v2582, %v2581
        %v2616 = vpack.c.b16 %v2584, %v2583
        %2649 = vmatprep.subr.bf16.mxu0 0
        %2650 = vmatpush1.bf16.msra.mxu0 %v2585
        %2651 = vmatprep.subr.bf16.mxu0 0
        %2652 = vmatpush1.bf16.msra.mxu0 %v2586
        %2653 = vmatprep.subr.bf16.mxu0 0
        %2654 = vmatpush1.bf16.msra.mxu0 %v2587
        %2655 = vmatprep.subr.bf16.mxu0 0
        %2656 = vmatpush1.bf16.msra.mxu0 %v2588
        %2657 = vmatprep.subr.bf16.mxu0 0
        %2658 = vmatpush1.bf16.msra.mxu0 %v2589
        %2659 = vmatprep.subr.bf16.mxu0 0
        %2660 = vmatpush1.bf16.msra.mxu0 %v2590
        %2661 = vmatprep.subr.bf16.mxu0 0
        %2662 = vmatpush1.bf16.msra.mxu0 %v2591
        %2663 = vmatprep.subr.bf16.mxu0 0
        %2664 = vmatpush1.bf16.msra.mxu0 %v2592
        %2665 = vmatprep.subr.bf16.mxu0 0
        %2666 = vmatpush1.bf16.msra.mxu0 %v2593
        %2667 = vmatprep.subr.bf16.mxu0 0
        %2668 = vmatpush1.bf16.msra.mxu0 %v2594
        %2669 = vmatprep.subr.bf16.mxu0 0
        %2670 = vmatpush1.bf16.msra.mxu0 %v2595
        %2671 = vmatprep.subr.bf16.mxu0 0
        %2672 = vmatpush1.bf16.msra.mxu0 %v2596
        %2673 = vmatprep.subr.bf16.mxu0 0
        %2674 = vmatpush1.bf16.msra.mxu0 %v2597
        %2675 = vmatprep.subr.bf16.mxu0 0
        %2676 = vmatpush1.bf16.msra.mxu0 %v2598
        %2677 = vmatprep.subr.bf16.mxu0 0
        %2678 = vmatpush1.bf16.msra.mxu0 %v2599
        %2679 = vmatprep.subr.bf16.mxu0 0
        %2680 = vmatpush1.bf16.msra.mxu0 %v2600
        %2681 = vmatprep.mubr.bf16.mxu0 %v2375
        %2682 = vmatmul.mubr.bf16.gmra.mrb[0].mxu0 %v2374
        %v2683 = vpop.f32.mrb[0].mxu0
        %v2684 = vadd.f32 %v2455, %v2683
        %v2685 = vpop.f32.mrb[0].mxu0
        %v2686 = vpop.f32.mrb[0].mxu0
        %v2687 = vadd.f32 %v2455, %v2686
        %v2688 = vpop.f32.mrb[0].mxu0
        %2689 = vmatprep.mubr.bf16.mxu0 %v2379
        %2690 = vmatmul.mubr.bf16.gmra.mrb[0].mxu0 %v2378
        %v2691 = vpop.f32.mrb[0].mxu0
        %v2692 = vadd.f32 %v2455, %v2691
        %v2693 = vpop.f32.mrb[0].mxu0
        %v2694 = vpop.f32.mrb[0].mxu0
        %v2695 = vadd.f32 %v2455, %v2694
        %v2696 = vpop.f32.mrb[0].mxu0
        %2697 = vmatprep.mubr.bf16.mxu0 %v2383
        %2698 = vmatmul.mubr.bf16.gmra.mrb[0].mxu0 %v2382
        %v2699 = vpop.f32.mrb[0].mxu0
        %v2700 = vadd.f32 %v2455, %v2699
        %v2701 = vpop.f32.mrb[0].mxu0
        %v2702 = vpop.f32.mrb[0].mxu0
        %v2703 = vpop.f32.mrb[0].mxu0
        %2704 = vdwg.mxu0
        %2705 = vmatprep.subr.bf16.mxu0 0
        %2706 = vmatpush1.bf16.msra.mxu0 %v2601
        %2707 = vmatprep.subr.bf16.mxu0 0
        %2708 = vmatpush1.bf16.msra.mxu0 %v2602
        %2709 = vmatprep.subr.bf16.mxu0 0
        %2710 = vmatpush1.bf16.msra.mxu0 %v2603
        %2711 = vmatprep.subr.bf16.mxu0 0
        %2712 = vmatpush1.bf16.msra.mxu0 %v2604
        %2713 = vmatprep.subr.bf16.mxu0 0
        %2714 = vmatpush1.bf16.msra.mxu0 %v2605
        %2715 = vmatprep.subr.bf16.mxu0 0
        %2716 = vmatpush1.bf16.msra.mxu0 %v2606
        %2717 = vmatprep.subr.bf16.mxu0 0
        %2718 = vmatpush1.bf16.msra.mxu0 %v2607
        %2719 = vmatprep.subr.bf16.mxu0 0
        %2720 = vmatpush1.bf16.msra.mxu0 %v2608
        %2721 = vmatprep.subr.bf16.mxu0 0
        %2722 = vmatpush1.bf16.msra.mxu0 %v2609
        %2723 = vmatprep.subr.bf16.mxu0 0
        %2724 = vmatpush1.bf16.msra.mxu0 %v2610
        %2725 = vmatprep.subr.bf16.mxu0 0
        %2726 = vmatpush1.bf16.msra.mxu0 %v2611
        %2727 = vmatprep.subr.bf16.mxu0 0
        %2728 = vmatpush1.bf16.msra.mxu0 %v2612
        %2729 = vmatprep.subr.bf16.mxu0 0
        %2730 = vmatpush1.bf16.msra.mxu0 %v2613
        %2731 = vmatprep.subr.bf16.mxu0 0
        %2732 = vmatpush1.bf16.msra.mxu0 %v2614
        %2733 = vmatprep.subr.bf16.mxu0 0
        %2734 = vmatpush1.bf16.msra.mxu0 %v2615
        %2735 = vmatprep.subr.bf16.mxu0 0
        %2736 = vmatpush1.bf16.msra.mxu0 %v2616
        %2737 = vmatprep.mubr.bf16.mxu0 %v2377
        %2738 = vmatmul.mubr.bf16.gmra.mrb[0].mxu0 %v2376
        %v2739 = vpop.f32.mrb[0].mxu0
        %v2740 = vadd.f32 %v2684, %v2739
        %v2741 = vpop.f32.mrb[0].mxu0
        %v2742 = vpop.f32.mrb[0].mxu0
        %v2743 = vadd.f32 %v2687, %v2742
        %v2744 = vpop.f32.mrb[0].mxu0
        %2745 = vmatprep.mubr.bf16.mxu0 %v2381
        %2746 = vmatmul.mubr.bf16.gmra.mrb[0].mxu0 %v2380
        %v2747 = vpop.f32.mrb[0].mxu0
        %v2748 = vadd.f32 %v2692, %v2747
        %v2749 = vpop.f32.mrb[0].mxu0
        %v2750 = vpop.f32.mrb[0].mxu0
        %v2751 = vadd.f32 %v2695, %v2750
        %v2752 = vpop.f32.mrb[0].mxu0
        %2753 = vmatprep.mubr.bf16.mxu0 %v2385
        %2754 = vmatmul.mubr.bf16.gmra.mrb[0].mxu0 %v2384
        %v2755 = vpop.f32.mrb[0].mxu0
        %v2756 = vadd.f32 %v2700, %v2755
        %v2757 = vpop.f32.mrb[0].mxu0
        %v2758 = vpop.f32.mrb[0].mxu0
        %v2759 = vpop.f32.mrb[0].mxu0
        %2760 = vdwg.mxu0
        %v2761 = vmax.f32 %v2740, 0.0
        %v2762 = vmax.f32 %v2743, 0.0
        %v2763 = vmax.f32 %v2748, 0.0
        %v2764 = vmax.f32 %v2751, 0.0
        %v2765 = vmax.f32 %v2756, 0.0
        %vm2766 = vcmask 516096
        %2767 = vst.msk [vmem:[#allocation4] sm:$0x1] %vm2766, %v2761
        %v2769 = vrot.slane %v2761, 5
        %v2770 = vrot.slane %v2769, 4
        %2771 = vrot.lane.b32.xlu0 %v2770, 64
        %v2772 = vpop.permute.xlu0 %2771
        %vm2774 = vcmask 1040896
        %2775 = vst.msk [vmem:[#allocation4] sm:$0x1] %vm2774, %v2772
        %v2776 = vrot.slane %v2761, 6
        %v2777 = vrot.slane %v2776, 4
        %2779 = vst.msk [vmem:[#allocation4 + $0x4] sm:$0x1] %vm2766, %v2777
        %v2780 = vrot.slane %v2761, 7
        %v2781 = vrot.slane %v2780, 4
        %2782 = vrot.lane.b32.xlu0 %v2781, 64
        %v2783 = vpop.permute.xlu0 %2782
        %2785 = vst.msk [vmem:[#allocation4 + $0x4] sm:$0x1] %vm2774, %v2783
        %v2786 = vcombine.high %v2761, %v2761
        %2788 = vst.msk [vmem:[#allocation4 + $0x8] sm:$0x1] %vm2766, %v2786
        %v2789 = vrot.slane %v2786, 5
        %v2790 = vrot.slane %v2789, 4
        %2791 = vrot.lane.b32.xlu0 %v2790, 64
        %v2792 = vpop.permute.xlu0 %2791
        %2794 = vst.msk [vmem:[#allocation4 + $0x8] sm:$0x1] %vm2774, %v2792
        %v2795 = vrot.slane %v2786, 6
        %v2796 = vrot.slane %v2795, 4
        %2798 = vst.msk [vmem:[#allocation4 + $0xc] sm:$0x1] %vm2766, %v2796
        %v2799 = vrot.slane %v2786, 7
        %v2800 = vrot.slane %v2799, 4
        %2801 = vrot.lane.b32.xlu0 %v2800, 64
        %v2802 = vpop.permute.xlu0 %2801
        %2804 = vst.msk [vmem:[#allocation4 + $0xc] sm:$0x1] %vm2774, %v2802
        %2805 = vst.msk [vmem:[#allocation4 + $0x10] sm:$0x1] %vm2766, %v2762
        %v2807 = vrot.slane %v2762, 5
        %v2808 = vrot.slane %v2807, 4
        %2810 = vst.msk [vmem:[#allocation4 + $0x1] sm:$0x1] %vm2766, %v2808
        %v2811 = vrot.slane %v2762, 6
        %v2812 = vrot.slane %v2811, 4
        %2813 = vrot.lane.b32.xlu0 %v2812, 64
        %v2814 = vpop.permute.xlu0 %2813
        %2816 = vst.msk [vmem:[#allocation4 + $0x1] sm:$0x1] %vm2774, %v2814
        %v2817 = vrot.slane %v2762, 7
        %v2818 = vrot.slane %v2817, 4
        %2820 = vst.msk [vmem:[#allocation4 + $0x5] sm:$0x1] %vm2766, %v2818
        %v2821 = vcombine.high %v2762, %v2762
        %2822 = vrot.lane.b32.xlu0 %v2821, 64
        %v2823 = vpop.permute.xlu0 %2822
        %2825 = vst.msk [vmem:[#allocation4 + $0x5] sm:$0x1] %vm2774, %v2823
        %v2826 = vrot.slane %v2821, 5
        %v2827 = vrot.slane %v2826, 4
        %2829 = vst.msk [vmem:[#allocation4 + $0x9] sm:$0x1] %vm2766, %v2827
        %v2830 = vrot.slane %v2821, 6
        %v2831 = vrot.slane %v2830, 4
        %2832 = vrot.lane.b32.xlu0 %v2831, 64
        %v2833 = vpop.permute.xlu0 %2832
        %2835 = vst.msk [vmem:[#allocation4 + $0x9] sm:$0x1] %vm2774, %v2833
        %v2836 = vrot.slane %v2821, 7
        %v2837 = vrot.slane %v2836, 4
        %2839 = vst.msk [vmem:[#allocation4 + $0xd] sm:$0x1] %vm2766, %v2837
        %2841 = vrot.lane.b32.xlu0 %v2763, 64
        %v2842 = vpop.permute.xlu0 %2841
        %2844 = vst.msk [vmem:[#allocation4 + $0xd] sm:$0x1] %vm2774, %v2842
        %v2845 = vrot.slane %v2763, 5
        %v2846 = vrot.slane %v2845, 4
        %2848 = vst.msk [vmem:[#allocation4 + $0x11] sm:$0x1] %vm2766, %v2846
        %v2849 = vrot.slane %v2763, 6
        %v2850 = vrot.slane %v2849, 4
        %2852 = vst.msk [vmem:[#allocation4 + $0x2] sm:$0x1] %vm2766, %v2850
        %v2853 = vrot.slane %v2763, 7
        %v2854 = vrot.slane %v2853, 4
        %2855 = vrot.lane.b32.xlu0 %v2854, 64
        %v2856 = vpop.permute.xlu0 %2855
        %2858 = vst.msk [vmem:[#allocation4 + $0x2] sm:$0x1] %vm2774, %v2856
        %v2859 = vcombine.high %v2763, %v2763
        %2861 = vst.msk [vmem:[#allocation4 + $0x6] sm:$0x1] %vm2766, %v2859
        %v2862 = vrot.slane %v2859, 5
        %v2863 = vrot.slane %v2862, 4
        %2864 = vrot.lane.b32.xlu0 %v2863, 64
        %v2865 = vpop.permute.xlu0 %2864
        %2867 = vst.msk [vmem:[#allocation4 + $0x6] sm:$0x1] %vm2774, %v2865
        %v2868 = vrot.slane %v2859, 6
        %v2869 = vrot.slane %v2868, 4
        %2871 = vst.msk [vmem:[#allocation4 + $0xa] sm:$0x1] %vm2766, %v2869
        %v2872 = vrot.slane %v2859, 7
        %v2873 = vrot.slane %v2872, 4
        %2874 = vrot.lane.b32.xlu0 %v2873, 64
        %v2875 = vpop.permute.xlu0 %2874
        %2877 = vst.msk [vmem:[#allocation4 + $0xa] sm:$0x1] %vm2774, %v2875
        %2878 = vst.msk [vmem:[#allocation4 + $0xe] sm:$0x1] %vm2766, %v2764
        %v2880 = vrot.slane %v2764, 5
        %v2881 = vrot.slane %v2880, 4
        %2882 = vrot.lane.b32.xlu0 %v2881, 64
        %v2883 = vpop.permute.xlu0 %2882
        %2885 = vst.msk [vmem:[#allocation4 + $0xe] sm:$0x1] %vm2774, %v2883
        %v2886 = vrot.slane %v2764, 6
        %v2887 = vrot.slane %v2886, 4
        %2889 = vst.msk [vmem:[#allocation4 + $0x12] sm:$0x1] %vm2766, %v2887
        %v2890 = vrot.slane %v2764, 7
        %v2891 = vrot.slane %v2890, 4
        %2893 = vst.msk [vmem:[#allocation4 + $0x3] sm:$0x1] %vm2766, %v2891
        %v2894 = vcombine.high %v2764, %v2764
        %2895 = vrot.lane.b32.xlu0 %v2894, 64
        %v2896 = vpop.permute.xlu0 %2895
        %2898 = vst.msk [vmem:[#allocation4 + $0x3] sm:$0x1] %vm2774, %v2896
        %v2899 = vrot.slane %v2894, 5
        %v2900 = vrot.slane %v2899, 4
        %2902 = vst.msk [vmem:[#allocation4 + $0x7] sm:$0x1] %vm2766, %v2900
        %v2903 = vrot.slane %v2894, 6
        %v2904 = vrot.slane %v2903, 4
        %2905 = vrot.lane.b32.xlu0 %v2904, 64
        %v2906 = vpop.permute.xlu0 %2905
        %2908 = vst.msk [vmem:[#allocation4 + $0x7] sm:$0x1] %vm2774, %v2906
        %v2909 = vrot.slane %v2894, 7
        %v2910 = vrot.slane %v2909, 4
        %2912 = vst.msk [vmem:[#allocation4 + $0xb] sm:$0x1] %vm2766, %v2910
        %2914 = vrot.lane.b32.xlu0 %v2765, 64
        %v2915 = vpop.permute.xlu0 %2914
        %2917 = vst.msk [vmem:[#allocation4 + $0xb] sm:$0x1] %vm2774, %v2915
        %v2918 = vrot.slane %v2765, 5
        %v2919 = vrot.slane %v2918, 4
        %2921 = vst.msk [vmem:[#allocation4 + $0xf] sm:$0x1] %vm2766, %v2919
        %v2922 = vrot.slane %v2765, 6
        %v2923 = vrot.slane %v2922, 4
        %2924 = vrot.lane.b32.xlu0 %v2923, 64
        %v2925 = vpop.permute.xlu0 %2924
        %2927 = vst.msk [vmem:[#allocation4 + $0xf] sm:$0x1] %vm2774, %v2925
        %v2928 = vrot.slane %v2765, 7
        %v2929 = vrot.slane %v2928, 4
        %2931 = vst.msk [vmem:[#allocation4 + $0x13] sm:$0x1] %vm2766, %v2929
        %v2932 = vld [vmem:[#allocation4] sm:$0xff]
        %v2933 = vld [vmem:[#allocation4 + $0x8] sm:$0xff]
        %v2934 = vld [vmem:[#allocation4 + $0x10] sm:$0xf]
        %v2937 = vcombine.high %v2932, %v2932
        %v2938 = vcombine.high %v2933, %v2933
        %v2941 = vpack.c.bf16 %v2932, %v2932
        %v2942 = vpack.c.bf16 %v2937, %v2937
        %v2943 = vpack.c.bf16 %v2933, %v2933
        %v2944 = vpack.c.bf16 %v2938, %v2938
        %v2945 = vpack.c.bf16 %v2934, %v2934
        %v2946 = vld [vmem:[%s5] sm:$0xf]
        %v2947 = vld [vmem:[%s5 + $0x4] sm:$0xf]
        %v2948 = vld [vmem:[%s5 + $0x8] sm:$0xf]
        %v2949 = vld [vmem:[%s5 + $0xc] sm:$0xf]
        %v2950 = vld [vmem:[%s5 + $0x10] sm:$0xf]
        %v2951 = vld [vmem:[%s5 + $0x14] sm:$0xf]
        %v2952 = vld [vmem:[%s5 + $0x18] sm:$0xf]
        %v2953 = vld [vmem:[%s5 + $0x1c] sm:$0xf]
        %v2954 = vld [vmem:[%s5 + $0x20] sm:$0xf]
        %v2955 = vld [vmem:[%s5 + $0x24] sm:$0xf]
        %v2956 = vld [vmem:[%s5 + $0x28] sm:$0xf]
        %v2957 = vld [vmem:[%s5 + $0x2c] sm:$0xf]
        %v2958 = vld [vmem:[%s5 + $0x30] sm:$0xf]
        %v2959 = vld [vmem:[%s5 + $0x34] sm:$0xf]
        %v2960 = vld [vmem:[%s5 + $0x38] sm:$0xf]
        %v2961 = vld [vmem:[%s5 + $0x3c] sm:$0xf]
        %v2962 = vld [vmem:[%s5 + $0x40] sm:$0xf]
        %v2963 = vld [vmem:[%s5 + $0x44] sm:$0xf]
        %v2964 = vld [vmem:[%s5 + $0x48] sm:$0xf]
        %v2965 = vld [vmem:[%s5 + $0x4c] sm:$0xf]
        %v2966 = vld [vmem:[%s5 + $0x50] sm:$0xf]
        %v2967 = vld [vmem:[%s5 + $0x54] sm:$0xf]
        %v2968 = vld [vmem:[%s5 + $0x58] sm:$0xf]
        %v2969 = vld [vmem:[%s5 + $0x5c] sm:$0xf]
        %v2970 = vld [vmem:[%s5 + $0x60] sm:$0xf]
        %v2971 = vld [vmem:[%s5 + $0x64] sm:$0xf]
        %v2972 = vld [vmem:[%s5 + $0x68] sm:$0xf]
        %v2973 = vld [vmem:[%s5 + $0x6c] sm:$0xf]
        %v2974 = vld [vmem:[%s5 + $0x70] sm:$0xf]
        %v2975 = vld [vmem:[%s5 + $0x74] sm:$0xf]
        %v2976 = vld [vmem:[%s5 + $0x78] sm:$0xf]
        %v2977 = vld [vmem:[%s5 + $0x7c] sm:$0xf]
        %v2978 = vld [vmem:[%s5 + $0x80] sm:$0xf]
        %v2979 = vld [vmem:[%s5 + $0x84] sm:$0xf]
        %v2980 = vld [vmem:[%s5 + $0x88] sm:$0xf]
        %v2981 = vld [vmem:[%s5 + $0x8c] sm:$0xf]
        %v2982 = vld [vmem:[%s5 + $0x90] sm:$0xf]
        %v2983 = vld [vmem:[%s5 + $0x94] sm:$0xf]
        %v2984 = vld [vmem:[%s5 + $0x98] sm:$0xf]
        %v2985 = vld [vmem:[%s5 + $0x9c] sm:$0xf]
        %v2986 = vld [vmem:[%s5 + $0xa0] sm:$0xf]
        %v2987 = vld [vmem:[%s5 + $0xa4] sm:$0xf]
        %v2988 = vld [vmem:[%s5 + $0xa8] sm:$0xf]
        %v2989 = vld [vmem:[%s5 + $0xac] sm:$0xf]
        %v2990 = vld [vmem:[%s5 + $0xb0] sm:$0xf]
        %v2991 = vld [vmem:[%s5 + $0xb4] sm:$0xf]
        %v2992 = vld [vmem:[%s5 + $0xb8] sm:$0xf]
        %v2993 = vld [vmem:[%s5 + $0xbc] sm:$0xf]
        %v2994 = vld [vmem:[%s5 + $0xc0] sm:$0xf]
        %v2995 = vld [vmem:[%s5 + $0xc4] sm:$0xf]
        %v2996 = vld [vmem:[%s5 + $0xc8] sm:$0xf]
        %v2997 = vld [vmem:[%s5 + $0xcc] sm:$0xf]
        %v2998 = vld [vmem:[%s5 + $0xd0] sm:$0xf]
        %v2999 = vld [vmem:[%s5 + $0xd4] sm:$0xf]
        %v3000 = vld [vmem:[%s5 + $0xd8] sm:$0xf]
        %v3001 = vld [vmem:[%s5 + $0xdc] sm:$0xf]
        %v3002 = vld [vmem:[%s5 + $0xe0] sm:$0xf]
        %v3003 = vld [vmem:[%s5 + $0xe4] sm:$0xf]
        %v3004 = vld [vmem:[%s5 + $0xe8] sm:$0xf]
        %v3005 = vld [vmem:[%s5 + $0xec] sm:$0xf]
        %v3006 = vld [vmem:[%s5 + $0xf0] sm:$0xf]
        %v3007 = vld [vmem:[%s5 + $0xf4] sm:$0xf]
        %v3008 = vld [vmem:[%s5 + $0xf8] sm:$0xf]
        %v3009 = vld [vmem:[%s5 + $0xfc] sm:$0xf]
        %v3010 = vld [vmem:[%s5 + $0x100] sm:$0xf]
        %v3011 = vld [vmem:[%s5 + $0x104] sm:$0xf]
        %v3012 = vld [vmem:[%s5 + $0x108] sm:$0xf]
        %v3013 = vld [vmem:[%s5 + $0x10c] sm:$0xf]
        %v3014 = vld [vmem:[%s5 + $0x110] sm:$0xf]
        %v3015 = vld [vmem:[%s5 + $0x114] sm:$0xf]
        %v3016 = vld [vmem:[%s5 + $0x118] sm:$0xf]
        %v3017 = vld [vmem:[%s5 + $0x11c] sm:$0xf]
        %v3018 = vld [vmem:[%s6] sm:$0x1]
        %v3020 = vlaneseq
        %v3021 = vshrl.u32 %v3020, 7
        %v3022 = vsub.s32 0, %v3021
        %v3023 = vrot.slane %v3018, %v3022
        %v3097 = vunpack.c.l.b16 %v2946
        %v3098 = vunpack.c.l.b16 %v2947
        %v3099 = vunpack.c.l.b16 %v2948
        %v3100 = vunpack.c.l.b16 %v2949
        %v3101 = vunpack.c.l.b16 %v2950
        %v3102 = vunpack.c.l.b16 %v2951
        %v3103 = vunpack.c.l.b16 %v2952
        %v3104 = vunpack.c.l.b16 %v2953
        %v3105 = vunpack.c.l.b16 %v2954
        %v3106 = vunpack.c.l.b16 %v2955
        %v3107 = vunpack.c.l.b16 %v2956
        %v3108 = vunpack.c.l.b16 %v2957
        %v3109 = vunpack.c.l.b16 %v2958
        %v3110 = vunpack.c.l.b16 %v2959
        %v3111 = vunpack.c.l.b16 %v2960
        %v3112 = vunpack.c.l.b16 %v2961
        %v3113 = vunpack.c.l.b16 %v2962
        %v3114 = vunpack.c.l.b16 %v2963
        %v3115 = vunpack.c.l.b16 %v2964
        %v3116 = vunpack.c.l.b16 %v2965
        %v3117 = vunpack.c.l.b16 %v2966
        %v3118 = vunpack.c.l.b16 %v2967
        %v3119 = vunpack.c.l.b16 %v2968
        %v3120 = vunpack.c.l.b16 %v2969
        %v3121 = vunpack.c.l.b16 %v2970
        %v3122 = vunpack.c.l.b16 %v2971
        %v3123 = vunpack.c.l.b16 %v2972
        %v3124 = vunpack.c.l.b16 %v2973
        %v3125 = vunpack.c.l.b16 %v2974
        %v3126 = vunpack.c.l.b16 %v2975
        %v3127 = vunpack.c.l.b16 %v2976
        %v3128 = vunpack.c.l.b16 %v2977
        %v3129 = vunpack.c.l.b16 %v2978
        %v3130 = vunpack.c.l.b16 %v2979
        %v3131 = vunpack.c.l.b16 %v2980
        %v3132 = vunpack.c.l.b16 %v2981
        %v3133 = vunpack.c.l.b16 %v2982
        %v3134 = vunpack.c.l.b16 %v2983
        %v3135 = vunpack.c.l.b16 %v2984
        %v3136 = vunpack.c.l.b16 %v2985
        %v3137 = vunpack.c.l.b16 %v2986
        %v3138 = vunpack.c.l.b16 %v2987
        %v3139 = vunpack.c.l.b16 %v2988
        %v3140 = vunpack.c.l.b16 %v2989
        %v3141 = vunpack.c.l.b16 %v2990
        %v3142 = vunpack.c.l.b16 %v2991
        %v3143 = vunpack.c.l.b16 %v2992
        %v3144 = vunpack.c.l.b16 %v2993
        %v3145 = vunpack.c.l.b16 %v2994
        %v3146 = vunpack.c.l.b16 %v2995
        %v3147 = vunpack.c.l.b16 %v2996
        %v3148 = vunpack.c.l.b16 %v2997
        %v3149 = vunpack.c.l.b16 %v2998
        %v3150 = vunpack.c.l.b16 %v2999
        %v3151 = vunpack.c.l.b16 %v3000
        %v3152 = vunpack.c.l.b16 %v3001
        %v3153 = vunpack.c.l.b16 %v3002
        %v3154 = vunpack.c.l.b16 %v3003
        %v3155 = vunpack.c.l.b16 %v3004
        %v3156 = vunpack.c.l.b16 %v3005
        %v3157 = vunpack.c.l.b16 %v3006
        %v3158 = vunpack.c.l.b16 %v3007
        %v3159 = vunpack.c.l.b16 %v3008
        %v3160 = vunpack.c.l.b16 %v3009
        %v3161 = vunpack.c.l.b16 %v3010
        %v3162 = vunpack.c.l.b16 %v3011
        %v3163 = vunpack.c.l.b16 %v3012
        %v3164 = vunpack.c.l.b16 %v3013
        %v3165 = vunpack.c.l.b16 %v3014
        %v3166 = vunpack.c.l.b16 %v3015
        %v3167 = vunpack.c.l.b16 %v3016
        %v3168 = vunpack.c.l.b16 %v3017
        %v3169 = vpack.c.b16 %v3098, %v3097
        %v3170 = vpack.c.b16 %v3100, %v3099
        %v3171 = vpack.c.b16 %v3102, %v3101
        %v3172 = vpack.c.b16 %v3104, %v3103
        %v3173 = vpack.c.b16 %v3106, %v3105
        %v3174 = vpack.c.b16 %v3108, %v3107
        %v3175 = vpack.c.b16 %v3110, %v3109
        %v3176 = vpack.c.b16 %v3112, %v3111
        %v3177 = vpack.c.b16 %v3114, %v3113
        %v3178 = vpack.c.b16 %v3116, %v3115
        %v3179 = vpack.c.b16 %v3118, %v3117
        %v3180 = vpack.c.b16 %v3120, %v3119
        %v3181 = vpack.c.b16 %v3122, %v3121
        %v3182 = vpack.c.b16 %v3124, %v3123
        %v3183 = vpack.c.b16 %v3126, %v3125
        %v3184 = vpack.c.b16 %v3128, %v3127
        %v3185 = vpack.c.b16 %v3130, %v3129
        %v3186 = vpack.c.b16 %v3132, %v3131
        %v3187 = vpack.c.b16 %v3134, %v3133
        %v3188 = vpack.c.b16 %v3136, %v3135
        %v3189 = vpack.c.b16 %v3138, %v3137
        %v3190 = vpack.c.b16 %v3140, %v3139
        %v3191 = vpack.c.b16 %v3142, %v3141
        %v3192 = vpack.c.b16 %v3144, %v3143
        %v3193 = vpack.c.b16 %v3146, %v3145
        %v3194 = vpack.c.b16 %v3148, %v3147
        %v3195 = vpack.c.b16 %v3150, %v3149
        %v3196 = vpack.c.b16 %v3152, %v3151
        %v3197 = vpack.c.b16 %v3154, %v3153
        %v3198 = vpack.c.b16 %v3156, %v3155
        %v3199 = vpack.c.b16 %v3158, %v3157
        %v3200 = vpack.c.b16 %v3160, %v3159
        %v3201 = vpack.c.b16 %v3162, %v3161
        %v3202 = vpack.c.b16 %v3164, %v3163
        %v3203 = vpack.c.b16 %v3166, %v3165
        %v3204 = vpack.c.b16 %v3168, %v3167
        %vm3241 = vcmask 523264
        %v3243 = vsel %vm3241, %v2945, 0
        %3245 = vmatprep.subr.bf16.mxu0 0
        %3246 = vmatpush1.bf16.msra.mxu0 %v3169
        %3247 = vmatprep.subr.bf16.mxu0 0
        %3248 = vmatpush1.bf16.msra.mxu0 %v3170
        %3249 = vmatprep.subr.bf16.mxu0 0
        %3250 = vmatpush1.bf16.msra.mxu0 %v3171
        %3251 = vmatprep.subr.bf16.mxu0 0
        %3252 = vmatpush1.bf16.msra.mxu0 %v3172
        %3253 = vmatprep.subr.bf16.mxu0 0
        %3254 = vmatpush1.bf16.msra.mxu0 %v3173
        %3255 = vmatprep.subr.bf16.mxu0 0
        %3256 = vmatpush1.bf16.msra.mxu0 %v3174
        %3257 = vmatprep.subr.bf16.mxu0 0
        %3258 = vmatpush1.bf16.msra.mxu0 %v3175
        %3259 = vmatprep.subr.bf16.mxu0 0
        %3260 = vmatpush1.bf16.msra.mxu0 %v3176
        %3261 = vmatprep.subr.bf16.mxu0 0
        %3262 = vmatpush1.bf16.msra.mxu0 %v3177
        %3263 = vmatprep.subr.bf16.mxu0 0
        %3264 = vmatpush1.bf16.msra.mxu0 %v3178
        %3265 = vmatprep.subr.bf16.mxu0 0
        %3266 = vmatpush1.bf16.msra.mxu0 %v3179
        %3267 = vmatprep.subr.bf16.mxu0 0
        %3268 = vmatpush1.bf16.msra.mxu0 %v3180
        %3269 = vmatprep.subr.bf16.mxu0 0
        %3270 = vmatpush1.bf16.msra.mxu0 %v3181
        %3271 = vmatprep.subr.bf16.mxu0 0
        %3272 = vmatpush1.bf16.msra.mxu0 %v3182
        %3273 = vmatprep.subr.bf16.mxu0 0
        %3274 = vmatpush1.bf16.msra.mxu0 %v3183
        %3275 = vmatprep.subr.bf16.mxu0 0
        %3276 = vmatpush1.bf16.msra.mxu0 %v3184
        %3277 = vmatprep.mubr.bf16.mxu0 %v2942
        %3278 = vmatmul.mubr.bf16.gmra.mrb[0].mxu0 %v2941
        %v3279 = vpop.f32.mrb[0].mxu0
        %v3280 = vadd.f32 %v3023, %v3279
        %v3281 = vpop.f32.mrb[0].mxu0
        %v3282 = vpop.f32.mrb[0].mxu0
        %v3283 = vpop.f32.mrb[0].mxu0
        %3284 = vdwg.mxu0
        %3285 = vmatprep.subr.bf16.mxu0 0
        %3286 = vmatpush1.bf16.msra.mxu0 %v3185
        %3287 = vmatprep.subr.bf16.mxu0 0
        %3288 = vmatpush1.bf16.msra.mxu0 %v3186
        %3289 = vmatprep.subr.bf16.mxu0 0
        %3290 = vmatpush1.bf16.msra.mxu0 %v3187
        %3291 = vmatprep.subr.bf16.mxu0 0
        %3292 = vmatpush1.bf16.msra.mxu0 %v3188
        %3293 = vmatprep.subr.bf16.mxu0 0
        %3294 = vmatpush1.bf16.msra.mxu0 %v3189
        %3295 = vmatprep.subr.bf16.mxu0 0
        %3296 = vmatpush1.bf16.msra.mxu0 %v3190
        %3297 = vmatprep.subr.bf16.mxu0 0
        %3298 = vmatpush1.bf16.msra.mxu0 %v3191
        %3299 = vmatprep.subr.bf16.mxu0 0
        %3300 = vmatpush1.bf16.msra.mxu0 %v3192
        %3301 = vmatprep.subr.bf16.mxu0 0
        %3302 = vmatpush1.bf16.msra.mxu0 %v3193
        %3303 = vmatprep.subr.bf16.mxu0 0
        %3304 = vmatpush1.bf16.msra.mxu0 %v3194
        %3305 = vmatprep.subr.bf16.mxu0 0
        %3306 = vmatpush1.bf16.msra.mxu0 %v3195
        %3307 = vmatprep.subr.bf16.mxu0 0
        %3308 = vmatpush1.bf16.msra.mxu0 %v3196
        %3309 = vmatprep.subr.bf16.mxu0 0
        %3310 = vmatpush1.bf16.msra.mxu0 %v3197
        %3311 = vmatprep.subr.bf16.mxu0 0
        %3312 = vmatpush1.bf16.msra.mxu0 %v3198
        %3313 = vmatprep.subr.bf16.mxu0 0
        %3314 = vmatpush1.bf16.msra.mxu0 %v3199
        %3315 = vmatprep.subr.bf16.mxu0 0
        %3316 = vmatpush1.bf16.msra.mxu0 %v3200
        %3317 = vmatprep.mubr.bf16.mxu0 %v2944
        %3318 = vmatmul.mubr.bf16.gmra.mrb[0].mxu0 %v2943
        %v3319 = vpop.f32.mrb[0].mxu0
        %v3320 = vadd.f32 %v3280, %v3319
        %v3321 = vpop.f32.mrb[0].mxu0
        %v3322 = vpop.f32.mrb[0].mxu0
        %v3323 = vpop.f32.mrb[0].mxu0
        %3324 = vdwg.mxu0
        %3325 = vmatprep.subr.bf16.mxu0 0
        %3326 = vmatpush1.bf16.msra.mxu0 %v3201
        %3327 = vmatprep.subr.bf16.mxu0 0
        %3328 = vmatpush1.bf16.msra.mxu0 %v3202
        %3329 = vmatprep.subr.bf16.mxu0 0
        %3330 = vmatpush1.bf16.msra.mxu0 %v3203
        %3331 = vmatprep.subr.bf16.mxu0 0
        %3332 = vmatpush1.bf16.msra.mxu0 %v3204
        %3333 = vmatprep.subr.bf16.mxu0 0
        %3334 = vmatpush1.bf16.msra.mxu0 0
        %3335 = vmatprep.subr.bf16.mxu0 0
        %3336 = vmatpush1.bf16.msra.mxu0 0
        %3337 = vmatprep.subr.bf16.mxu0 0
        %3338 = vmatpush1.bf16.msra.mxu0 0
        %3339 = vmatprep.subr.bf16.mxu0 0
        %3340 = vmatpush1.bf16.msra.mxu0 0
        %3341 = vmatprep.subr.bf16.mxu0 0
        %3342 = vmatpush1.bf16.msra.mxu0 0
        %3343 = vmatprep.subr.bf16.mxu0 0
        %3344 = vmatpush1.bf16.msra.mxu0 0
        %3345 = vmatprep.subr.bf16.mxu0 0
        %3346 = vmatpush1.bf16.msra.mxu0 0
        %3347 = vmatprep.subr.bf16.mxu0 0
        %3348 = vmatpush1.bf16.msra.mxu0 0
        %3349 = vmatprep.subr.bf16.mxu0 0
        %3350 = vmatpush1.bf16.msra.mxu0 0
        %3351 = vmatprep.subr.bf16.mxu0 0
        %3352 = vmatpush1.bf16.msra.mxu0 0
        %3353 = vmatprep.subr.bf16.mxu0 0
        %3354 = vmatpush1.bf16.msra.mxu0 0
        %3355 = vmatprep.subr.bf16.mxu0 0
        %3356 = vmatpush1.bf16.msra.mxu0 0
        %3357 = vmatprep.mubr.bf16.mxu0 0
        %3358 = vmatmul.mubr.bf16.gmra.mrb[0].mxu0 %v3243
        %v3359 = vpop.f32.mrb[0].mxu0
        %v3360 = vadd.f32 %v3320, %v3359
        %v3361 = vpop.f32.mrb[0].mxu0
        %v3362 = vpop.f32.mrb[0].mxu0
        %v3363 = vpop.f32.mrb[0].mxu0
        %3364 = vdwg.mxu0
        %v3365 = vmax.f32 %v3360, 0.0
        %v3366 = vpack.c.bf16 %v3365, %v3365
        %v3367 = vld [vmem:[%s7] sm:$0xff]
        %v3368 = vld [vmem:[%s7 + $0x8] sm:$0xff]
        %v3369 = vld [vmem:[%s7 + $0x10] sm:$0xff]
        %v3370 = vld [vmem:[%s7 + $0x18] sm:$0xff]
        %v3371 = vld [vmem:[%s7 + $0x20] sm:$0xff]
        %v3372 = vld [vmem:[%s7 + $0x28] sm:$0xff]
        %v3373 = vld [vmem:[%s7 + $0x30] sm:$0xff]
        %v3374 = vld [vmem:[%s7 + $0x38] sm:$0xff]
        %v3375 = vld [vmem:[%s7 + $0x40] sm:$0xff]
        %v3376 = vld [vmem:[%s7 + $0x48] sm:$0xff]
        %v3377 = vld [vmem:[%s7 + $0x50] sm:$0xff]
        %v3378 = vld [vmem:[%s7 + $0x58] sm:$0xff]
        %v3379 = vld [vmem:[%s7 + $0x60] sm:$0xff]
        %v3380 = vld [vmem:[%s7 + $0x68] sm:$0xff]
        %v3381 = vld [vmem:[%s7 + $0x70] sm:$0xff]
        %v3382 = vld [vmem:[%s7 + $0x78] sm:$0xff]
        %v3383 = vld [vmem:[%s8] sm:$0xf]
        %v3385 = vlaneseq
        %v3386 = vshrl.u32 %v3385, 7
        %v3387 = vsub.s32 0, %v3386
        %v3388 = vrot.slane %v3383, %v3387
        %v3389 = vlaneseq
        %v3390 = vshrl.u32 %v3389, 7
        %v3391 = vsub.s32 1, %v3390
        %v3392 = vrot.slane %v3383, %v3391
        %v3393 = vlaneseq
        %v3394 = vshrl.u32 %v3393, 7
        %v3395 = vsub.s32 2, %v3394
        %v3396 = vrot.slane %v3383, %v3395
        %v3397 = vlaneseq
        %v3398 = vshrl.u32 %v3397, 7
        %v3399 = vsub.s32 3, %v3398
        %v3400 = vrot.slane %v3383, %v3399
        %v3421 = vunpack.c.l.b16 %v3367
        %v3422 = vunpack.c.h.b16 %v3367
        %v3423 = vunpack.c.l.b16 %v3368
        %v3424 = vunpack.c.h.b16 %v3368
        %v3425 = vunpack.c.l.b16 %v3369
        %v3426 = vunpack.c.h.b16 %v3369
        %v3427 = vunpack.c.l.b16 %v3370
        %v3428 = vunpack.c.h.b16 %v3370
        %v3429 = vunpack.c.l.b16 %v3371
        %v3430 = vunpack.c.h.b16 %v3371
        %v3431 = vunpack.c.l.b16 %v3372
        %v3432 = vunpack.c.h.b16 %v3372
        %v3433 = vunpack.c.l.b16 %v3373
        %v3434 = vunpack.c.h.b16 %v3373
        %v3435 = vunpack.c.l.b16 %v3374
        %v3436 = vunpack.c.h.b16 %v3374
        %v3437 = vunpack.c.l.b16 %v3375
        %v3438 = vunpack.c.h.b16 %v3375
        %v3439 = vunpack.c.l.b16 %v3376
        %v3440 = vunpack.c.h.b16 %v3376
        %v3441 = vunpack.c.l.b16 %v3377
        %v3442 = vunpack.c.h.b16 %v3377
        %v3443 = vunpack.c.l.b16 %v3378
        %v3444 = vunpack.c.h.b16 %v3378
        %v3445 = vunpack.c.l.b16 %v3379
        %v3446 = vunpack.c.h.b16 %v3379
        %v3447 = vunpack.c.l.b16 %v3380
        %v3448 = vunpack.c.h.b16 %v3380
        %v3449 = vunpack.c.l.b16 %v3381
        %v3450 = vunpack.c.h.b16 %v3381
        %v3451 = vunpack.c.l.b16 %v3382
        %v3452 = vunpack.c.h.b16 %v3382
        %v3453 = vpack.c.b16 %v3425, %v3421
        %v3454 = vpack.c.b16 %v3426, %v3422
        %v3455 = vpack.c.b16 %v3427, %v3423
        %v3456 = vpack.c.b16 %v3428, %v3424
        %v3457 = vpack.c.b16 %v3433, %v3429
        %v3458 = vpack.c.b16 %v3434, %v3430
        %v3459 = vpack.c.b16 %v3435, %v3431
        %v3460 = vpack.c.b16 %v3436, %v3432
        %v3461 = vpack.c.b16 %v3441, %v3437
        %v3462 = vpack.c.b16 %v3442, %v3438
        %v3463 = vpack.c.b16 %v3443, %v3439
        %v3464 = vpack.c.b16 %v3444, %v3440
        %v3465 = vpack.c.b16 %v3449, %v3445
        %v3466 = vpack.c.b16 %v3450, %v3446
        %v3467 = vpack.c.b16 %v3451, %v3447
        %v3468 = vpack.c.b16 %v3452, %v3448
        %v3486 = vsel %vm3241, %v3366, 0
        %3488 = vmatprep.subr.bf16.mxu0 %v3454
        %3489 = vmatpush1.bf16.msra.mxu0 %v3453
        %3490 = vmatprep.subr.bf16.mxu0 %v3458
        %3491 = vmatpush1.bf16.msra.mxu0 %v3457
        %3492 = vmatprep.subr.bf16.mxu0 %v3462
        %3493 = vmatpush1.bf16.msra.mxu0 %v3461
        %3494 = vmatprep.subr.bf16.mxu0 %v3466
        %3495 = vmatpush1.bf16.msra.mxu0 %v3465
        %3496 = vmatprep.subr.bf16.mxu0 0
        %3497 = vmatpush1.bf16.msra.mxu0 0
        %3498 = vmatprep.subr.bf16.mxu0 0
        %3499 = vmatpush1.bf16.msra.mxu0 0
        %3500 = vmatprep.subr.bf16.mxu0 0
        %3501 = vmatpush1.bf16.msra.mxu0 0
        %3502 = vmatprep.subr.bf16.mxu0 0
        %3503 = vmatpush1.bf16.msra.mxu0 0
        %3504 = vmatprep.subr.bf16.mxu0 0
        %3505 = vmatpush1.bf16.msra.mxu0 0
        %3506 = vmatprep.subr.bf16.mxu0 0
        %3507 = vmatpush1.bf16.msra.mxu0 0
        %3508 = vmatprep.subr.bf16.mxu0 0
        %3509 = vmatpush1.bf16.msra.mxu0 0
        %3510 = vmatprep.subr.bf16.mxu0 0
        %3511 = vmatpush1.bf16.msra.mxu0 0
        %3512 = vmatprep.subr.bf16.mxu0 0
        %3513 = vmatpush1.bf16.msra.mxu0 0
        %3514 = vmatprep.subr.bf16.mxu0 0
        %3515 = vmatpush1.bf16.msra.mxu0 0
        %3516 = vmatprep.subr.bf16.mxu0 0
        %3517 = vmatpush1.bf16.msra.mxu0 0
        %3518 = vmatprep.subr.bf16.mxu0 0
        %3519 = vmatpush1.bf16.msra.mxu0 0
        %3520 = vmatprep.mubr.bf16.mxu0 0
        %3521 = vmatmul.mubr.bf16.gmra.mrb[0].mxu0 %v3486
        %v3522 = vpop.f32.mrb[0].mxu0
        %v3523 = vadd.f32 %v3388, %v3522
        %v3524 = vpop.f32.mrb[0].mxu0
        %v3525 = vadd.f32 %v3392, %v3524
        %v3526 = vpop.f32.mrb[0].mxu0
        %v3527 = vpop.f32.mrb[0].mxu0
        %3528 = vdwg.mxu0
        %3529 = vmatprep.subr.bf16.mxu0 %v3456
        %3530 = vmatpush1.bf16.msra.mxu0 %v3455
        %3531 = vmatprep.subr.bf16.mxu0 %v3460
        %3532 = vmatpush1.bf16.msra.mxu0 %v3459
        %3533 = vmatprep.subr.bf16.mxu0 %v3464
        %3534 = vmatpush1.bf16.msra.mxu0 %v3463
        %3535 = vmatprep.subr.bf16.mxu0 %v3468
        %3536 = vmatpush1.bf16.msra.mxu0 %v3467
        %3537 = vmatprep.subr.bf16.mxu0 0
        %3538 = vmatpush1.bf16.msra.mxu0 0
        %3539 = vmatprep.subr.bf16.mxu0 0
        %3540 = vmatpush1.bf16.msra.mxu0 0
        %3541 = vmatprep.subr.bf16.mxu0 0
        %3542 = vmatpush1.bf16.msra.mxu0 0
        %3543 = vmatprep.subr.bf16.mxu0 0
        %3544 = vmatpush1.bf16.msra.mxu0 0
        %3545 = vmatprep.subr.bf16.mxu0 0
        %3546 = vmatpush1.bf16.msra.mxu0 0
        %3547 = vmatprep.subr.bf16.mxu0 0
        %3548 = vmatpush1.bf16.msra.mxu0 0
        %3549 = vmatprep.subr.bf16.mxu0 0
        %3550 = vmatpush1.bf16.msra.mxu0 0
        %3551 = vmatprep.subr.bf16.mxu0 0
        %3552 = vmatpush1.bf16.msra.mxu0 0
        %3553 = vmatprep.subr.bf16.mxu0 0
        %3554 = vmatpush1.bf16.msra.mxu0 0
        %3555 = vmatprep.subr.bf16.mxu0 0
        %3556 = vmatpush1.bf16.msra.mxu0 0
        %3557 = vmatprep.subr.bf16.mxu0 0
        %3558 = vmatpush1.bf16.msra.mxu0 0
        %3559 = vmatprep.subr.bf16.mxu0 0
        %3560 = vmatpush1.bf16.msra.mxu0 0
        %3561 = vmatprep.mubr.bf16.mxu0 0
        %3562 = vmatmul.mubr.bf16.gmra.mrb[0].mxu0 %v3486
        %v3563 = vpop.f32.mrb[0].mxu0
        %v3564 = vadd.f32 %v3396, %v3563
        %v3565 = vpop.f32.mrb[0].mxu0
        %v3566 = vadd.f32 %v3400, %v3565
        %v3567 = vpop.f32.mrb[0].mxu0
        %v3568 = vpop.f32.mrb[0].mxu0
        %3569 = vdwg.mxu0
        %v3570 = vmax.f32 %v3523, 0.0
        %v3571 = vmax.f32 %v3525, 0.0
        %v3572 = vmax.f32 %v3564, 0.0
        %v3573 = vmax.f32 %v3566, 0.0
        %v3574 = vpack.c.bf16 %v3570, %v3570
        %v3575 = vpack.c.bf16 %v3571, %v3571
        %v3576 = vpack.c.bf16 %v3572, %v3572
        %v3577 = vpack.c.bf16 %v3573, %v3573
        %v3578 = vld [vmem:[%s9] sm:$0xf]
        %v3579 = vld [vmem:[%s9 + $0x4] sm:$0xf]
        %v3580 = vld [vmem:[%s9 + $0x8] sm:$0xf]
        %v3581 = vld [vmem:[%s9 + $0xc] sm:$0xf]
        %v3582 = vld [vmem:[%s9 + $0x10] sm:$0xf]
        %v3583 = vld [vmem:[%s9 + $0x14] sm:$0xf]
        %v3584 = vld [vmem:[%s9 + $0x18] sm:$0xf]
        %v3585 = vld [vmem:[%s9 + $0x1c] sm:$0xf]
        %v3586 = vld [vmem:[%s9 + $0x20] sm:$0xf]
        %v3587 = vld [vmem:[%s9 + $0x24] sm:$0xf]
        %v3588 = vld [vmem:[%s9 + $0x28] sm:$0xf]
        %v3589 = vld [vmem:[%s9 + $0x2c] sm:$0xf]
        %v3590 = vld [vmem:[%s9 + $0x30] sm:$0xf]
        %v3591 = vld [vmem:[%s9 + $0x34] sm:$0xf]
        %v3592 = vld [vmem:[%s9 + $0x38] sm:$0xf]
        %v3593 = vld [vmem:[%s9 + $0x3c] sm:$0xf]
        %v3594 = vld [vmem:[%s9 + $0x40] sm:$0xf]
        %v3595 = vld [vmem:[%s9 + $0x44] sm:$0xf]
        %v3596 = vld [vmem:[%s9 + $0x48] sm:$0xf]
        %v3597 = vld [vmem:[%s9 + $0x4c] sm:$0xf]
        %v3598 = vld [vmem:[%s9 + $0x50] sm:$0xf]
        %v3599 = vld [vmem:[%s9 + $0x54] sm:$0xf]
        %v3600 = vld [vmem:[%s9 + $0x58] sm:$0xf]
        %v3601 = vld [vmem:[%s9 + $0x5c] sm:$0xf]
        %v3602 = vld [vmem:[%s9 + $0x60] sm:$0xf]
        %v3603 = vld [vmem:[%s9 + $0x64] sm:$0xf]
        %v3604 = vld [vmem:[%s9 + $0x68] sm:$0xf]
        %v3605 = vld [vmem:[%s9 + $0x6c] sm:$0xf]
        %v3606 = vld [vmem:[%s9 + $0x70] sm:$0xf]
        %v3607 = vld [vmem:[%s9 + $0x74] sm:$0xf]
        %v3608 = vld [vmem:[%s9 + $0x78] sm:$0xf]
        %v3609 = vld [vmem:[%s9 + $0x7c] sm:$0xf]
        %v3610 = vld [vmem:[%s9 + $0x80] sm:$0xf]
        %v3611 = vld [vmem:[%s9 + $0x84] sm:$0xf]
        %v3612 = vld [vmem:[%s9 + $0x88] sm:$0xf]
        %v3613 = vld [vmem:[%s9 + $0x8c] sm:$0xf]
        %v3614 = vld [vmem:[%s9 + $0x90] sm:$0xf]
        %v3615 = vld [vmem:[%s9 + $0x94] sm:$0xf]
        %v3616 = vld [vmem:[%s9 + $0x98] sm:$0xf]
        %v3617 = vld [vmem:[%s9 + $0x9c] sm:$0xf]
        %v3618 = vld [vmem:[%s9 + $0xa0] sm:$0xf]
        %v3619 = vld [vmem:[%s9 + $0xa4] sm:$0xf]
        %v3620 = vld [vmem:[%s9 + $0xa8] sm:$0xf]
        %v3621 = vld [vmem:[%s9 + $0xac] sm:$0xf]
        %v3622 = vld [vmem:[%s9 + $0xb0] sm:$0xf]
        %v3623 = vld [vmem:[%s9 + $0xb4] sm:$0xf]
        %v3624 = vld [vmem:[%s9 + $0xb8] sm:$0xf]
        %v3625 = vld [vmem:[%s9 + $0xbc] sm:$0xf]
        %v3626 = vld [vmem:[%s9 + $0xc0] sm:$0xf]
        %v3627 = vld [vmem:[%s9 + $0xc4] sm:$0xf]
        %v3628 = vld [vmem:[%s9 + $0xc8] sm:$0xf]
        %v3629 = vld [vmem:[%s9 + $0xcc] sm:$0xf]
        %v3630 = vld [vmem:[%s9 + $0xd0] sm:$0xf]
        %v3631 = vld [vmem:[%s9 + $0xd4] sm:$0xf]
        %v3632 = vld [vmem:[%s9 + $0xd8] sm:$0xf]
        %v3633 = vld [vmem:[%s9 + $0xdc] sm:$0xf]
        %v3634 = vld [vmem:[%s9 + $0xe0] sm:$0xf]
        %v3635 = vld [vmem:[%s9 + $0xe4] sm:$0xf]
        %v3636 = vld [vmem:[%s9 + $0xe8] sm:$0xf]
        %v3637 = vld [vmem:[%s9 + $0xec] sm:$0xf]
        %v3638 = vld [vmem:[%s9 + $0xf0] sm:$0xf]
        %v3639 = vld [vmem:[%s9 + $0xf4] sm:$0xf]
        %v3640 = vld [vmem:[%s9 + $0xf8] sm:$0xf]
        %v3641 = vld [vmem:[%s9 + $0xfc] sm:$0xf]
        %v3642 = vld [vmem:[%s10] sm:$0x1]
        %v3644 = vlaneseq
        %v3645 = vshrl.u32 %v3644, 7
        %v3646 = vsub.s32 0, %v3645
        %v3647 = vrot.slane %v3642, %v3646
        %v3713 = vunpack.c.l.b16 %v3578
        %v3714 = vunpack.c.l.b16 %v3579
        %v3715 = vunpack.c.l.b16 %v3580
        %v3716 = vunpack.c.l.b16 %v3581
        %v3717 = vunpack.c.l.b16 %v3582
        %v3718 = vunpack.c.l.b16 %v3583
        %v3719 = vunpack.c.l.b16 %v3584
        %v3720 = vunpack.c.l.b16 %v3585
        %v3721 = vunpack.c.l.b16 %v3586
        %v3722 = vunpack.c.l.b16 %v3587
        %v3723 = vunpack.c.l.b16 %v3588
        %v3724 = vunpack.c.l.b16 %v3589
        %v3725 = vunpack.c.l.b16 %v3590
        %v3726 = vunpack.c.l.b16 %v3591
        %v3727 = vunpack.c.l.b16 %v3592
        %v3728 = vunpack.c.l.b16 %v3593
        %v3729 = vunpack.c.l.b16 %v3594
        %v3730 = vunpack.c.l.b16 %v3595
        %v3731 = vunpack.c.l.b16 %v3596
        %v3732 = vunpack.c.l.b16 %v3597
        %v3733 = vunpack.c.l.b16 %v3598
        %v3734 = vunpack.c.l.b16 %v3599
        %v3735 = vunpack.c.l.b16 %v3600
        %v3736 = vunpack.c.l.b16 %v3601
        %v3737 = vunpack.c.l.b16 %v3602
        %v3738 = vunpack.c.l.b16 %v3603
        %v3739 = vunpack.c.l.b16 %v3604
        %v3740 = vunpack.c.l.b16 %v3605
        %v3741 = vunpack.c.l.b16 %v3606
        %v3742 = vunpack.c.l.b16 %v3607
        %v3743 = vunpack.c.l.b16 %v3608
        %v3744 = vunpack.c.l.b16 %v3609
        %v3745 = vunpack.c.l.b16 %v3610
        %v3746 = vunpack.c.l.b16 %v3611
        %v3747 = vunpack.c.l.b16 %v3612
        %v3748 = vunpack.c.l.b16 %v3613
        %v3749 = vunpack.c.l.b16 %v3614
        %v3750 = vunpack.c.l.b16 %v3615
        %v3751 = vunpack.c.l.b16 %v3616
        %v3752 = vunpack.c.l.b16 %v3617
        %v3753 = vunpack.c.l.b16 %v3618
        %v3754 = vunpack.c.l.b16 %v3619
        %v3755 = vunpack.c.l.b16 %v3620
        %v3756 = vunpack.c.l.b16 %v3621
        %v3757 = vunpack.c.l.b16 %v3622
        %v3758 = vunpack.c.l.b16 %v3623
        %v3759 = vunpack.c.l.b16 %v3624
        %v3760 = vunpack.c.l.b16 %v3625
        %v3761 = vunpack.c.l.b16 %v3626
        %v3762 = vunpack.c.l.b16 %v3627
        %v3763 = vunpack.c.l.b16 %v3628
        %v3764 = vunpack.c.l.b16 %v3629
        %v3765 = vunpack.c.l.b16 %v3630
        %v3766 = vunpack.c.l.b16 %v3631
        %v3767 = vunpack.c.l.b16 %v3632
        %v3768 = vunpack.c.l.b16 %v3633
        %v3769 = vunpack.c.l.b16 %v3634
        %v3770 = vunpack.c.l.b16 %v3635
        %v3771 = vunpack.c.l.b16 %v3636
        %v3772 = vunpack.c.l.b16 %v3637
        %v3773 = vunpack.c.l.b16 %v3638
        %v3774 = vunpack.c.l.b16 %v3639
        %v3775 = vunpack.c.l.b16 %v3640
        %v3776 = vunpack.c.l.b16 %v3641
        %v3777 = vpack.c.b16 %v3714, %v3713
        %v3778 = vpack.c.b16 %v3716, %v3715
        %v3779 = vpack.c.b16 %v3718, %v3717
        %v3780 = vpack.c.b16 %v3720, %v3719
        %v3781 = vpack.c.b16 %v3722, %v3721
        %v3782 = vpack.c.b16 %v3724, %v3723
        %v3783 = vpack.c.b16 %v3726, %v3725
        %v3784 = vpack.c.b16 %v3728, %v3727
        %v3785 = vpack.c.b16 %v3730, %v3729
        %v3786 = vpack.c.b16 %v3732, %v3731
        %v3787 = vpack.c.b16 %v3734, %v3733
        %v3788 = vpack.c.b16 %v3736, %v3735
        %v3789 = vpack.c.b16 %v3738, %v3737
        %v3790 = vpack.c.b16 %v3740, %v3739
        %v3791 = vpack.c.b16 %v3742, %v3741
        %v3792 = vpack.c.b16 %v3744, %v3743
        %v3793 = vpack.c.b16 %v3746, %v3745
        %v3794 = vpack.c.b16 %v3748, %v3747
        %v3795 = vpack.c.b16 %v3750, %v3749
        %v3796 = vpack.c.b16 %v3752, %v3751
        %v3797 = vpack.c.b16 %v3754, %v3753
        %v3798 = vpack.c.b16 %v3756, %v3755
        %v3799 = vpack.c.b16 %v3758, %v3757
        %v3800 = vpack.c.b16 %v3760, %v3759
        %v3801 = vpack.c.b16 %v3762, %v3761
        %v3802 = vpack.c.b16 %v3764, %v3763
        %v3803 = vpack.c.b16 %v3766, %v3765
        %v3804 = vpack.c.b16 %v3768, %v3767
        %v3805 = vpack.c.b16 %v3770, %v3769
        %v3806 = vpack.c.b16 %v3772, %v3771
        %v3807 = vpack.c.b16 %v3774, %v3773
        %v3808 = vpack.c.b16 %v3776, %v3775
        %3841 = vmatprep.subr.bf16.mxu0 0
        %3842 = vmatpush1.bf16.msra.mxu0 %v3777
        %3843 = vmatprep.subr.bf16.mxu0 0
        %3844 = vmatpush1.bf16.msra.mxu0 %v3778
        %3845 = vmatprep.subr.bf16.mxu0 0
        %3846 = vmatpush1.bf16.msra.mxu0 %v3779
        %3847 = vmatprep.subr.bf16.mxu0 0
        %3848 = vmatpush1.bf16.msra.mxu0 %v3780
        %3849 = vmatprep.subr.bf16.mxu0 0
        %3850 = vmatpush1.bf16.msra.mxu0 %v3781
        %3851 = vmatprep.subr.bf16.mxu0 0
        %3852 = vmatpush1.bf16.msra.mxu0 %v3782
        %3853 = vmatprep.subr.bf16.mxu0 0
        %3854 = vmatpush1.bf16.msra.mxu0 %v3783
        %3855 = vmatprep.subr.bf16.mxu0 0
        %3856 = vmatpush1.bf16.msra.mxu0 %v3784
        %3857 = vmatprep.subr.bf16.mxu0 0
        %3858 = vmatpush1.bf16.msra.mxu0 %v3785
        %3859 = vmatprep.subr.bf16.mxu0 0
        %3860 = vmatpush1.bf16.msra.mxu0 %v3786
        %3861 = vmatprep.subr.bf16.mxu0 0
        %3862 = vmatpush1.bf16.msra.mxu0 %v3787
        %3863 = vmatprep.subr.bf16.mxu0 0
        %3864 = vmatpush1.bf16.msra.mxu0 %v3788
        %3865 = vmatprep.subr.bf16.mxu0 0
        %3866 = vmatpush1.bf16.msra.mxu0 %v3789
        %3867 = vmatprep.subr.bf16.mxu0 0
        %3868 = vmatpush1.bf16.msra.mxu0 %v3790
        %3869 = vmatprep.subr.bf16.mxu0 0
        %3870 = vmatpush1.bf16.msra.mxu0 %v3791
        %3871 = vmatprep.subr.bf16.mxu0 0
        %3872 = vmatpush1.bf16.msra.mxu0 %v3792
        %3873 = vmatprep.mubr.bf16.mxu0 %v3575
        %3874 = vmatmul.mubr.bf16.gmra.mrb[0].mxu0 %v3574
        %v3875 = vpop.f32.mrb[0].mxu0
        %v3876 = vadd.f32 %v3647, %v3875
        %v3877 = vpop.f32.mrb[0].mxu0
        %v3878 = vpop.f32.mrb[0].mxu0
        %v3879 = vpop.f32.mrb[0].mxu0
        %3880 = vdwg.mxu0
        %3881 = vmatprep.subr.bf16.mxu0 0
        %3882 = vmatpush1.bf16.msra.mxu0 %v3793
        %3883 = vmatprep.subr.bf16.mxu0 0
        %3884 = vmatpush1.bf16.msra.mxu0 %v3794
        %3885 = vmatprep.subr.bf16.mxu0 0
        %3886 = vmatpush1.bf16.msra.mxu0 %v3795
        %3887 = vmatprep.subr.bf16.mxu0 0
        %3888 = vmatpush1.bf16.msra.mxu0 %v3796
        %3889 = vmatprep.subr.bf16.mxu0 0
        %3890 = vmatpush1.bf16.msra.mxu0 %v3797
        %3891 = vmatprep.subr.bf16.mxu0 0
        %3892 = vmatpush1.bf16.msra.mxu0 %v3798
        %3893 = vmatprep.subr.bf16.mxu0 0
        %3894 = vmatpush1.bf16.msra.mxu0 %v3799
        %3895 = vmatprep.subr.bf16.mxu0 0
        %3896 = vmatpush1.bf16.msra.mxu0 %v3800
        %3897 = vmatprep.subr.bf16.mxu0 0
        %3898 = vmatpush1.bf16.msra.mxu0 %v3801
        %3899 = vmatprep.subr.bf16.mxu0 0
        %3900 = vmatpush1.bf16.msra.mxu0 %v3802
        %3901 = vmatprep.subr.bf16.mxu0 0
        %3902 = vmatpush1.bf16.msra.mxu0 %v3803
        %3903 = vmatprep.subr.bf16.mxu0 0
        %3904 = vmatpush1.bf16.msra.mxu0 %v3804
        %3905 = vmatprep.subr.bf16.mxu0 0
        %3906 = vmatpush1.bf16.msra.mxu0 %v3805
        %3907 = vmatprep.subr.bf16.mxu0 0
        %3908 = vmatpush1.bf16.msra.mxu0 %v3806
        %3909 = vmatprep.subr.bf16.mxu0 0
        %3910 = vmatpush1.bf16.msra.mxu0 %v3807
        %3911 = vmatprep.subr.bf16.mxu0 0
        %3912 = vmatpush1.bf16.msra.mxu0 %v3808
        %3913 = vmatprep.mubr.bf16.mxu0 %v3577
        %3914 = vmatmul.mubr.bf16.gmra.mrb[0].mxu0 %v3576
        %v3915 = vpop.f32.mrb[0].mxu0
        %v3916 = vadd.f32 %v3876, %v3915
        %v3917 = vpop.f32.mrb[0].mxu0
        %v3918 = vpop.f32.mrb[0].mxu0
        %v3919 = vpop.f32.mrb[0].mxu0
        %3920 = vdwg.mxu0
        %3922 = vrot.lane.b32.xlu0 %v3916, 127
        %v3923 = vpop.permute.xlu0 %3922
        %vm3925 = vcmask 44032
        %v3926 = vsel %vm3925, %v3923, 0.0
        %3927 = vadd.xlane.f32.xlu0 %v3926
        %v3928 = vpop.xlane.xlu0 %3927
        %v3929 = vrcp.pop 6.0
        %v3930 = vmul.f32 %v3928, %v3929
        %v3931 = vsub.f32 %v3916, %v3930
        %3932 = vset.pattern.permute.xlu0 0
        %3933 = vperm.xlu0 %3932, %v3916
        %v3934 = vpop.permute.xlu0 %3933
        %v3936 = vadd.f32 %v3934, %v3931
        %3938 = vrot.lane.b32.xlu0 %v3936, 127
        %v3939 = vpop.permute.xlu0 %3938
        %3941 = vst.msk [vmem:[%s379] sm:$0xf] %vm3925, %v3939
        %s3942 = sand.u32 %s269, 1
        %s3943 = scalar_lea.sflag [#allocation6], %s3942
        %s3944 = sand.u32 %s269, 1
        %s3945 = smul.addr %s3944, 4
        %s3946 = scalar_lea.vmem [#allocation5], %s3945
        // Predicated region
        $region65: #{dueling_dqn_forward.1} parent=63 // pred_check
          %p3947 = pneg %p279
        $region66: #{dueling_dqn_forward.1} parent=63 // pred_check_branch
          %3949 = sbr.rel (%p3947) target = $region68
        $region67: #{dueling_dqn_forward.1} parent=63 // pred_region
          %s3951 = ssub.s32 64, 64
          %3952 = vsyncadd %s3943, %s3951
          %s3953 = smul.addr %s25, 64
          %s3954 = scalar_lea.hbm %s11, %s3953
          %s3956 = sshll.u32 %s3946, 4
          %s3957 = int_to_ptr.vmem [resolvable:$true] %s3956
          %3959 = dma.vmem_to_hbm [thread:$0]  %s3957, 64, %s3954, %s3943
        $region68: #{dueling_dqn_forward.1} parent=63 // pred_fallthru
          _
      $region64: #{dueling_dqn_forward.1} parent=5 // pred_fallthru
        _
      %p3960 = scmp.le.s32.totalorder 2, %s20
      // Predicated region
      $region69: #{dueling_dqn_forward.1} parent=5 // pred_check
        %p3961 = pneg %p3960
      $region70: #{dueling_dqn_forward.1} parent=5 // pred_check_branch
        %3963 = sbr.rel (%p3961) target = $region72
      $region71: #{dueling_dqn_forward.1} parent=5 // pred_region
        %s3964 = ssub.s32 %s20, 2
        // Predicated region
        $region73: #{dueling_dqn_forward.1} parent=71 // pred_check
          %p3965 = pneg %p285
        $region74: #{dueling_dqn_forward.1} parent=71 // pred_check_branch
          %3967 = sbr.rel (%p3965) target = $region76
        $region75: #{dueling_dqn_forward.1} parent=71 // pred_region
          %s3968 = sand.u32 %s270, 1
          %s3969 = scalar_lea.sflag [#allocation6], %s3968
          %s3970 = sand.u32 %s270, 1
          %s3971 = smul.addr %s3970, 4
          %s3972 = scalar_lea.vmem [#allocation5], %s3971
          %3973 = dma.done %s3969, 64
        $region76: #{dueling_dqn_forward.1} parent=71 // pred_fallthru
          _
      $region72: #{dueling_dqn_forward.1} parent=5 // pred_fallthru
        _
    $region6: #{dueling_dqn_forward.1} parent=1 // loop_footer
      %s24 = sadd.s32 1, %s20
    $region7: #{dueling_dqn_forward.1} parent=1 // loop_footer_branch
      %19 = sbr.rel target = $region3
    $region8: #{dueling_dqn_forward.1} parent=1 // loop_exit
      _
    %3974 = vsyncpa [#allocation6], 1
    %s3975 = scalar_lea.sflag [#allocation6], 1
    %3976 = vsyncpa %s3975, 1

</llo_original>
